<compile_context>
chip_gen: v6e
topology: v6e:2x2x1
jax: 0.10.0
libtpu: 0.0.40
codegen_flags: <defaults>
</compile_context>

<pallas_src>
import math

import jax
import jax.numpy as jnp
from jax.experimental import pallas as pl
from jax.experimental.pallas import tpu as pltpu

# ---- config (module globals, sized small for the test) ----
EMBED_DIM = 64
NUM_LAYERS = 6
NUM_HEADS = 2
HEAD_DIM = EMBED_DIM // NUM_HEADS
VOCAB_SIZE = 256          # small stand-in for 5000 (pad real vocab to 5120)
FF_DIM = EMBED_DIM * 4
LN_EPS = 1e-5
NEG_INF = -1e30           # finite "-inf": exp underflows to exactly 0 in f32


def _layer_norm(x, g, b):
    mu = jnp.mean(x, axis=-1, keepdims=True)
    var = jnp.mean(jnp.square(x - mu), axis=-1, keepdims=True)
    return (x - mu) * jax.lax.rsqrt(var + LN_EPS) * g + b


def sparse_depth_kernel(x_ref, sw_ref, sb_ref,
                        ln1g_ref, ln1b_ref,
                        wq_ref, bq_ref, wk_ref, bk_ref, wv_ref, bv_ref,
                        wo_ref, bo_ref,
                        ln2g_ref, ln2b_ref, w1_ref, b1_ref, w2_ref, b2_ref,
                        lnfg_ref, lnfb_ref, hw_ref, hb_ref,
                        logits_ref, usage_ref):
    f32 = jnp.float32
    bf16 = jnp.bfloat16
    dn = (((1,), (1,)), ((), ()))        # contract last dims ('nd,md->nm')

    x = x_ref[...]                       # (N, E) f32 residual stream
    N, E = x.shape
    scale = 1.0 / math.sqrt(HEAD_DIM)

    # ---- TokenSemanticScorer: sigmoid(x @ w.T + b) --------------------------
    # Produced in both layouts natively (no in-kernel (N,1)<->(1,N) relayout):
    #   column (N,1): VPU lane-reduction  -> residual-select mask
    #   row    (1,N): M=1 MXU matmul      -> key mask / layer-usage
    sw = sw_ref[...]                     # (1, E) f32
    sb = sb_ref[...]                     # (1, 1) f32
    s_col = jax.nn.sigmoid(
        jnp.sum(x * sw, axis=-1, keepdims=True) + sb)                       # (N, 1)
    s_row = jax.nn.sigmoid(
        jax.lax.dot_general(sw, x, dn, preferred_element_type=f32) + sb)    # (1, N)

    usage = jnp.zeros((1, N), f32)

    # ---- fully unrolled layer loop: all weights VMEM-resident ---------------
    for l in range(NUM_LAYERS):
        thr = jnp.float32(l / NUM_LAYERS)
        keep_col = s_col > thr                            # (N, 1) bool
        keep_row = s_row > thr                            # (1, N) bool
        usage = usage + keep_row.astype(f32)
        key_bias = jnp.where(keep_row, 0.0, NEG_INF)      # (1, N) f32

        # MiniTransformerBlock on kept tokens (masked-attention equivalent of
        # PyTorch's pack/unpack of the selected tokens).
        y = _layer_norm(x, ln1g_ref[l], ln1b_ref[l])      # (N, E) f32
        y16 = y.astype(bf16)

        # Per-head attention with head-major weights: no lane slices, no concat.
        attn = jnp.zeros((N, E), f32)
        for h in range(NUM_HEADS):
            q = jnp.dot(y16, wq_ref[l, h], preferred_element_type=f32) + bq_ref[l, h]
            k = jnp.dot(y16, wk_ref[l, h], preferred_element_type=f32) + bk_ref[l, h]
            v = jnp.dot(y16, wv_ref[l, h], preferred_element_type=f32) + bv_ref[l, h]

            s = jax.lax.dot_general(q.astype(bf16), k.astype(bf16), dn,
                                    preferred_element_type=f32) * scale     # (N, N)
            s = s + key_bias                               # mask non-kept keys
            s = s - jnp.max(s, axis=-1, keepdims=True)
            p = jnp.exp(s)                                 # (N, N) f32
            denom = jnp.sum(p, axis=-1, keepdims=True)     # (N, 1)
            ctx = jnp.dot(p.astype(bf16), v.astype(bf16),
                          preferred_element_type=f32)      # (N, HEAD_DIM)
            ctx = ctx * pl.reciprocal(denom, approx=True)  # deferred softmax norm
            # head reduction folded into the per-head output projection
            attn = attn + jnp.dot(ctx.astype(bf16), wo_ref[l, h],
                                  preferred_element_type=f32)

        y2 = x + attn + bo_ref[l]
        z = _layer_norm(y2, ln2g_ref[l], ln2b_ref[l])
        ff = jnp.maximum(
            jnp.dot(z.astype(bf16), w1_ref[l], preferred_element_type=f32)
            + b1_ref[l], 0.0)
        ff = jnp.dot(ff.astype(bf16), w2_ref[l],
                     preferred_element_type=f32) + b2_ref[l]
        x_layer = y2 + ff

        # x_new[kept] = layer(selected); non-kept tokens keep their old value.
        x = jnp.where(keep_col, x_layer, x)

    # ---- finalize: usage writeback, final LN + LM head ----------------------
    usage_ref[...] = usage
    xf = _layer_norm(x, lnfg_ref[...], lnfb_ref[...])
    logits_ref[...] = (jnp.dot(xf.astype(bf16), hw_ref[...],
                               preferred_element_type=f32) + hb_ref[...])


def init_params(key):
    ks = jax.random.split(key, 8)

    def w(k, shape, scale=0.02):
        return (scale * jax.random.normal(k, shape)).astype(jnp.float32)

    L, E, F, V = NUM_LAYERS, EMBED_DIM, FF_DIM, VOCAB_SIZE
    return dict(                                   # PyTorch (out, in) layout
        embed=w(ks[0], (V, E), 0.02),
        pos_embed=w(ks[1], (1, 2048, E), 1.0),
        scorer_w=w(ks[2], (1, E), 0.2),
        scorer_b=jnp.zeros((1, 1), jnp.float32),
        ln1_g=jnp.ones((L, E), jnp.float32),
        ln1_b=jnp.zeros((L, E), jnp.float32),
        wqkv=w(ks[3], (L, 3 * E, E)),
        bqkv=jnp.zeros((L, 3 * E), jnp.float32),
        wo=w(ks[4], (L, E, E)),
        bo=jnp.zeros((L, E), jnp.float32),
        ln2_g=jnp.ones((L, E), jnp.float32),
        ln2_b=jnp.zeros((L, E), jnp.float32),
        w1=w(ks[5], (L, F, E)),
        b1=jnp.zeros((L, F), jnp.float32),
        w2=w(ks[6], (L, E, F)),
        b2=jnp.zeros((L, E), jnp.float32),
        lnf_g=jnp.ones((1, E), jnp.float32),
        lnf_b=jnp.zeros((1, E), jnp.float32),
        head_w=w(ks[7], (V, E)),
        head_b=jnp.zeros((1, V), jnp.float32),
    )


def sparse_depth_transformer(tokens, p):
    B, T = tokens.shape
    N = B * T
    E, L, F, V = EMBED_DIM, NUM_LAYERS, FF_DIM, VOCAB_SIZE
    H, D = NUM_HEADS, HEAD_DIM
    bf16 = jnp.bfloat16

    # glue: embedding gather + positional add (data-dependent gather stays in JAX)
    x = p['embed'][tokens] + p['pos_embed'][:, :T, :]          # (B, T, E)
    x = x.reshape(N, E).astype(jnp.float32)

    # --- wrapper-side layout plumbing (free): head-major, pre-transposed, bf16 --
    wqkv = p['wqkv']                                           # (L, 3E, E), rows=out
    wq = wqkv[:, :E, :].reshape(L, H, D, E).transpose(0, 1, 3, 2).astype(bf16)
    wk = wqkv[:, E:2 * E, :].reshape(L, H, D, E).transpose(0, 1, 3, 2).astype(bf16)
    wv = wqkv[:, 2 * E:, :].reshape(L, H, D, E).transpose(0, 1, 3, 2).astype(bf16)
    bqkv = p['bqkv']
    bq = bqkv[:, :E].reshape(L, H, 1, D)
    bk = bqkv[:, E:2 * E].reshape(L, H, 1, D)
    bv = bqkv[:, 2 * E:].reshape(L, H, 1, D)
    # out proj: attn = sum_h ctx_h @ Wo.T[h*D:(h+1)*D, :]
    wo = jnp.transpose(p['wo'], (0, 2, 1)).reshape(L, H, D, E).astype(bf16)
    bo = p['bo'].reshape(L, 1, E)
    w1 = jnp.transpose(p['w1'], (0, 2, 1)).astype(bf16)        # (L, E, F)
    b1 = p['b1'].reshape(L, 1, F)
    w2 = jnp.transpose(p['w2'], (0, 2, 1)).astype(bf16)        # (L, F, E)
    b2 = p['b2'].reshape(L, 1, E)
    ln1g = p['ln1_g'].reshape(L, 1, E)
    ln1b = p['ln1_b'].reshape(L, 1, E)
    ln2g = p['ln2_g'].reshape(L, 1, E)
    ln2b = p['ln2_b'].reshape(L, 1, E)
    hw = p['head_w'].T.astype(bf16)                            # (E, V)

    inputs = [x, p['scorer_w'], p['scorer_b'],
              ln1g, ln1b, wq, bq, wk, bk, wv, bv, wo, bo,
              ln2g, ln2b, w1, b1, w2, b2,
              p['lnf_g'], p['lnf_b'], hw, p['head_b']]

    # generation-aware VMEM limit (~80% of physical), with a safe fallback
    try:
        vmem_limit = min(int(0.8 * pltpu.get_tpu_info().vmem_capacity_bytes),
                         128 * 1024 * 1024)
    except Exception:
        vmem_limit = 32 * 1024 * 1024

    # No grid at this size: everything (weights, x, logits) fits VMEM, so the
    # kernel runs in a single invocation with whole-array (resident) operands.
    logits, usage = pl.pallas_call(
        sparse_depth_kernel,
        out_shape=(jax.ShapeDtypeStruct((N, V), jnp.float32),
                   jax.ShapeDtypeStruct((1, N), jnp.float32)),
        compiler_params=pltpu.CompilerParams(vmem_limit_bytes=vmem_limit),
    )(*inputs)

    return logits.reshape(B, T, V), usage.reshape(B, T)


if __name__ == "__main__":
    key = jax.random.PRNGKey(0)
    pkey, tkey = jax.random.split(key)
    params = init_params(pkey)

    B, T = 2, 8
    tokens = jax.random.randint(tkey, (B, T), 0, VOCAB_SIZE, dtype=jnp.int32)

    logits, layer_usage = sparse_depth_transformer(tokens, params)
    jax.block_until_ready((logits, layer_usage))

    assert logits.shape == (B, T, VOCAB_SIZE)
    assert layer_usage.shape == (B, T)
    assert bool(jnp.all(jnp.isfinite(logits)))
    print("KERNEL_OK")
</pallas_src>

<mosaic_0001>
module attributes {stable_mosaic.version = 11 : i64} {
  func.func @sparse_depth_kernel(%arg0: memref<16x64xf32, #tpu.memory_space<vmem>>, %arg1: memref<1x64xf32, #tpu.memory_space<vmem>>, %arg2: memref<1x1xf32, #tpu.memory_space<vmem>>, %arg3: memref<6x1x64xf32, #tpu.memory_space<vmem>>, %arg4: memref<6x1x64xf32, #tpu.memory_space<vmem>>, %arg5: memref<6x2x64x32xbf16, #tpu.memory_space<vmem>>, %arg6: memref<6x2x1x32xf32, #tpu.memory_space<vmem>>, %arg7: memref<6x2x64x32xbf16, #tpu.memory_space<vmem>>, %arg8: memref<6x2x1x32xf32, #tpu.memory_space<vmem>>, %arg9: memref<6x2x64x32xbf16, #tpu.memory_space<vmem>>, %arg10: memref<6x2x1x32xf32, #tpu.memory_space<vmem>>, %arg11: memref<6x2x32x64xbf16, #tpu.memory_space<vmem>>, %arg12: memref<6x1x64xf32, #tpu.memory_space<vmem>>, %arg13: memref<6x1x64xf32, #tpu.memory_space<vmem>>, %arg14: memref<6x1x64xf32, #tpu.memory_space<vmem>>, %arg15: memref<6x64x256xbf16, #tpu.memory_space<vmem>>, %arg16: memref<6x1x256xf32, #tpu.memory_space<vmem>>, %arg17: memref<6x256x64xbf16, #tpu.memory_space<vmem>>, %arg18: memref<6x1x64xf32, #tpu.memory_space<vmem>>, %arg19: memref<1x64xf32, #tpu.memory_space<vmem>>, %arg20: memref<1x64xf32, #tpu.memory_space<vmem>>, %arg21: memref<64x256xbf16, #tpu.memory_space<vmem>>, %arg22: memref<1x256xf32, #tpu.memory_space<vmem>>, %arg23: memref<16x256xf32, #tpu.memory_space<vmem>>, %arg24: memref<1x16xf32, #tpu.memory_space<vmem>>) attributes {dimension_semantics = [], scalar_prefetch = 0 : i64, scratch_operands = 0 : i64, tpu.core_type = #tpu.core_type<tc>} {
    %c0 = arith.constant 0 : index
    %c0_0 = arith.constant 0 : index
    %0 = vector.load %arg0[%c0, %c0_0] : memref<16x64xf32, #tpu.memory_space<vmem>>, vector<16x64xf32>
    %c0_1 = arith.constant 0 : index
    %c0_2 = arith.constant 0 : index
    %1 = vector.load %arg1[%c0_1, %c0_2] : memref<1x64xf32, #tpu.memory_space<vmem>>, vector<1x64xf32>
    %c0_3 = arith.constant 0 : index
    %c0_4 = arith.constant 0 : index
    %2 = vector.load %arg2[%c0_3, %c0_4] : memref<1x1xf32, #tpu.memory_space<vmem>>, vector<1x1xf32>
    %3 = vector.broadcast %1 : vector<1x64xf32> to vector<16x64xf32>
    %4 = arith.mulf %0, %3 : vector<16x64xf32>
    %cst = arith.constant dense<0.000000e+00> : vector<16xf32>
    %5 = vector.multi_reduction <add>, %4, %cst [1] : vector<16x64xf32> to vector<16xf32>
    %6 = vector.shape_cast %5 : vector<16xf32> to vector<16x1xf32>
    %7 = vector.broadcast %2 : vector<1x1xf32> to vector<16x1xf32>
    %8 = arith.addf %6, %7 : vector<16x1xf32>
    %9 = arith.negf %8 : vector<16x1xf32>
    %10 = math.exp %9 : vector<16x1xf32>
    %cst_5 = arith.constant 1.000000e+00 : f32
    %11 = vector.broadcast %cst_5 : f32 to vector<16x1xf32>
    %12 = arith.addf %11, %10 : vector<16x1xf32>
    %13 = arith.divf %11, %12 : vector<16x1xf32>
    %cst_6 = arith.constant dense<0.000000e+00> : vector<1x16xf32>
    %14 = tpu.matmul %1, %0, %cst_6 {dimension_numbers = #tpu.dot_dimension_numbers<[1], [1], [0], [0], [0, 0, 1, 0], [], []>} : vector<1x64xf32>, vector<16x64xf32>, vector<1x16xf32> -> vector<1x16xf32>
    %15 = vector.broadcast %2 : vector<1x1xf32> to vector<1x16xf32>
    %16 = arith.addf %14, %15 : vector<1x16xf32>
    %17 = arith.negf %16 : vector<1x16xf32>
    %18 = math.exp %17 : vector<1x16xf32>
    %cst_7 = arith.constant 1.000000e+00 : f32
    %19 = vector.broadcast %cst_7 : f32 to vector<1x16xf32>
    %20 = arith.addf %19, %18 : vector<1x16xf32>
    %21 = arith.divf %19, %20 : vector<1x16xf32>
    %cst_8 = arith.constant 0.000000e+00 : f32
    %22 = vector.broadcast %cst_8 : f32 to vector<1x16xf32>
    %cst_9 = arith.constant 0.000000e+00 : f32
    %23 = vector.broadcast %cst_9 : f32 to vector<16x1xf32>
    %24 = arith.cmpf ogt, %13, %23 : vector<16x1xf32>
    %cst_10 = arith.constant 0.000000e+00 : f32
    %25 = vector.broadcast %cst_10 : f32 to vector<1x16xf32>
    %26 = arith.cmpf ogt, %21, %25 : vector<1x16xf32>
    %27 = arith.extui %26 : vector<1x16xi1> to vector<1x16xi32>
    %28 = arith.sitofp %27 : vector<1x16xi32> to vector<1x16xf32>
    %29 = arith.addf %22, %28 : vector<1x16xf32>
    %cst_11 = arith.constant 0.000000e+00 : f32
    %cst_12 = arith.constant -1.000000e+30 : f32
    %30 = vector.broadcast %cst_11 : f32 to vector<1x16xf32>
    %31 = vector.broadcast %cst_12 : f32 to vector<1x16xf32>
    %32 = arith.select %26, %30, %31 : vector<1x16xi1>, vector<1x16xf32>
    %c0_13 = arith.constant 0 : index
    %c0_14 = arith.constant 0 : index
    %c0_15 = arith.constant 0 : index
    %33 = vector.load %arg3[%c0_13, %c0_14, %c0_15] : memref<6x1x64xf32, #tpu.memory_space<vmem>>, vector<1x1x64xf32>
    %34 = vector.shape_cast %33 : vector<1x1x64xf32> to vector<1x64xf32>
    %c0_16 = arith.constant 0 : index
    %c0_17 = arith.constant 0 : index
    %c0_18 = arith.constant 0 : index
    %35 = vector.load %arg4[%c0_16, %c0_17, %c0_18] : memref<6x1x64xf32, #tpu.memory_space<vmem>>, vector<1x1x64xf32>
    %36 = vector.shape_cast %35 : vector<1x1x64xf32> to vector<1x64xf32>
    %cst_19 = arith.constant dense<0.000000e+00> : vector<16xf32>
    %37 = vector.multi_reduction <add>, %0, %cst_19 [1] : vector<16x64xf32> to vector<16xf32>
    %38 = vector.shape_cast %37 : vector<16xf32> to vector<16x1xf32>
    %cst_20 = arith.constant 6.400000e+01 : f32
    %39 = vector.broadcast %cst_20 : f32 to vector<16x1xf32>
    %40 = arith.divf %38, %39 : vector<16x1xf32>
    %41 = vector.broadcast %40 : vector<16x1xf32> to vector<16x64xf32>
    %42 = arith.subf %0, %41 : vector<16x64xf32>
    %43 = arith.mulf %42, %42 : vector<16x64xf32>
    %cst_21 = arith.constant dense<0.000000e+00> : vector<16xf32>
    %44 = vector.multi_reduction <add>, %43, %cst_21 [1] : vector<16x64xf32> to vector<16xf32>
    %45 = vector.shape_cast %44 : vector<16xf32> to vector<16x1xf32>
    %cst_22 = arith.constant 6.400000e+01 : f32
    %46 = vector.broadcast %cst_22 : f32 to vector<16x1xf32>
    %47 = arith.divf %45, %46 : vector<16x1xf32>
    %48 = vector.broadcast %40 : vector<16x1xf32> to vector<16x64xf32>
    %49 = arith.subf %0, %48 : vector<16x64xf32>
    %cst_23 = arith.constant 9.99999974E-6 : f32
    %50 = vector.broadcast %cst_23 : f32 to vector<16x1xf32>
    %51 = arith.addf %47, %50 : vector<16x1xf32>
    %52 = math.rsqrt %51 : vector<16x1xf32>
    %53 = vector.broadcast %52 : vector<16x1xf32> to vector<16x64xf32>
    %54 = arith.mulf %49, %53 : vector<16x64xf32>
    %55 = vector.broadcast %34 : vector<1x64xf32> to vector<16x64xf32>
    %56 = arith.mulf %54, %55 : vector<16x64xf32>
    %57 = vector.broadcast %36 : vector<1x64xf32> to vector<16x64xf32>
    %58 = arith.addf %56, %57 : vector<16x64xf32>
    %59 = arith.truncf %58 : vector<16x64xf32> to vector<16x64xbf16>
    %cst_24 = arith.constant 0.000000e+00 : f32
    %60 = vector.broadcast %cst_24 : f32 to vector<16x64xf32>
    %c0_25 = arith.constant 0 : index
    %c0_26 = arith.constant 0 : index
    %c0_27 = arith.constant 0 : index
    %c0_28 = arith.constant 0 : index
    %61 = vector.load %arg5[%c0_25, %c0_26, %c0_27, %c0_28] : memref<6x2x64x32xbf16, #tpu.memory_space<vmem>>, vector<1x1x64x32xbf16>
    %62 = vector.shape_cast %61 : vector<1x1x64x32xbf16> to vector<64x32xbf16>
    %cst_29 = arith.constant dense<0.000000e+00> : vector<16x32xf32>
    %63 = tpu.matmul %59, %62, %cst_29 {dimension_numbers = #tpu.dot_dimension_numbers<[1], [0], [0], [1], [0, 0, 1, 1], [], []>} : vector<16x64xbf16>, vector<64x32xbf16>, vector<16x32xf32> -> vector<16x32xf32>
    %c0_30 = arith.constant 0 : index
    %c0_31 = arith.constant 0 : index
    %c0_32 = arith.constant 0 : index
    %c0_33 = arith.constant 0 : index
    %64 = vector.load %arg6[%c0_30, %c0_31, %c0_32, %c0_33] : memref<6x2x1x32xf32, #tpu.memory_space<vmem>>, vector<1x1x1x32xf32>
    %65 = vector.shape_cast %64 : vector<1x1x1x32xf32> to vector<1x32xf32>
    %66 = vector.broadcast %65 : vector<1x32xf32> to vector<16x32xf32>
    %67 = arith.addf %63, %66 : vector<16x32xf32>
    %c0_34 = arith.constant 0 : index
    %c0_35 = arith.constant 0 : index
    %c0_36 = arith.constant 0 : index
    %c0_37 = arith.constant 0 : index
    %68 = vector.load %arg7[%c0_34, %c0_35, %c0_36, %c0_37] : memref<6x2x64x32xbf16, #tpu.memory_space<vmem>>, vector<1x1x64x32xbf16>
    %69 = vector.shape_cast %68 : vector<1x1x64x32xbf16> to vector<64x32xbf16>
    %cst_38 = arith.constant dense<0.000000e+00> : vector<16x32xf32>
    %70 = tpu.matmul %59, %69, %cst_38 {dimension_numbers = #tpu.dot_dimension_numbers<[1], [0], [0], [1], [0, 0, 1, 1], [], []>} : vector<16x64xbf16>, vector<64x32xbf16>, vector<16x32xf32> -> vector<16x32xf32>
    %c0_39 = arith.constant 0 : index
    %c0_40 = arith.constant 0 : index
    %c0_41 = arith.constant 0 : index
    %c0_42 = arith.constant 0 : index
    %71 = vector.load %arg8[%c0_39, %c0_40, %c0_41, %c0_42] : memref<6x2x1x32xf32, #tpu.memory_space<vmem>>, vector<1x1x1x32xf32>
    %72 = vector.shape_cast %71 : vector<1x1x1x32xf32> to vector<1x32xf32>
    %73 = vector.broadcast %72 : vector<1x32xf32> to vector<16x32xf32>
    %74 = arith.addf %70, %73 : vector<16x32xf32>
    %c0_43 = arith.constant 0 : index
    %c0_44 = arith.constant 0 : index
    %c0_45 = arith.constant 0 : index
    %c0_46 = arith.constant 0 : index
    %75 = vector.load %arg9[%c0_43, %c0_44, %c0_45, %c0_46] : memref<6x2x64x32xbf16, #tpu.memory_space<vmem>>, vector<1x1x64x32xbf16>
    %76 = vector.shape_cast %75 : vector<1x1x64x32xbf16> to vector<64x32xbf16>
    %cst_47 = arith.constant dense<0.000000e+00> : vector<16x32xf32>
    %77 = tpu.matmul %59, %76, %cst_47 {dimension_numbers = #tpu.dot_dimension_numbers<[1], [0], [0], [1], [0, 0, 1, 1], [], []>} : vector<16x64xbf16>, vector<64x32xbf16>, vector<16x32xf32> -> vector<16x32xf32>
    %c0_48 = arith.constant 0 : index
    %c0_49 = arith.constant 0 : index
    %c0_50 = arith.constant 0 : index
    %c0_51 = arith.constant 0 : index
    %78 = vector.load %arg10[%c0_48, %c0_49, %c0_50, %c0_51] : memref<6x2x1x32xf32, #tpu.memory_space<vmem>>, vector<1x1x1x32xf32>
    %79 = vector.shape_cast %78 : vector<1x1x1x32xf32> to vector<1x32xf32>
    %80 = vector.broadcast %79 : vector<1x32xf32> to vector<16x32xf32>
    %81 = arith.addf %77, %80 : vector<16x32xf32>
    %82 = arith.truncf %67 : vector<16x32xf32> to vector<16x32xbf16>
    %83 = arith.truncf %74 : vector<16x32xf32> to vector<16x32xbf16>
    %cst_52 = arith.constant dense<0.000000e+00> : vector<16x16xf32>
    %84 = tpu.matmul %82, %83, %cst_52 {dimension_numbers = #tpu.dot_dimension_numbers<[1], [1], [0], [0], [0, 0, 1, 0], [], []>} : vector<16x32xbf16>, vector<16x32xbf16>, vector<16x16xf32> -> vector<16x16xf32>
    %cst_53 = arith.constant 0.176776692 : f32
    %85 = vector.broadcast %cst_53 : f32 to vector<16x16xf32>
    %86 = arith.mulf %84, %85 : vector<16x16xf32>
    %87 = vector.broadcast %32 : vector<1x16xf32> to vector<16x16xf32>
    %88 = arith.addf %86, %87 : vector<16x16xf32>
    %cst_54 = arith.constant dense<0xFF800000> : vector<16xf32>
    %89 = vector.multi_reduction <maximumf>, %88, %cst_54 [1] : vector<16x16xf32> to vector<16xf32>
    %90 = vector.shape_cast %89 : vector<16xf32> to vector<16x1xf32>
    %91 = vector.broadcast %90 : vector<16x1xf32> to vector<16x16xf32>
    %92 = arith.subf %88, %91 : vector<16x16xf32>
    %93 = math.exp %92 : vector<16x16xf32>
    %cst_55 = arith.constant dense<0.000000e+00> : vector<16xf32>
    %94 = vector.multi_reduction <add>, %93, %cst_55 [1] : vector<16x16xf32> to vector<16xf32>
    %95 = vector.shape_cast %94 : vector<16xf32> to vector<16x1xf32>
    %96 = arith.truncf %93 : vector<16x16xf32> to vector<16x16xbf16>
    %97 = arith.truncf %81 : vector<16x32xf32> to vector<16x32xbf16>
    %cst_56 = arith.constant dense<0.000000e+00> : vector<16x32xf32>
    %98 = tpu.matmul %96, %97, %cst_56 {dimension_numbers = #tpu.dot_dimension_numbers<[1], [0], [0], [1], [0, 0, 1, 1], [], []>} : vector<16x16xbf16>, vector<16x32xbf16>, vector<16x32xf32> -> vector<16x32xf32>
    %99 = tpu.reciprocal %95 {approx = true} : vector<16x1xf32> -> vector<16x1xf32>
    %100 = vector.broadcast %99 : vector<16x1xf32> to vector<16x32xf32>
    %101 = arith.mulf %98, %100 : vector<16x32xf32>
    %102 = arith.truncf %101 : vector<16x32xf32> to vector<16x32xbf16>
    %c0_57 = arith.constant 0 : index
    %c0_58 = arith.constant 0 : index
    %c0_59 = arith.constant 0 : index
    %c0_60 = arith.constant 0 : index
    %103 = vector.load %arg11[%c0_57, %c0_58, %c0_59, %c0_60] : memref<6x2x32x64xbf16, #tpu.memory_space<vmem>>, vector<1x1x32x64xbf16>
    %104 = vector.shape_cast %103 : vector<1x1x32x64xbf16> to vector<32x64xbf16>
    %cst_61 = arith.constant dense<0.000000e+00> : vector<16x64xf32>
    %105 = tpu.matmul %102, %104, %cst_61 {dimension_numbers = #tpu.dot_dimension_numbers<[1], [0], [0], [1], [0, 0, 1, 1], [], []>} : vector<16x32xbf16>, vector<32x64xbf16>, vector<16x64xf32> -> vector<16x64xf32>
    %106 = arith.addf %60, %105 : vector<16x64xf32>
    %c0_62 = arith.constant 0 : index
    %c1 = arith.constant 1 : index
    %c0_63 = arith.constant 0 : index
    %c0_64 = arith.constant 0 : index
    %107 = vector.load %arg5[%c0_62, %c1, %c0_63, %c0_64] : memref<6x2x64x32xbf16, #tpu.memory_space<vmem>>, vector<1x1x64x32xbf16>
    %108 = vector.shape_cast %107 : vector<1x1x64x32xbf16> to vector<64x32xbf16>
    %cst_65 = arith.constant dense<0.000000e+00> : vector<16x32xf32>
    %109 = tpu.matmul %59, %108, %cst_65 {dimension_numbers = #tpu.dot_dimension_numbers<[1], [0], [0], [1], [0, 0, 1, 1], [], []>} : vector<16x64xbf16>, vector<64x32xbf16>, vector<16x32xf32> -> vector<16x32xf32>
    %c0_66 = arith.constant 0 : index
    %c1_67 = arith.constant 1 : index
    %c0_68 = arith.constant 0 : index
    %c0_69 = arith.constant 0 : index
    %110 = vector.load %arg6[%c0_66, %c1_67, %c0_68, %c0_69] : memref<6x2x1x32xf32, #tpu.memory_space<vmem>>, vector<1x1x1x32xf32>
    %111 = vector.shape_cast %110 : vector<1x1x1x32xf32> to vector<1x32xf32>
    %112 = vector.broadcast %111 : vector<1x32xf32> to vector<16x32xf32>
    %113 = arith.addf %109, %112 : vector<16x32xf32>
    %c0_70 = arith.constant 0 : index
    %c1_71 = arith.constant 1 : index
    %c0_72 = arith.constant 0 : index
    %c0_73 = arith.constant 0 : index
    %114 = vector.load %arg7[%c0_70, %c1_71, %c0_72, %c0_73] : memref<6x2x64x32xbf16, #tpu.memory_space<vmem>>, vector<1x1x64x32xbf16>
    %115 = vector.shape_cast %114 : vector<1x1x64x32xbf16> to vector<64x32xbf16>
    %cst_74 = arith.constant dense<0.000000e+00> : vector<16x32xf32>
    %116 = tpu.matmul %59, %115, %cst_74 {dimension_numbers = #tpu.dot_dimension_numbers<[1], [0], [0], [1], [0, 0, 1, 1], [], []>} : vector<16x64xbf16>, vector<64x32xbf16>, vector<16x32xf32> -> vector<16x32xf32>
    %c0_75 = arith.constant 0 : index
    %c1_76 = arith.constant 1 : index
    %c0_77 = arith.constant 0 : index
    %c0_78 = arith.constant 0 : index
    %117 = vector.load %arg8[%c0_75, %c1_76, %c0_77, %c0_78] : memref<6x2x1x32xf32, #tpu.memory_space<vmem>>, vector<1x1x1x32xf32>
    %118 = vector.shape_cast %117 : vector<1x1x1x32xf32> to vector<1x32xf32>
    %119 = vector.broadcast %118 : vector<1x32xf32> to vector<16x32xf32>
    %120 = arith.addf %116, %119 : vector<16x32xf32>
    %c0_79 = arith.constant 0 : index
    %c1_80 = arith.constant 1 : index
    %c0_81 = arith.constant 0 : index
    %c0_82 = arith.constant 0 : index
    %121 = vector.load %arg9[%c0_79, %c1_80, %c0_81, %c0_82] : memref<6x2x64x32xbf16, #tpu.memory_space<vmem>>, vector<1x1x64x32xbf16>
    %122 = vector.shape_cast %121 : vector<1x1x64x32xbf16> to vector<64x32xbf16>
    %cst_83 = arith.constant dense<0.000000e+00> : vector<16x32xf32>
    %123 = tpu.matmul %59, %122, %cst_83 {dimension_numbers = #tpu.dot_dimension_numbers<[1], [0], [0], [1], [0, 0, 1, 1], [], []>} : vector<16x64xbf16>, vector<64x32xbf16>, vector<16x32xf32> -> vector<16x32xf32>
    %c0_84 = arith.constant 0 : index
    %c1_85 = arith.constant 1 : index
    %c0_86 = arith.constant 0 : index
    %c0_87 = arith.constant 0 : index
    %124 = vector.load %arg10[%c0_84, %c1_85, %c0_86, %c0_87] : memref<6x2x1x32xf32, #tpu.memory_space<vmem>>, vector<1x1x1x32xf32>
    %125 = vector.shape_cast %124 : vector<1x1x1x32xf32> to vector<1x32xf32>
    %126 = vector.broadcast %125 : vector<1x32xf32> to vector<16x32xf32>
    %127 = arith.addf %123, %126 : vector<16x32xf32>
    %128 = arith.truncf %113 : vector<16x32xf32> to vector<16x32xbf16>
    %129 = arith.truncf %120 : vector<16x32xf32> to vector<16x32xbf16>
    %cst_88 = arith.constant dense<0.000000e+00> : vector<16x16xf32>
    %130 = tpu.matmul %128, %129, %cst_88 {dimension_numbers = #tpu.dot_dimension_numbers<[1], [1], [0], [0], [0, 0, 1, 0], [], []>} : vector<16x32xbf16>, vector<16x32xbf16>, vector<16x16xf32> -> vector<16x16xf32>
    %cst_89 = arith.constant 0.176776692 : f32
    %131 = vector.broadcast %cst_89 : f32 to vector<16x16xf32>
    %132 = arith.mulf %130, %131 : vector<16x16xf32>
    %133 = vector.broadcast %32 : vector<1x16xf32> to vector<16x16xf32>
    %134 = arith.addf %132, %133 : vector<16x16xf32>
    %cst_90 = arith.constant dense<0xFF800000> : vector<16xf32>
    %135 = vector.multi_reduction <maximumf>, %134, %cst_90 [1] : vector<16x16xf32> to vector<16xf32>
    %136 = vector.shape_cast %135 : vector<16xf32> to vector<16x1xf32>
    %137 = vector.broadcast %136 : vector<16x1xf32> to vector<16x16xf32>
    %138 = arith.subf %134, %137 : vector<16x16xf32>
    %139 = math.exp %138 : vector<16x16xf32>
    %cst_91 = arith.constant dense<0.000000e+00> : vector<16xf32>
    %140 = vector.multi_reduction <add>, %139, %cst_91 [1] : vector<16x16xf32> to vector<16xf32>
    %141 = vector.shape_cast %140 : vector<16xf32> to vector<16x1xf32>
    %142 = arith.truncf %139 : vector<16x16xf32> to vector<16x16xbf16>
    %143 = arith.truncf %127 : vector<16x32xf32> to vector<16x32xbf16>
    %cst_92 = arith.constant dense<0.000000e+00> : vector<16x32xf32>
    %144 = tpu.matmul %142, %143, %cst_92 {dimension_numbers = #tpu.dot_dimension_numbers<[1], [0], [0], [1], [0, 0, 1, 1], [], []>} : vector<16x16xbf16>, vector<16x32xbf16>, vector<16x32xf32> -> vector<16x32xf32>
    %145 = tpu.reciprocal %141 {approx = true} : vector<16x1xf32> -> vector<16x1xf32>
    %146 = vector.broadcast %145 : vector<16x1xf32> to vector<16x32xf32>
    %147 = arith.mulf %144, %146 : vector<16x32xf32>
    %148 = arith.truncf %147 : vector<16x32xf32> to vector<16x32xbf16>
    %c0_93 = arith.constant 0 : index
    %c1_94 = arith.constant 1 : index
    %c0_95 = arith.constant 0 : index
    %c0_96 = arith.constant 0 : index
    %149 = vector.load %arg11[%c0_93, %c1_94, %c0_95, %c0_96] : memref<6x2x32x64xbf16, #tpu.memory_space<vmem>>, vector<1x1x32x64xbf16>
    %150 = vector.shape_cast %149 : vector<1x1x32x64xbf16> to vector<32x64xbf16>
    %cst_97 = arith.constant dense<0.000000e+00> : vector<16x64xf32>
    %151 = tpu.matmul %148, %150, %cst_97 {dimension_numbers = #tpu.dot_dimension_numbers<[1], [0], [0], [1], [0, 0, 1, 1], [], []>} : vector<16x32xbf16>, vector<32x64xbf16>, vector<16x64xf32> -> vector<16x64xf32>
    %152 = arith.addf %106, %151 : vector<16x64xf32>
    %153 = arith.addf %0, %152 : vector<16x64xf32>
    %c0_98 = arith.constant 0 : index
    %c0_99 = arith.constant 0 : index
    %c0_100 = arith.constant 0 : index
    %154 = vector.load %arg12[%c0_98, %c0_99, %c0_100] : memref<6x1x64xf32, #tpu.memory_space<vmem>>, vector<1x1x64xf32>
    %155 = vector.shape_cast %154 : vector<1x1x64xf32> to vector<1x64xf32>
    %156 = vector.broadcast %155 : vector<1x64xf32> to vector<16x64xf32>
    %157 = arith.addf %153, %156 : vector<16x64xf32>
    %c0_101 = arith.constant 0 : index
    %c0_102 = arith.constant 0 : index
    %c0_103 = arith.constant 0 : index
    %158 = vector.load %arg13[%c0_101, %c0_102, %c0_103] : memref<6x1x64xf32, #tpu.memory_space<vmem>>, vector<1x1x64xf32>
    %159 = vector.shape_cast %158 : vector<1x1x64xf32> to vector<1x64xf32>
    %c0_104 = arith.constant 0 : index
    %c0_105 = arith.constant 0 : index
    %c0_106 = arith.constant 0 : index
    %160 = vector.load %arg14[%c0_104, %c0_105, %c0_106] : memref<6x1x64xf32, #tpu.memory_space<vmem>>, vector<1x1x64xf32>
    %161 = vector.shape_cast %160 : vector<1x1x64xf32> to vector<1x64xf32>
    %cst_107 = arith.constant dense<0.000000e+00> : vector<16xf32>
    %162 = vector.multi_reduction <add>, %157, %cst_107 [1] : vector<16x64xf32> to vector<16xf32>
    %163 = vector.shape_cast %162 : vector<16xf32> to vector<16x1xf32>
    %cst_108 = arith.constant 6.400000e+01 : f32
    %164 = vector.broadcast %cst_108 : f32 to vector<16x1xf32>
    %165 = arith.divf %163, %164 : vector<16x1xf32>
    %166 = vector.broadcast %165 : vector<16x1xf32> to vector<16x64xf32>
    %167 = arith.subf %157, %166 : vector<16x64xf32>
    %168 = arith.mulf %167, %167 : vector<16x64xf32>
    %cst_109 = arith.constant dense<0.000000e+00> : vector<16xf32>
    %169 = vector.multi_reduction <add>, %168, %cst_109 [1] : vector<16x64xf32> to vector<16xf32>
    %170 = vector.shape_cast %169 : vector<16xf32> to vector<16x1xf32>
    %cst_110 = arith.constant 6.400000e+01 : f32
    %171 = vector.broadcast %cst_110 : f32 to vector<16x1xf32>
    %172 = arith.divf %170, %171 : vector<16x1xf32>
    %173 = vector.broadcast %165 : vector<16x1xf32> to vector<16x64xf32>
    %174 = arith.subf %157, %173 : vector<16x64xf32>
    %cst_111 = arith.constant 9.99999974E-6 : f32
    %175 = vector.broadcast %cst_111 : f32 to vector<16x1xf32>
    %176 = arith.addf %172, %175 : vector<16x1xf32>
    %177 = math.rsqrt %176 : vector<16x1xf32>
    %178 = vector.broadcast %177 : vector<16x1xf32> to vector<16x64xf32>
    %179 = arith.mulf %174, %178 : vector<16x64xf32>
    %180 = vector.broadcast %159 : vector<1x64xf32> to vector<16x64xf32>
    %181 = arith.mulf %179, %180 : vector<16x64xf32>
    %182 = vector.broadcast %161 : vector<1x64xf32> to vector<16x64xf32>
    %183 = arith.addf %181, %182 : vector<16x64xf32>
    %184 = arith.truncf %183 : vector<16x64xf32> to vector<16x64xbf16>
    %c0_112 = arith.constant 0 : index
    %c0_113 = arith.constant 0 : index
    %c0_114 = arith.constant 0 : index
    %185 = vector.load %arg15[%c0_112, %c0_113, %c0_114] : memref<6x64x256xbf16, #tpu.memory_space<vmem>>, vector<1x64x256xbf16>
    %186 = vector.shape_cast %185 : vector<1x64x256xbf16> to vector<64x256xbf16>
    %cst_115 = arith.constant dense<0.000000e+00> : vector<16x256xf32>
    %187 = tpu.matmul %184, %186, %cst_115 {dimension_numbers = #tpu.dot_dimension_numbers<[1], [0], [0], [1], [0, 0, 1, 1], [], []>} : vector<16x64xbf16>, vector<64x256xbf16>, vector<16x256xf32> -> vector<16x256xf32>
    %c0_116 = arith.constant 0 : index
    %c0_117 = arith.constant 0 : index
    %c0_118 = arith.constant 0 : index
    %188 = vector.load %arg16[%c0_116, %c0_117, %c0_118] : memref<6x1x256xf32, #tpu.memory_space<vmem>>, vector<1x1x256xf32>
    %189 = vector.shape_cast %188 : vector<1x1x256xf32> to vector<1x256xf32>
    %190 = vector.broadcast %189 : vector<1x256xf32> to vector<16x256xf32>
    %191 = arith.addf %187, %190 : vector<16x256xf32>
    %cst_119 = arith.constant 0.000000e+00 : f32
    %192 = vector.broadcast %cst_119 : f32 to vector<16x256xf32>
    %193 = arith.maximumf %191, %192 : vector<16x256xf32>
    %194 = arith.truncf %193 : vector<16x256xf32> to vector<16x256xbf16>
    %c0_120 = arith.constant 0 : index
    %c0_121 = arith.constant 0 : index
    %c0_122 = arith.constant 0 : index
    %195 = vector.load %arg17[%c0_120, %c0_121, %c0_122] : memref<6x256x64xbf16, #tpu.memory_space<vmem>>, vector<1x256x64xbf16>
    %196 = vector.shape_cast %195 : vector<1x256x64xbf16> to vector<256x64xbf16>
    %cst_123 = arith.constant dense<0.000000e+00> : vector<16x64xf32>
    %197 = tpu.matmul %194, %196, %cst_123 {dimension_numbers = #tpu.dot_dimension_numbers<[1], [0], [0], [1], [0, 0, 1, 1], [], []>} : vector<16x256xbf16>, vector<256x64xbf16>, vector<16x64xf32> -> vector<16x64xf32>
    %c0_124 = arith.constant 0 : index
    %c0_125 = arith.constant 0 : index
    %c0_126 = arith.constant 0 : index
    %198 = vector.load %arg18[%c0_124, %c0_125, %c0_126] : memref<6x1x64xf32, #tpu.memory_space<vmem>>, vector<1x1x64xf32>
    %199 = vector.shape_cast %198 : vector<1x1x64xf32> to vector<1x64xf32>
    %200 = vector.broadcast %199 : vector<1x64xf32> to vector<16x64xf32>
    %201 = arith.addf %197, %200 : vector<16x64xf32>
    %202 = arith.addf %157, %201 : vector<16x64xf32>
    %203 = vector.shape_cast %24 : vector<16x1xi1> to vector<16x1xi1>
    %204 = vector.broadcast %203 : vector<16x1xi1> to vector<16x64xi1>
    %205 = arith.select %204, %202, %0 : vector<16x64xi1>, vector<16x64xf32>
    %cst_127 = arith.constant 0.166666672 : f32
    %206 = vector.broadcast %cst_127 : f32 to vector<16x1xf32>
    %207 = arith.cmpf ogt, %13, %206 : vector<16x1xf32>
    %cst_128 = arith.constant 0.166666672 : f32
    %208 = vector.broadcast %cst_128 : f32 to vector<1x16xf32>
    %209 = arith.cmpf ogt, %21, %208 : vector<1x16xf32>
    %210 = arith.extui %209 : vector<1x16xi1> to vector<1x16xi32>
    %211 = arith.sitofp %210 : vector<1x16xi32> to vector<1x16xf32>
    %212 = arith.addf %29, %211 : vector<1x16xf32>
    %cst_129 = arith.constant 0.000000e+00 : f32
    %cst_130 = arith.constant -1.000000e+30 : f32
    %213 = vector.broadcast %cst_129 : f32 to vector<1x16xf32>
    %214 = vector.broadcast %cst_130 : f32 to vector<1x16xf32>
    %215 = arith.select %209, %213, %214 : vector<1x16xi1>, vector<1x16xf32>
    %c1_131 = arith.constant 1 : index
    %c0_132 = arith.constant 0 : index
    %c0_133 = arith.constant 0 : index
    %216 = vector.load %arg3[%c1_131, %c0_132, %c0_133] : memref<6x1x64xf32, #tpu.memory_space<vmem>>, vector<1x1x64xf32>
    %217 = vector.shape_cast %216 : vector<1x1x64xf32> to vector<1x64xf32>
    %c1_134 = arith.constant 1 : index
    %c0_135 = arith.constant 0 : index
    %c0_136 = arith.constant 0 : index
    %218 = vector.load %arg4[%c1_134, %c0_135, %c0_136] : memref<6x1x64xf32, #tpu.memory_space<vmem>>, vector<1x1x64xf32>
    %219 = vector.shape_cast %218 : vector<1x1x64xf32> to vector<1x64xf32>
    %cst_137 = arith.constant dense<0.000000e+00> : vector<16xf32>
    %220 = vector.multi_reduction <add>, %205, %cst_137 [1] : vector<16x64xf32> to vector<16xf32>
    %221 = vector.shape_cast %220 : vector<16xf32> to vector<16x1xf32>
    %cst_138 = arith.constant 6.400000e+01 : f32
    %222 = vector.broadcast %cst_138 : f32 to vector<16x1xf32>
    %223 = arith.divf %221, %222 : vector<16x1xf32>
    %224 = vector.broadcast %223 : vector<16x1xf32> to vector<16x64xf32>
    %225 = arith.subf %205, %224 : vector<16x64xf32>
    %226 = arith.mulf %225, %225 : vector<16x64xf32>
    %cst_139 = arith.constant dense<0.000000e+00> : vector<16xf32>
    %227 = vector.multi_reduction <add>, %226, %cst_139 [1] : vector<16x64xf32> to vector<16xf32>
    %228 = vector.shape_cast %227 : vector<16xf32> to vector<16x1xf32>
    %cst_140 = arith.constant 6.400000e+01 : f32
    %229 = vector.broadcast %cst_140 : f32 to vector<16x1xf32>
    %230 = arith.divf %228, %229 : vector<16x1xf32>
    %231 = vector.broadcast %223 : vector<16x1xf32> to vector<16x64xf32>
    %232 = arith.subf %205, %231 : vector<16x64xf32>
    %cst_141 = arith.constant 9.99999974E-6 : f32
    %233 = vector.broadcast %cst_141 : f32 to vector<16x1xf32>
    %234 = arith.addf %230, %233 : vector<16x1xf32>
    %235 = math.rsqrt %234 : vector<16x1xf32>
    %236 = vector.broadcast %235 : vector<16x1xf32> to vector<16x64xf32>
    %237 = arith.mulf %232, %236 : vector<16x64xf32>
    %238 = vector.broadcast %217 : vector<1x64xf32> to vector<16x64xf32>
    %239 = arith.mulf %237, %238 : vector<16x64xf32>
    %240 = vector.broadcast %219 : vector<1x64xf32> to vector<16x64xf32>
    %241 = arith.addf %239, %240 : vector<16x64xf32>
    %242 = arith.truncf %241 : vector<16x64xf32> to vector<16x64xbf16>
    %cst_142 = arith.constant 0.000000e+00 : f32
    %243 = vector.broadcast %cst_142 : f32 to vector<16x64xf32>
    %c1_143 = arith.constant 1 : index
    %c0_144 = arith.constant 0 : index
    %c0_145 = arith.constant 0 : index
    %c0_146 = arith.constant 0 : index
    %244 = vector.load %arg5[%c1_143, %c0_144, %c0_145, %c0_146] : memref<6x2x64x32xbf16, #tpu.memory_space<vmem>>, vector<1x1x64x32xbf16>
    %245 = vector.shape_cast %244 : vector<1x1x64x32xbf16> to vector<64x32xbf16>
    %cst_147 = arith.constant dense<0.000000e+00> : vector<16x32xf32>
    %246 = tpu.matmul %242, %245, %cst_147 {dimension_numbers = #tpu.dot_dimension_numbers<[1], [0], [0], [1], [0, 0, 1, 1], [], []>} : vector<16x64xbf16>, vector<64x32xbf16>, vector<16x32xf32> -> vector<16x32xf32>
    %c1_148 = arith.constant 1 : index
    %c0_149 = arith.constant 0 : index
    %c0_150 = arith.constant 0 : index
    %c0_151 = arith.constant 0 : index
    %247 = vector.load %arg6[%c1_148, %c0_149, %c0_150, %c0_151] : memref<6x2x1x32xf32, #tpu.memory_space<vmem>>, vector<1x1x1x32xf32>
    %248 = vector.shape_cast %247 : vector<1x1x1x32xf32> to vector<1x32xf32>
    %249 = vector.broadcast %248 : vector<1x32xf32> to vector<16x32xf32>
    %250 = arith.addf %246, %249 : vector<16x32xf32>
    %c1_152 = arith.constant 1 : index
    %c0_153 = arith.constant 0 : index
    %c0_154 = arith.constant 0 : index
    %c0_155 = arith.constant 0 : index
    %251 = vector.load %arg7[%c1_152, %c0_153, %c0_154, %c0_155] : memref<6x2x64x32xbf16, #tpu.memory_space<vmem>>, vector<1x1x64x32xbf16>
    %252 = vector.shape_cast %251 : vector<1x1x64x32xbf16> to vector<64x32xbf16>
    %cst_156 = arith.constant dense<0.000000e+00> : vector<16x32xf32>
    %253 = tpu.matmul %242, %252, %cst_156 {dimension_numbers = #tpu.dot_dimension_numbers<[1], [0], [0], [1], [0, 0, 1, 1], [], []>} : vector<16x64xbf16>, vector<64x32xbf16>, vector<16x32xf32> -> vector<16x32xf32>
    %c1_157 = arith.constant 1 : index
    %c0_158 = arith.constant 0 : index
    %c0_159 = arith.constant 0 : index
    %c0_160 = arith.constant 0 : index
    %254 = vector.load %arg8[%c1_157, %c0_158, %c0_159, %c0_160] : memref<6x2x1x32xf32, #tpu.memory_space<vmem>>, vector<1x1x1x32xf32>
    %255 = vector.shape_cast %254 : vector<1x1x1x32xf32> to vector<1x32xf32>
    %256 = vector.broadcast %255 : vector<1x32xf32> to vector<16x32xf32>
    %257 = arith.addf %253, %256 : vector<16x32xf32>
    %c1_161 = arith.constant 1 : index
    %c0_162 = arith.constant 0 : index
    %c0_163 = arith.constant 0 : index
    %c0_164 = arith.constant 0 : index
    %258 = vector.load %arg9[%c1_161, %c0_162, %c0_163, %c0_164] : memref<6x2x64x32xbf16, #tpu.memory_space<vmem>>, vector<1x1x64x32xbf16>
    %259 = vector.shape_cast %258 : vector<1x1x64x32xbf16> to vector<64x32xbf16>
    %cst_165 = arith.constant dense<0.000000e+00> : vector<16x32xf32>
    %260 = tpu.matmul %242, %259, %cst_165 {dimension_numbers = #tpu.dot_dimension_numbers<[1], [0], [0], [1], [0, 0, 1, 1], [], []>} : vector<16x64xbf16>, vector<64x32xbf16>, vector<16x32xf32> -> vector<16x32xf32>
    %c1_166 = arith.constant 1 : index
    %c0_167 = arith.constant 0 : index
    %c0_168 = arith.constant 0 : index
    %c0_169 = arith.constant 0 : index
    %261 = vector.load %arg10[%c1_166, %c0_167, %c0_168, %c0_169] : memref<6x2x1x32xf32, #tpu.memory_space<vmem>>, vector<1x1x1x32xf32>
    %262 = vector.shape_cast %261 : vector<1x1x1x32xf32> to vector<1x32xf32>
    %263 = vector.broadcast %262 : vector<1x32xf32> to vector<16x32xf32>
    %264 = arith.addf %260, %263 : vector<16x32xf32>
    %265 = arith.truncf %250 : vector<16x32xf32> to vector<16x32xbf16>
    %266 = arith.truncf %257 : vector<16x32xf32> to vector<16x32xbf16>
    %cst_170 = arith.constant dense<0.000000e+00> : vector<16x16xf32>
    %267 = tpu.matmul %265, %266, %cst_170 {dimension_numbers = #tpu.dot_dimension_numbers<[1], [1], [0], [0], [0, 0, 1, 0], [], []>} : vector<16x32xbf16>, vector<16x32xbf16>, vector<16x16xf32> -> vector<16x16xf32>
    %cst_171 = arith.constant 0.176776692 : f32
    %268 = vector.broadcast %cst_171 : f32 to vector<16x16xf32>
    %269 = arith.mulf %267, %268 : vector<16x16xf32>
    %270 = vector.broadcast %215 : vector<1x16xf32> to vector<16x16xf32>
    %271 = arith.addf %269, %270 : vector<16x16xf32>
    %cst_172 = arith.constant dense<0xFF800000> : vector<16xf32>
    %272 = vector.multi_reduction <maximumf>, %271, %cst_172 [1] : vector<16x16xf32> to vector<16xf32>
    %273 = vector.shape_cast %272 : vector<16xf32> to vector<16x1xf32>
    %274 = vector.broadcast %273 : vector<16x1xf32> to vector<16x16xf32>
    %275 = arith.subf %271, %274 : vector<16x16xf32>
    %276 = math.exp %275 : vector<16x16xf32>
    %cst_173 = arith.constant dense<0.000000e+00> : vector<16xf32>
    %277 = vector.multi_reduction <add>, %276, %cst_173 [1] : vector<16x16xf32> to vector<16xf32>
    %278 = vector.shape_cast %277 : vector<16xf32> to vector<16x1xf32>
    %279 = arith.truncf %276 : vector<16x16xf32> to vector<16x16xbf16>
    %280 = arith.truncf %264 : vector<16x32xf32> to vector<16x32xbf16>
    %cst_174 = arith.constant dense<0.000000e+00> : vector<16x32xf32>
    %281 = tpu.matmul %279, %280, %cst_174 {dimension_numbers = #tpu.dot_dimension_numbers<[1], [0], [0], [1], [0, 0, 1, 1], [], []>} : vector<16x16xbf16>, vector<16x32xbf16>, vector<16x32xf32> -> vector<16x32xf32>
    %282 = tpu.reciprocal %278 {approx = true} : vector<16x1xf32> -> vector<16x1xf32>
    %283 = vector.broadcast %282 : vector<16x1xf32> to vector<16x32xf32>
    %284 = arith.mulf %281, %283 : vector<16x32xf32>
    %285 = arith.truncf %284 : vector<16x32xf32> to vector<16x32xbf16>
    %c1_175 = arith.constant 1 : index
    %c0_176 = arith.constant 0 : index
    %c0_177 = arith.constant 0 : index
    %c0_178 = arith.constant 0 : index
    %286 = vector.load %arg11[%c1_175, %c0_176, %c0_177, %c0_178] : memref<6x2x32x64xbf16, #tpu.memory_space<vmem>>, vector<1x1x32x64xbf16>
    %287 = vector.shape_cast %286 : vector<1x1x32x64xbf16> to vector<32x64xbf16>
    %cst_179 = arith.constant dense<0.000000e+00> : vector<16x64xf32>
    %288 = tpu.matmul %285, %287, %cst_179 {dimension_numbers = #tpu.dot_dimension_numbers<[1], [0], [0], [1], [0, 0, 1, 1], [], []>} : vector<16x32xbf16>, vector<32x64xbf16>, vector<16x64xf32> -> vector<16x64xf32>
    %289 = arith.addf %243, %288 : vector<16x64xf32>
    %c1_180 = arith.constant 1 : index
    %c1_181 = arith.constant 1 : index
    %c0_182 = arith.constant 0 : index
    %c0_183 = arith.constant 0 : index
    %290 = vector.load %arg5[%c1_180, %c1_181, %c0_182, %c0_183] : memref<6x2x64x32xbf16, #tpu.memory_space<vmem>>, vector<1x1x64x32xbf16>
    %291 = vector.shape_cast %290 : vector<1x1x64x32xbf16> to vector<64x32xbf16>
    %cst_184 = arith.constant dense<0.000000e+00> : vector<16x32xf32>
    %292 = tpu.matmul %242, %291, %cst_184 {dimension_numbers = #tpu.dot_dimension_numbers<[1], [0], [0], [1], [0, 0, 1, 1], [], []>} : vector<16x64xbf16>, vector<64x32xbf16>, vector<16x32xf32> -> vector<16x32xf32>
    %c1_185 = arith.constant 1 : index
    %c1_186 = arith.constant 1 : index
    %c0_187 = arith.constant 0 : index
    %c0_188 = arith.constant 0 : index
    %293 = vector.load %arg6[%c1_185, %c1_186, %c0_187, %c0_188] : memref<6x2x1x32xf32, #tpu.memory_space<vmem>>, vector<1x1x1x32xf32>
    %294 = vector.shape_cast %293 : vector<1x1x1x32xf32> to vector<1x32xf32>
    %295 = vector.broadcast %294 : vector<1x32xf32> to vector<16x32xf32>
    %296 = arith.addf %292, %295 : vector<16x32xf32>
    %c1_189 = arith.constant 1 : index
    %c1_190 = arith.constant 1 : index
    %c0_191 = arith.constant 0 : index
    %c0_192 = arith.constant 0 : index
    %297 = vector.load %arg7[%c1_189, %c1_190, %c0_191, %c0_192] : memref<6x2x64x32xbf16, #tpu.memory_space<vmem>>, vector<1x1x64x32xbf16>
    %298 = vector.shape_cast %297 : vector<1x1x64x32xbf16> to vector<64x32xbf16>
    %cst_193 = arith.constant dense<0.000000e+00> : vector<16x32xf32>
    %299 = tpu.matmul %242, %298, %cst_193 {dimension_numbers = #tpu.dot_dimension_numbers<[1], [0], [0], [1], [0, 0, 1, 1], [], []>} : vector<16x64xbf16>, vector<64x32xbf16>, vector<16x32xf32> -> vector<16x32xf32>
    %c1_194 = arith.constant 1 : index
    %c1_195 = arith.constant 1 : index
    %c0_196 = arith.constant 0 : index
    %c0_197 = arith.constant 0 : index
    %300 = vector.load %arg8[%c1_194, %c1_195, %c0_196, %c0_197] : memref<6x2x1x32xf32, #tpu.memory_space<vmem>>, vector<1x1x1x32xf32>
    %301 = vector.shape_cast %300 : vector<1x1x1x32xf32> to vector<1x32xf32>
    %302 = vector.broadcast %301 : vector<1x32xf32> to vector<16x32xf32>
    %303 = arith.addf %299, %302 : vector<16x32xf32>
    %c1_198 = arith.constant 1 : index
    %c1_199 = arith.constant 1 : index
    %c0_200 = arith.constant 0 : index
    %c0_201 = arith.constant 0 : index
    %304 = vector.load %arg9[%c1_198, %c1_199, %c0_200, %c0_201] : memref<6x2x64x32xbf16, #tpu.memory_space<vmem>>, vector<1x1x64x32xbf16>
    %305 = vector.shape_cast %304 : vector<1x1x64x32xbf16> to vector<64x32xbf16>
    %cst_202 = arith.constant dense<0.000000e+00> : vector<16x32xf32>
    %306 = tpu.matmul %242, %305, %cst_202 {dimension_numbers = #tpu.dot_dimension_numbers<[1], [0], [0], [1], [0, 0, 1, 1], [], []>} : vector<16x64xbf16>, vector<64x32xbf16>, vector<16x32xf32> -> vector<16x32xf32>
    %c1_203 = arith.constant 1 : index
    %c1_204 = arith.constant 1 : index
    %c0_205 = arith.constant 0 : index
    %c0_206 = arith.constant 0 : index
    %307 = vector.load %arg10[%c1_203, %c1_204, %c0_205, %c0_206] : memref<6x2x1x32xf32, #tpu.memory_space<vmem>>, vector<1x1x1x32xf32>
    %308 = vector.shape_cast %307 : vector<1x1x1x32xf32> to vector<1x32xf32>
    %309 = vector.broadcast %308 : vector<1x32xf32> to vector<16x32xf32>
    %310 = arith.addf %306, %309 : vector<16x32xf32>
    %311 = arith.truncf %296 : vector<16x32xf32> to vector<16x32xbf16>
    %312 = arith.truncf %303 : vector<16x32xf32> to vector<16x32xbf16>
    %cst_207 = arith.constant dense<0.000000e+00> : vector<16x16xf32>
    %313 = tpu.matmul %311, %312, %cst_207 {dimension_numbers = #tpu.dot_dimension_numbers<[1], [1], [0], [0], [0, 0, 1, 0], [], []>} : vector<16x32xbf16>, vector<16x32xbf16>, vector<16x16xf32> -> vector<16x16xf32>
    %cst_208 = arith.constant 0.176776692 : f32
    %314 = vector.broadcast %cst_208 : f32 to vector<16x16xf32>
    %315 = arith.mulf %313, %314 : vector<16x16xf32>
    %316 = vector.broadcast %215 : vector<1x16xf32> to vector<16x16xf32>
    %317 = arith.addf %315, %316 : vector<16x16xf32>
    %cst_209 = arith.constant dense<0xFF800000> : vector<16xf32>
    %318 = vector.multi_reduction <maximumf>, %317, %cst_209 [1] : vector<16x16xf32> to vector<16xf32>
    %319 = vector.shape_cast %318 : vector<16xf32> to vector<16x1xf32>
    %320 = vector.broadcast %319 : vector<16x1xf32> to vector<16x16xf32>
    %321 = arith.subf %317, %320 : vector<16x16xf32>
    %322 = math.exp %321 : vector<16x16xf32>
    %cst_210 = arith.constant dense<0.000000e+00> : vector<16xf32>
    %323 = vector.multi_reduction <add>, %322, %cst_210 [1] : vector<16x16xf32> to vector<16xf32>
    %324 = vector.shape_cast %323 : vector<16xf32> to vector<16x1xf32>
    %325 = arith.truncf %322 : vector<16x16xf32> to vector<16x16xbf16>
    %326 = arith.truncf %310 : vector<16x32xf32> to vector<16x32xbf16>
    %cst_211 = arith.constant dense<0.000000e+00> : vector<16x32xf32>
    %327 = tpu.matmul %325, %326, %cst_211 {dimension_numbers = #tpu.dot_dimension_numbers<[1], [0], [0], [1], [0, 0, 1, 1], [], []>} : vector<16x16xbf16>, vector<16x32xbf16>, vector<16x32xf32> -> vector<16x32xf32>
    %328 = tpu.reciprocal %324 {approx = true} : vector<16x1xf32> -> vector<16x1xf32>
    %329 = vector.broadcast %328 : vector<16x1xf32> to vector<16x32xf32>
    %330 = arith.mulf %327, %329 : vector<16x32xf32>
    %331 = arith.truncf %330 : vector<16x32xf32> to vector<16x32xbf16>
    %c1_212 = arith.constant 1 : index
    %c1_213 = arith.constant 1 : index
    %c0_214 = arith.constant 0 : index
    %c0_215 = arith.constant 0 : index
    %332 = vector.load %arg11[%c1_212, %c1_213, %c0_214, %c0_215] : memref<6x2x32x64xbf16, #tpu.memory_space<vmem>>, vector<1x1x32x64xbf16>
    %333 = vector.shape_cast %332 : vector<1x1x32x64xbf16> to vector<32x64xbf16>
    %cst_216 = arith.constant dense<0.000000e+00> : vector<16x64xf32>
    %334 = tpu.matmul %331, %333, %cst_216 {dimension_numbers = #tpu.dot_dimension_numbers<[1], [0], [0], [1], [0, 0, 1, 1], [], []>} : vector<16x32xbf16>, vector<32x64xbf16>, vector<16x64xf32> -> vector<16x64xf32>
    %335 = arith.addf %289, %334 : vector<16x64xf32>
    %336 = arith.addf %205, %335 : vector<16x64xf32>
    %c1_217 = arith.constant 1 : index
    %c0_218 = arith.constant 0 : index
    %c0_219 = arith.constant 0 : index
    %337 = vector.load %arg12[%c1_217, %c0_218, %c0_219] : memref<6x1x64xf32, #tpu.memory_space<vmem>>, vector<1x1x64xf32>
    %338 = vector.shape_cast %337 : vector<1x1x64xf32> to vector<1x64xf32>
    %339 = vector.broadcast %338 : vector<1x64xf32> to vector<16x64xf32>
    %340 = arith.addf %336, %339 : vector<16x64xf32>
    %c1_220 = arith.constant 1 : index
    %c0_221 = arith.constant 0 : index
    %c0_222 = arith.constant 0 : index
    %341 = vector.load %arg13[%c1_220, %c0_221, %c0_222] : memref<6x1x64xf32, #tpu.memory_space<vmem>>, vector<1x1x64xf32>
    %342 = vector.shape_cast %341 : vector<1x1x64xf32> to vector<1x64xf32>
    %c1_223 = arith.constant 1 : index
    %c0_224 = arith.constant 0 : index
    %c0_225 = arith.constant 0 : index
    %343 = vector.load %arg14[%c1_223, %c0_224, %c0_225] : memref<6x1x64xf32, #tpu.memory_space<vmem>>, vector<1x1x64xf32>
    %344 = vector.shape_cast %343 : vector<1x1x64xf32> to vector<1x64xf32>
    %cst_226 = arith.constant dense<0.000000e+00> : vector<16xf32>
    %345 = vector.multi_reduction <add>, %340, %cst_226 [1] : vector<16x64xf32> to vector<16xf32>
    %346 = vector.shape_cast %345 : vector<16xf32> to vector<16x1xf32>
    %cst_227 = arith.constant 6.400000e+01 : f32
    %347 = vector.broadcast %cst_227 : f32 to vector<16x1xf32>
    %348 = arith.divf %346, %347 : vector<16x1xf32>
    %349 = vector.broadcast %348 : vector<16x1xf32> to vector<16x64xf32>
    %350 = arith.subf %340, %349 : vector<16x64xf32>
    %351 = arith.mulf %350, %350 : vector<16x64xf32>
    %cst_228 = arith.constant dense<0.000000e+00> : vector<16xf32>
    %352 = vector.multi_reduction <add>, %351, %cst_228 [1] : vector<16x64xf32> to vector<16xf32>
    %353 = vector.shape_cast %352 : vector<16xf32> to vector<16x1xf32>
    %cst_229 = arith.constant 6.400000e+01 : f32
    %354 = vector.broadcast %cst_229 : f32 to vector<16x1xf32>
    %355 = arith.divf %353, %354 : vector<16x1xf32>
    %356 = vector.broadcast %348 : vector<16x1xf32> to vector<16x64xf32>
    %357 = arith.subf %340, %356 : vector<16x64xf32>
    %cst_230 = arith.constant 9.99999974E-6 : f32
    %358 = vector.broadcast %cst_230 : f32 to vector<16x1xf32>
    %359 = arith.addf %355, %358 : vector<16x1xf32>
    %360 = math.rsqrt %359 : vector<16x1xf32>
    %361 = vector.broadcast %360 : vector<16x1xf32> to vector<16x64xf32>
    %362 = arith.mulf %357, %361 : vector<16x64xf32>
    %363 = vector.broadcast %342 : vector<1x64xf32> to vector<16x64xf32>
    %364 = arith.mulf %362, %363 : vector<16x64xf32>
    %365 = vector.broadcast %344 : vector<1x64xf32> to vector<16x64xf32>
    %366 = arith.addf %364, %365 : vector<16x64xf32>
    %367 = arith.truncf %366 : vector<16x64xf32> to vector<16x64xbf16>
    %c1_231 = arith.constant 1 : index
    %c0_232 = arith.constant 0 : index
    %c0_233 = arith.constant 0 : index
    %368 = vector.load %arg15[%c1_231, %c0_232, %c0_233] : memref<6x64x256xbf16, #tpu.memory_space<vmem>>, vector<1x64x256xbf16>
    %369 = vector.shape_cast %368 : vector<1x64x256xbf16> to vector<64x256xbf16>
    %cst_234 = arith.constant dense<0.000000e+00> : vector<16x256xf32>
    %370 = tpu.matmul %367, %369, %cst_234 {dimension_numbers = #tpu.dot_dimension_numbers<[1], [0], [0], [1], [0, 0, 1, 1], [], []>} : vector<16x64xbf16>, vector<64x256xbf16>, vector<16x256xf32> -> vector<16x256xf32>
    %c1_235 = arith.constant 1 : index
    %c0_236 = arith.constant 0 : index
    %c0_237 = arith.constant 0 : index
    %371 = vector.load %arg16[%c1_235, %c0_236, %c0_237] : memref<6x1x256xf32, #tpu.memory_space<vmem>>, vector<1x1x256xf32>
    %372 = vector.shape_cast %371 : vector<1x1x256xf32> to vector<1x256xf32>
    %373 = vector.broadcast %372 : vector<1x256xf32> to vector<16x256xf32>
    %374 = arith.addf %370, %373 : vector<16x256xf32>
    %cst_238 = arith.constant 0.000000e+00 : f32
    %375 = vector.broadcast %cst_238 : f32 to vector<16x256xf32>
    %376 = arith.maximumf %374, %375 : vector<16x256xf32>
    %377 = arith.truncf %376 : vector<16x256xf32> to vector<16x256xbf16>
    %c1_239 = arith.constant 1 : index
    %c0_240 = arith.constant 0 : index
    %c0_241 = arith.constant 0 : index
    %378 = vector.load %arg17[%c1_239, %c0_240, %c0_241] : memref<6x256x64xbf16, #tpu.memory_space<vmem>>, vector<1x256x64xbf16>
    %379 = vector.shape_cast %378 : vector<1x256x64xbf16> to vector<256x64xbf16>
    %cst_242 = arith.constant dense<0.000000e+00> : vector<16x64xf32>
    %380 = tpu.matmul %377, %379, %cst_242 {dimension_numbers = #tpu.dot_dimension_numbers<[1], [0], [0], [1], [0, 0, 1, 1], [], []>} : vector<16x256xbf16>, vector<256x64xbf16>, vector<16x64xf32> -> vector<16x64xf32>
    %c1_243 = arith.constant 1 : index
    %c0_244 = arith.constant 0 : index
    %c0_245 = arith.constant 0 : index
    %381 = vector.load %arg18[%c1_243, %c0_244, %c0_245] : memref<6x1x64xf32, #tpu.memory_space<vmem>>, vector<1x1x64xf32>
    %382 = vector.shape_cast %381 : vector<1x1x64xf32> to vector<1x64xf32>
    %383 = vector.broadcast %382 : vector<1x64xf32> to vector<16x64xf32>
    %384 = arith.addf %380, %383 : vector<16x64xf32>
    %385 = arith.addf %340, %384 : vector<16x64xf32>
    %386 = vector.shape_cast %207 : vector<16x1xi1> to vector<16x1xi1>
    %387 = vector.broadcast %386 : vector<16x1xi1> to vector<16x64xi1>
    %388 = arith.select %387, %385, %205 : vector<16x64xi1>, vector<16x64xf32>
    %cst_246 = arith.constant 0.333333343 : f32
    %389 = vector.broadcast %cst_246 : f32 to vector<16x1xf32>
    %390 = arith.cmpf ogt, %13, %389 : vector<16x1xf32>
    %cst_247 = arith.constant 0.333333343 : f32
    %391 = vector.broadcast %cst_247 : f32 to vector<1x16xf32>
    %392 = arith.cmpf ogt, %21, %391 : vector<1x16xf32>
    %393 = arith.extui %392 : vector<1x16xi1> to vector<1x16xi32>
    %394 = arith.sitofp %393 : vector<1x16xi32> to vector<1x16xf32>
    %395 = arith.addf %212, %394 : vector<1x16xf32>
    %cst_248 = arith.constant 0.000000e+00 : f32
    %cst_249 = arith.constant -1.000000e+30 : f32
    %396 = vector.broadcast %cst_248 : f32 to vector<1x16xf32>
    %397 = vector.broadcast %cst_249 : f32 to vector<1x16xf32>
    %398 = arith.select %392, %396, %397 : vector<1x16xi1>, vector<1x16xf32>
    %c2 = arith.constant 2 : index
    %c0_250 = arith.constant 0 : index
    %c0_251 = arith.constant 0 : index
    %399 = vector.load %arg3[%c2, %c0_250, %c0_251] : memref<6x1x64xf32, #tpu.memory_space<vmem>>, vector<1x1x64xf32>
    %400 = vector.shape_cast %399 : vector<1x1x64xf32> to vector<1x64xf32>
    %c2_252 = arith.constant 2 : index
    %c0_253 = arith.constant 0 : index
    %c0_254 = arith.constant 0 : index
    %401 = vector.load %arg4[%c2_252, %c0_253, %c0_254] : memref<6x1x64xf32, #tpu.memory_space<vmem>>, vector<1x1x64xf32>
    %402 = vector.shape_cast %401 : vector<1x1x64xf32> to vector<1x64xf32>
    %cst_255 = arith.constant dense<0.000000e+00> : vector<16xf32>
    %403 = vector.multi_reduction <add>, %388, %cst_255 [1] : vector<16x64xf32> to vector<16xf32>
    %404 = vector.shape_cast %403 : vector<16xf32> to vector<16x1xf32>
    %cst_256 = arith.constant 6.400000e+01 : f32
    %405 = vector.broadcast %cst_256 : f32 to vector<16x1xf32>
    %406 = arith.divf %404, %405 : vector<16x1xf32>
    %407 = vector.broadcast %406 : vector<16x1xf32> to vector<16x64xf32>
    %408 = arith.subf %388, %407 : vector<16x64xf32>
    %409 = arith.mulf %408, %408 : vector<16x64xf32>
    %cst_257 = arith.constant dense<0.000000e+00> : vector<16xf32>
    %410 = vector.multi_reduction <add>, %409, %cst_257 [1] : vector<16x64xf32> to vector<16xf32>
    %411 = vector.shape_cast %410 : vector<16xf32> to vector<16x1xf32>
    %cst_258 = arith.constant 6.400000e+01 : f32
    %412 = vector.broadcast %cst_258 : f32 to vector<16x1xf32>
    %413 = arith.divf %411, %412 : vector<16x1xf32>
    %414 = vector.broadcast %406 : vector<16x1xf32> to vector<16x64xf32>
    %415 = arith.subf %388, %414 : vector<16x64xf32>
    %cst_259 = arith.constant 9.99999974E-6 : f32
    %416 = vector.broadcast %cst_259 : f32 to vector<16x1xf32>
    %417 = arith.addf %413, %416 : vector<16x1xf32>
    %418 = math.rsqrt %417 : vector<16x1xf32>
    %419 = vector.broadcast %418 : vector<16x1xf32> to vector<16x64xf32>
    %420 = arith.mulf %415, %419 : vector<16x64xf32>
    %421 = vector.broadcast %400 : vector<1x64xf32> to vector<16x64xf32>
    %422 = arith.mulf %420, %421 : vector<16x64xf32>
    %423 = vector.broadcast %402 : vector<1x64xf32> to vector<16x64xf32>
    %424 = arith.addf %422, %423 : vector<16x64xf32>
    %425 = arith.truncf %424 : vector<16x64xf32> to vector<16x64xbf16>
    %cst_260 = arith.constant 0.000000e+00 : f32
    %426 = vector.broadcast %cst_260 : f32 to vector<16x64xf32>
    %c2_261 = arith.constant 2 : index
    %c0_262 = arith.constant 0 : index
    %c0_263 = arith.constant 0 : index
    %c0_264 = arith.constant 0 : index
    %427 = vector.load %arg5[%c2_261, %c0_262, %c0_263, %c0_264] : memref<6x2x64x32xbf16, #tpu.memory_space<vmem>>, vector<1x1x64x32xbf16>
    %428 = vector.shape_cast %427 : vector<1x1x64x32xbf16> to vector<64x32xbf16>
    %cst_265 = arith.constant dense<0.000000e+00> : vector<16x32xf32>
    %429 = tpu.matmul %425, %428, %cst_265 {dimension_numbers = #tpu.dot_dimension_numbers<[1], [0], [0], [1], [0, 0, 1, 1], [], []>} : vector<16x64xbf16>, vector<64x32xbf16>, vector<16x32xf32> -> vector<16x32xf32>
    %c2_266 = arith.constant 2 : index
    %c0_267 = arith.constant 0 : index
    %c0_268 = arith.constant 0 : index
    %c0_269 = arith.constant 0 : index
    %430 = vector.load %arg6[%c2_266, %c0_267, %c0_268, %c0_269] : memref<6x2x1x32xf32, #tpu.memory_space<vmem>>, vector<1x1x1x32xf32>
    %431 = vector.shape_cast %430 : vector<1x1x1x32xf32> to vector<1x32xf32>
    %432 = vector.broadcast %431 : vector<1x32xf32> to vector<16x32xf32>
    %433 = arith.addf %429, %432 : vector<16x32xf32>
    %c2_270 = arith.constant 2 : index
    %c0_271 = arith.constant 0 : index
    %c0_272 = arith.constant 0 : index
    %c0_273 = arith.constant 0 : index
    %434 = vector.load %arg7[%c2_270, %c0_271, %c0_272, %c0_273] : memref<6x2x64x32xbf16, #tpu.memory_space<vmem>>, vector<1x1x64x32xbf16>
    %435 = vector.shape_cast %434 : vector<1x1x64x32xbf16> to vector<64x32xbf16>
    %cst_274 = arith.constant dense<0.000000e+00> : vector<16x32xf32>
    %436 = tpu.matmul %425, %435, %cst_274 {dimension_numbers = #tpu.dot_dimension_numbers<[1], [0], [0], [1], [0, 0, 1, 1], [], []>} : vector<16x64xbf16>, vector<64x32xbf16>, vector<16x32xf32> -> vector<16x32xf32>
    %c2_275 = arith.constant 2 : index
    %c0_276 = arith.constant 0 : index
    %c0_277 = arith.constant 0 : index
    %c0_278 = arith.constant 0 : index
    %437 = vector.load %arg8[%c2_275, %c0_276, %c0_277, %c0_278] : memref<6x2x1x32xf32, #tpu.memory_space<vmem>>, vector<1x1x1x32xf32>
    %438 = vector.shape_cast %437 : vector<1x1x1x32xf32> to vector<1x32xf32>
    %439 = vector.broadcast %438 : vector<1x32xf32> to vector<16x32xf32>
    %440 = arith.addf %436, %439 : vector<16x32xf32>
    %c2_279 = arith.constant 2 : index
    %c0_280 = arith.constant 0 : index
    %c0_281 = arith.constant 0 : index
    %c0_282 = arith.constant 0 : index
    %441 = vector.load %arg9[%c2_279, %c0_280, %c0_281, %c0_282] : memref<6x2x64x32xbf16, #tpu.memory_space<vmem>>, vector<1x1x64x32xbf16>
    %442 = vector.shape_cast %441 : vector<1x1x64x32xbf16> to vector<64x32xbf16>
    %cst_283 = arith.constant dense<0.000000e+00> : vector<16x32xf32>
    %443 = tpu.matmul %425, %442, %cst_283 {dimension_numbers = #tpu.dot_dimension_numbers<[1], [0], [0], [1], [0, 0, 1, 1], [], []>} : vector<16x64xbf16>, vector<64x32xbf16>, vector<16x32xf32> -> vector<16x32xf32>
    %c2_284 = arith.constant 2 : index
    %c0_285 = arith.constant 0 : index
    %c0_286 = arith.constant 0 : index
    %c0_287 = arith.constant 0 : index
    %444 = vector.load %arg10[%c2_284, %c0_285, %c0_286, %c0_287] : memref<6x2x1x32xf32, #tpu.memory_space<vmem>>, vector<1x1x1x32xf32>
    %445 = vector.shape_cast %444 : vector<1x1x1x32xf32> to vector<1x32xf32>
    %446 = vector.broadcast %445 : vector<1x32xf32> to vector<16x32xf32>
    %447 = arith.addf %443, %446 : vector<16x32xf32>
    %448 = arith.truncf %433 : vector<16x32xf32> to vector<16x32xbf16>
    %449 = arith.truncf %440 : vector<16x32xf32> to vector<16x32xbf16>
    %cst_288 = arith.constant dense<0.000000e+00> : vector<16x16xf32>
    %450 = tpu.matmul %448, %449, %cst_288 {dimension_numbers = #tpu.dot_dimension_numbers<[1], [1], [0], [0], [0, 0, 1, 0], [], []>} : vector<16x32xbf16>, vector<16x32xbf16>, vector<16x16xf32> -> vector<16x16xf32>
    %cst_289 = arith.constant 0.176776692 : f32
    %451 = vector.broadcast %cst_289 : f32 to vector<16x16xf32>
    %452 = arith.mulf %450, %451 : vector<16x16xf32>
    %453 = vector.broadcast %398 : vector<1x16xf32> to vector<16x16xf32>
    %454 = arith.addf %452, %453 : vector<16x16xf32>
    %cst_290 = arith.constant dense<0xFF800000> : vector<16xf32>
    %455 = vector.multi_reduction <maximumf>, %454, %cst_290 [1] : vector<16x16xf32> to vector<16xf32>
    %456 = vector.shape_cast %455 : vector<16xf32> to vector<16x1xf32>
    %457 = vector.broadcast %456 : vector<16x1xf32> to vector<16x16xf32>
    %458 = arith.subf %454, %457 : vector<16x16xf32>
    %459 = math.exp %458 : vector<16x16xf32>
    %cst_291 = arith.constant dense<0.000000e+00> : vector<16xf32>
    %460 = vector.multi_reduction <add>, %459, %cst_291 [1] : vector<16x16xf32> to vector<16xf32>
    %461 = vector.shape_cast %460 : vector<16xf32> to vector<16x1xf32>
    %462 = arith.truncf %459 : vector<16x16xf32> to vector<16x16xbf16>
    %463 = arith.truncf %447 : vector<16x32xf32> to vector<16x32xbf16>
    %cst_292 = arith.constant dense<0.000000e+00> : vector<16x32xf32>
    %464 = tpu.matmul %462, %463, %cst_292 {dimension_numbers = #tpu.dot_dimension_numbers<[1], [0], [0], [1], [0, 0, 1, 1], [], []>} : vector<16x16xbf16>, vector<16x32xbf16>, vector<16x32xf32> -> vector<16x32xf32>
    %465 = tpu.reciprocal %461 {approx = true} : vector<16x1xf32> -> vector<16x1xf32>
    %466 = vector.broadcast %465 : vector<16x1xf32> to vector<16x32xf32>
    %467 = arith.mulf %464, %466 : vector<16x32xf32>
    %468 = arith.truncf %467 : vector<16x32xf32> to vector<16x32xbf16>
    %c2_293 = arith.constant 2 : index
    %c0_294 = arith.constant 0 : index
    %c0_295 = arith.constant 0 : index
    %c0_296 = arith.constant 0 : index
    %469 = vector.load %arg11[%c2_293, %c0_294, %c0_295, %c0_296] : memref<6x2x32x64xbf16, #tpu.memory_space<vmem>>, vector<1x1x32x64xbf16>
    %470 = vector.shape_cast %469 : vector<1x1x32x64xbf16> to vector<32x64xbf16>
    %cst_297 = arith.constant dense<0.000000e+00> : vector<16x64xf32>
    %471 = tpu.matmul %468, %470, %cst_297 {dimension_numbers = #tpu.dot_dimension_numbers<[1], [0], [0], [1], [0, 0, 1, 1], [], []>} : vector<16x32xbf16>, vector<32x64xbf16>, vector<16x64xf32> -> vector<16x64xf32>
    %472 = arith.addf %426, %471 : vector<16x64xf32>
    %c2_298 = arith.constant 2 : index
    %c1_299 = arith.constant 1 : index
    %c0_300 = arith.constant 0 : index
    %c0_301 = arith.constant 0 : index
    %473 = vector.load %arg5[%c2_298, %c1_299, %c0_300, %c0_301] : memref<6x2x64x32xbf16, #tpu.memory_space<vmem>>, vector<1x1x64x32xbf16>
    %474 = vector.shape_cast %473 : vector<1x1x64x32xbf16> to vector<64x32xbf16>
    %cst_302 = arith.constant dense<0.000000e+00> : vector<16x32xf32>
    %475 = tpu.matmul %425, %474, %cst_302 {dimension_numbers = #tpu.dot_dimension_numbers<[1], [0], [0], [1], [0, 0, 1, 1], [], []>} : vector<16x64xbf16>, vector<64x32xbf16>, vector<16x32xf32> -> vector<16x32xf32>
    %c2_303 = arith.constant 2 : index
    %c1_304 = arith.constant 1 : index
    %c0_305 = arith.constant 0 : index
    %c0_306 = arith.constant 0 : index
    %476 = vector.load %arg6[%c2_303, %c1_304, %c0_305, %c0_306] : memref<6x2x1x32xf32, #tpu.memory_space<vmem>>, vector<1x1x1x32xf32>
    %477 = vector.shape_cast %476 : vector<1x1x1x32xf32> to vector<1x32xf32>
    %478 = vector.broadcast %477 : vector<1x32xf32> to vector<16x32xf32>
    %479 = arith.addf %475, %478 : vector<16x32xf32>
    %c2_307 = arith.constant 2 : index
    %c1_308 = arith.constant 1 : index
    %c0_309 = arith.constant 0 : index
    %c0_310 = arith.constant 0 : index
    %480 = vector.load %arg7[%c2_307, %c1_308, %c0_309, %c0_310] : memref<6x2x64x32xbf16, #tpu.memory_space<vmem>>, vector<1x1x64x32xbf16>
    %481 = vector.shape_cast %480 : vector<1x1x64x32xbf16> to vector<64x32xbf16>
    %cst_311 = arith.constant dense<0.000000e+00> : vector<16x32xf32>
    %482 = tpu.matmul %425, %481, %cst_311 {dimension_numbers = #tpu.dot_dimension_numbers<[1], [0], [0], [1], [0, 0, 1, 1], [], []>} : vector<16x64xbf16>, vector<64x32xbf16>, vector<16x32xf32> -> vector<16x32xf32>
    %c2_312 = arith.constant 2 : index
    %c1_313 = arith.constant 1 : index
    %c0_314 = arith.constant 0 : index
    %c0_315 = arith.constant 0 : index
    %483 = vector.load %arg8[%c2_312, %c1_313, %c0_314, %c0_315] : memref<6x2x1x32xf32, #tpu.memory_space<vmem>>, vector<1x1x1x32xf32>
    %484 = vector.shape_cast %483 : vector<1x1x1x32xf32> to vector<1x32xf32>
    %485 = vector.broadcast %484 : vector<1x32xf32> to vector<16x32xf32>
    %486 = arith.addf %482, %485 : vector<16x32xf32>
    %c2_316 = arith.constant 2 : index
    %c1_317 = arith.constant 1 : index
    %c0_318 = arith.constant 0 : index
    %c0_319 = arith.constant 0 : index
    %487 = vector.load %arg9[%c2_316, %c1_317, %c0_318, %c0_319] : memref<6x2x64x32xbf16, #tpu.memory_space<vmem>>, vector<1x1x64x32xbf16>
    %488 = vector.shape_cast %487 : vector<1x1x64x32xbf16> to vector<64x32xbf16>
    %cst_320 = arith.constant dense<0.000000e+00> : vector<16x32xf32>
    %489 = tpu.matmul %425, %488, %cst_320 {dimension_numbers = #tpu.dot_dimension_numbers<[1], [0], [0], [1], [0, 0, 1, 1], [], []>} : vector<16x64xbf16>, vector<64x32xbf16>, vector<16x32xf32> -> vector<16x32xf32>
    %c2_321 = arith.constant 2 : index
    %c1_322 = arith.constant 1 : index
    %c0_323 = arith.constant 0 : index
    %c0_324 = arith.constant 0 : index
    %490 = vector.load %arg10[%c2_321, %c1_322, %c0_323, %c0_324] : memref<6x2x1x32xf32, #tpu.memory_space<vmem>>, vector<1x1x1x32xf32>
    %491 = vector.shape_cast %490 : vector<1x1x1x32xf32> to vector<1x32xf32>
    %492 = vector.broadcast %491 : vector<1x32xf32> to vector<16x32xf32>
    %493 = arith.addf %489, %492 : vector<16x32xf32>
    %494 = arith.truncf %479 : vector<16x32xf32> to vector<16x32xbf16>
    %495 = arith.truncf %486 : vector<16x32xf32> to vector<16x32xbf16>
    %cst_325 = arith.constant dense<0.000000e+00> : vector<16x16xf32>
    %496 = tpu.matmul %494, %495, %cst_325 {dimension_numbers = #tpu.dot_dimension_numbers<[1], [1], [0], [0], [0, 0, 1, 0], [], []>} : vector<16x32xbf16>, vector<16x32xbf16>, vector<16x16xf32> -> vector<16x16xf32>
    %cst_326 = arith.constant 0.176776692 : f32
    %497 = vector.broadcast %cst_326 : f32 to vector<16x16xf32>
    %498 = arith.mulf %496, %497 : vector<16x16xf32>
    %499 = vector.broadcast %398 : vector<1x16xf32> to vector<16x16xf32>
    %500 = arith.addf %498, %499 : vector<16x16xf32>
    %cst_327 = arith.constant dense<0xFF800000> : vector<16xf32>
    %501 = vector.multi_reduction <maximumf>, %500, %cst_327 [1] : vector<16x16xf32> to vector<16xf32>
    %502 = vector.shape_cast %501 : vector<16xf32> to vector<16x1xf32>
    %503 = vector.broadcast %502 : vector<16x1xf32> to vector<16x16xf32>
    %504 = arith.subf %500, %503 : vector<16x16xf32>
    %505 = math.exp %504 : vector<16x16xf32>
    %cst_328 = arith.constant dense<0.000000e+00> : vector<16xf32>
    %506 = vector.multi_reduction <add>, %505, %cst_328 [1] : vector<16x16xf32> to vector<16xf32>
    %507 = vector.shape_cast %506 : vector<16xf32> to vector<16x1xf32>
    %508 = arith.truncf %505 : vector<16x16xf32> to vector<16x16xbf16>
    %509 = arith.truncf %493 : vector<16x32xf32> to vector<16x32xbf16>
    %cst_329 = arith.constant dense<0.000000e+00> : vector<16x32xf32>
    %510 = tpu.matmul %508, %509, %cst_329 {dimension_numbers = #tpu.dot_dimension_numbers<[1], [0], [0], [1], [0, 0, 1, 1], [], []>} : vector<16x16xbf16>, vector<16x32xbf16>, vector<16x32xf32> -> vector<16x32xf32>
    %511 = tpu.reciprocal %507 {approx = true} : vector<16x1xf32> -> vector<16x1xf32>
    %512 = vector.broadcast %511 : vector<16x1xf32> to vector<16x32xf32>
    %513 = arith.mulf %510, %512 : vector<16x32xf32>
    %514 = arith.truncf %513 : vector<16x32xf32> to vector<16x32xbf16>
    %c2_330 = arith.constant 2 : index
    %c1_331 = arith.constant 1 : index
    %c0_332 = arith.constant 0 : index
    %c0_333 = arith.constant 0 : index
    %515 = vector.load %arg11[%c2_330, %c1_331, %c0_332, %c0_333] : memref<6x2x32x64xbf16, #tpu.memory_space<vmem>>, vector<1x1x32x64xbf16>
    %516 = vector.shape_cast %515 : vector<1x1x32x64xbf16> to vector<32x64xbf16>
    %cst_334 = arith.constant dense<0.000000e+00> : vector<16x64xf32>
    %517 = tpu.matmul %514, %516, %cst_334 {dimension_numbers = #tpu.dot_dimension_numbers<[1], [0], [0], [1], [0, 0, 1, 1], [], []>} : vector<16x32xbf16>, vector<32x64xbf16>, vector<16x64xf32> -> vector<16x64xf32>
    %518 = arith.addf %472, %517 : vector<16x64xf32>
    %519 = arith.addf %388, %518 : vector<16x64xf32>
    %c2_335 = arith.constant 2 : index
    %c0_336 = arith.constant 0 : index
    %c0_337 = arith.constant 0 : index
    %520 = vector.load %arg12[%c2_335, %c0_336, %c0_337] : memref<6x1x64xf32, #tpu.memory_space<vmem>>, vector<1x1x64xf32>
    %521 = vector.shape_cast %520 : vector<1x1x64xf32> to vector<1x64xf32>
    %522 = vector.broadcast %521 : vector<1x64xf32> to vector<16x64xf32>
    %523 = arith.addf %519, %522 : vector<16x64xf32>
    %c2_338 = arith.constant 2 : index
    %c0_339 = arith.constant 0 : index
    %c0_340 = arith.constant 0 : index
    %524 = vector.load %arg13[%c2_338, %c0_339, %c0_340] : memref<6x1x64xf32, #tpu.memory_space<vmem>>, vector<1x1x64xf32>
    %525 = vector.shape_cast %524 : vector<1x1x64xf32> to vector<1x64xf32>
    %c2_341 = arith.constant 2 : index
    %c0_342 = arith.constant 0 : index
    %c0_343 = arith.constant 0 : index
    %526 = vector.load %arg14[%c2_341, %c0_342, %c0_343] : memref<6x1x64xf32, #tpu.memory_space<vmem>>, vector<1x1x64xf32>
    %527 = vector.shape_cast %526 : vector<1x1x64xf32> to vector<1x64xf32>
    %cst_344 = arith.constant dense<0.000000e+00> : vector<16xf32>
    %528 = vector.multi_reduction <add>, %523, %cst_344 [1] : vector<16x64xf32> to vector<16xf32>
    %529 = vector.shape_cast %528 : vector<16xf32> to vector<16x1xf32>
    %cst_345 = arith.constant 6.400000e+01 : f32
    %530 = vector.broadcast %cst_345 : f32 to vector<16x1xf32>
    %531 = arith.divf %529, %530 : vector<16x1xf32>
    %532 = vector.broadcast %531 : vector<16x1xf32> to vector<16x64xf32>
    %533 = arith.subf %523, %532 : vector<16x64xf32>
    %534 = arith.mulf %533, %533 : vector<16x64xf32>
    %cst_346 = arith.constant dense<0.000000e+00> : vector<16xf32>
    %535 = vector.multi_reduction <add>, %534, %cst_346 [1] : vector<16x64xf32> to vector<16xf32>
    %536 = vector.shape_cast %535 : vector<16xf32> to vector<16x1xf32>
    %cst_347 = arith.constant 6.400000e+01 : f32
    %537 = vector.broadcast %cst_347 : f32 to vector<16x1xf32>
    %538 = arith.divf %536, %537 : vector<16x1xf32>
    %539 = vector.broadcast %531 : vector<16x1xf32> to vector<16x64xf32>
    %540 = arith.subf %523, %539 : vector<16x64xf32>
    %cst_348 = arith.constant 9.99999974E-6 : f32
    %541 = vector.broadcast %cst_348 : f32 to vector<16x1xf32>
    %542 = arith.addf %538, %541 : vector<16x1xf32>
    %543 = math.rsqrt %542 : vector<16x1xf32>
    %544 = vector.broadcast %543 : vector<16x1xf32> to vector<16x64xf32>
    %545 = arith.mulf %540, %544 : vector<16x64xf32>
    %546 = vector.broadcast %525 : vector<1x64xf32> to vector<16x64xf32>
    %547 = arith.mulf %545, %546 : vector<16x64xf32>
    %548 = vector.broadcast %527 : vector<1x64xf32> to vector<16x64xf32>
    %549 = arith.addf %547, %548 : vector<16x64xf32>
    %550 = arith.truncf %549 : vector<16x64xf32> to vector<16x64xbf16>
    %c2_349 = arith.constant 2 : index
    %c0_350 = arith.constant 0 : index
    %c0_351 = arith.constant 0 : index
    %551 = vector.load %arg15[%c2_349, %c0_350, %c0_351] : memref<6x64x256xbf16, #tpu.memory_space<vmem>>, vector<1x64x256xbf16>
    %552 = vector.shape_cast %551 : vector<1x64x256xbf16> to vector<64x256xbf16>
    %cst_352 = arith.constant dense<0.000000e+00> : vector<16x256xf32>
    %553 = tpu.matmul %550, %552, %cst_352 {dimension_numbers = #tpu.dot_dimension_numbers<[1], [0], [0], [1], [0, 0, 1, 1], [], []>} : vector<16x64xbf16>, vector<64x256xbf16>, vector<16x256xf32> -> vector<16x256xf32>
    %c2_353 = arith.constant 2 : index
    %c0_354 = arith.constant 0 : index
    %c0_355 = arith.constant 0 : index
    %554 = vector.load %arg16[%c2_353, %c0_354, %c0_355] : memref<6x1x256xf32, #tpu.memory_space<vmem>>, vector<1x1x256xf32>
    %555 = vector.shape_cast %554 : vector<1x1x256xf32> to vector<1x256xf32>
    %556 = vector.broadcast %555 : vector<1x256xf32> to vector<16x256xf32>
    %557 = arith.addf %553, %556 : vector<16x256xf32>
    %cst_356 = arith.constant 0.000000e+00 : f32
    %558 = vector.broadcast %cst_356 : f32 to vector<16x256xf32>
    %559 = arith.maximumf %557, %558 : vector<16x256xf32>
    %560 = arith.truncf %559 : vector<16x256xf32> to vector<16x256xbf16>
    %c2_357 = arith.constant 2 : index
    %c0_358 = arith.constant 0 : index
    %c0_359 = arith.constant 0 : index
    %561 = vector.load %arg17[%c2_357, %c0_358, %c0_359] : memref<6x256x64xbf16, #tpu.memory_space<vmem>>, vector<1x256x64xbf16>
    %562 = vector.shape_cast %561 : vector<1x256x64xbf16> to vector<256x64xbf16>
    %cst_360 = arith.constant dense<0.000000e+00> : vector<16x64xf32>
    %563 = tpu.matmul %560, %562, %cst_360 {dimension_numbers = #tpu.dot_dimension_numbers<[1], [0], [0], [1], [0, 0, 1, 1], [], []>} : vector<16x256xbf16>, vector<256x64xbf16>, vector<16x64xf32> -> vector<16x64xf32>
    %c2_361 = arith.constant 2 : index
    %c0_362 = arith.constant 0 : index
    %c0_363 = arith.constant 0 : index
    %564 = vector.load %arg18[%c2_361, %c0_362, %c0_363] : memref<6x1x64xf32, #tpu.memory_space<vmem>>, vector<1x1x64xf32>
    %565 = vector.shape_cast %564 : vector<1x1x64xf32> to vector<1x64xf32>
    %566 = vector.broadcast %565 : vector<1x64xf32> to vector<16x64xf32>
    %567 = arith.addf %563, %566 : vector<16x64xf32>
    %568 = arith.addf %523, %567 : vector<16x64xf32>
    %569 = vector.shape_cast %390 : vector<16x1xi1> to vector<16x1xi1>
    %570 = vector.broadcast %569 : vector<16x1xi1> to vector<16x64xi1>
    %571 = arith.select %570, %568, %388 : vector<16x64xi1>, vector<16x64xf32>
    %cst_364 = arith.constant 5.000000e-01 : f32
    %572 = vector.broadcast %cst_364 : f32 to vector<16x1xf32>
    %573 = arith.cmpf ogt, %13, %572 : vector<16x1xf32>
    %cst_365 = arith.constant 5.000000e-01 : f32
    %574 = vector.broadcast %cst_365 : f32 to vector<1x16xf32>
    %575 = arith.cmpf ogt, %21, %574 : vector<1x16xf32>
    %576 = arith.extui %575 : vector<1x16xi1> to vector<1x16xi32>
    %577 = arith.sitofp %576 : vector<1x16xi32> to vector<1x16xf32>
    %578 = arith.addf %395, %577 : vector<1x16xf32>
    %cst_366 = arith.constant 0.000000e+00 : f32
    %cst_367 = arith.constant -1.000000e+30 : f32
    %579 = vector.broadcast %cst_366 : f32 to vector<1x16xf32>
    %580 = vector.broadcast %cst_367 : f32 to vector<1x16xf32>
    %581 = arith.select %575, %579, %580 : vector<1x16xi1>, vector<1x16xf32>
    %c3 = arith.constant 3 : index
    %c0_368 = arith.constant 0 : index
    %c0_369 = arith.constant 0 : index
    %582 = vector.load %arg3[%c3, %c0_368, %c0_369] : memref<6x1x64xf32, #tpu.memory_space<vmem>>, vector<1x1x64xf32>
    %583 = vector.shape_cast %582 : vector<1x1x64xf32> to vector<1x64xf32>
    %c3_370 = arith.constant 3 : index
    %c0_371 = arith.constant 0 : index
    %c0_372 = arith.constant 0 : index
    %584 = vector.load %arg4[%c3_370, %c0_371, %c0_372] : memref<6x1x64xf32, #tpu.memory_space<vmem>>, vector<1x1x64xf32>
    %585 = vector.shape_cast %584 : vector<1x1x64xf32> to vector<1x64xf32>
    %cst_373 = arith.constant dense<0.000000e+00> : vector<16xf32>
    %586 = vector.multi_reduction <add>, %571, %cst_373 [1] : vector<16x64xf32> to vector<16xf32>
    %587 = vector.shape_cast %586 : vector<16xf32> to vector<16x1xf32>
    %cst_374 = arith.constant 6.400000e+01 : f32
    %588 = vector.broadcast %cst_374 : f32 to vector<16x1xf32>
    %589 = arith.divf %587, %588 : vector<16x1xf32>
    %590 = vector.broadcast %589 : vector<16x1xf32> to vector<16x64xf32>
    %591 = arith.subf %571, %590 : vector<16x64xf32>
    %592 = arith.mulf %591, %591 : vector<16x64xf32>
    %cst_375 = arith.constant dense<0.000000e+00> : vector<16xf32>
    %593 = vector.multi_reduction <add>, %592, %cst_375 [1] : vector<16x64xf32> to vector<16xf32>
    %594 = vector.shape_cast %593 : vector<16xf32> to vector<16x1xf32>
    %cst_376 = arith.constant 6.400000e+01 : f32
    %595 = vector.broadcast %cst_376 : f32 to vector<16x1xf32>
    %596 = arith.divf %594, %595 : vector<16x1xf32>
    %597 = vector.broadcast %589 : vector<16x1xf32> to vector<16x64xf32>
    %598 = arith.subf %571, %597 : vector<16x64xf32>
    %cst_377 = arith.constant 9.99999974E-6 : f32
    %599 = vector.broadcast %cst_377 : f32 to vector<16x1xf32>
    %600 = arith.addf %596, %599 : vector<16x1xf32>
    %601 = math.rsqrt %600 : vector<16x1xf32>
    %602 = vector.broadcast %601 : vector<16x1xf32> to vector<16x64xf32>
    %603 = arith.mulf %598, %602 : vector<16x64xf32>
    %604 = vector.broadcast %583 : vector<1x64xf32> to vector<16x64xf32>
    %605 = arith.mulf %603, %604 : vector<16x64xf32>
    %606 = vector.broadcast %585 : vector<1x64xf32> to vector<16x64xf32>
    %607 = arith.addf %605, %606 : vector<16x64xf32>
    %608 = arith.truncf %607 : vector<16x64xf32> to vector<16x64xbf16>
    %cst_378 = arith.constant 0.000000e+00 : f32
    %609 = vector.broadcast %cst_378 : f32 to vector<16x64xf32>
    %c3_379 = arith.constant 3 : index
    %c0_380 = arith.constant 0 : index
    %c0_381 = arith.constant 0 : index
    %c0_382 = arith.constant 0 : index
    %610 = vector.load %arg5[%c3_379, %c0_380, %c0_381, %c0_382] : memref<6x2x64x32xbf16, #tpu.memory_space<vmem>>, vector<1x1x64x32xbf16>
    %611 = vector.shape_cast %610 : vector<1x1x64x32xbf16> to vector<64x32xbf16>
    %cst_383 = arith.constant dense<0.000000e+00> : vector<16x32xf32>
    %612 = tpu.matmul %608, %611, %cst_383 {dimension_numbers = #tpu.dot_dimension_numbers<[1], [0], [0], [1], [0, 0, 1, 1], [], []>} : vector<16x64xbf16>, vector<64x32xbf16>, vector<16x32xf32> -> vector<16x32xf32>
    %c3_384 = arith.constant 3 : index
    %c0_385 = arith.constant 0 : index
    %c0_386 = arith.constant 0 : index
    %c0_387 = arith.constant 0 : index
    %613 = vector.load %arg6[%c3_384, %c0_385, %c0_386, %c0_387] : memref<6x2x1x32xf32, #tpu.memory_space<vmem>>, vector<1x1x1x32xf32>
    %614 = vector.shape_cast %613 : vector<1x1x1x32xf32> to vector<1x32xf32>
    %615 = vector.broadcast %614 : vector<1x32xf32> to vector<16x32xf32>
    %616 = arith.addf %612, %615 : vector<16x32xf32>
    %c3_388 = arith.constant 3 : index
    %c0_389 = arith.constant 0 : index
    %c0_390 = arith.constant 0 : index
    %c0_391 = arith.constant 0 : index
    %617 = vector.load %arg7[%c3_388, %c0_389, %c0_390, %c0_391] : memref<6x2x64x32xbf16, #tpu.memory_space<vmem>>, vector<1x1x64x32xbf16>
    %618 = vector.shape_cast %617 : vector<1x1x64x32xbf16> to vector<64x32xbf16>
    %cst_392 = arith.constant dense<0.000000e+00> : vector<16x32xf32>
    %619 = tpu.matmul %608, %618, %cst_392 {dimension_numbers = #tpu.dot_dimension_numbers<[1], [0], [0], [1], [0, 0, 1, 1], [], []>} : vector<16x64xbf16>, vector<64x32xbf16>, vector<16x32xf32> -> vector<16x32xf32>
    %c3_393 = arith.constant 3 : index
    %c0_394 = arith.constant 0 : index
    %c0_395 = arith.constant 0 : index
    %c0_396 = arith.constant 0 : index
    %620 = vector.load %arg8[%c3_393, %c0_394, %c0_395, %c0_396] : memref<6x2x1x32xf32, #tpu.memory_space<vmem>>, vector<1x1x1x32xf32>
    %621 = vector.shape_cast %620 : vector<1x1x1x32xf32> to vector<1x32xf32>
    %622 = vector.broadcast %621 : vector<1x32xf32> to vector<16x32xf32>
    %623 = arith.addf %619, %622 : vector<16x32xf32>
    %c3_397 = arith.constant 3 : index
    %c0_398 = arith.constant 0 : index
    %c0_399 = arith.constant 0 : index
    %c0_400 = arith.constant 0 : index
    %624 = vector.load %arg9[%c3_397, %c0_398, %c0_399, %c0_400] : memref<6x2x64x32xbf16, #tpu.memory_space<vmem>>, vector<1x1x64x32xbf16>
    %625 = vector.shape_cast %624 : vector<1x1x64x32xbf16> to vector<64x32xbf16>
    %cst_401 = arith.constant dense<0.000000e+00> : vector<16x32xf32>
    %626 = tpu.matmul %608, %625, %cst_401 {dimension_numbers = #tpu.dot_dimension_numbers<[1], [0], [0], [1], [0, 0, 1, 1], [], []>} : vector<16x64xbf16>, vector<64x32xbf16>, vector<16x32xf32> -> vector<16x32xf32>
    %c3_402 = arith.constant 3 : index
    %c0_403 = arith.constant 0 : index
    %c0_404 = arith.constant 0 : index
    %c0_405 = arith.constant 0 : index
    %627 = vector.load %arg10[%c3_402, %c0_403, %c0_404, %c0_405] : memref<6x2x1x32xf32, #tpu.memory_space<vmem>>, vector<1x1x1x32xf32>
    %628 = vector.shape_cast %627 : vector<1x1x1x32xf32> to vector<1x32xf32>
    %629 = vector.broadcast %628 : vector<1x32xf32> to vector<16x32xf32>
    %630 = arith.addf %626, %629 : vector<16x32xf32>
    %631 = arith.truncf %616 : vector<16x32xf32> to vector<16x32xbf16>
    %632 = arith.truncf %623 : vector<16x32xf32> to vector<16x32xbf16>
    %cst_406 = arith.constant dense<0.000000e+00> : vector<16x16xf32>
    %633 = tpu.matmul %631, %632, %cst_406 {dimension_numbers = #tpu.dot_dimension_numbers<[1], [1], [0], [0], [0, 0, 1, 0], [], []>} : vector<16x32xbf16>, vector<16x32xbf16>, vector<16x16xf32> -> vector<16x16xf32>
    %cst_407 = arith.constant 0.176776692 : f32
    %634 = vector.broadcast %cst_407 : f32 to vector<16x16xf32>
    %635 = arith.mulf %633, %634 : vector<16x16xf32>
    %636 = vector.broadcast %581 : vector<1x16xf32> to vector<16x16xf32>
    %637 = arith.addf %635, %636 : vector<16x16xf32>
    %cst_408 = arith.constant dense<0xFF800000> : vector<16xf32>
    %638 = vector.multi_reduction <maximumf>, %637, %cst_408 [1] : vector<16x16xf32> to vector<16xf32>
    %639 = vector.shape_cast %638 : vector<16xf32> to vector<16x1xf32>
    %640 = vector.broadcast %639 : vector<16x1xf32> to vector<16x16xf32>
    %641 = arith.subf %637, %640 : vector<16x16xf32>
    %642 = math.exp %641 : vector<16x16xf32>
    %cst_409 = arith.constant dense<0.000000e+00> : vector<16xf32>
    %643 = vector.multi_reduction <add>, %642, %cst_409 [1] : vector<16x16xf32> to vector<16xf32>
    %644 = vector.shape_cast %643 : vector<16xf32> to vector<16x1xf32>
    %645 = arith.truncf %642 : vector<16x16xf32> to vector<16x16xbf16>
    %646 = arith.truncf %630 : vector<16x32xf32> to vector<16x32xbf16>
    %cst_410 = arith.constant dense<0.000000e+00> : vector<16x32xf32>
    %647 = tpu.matmul %645, %646, %cst_410 {dimension_numbers = #tpu.dot_dimension_numbers<[1], [0], [0], [1], [0, 0, 1, 1], [], []>} : vector<16x16xbf16>, vector<16x32xbf16>, vector<16x32xf32> -> vector<16x32xf32>
    %648 = tpu.reciprocal %644 {approx = true} : vector<16x1xf32> -> vector<16x1xf32>
    %649 = vector.broadcast %648 : vector<16x1xf32> to vector<16x32xf32>
    %650 = arith.mulf %647, %649 : vector<16x32xf32>
    %651 = arith.truncf %650 : vector<16x32xf32> to vector<16x32xbf16>
    %c3_411 = arith.constant 3 : index
    %c0_412 = arith.constant 0 : index
    %c0_413 = arith.constant 0 : index
    %c0_414 = arith.constant 0 : index
    %652 = vector.load %arg11[%c3_411, %c0_412, %c0_413, %c0_414] : memref<6x2x32x64xbf16, #tpu.memory_space<vmem>>, vector<1x1x32x64xbf16>
    %653 = vector.shape_cast %652 : vector<1x1x32x64xbf16> to vector<32x64xbf16>
    %cst_415 = arith.constant dense<0.000000e+00> : vector<16x64xf32>
    %654 = tpu.matmul %651, %653, %cst_415 {dimension_numbers = #tpu.dot_dimension_numbers<[1], [0], [0], [1], [0, 0, 1, 1], [], []>} : vector<16x32xbf16>, vector<32x64xbf16>, vector<16x64xf32> -> vector<16x64xf32>
    %655 = arith.addf %609, %654 : vector<16x64xf32>
    %c3_416 = arith.constant 3 : index
    %c1_417 = arith.constant 1 : index
    %c0_418 = arith.constant 0 : index
    %c0_419 = arith.constant 0 : index
    %656 = vector.load %arg5[%c3_416, %c1_417, %c0_418, %c0_419] : memref<6x2x64x32xbf16, #tpu.memory_space<vmem>>, vector<1x1x64x32xbf16>
    %657 = vector.shape_cast %656 : vector<1x1x64x32xbf16> to vector<64x32xbf16>
    %cst_420 = arith.constant dense<0.000000e+00> : vector<16x32xf32>
    %658 = tpu.matmul %608, %657, %cst_420 {dimension_numbers = #tpu.dot_dimension_numbers<[1], [0], [0], [1], [0, 0, 1, 1], [], []>} : vector<16x64xbf16>, vector<64x32xbf16>, vector<16x32xf32> -> vector<16x32xf32>
    %c3_421 = arith.constant 3 : index
    %c1_422 = arith.constant 1 : index
    %c0_423 = arith.constant 0 : index
    %c0_424 = arith.constant 0 : index
    %659 = vector.load %arg6[%c3_421, %c1_422, %c0_423, %c0_424] : memref<6x2x1x32xf32, #tpu.memory_space<vmem>>, vector<1x1x1x32xf32>
    %660 = vector.shape_cast %659 : vector<1x1x1x32xf32> to vector<1x32xf32>
    %661 = vector.broadcast %660 : vector<1x32xf32> to vector<16x32xf32>
    %662 = arith.addf %658, %661 : vector<16x32xf32>
    %c3_425 = arith.constant 3 : index
    %c1_426 = arith.constant 1 : index
    %c0_427 = arith.constant 0 : index
    %c0_428 = arith.constant 0 : index
    %663 = vector.load %arg7[%c3_425, %c1_426, %c0_427, %c0_428] : memref<6x2x64x32xbf16, #tpu.memory_space<vmem>>, vector<1x1x64x32xbf16>
    %664 = vector.shape_cast %663 : vector<1x1x64x32xbf16> to vector<64x32xbf16>
    %cst_429 = arith.constant dense<0.000000e+00> : vector<16x32xf32>
    %665 = tpu.matmul %608, %664, %cst_429 {dimension_numbers = #tpu.dot_dimension_numbers<[1], [0], [0], [1], [0, 0, 1, 1], [], []>} : vector<16x64xbf16>, vector<64x32xbf16>, vector<16x32xf32> -> vector<16x32xf32>
    %c3_430 = arith.constant 3 : index
    %c1_431 = arith.constant 1 : index
    %c0_432 = arith.constant 0 : index
    %c0_433 = arith.constant 0 : index
    %666 = vector.load %arg8[%c3_430, %c1_431, %c0_432, %c0_433] : memref<6x2x1x32xf32, #tpu.memory_space<vmem>>, vector<1x1x1x32xf32>
    %667 = vector.shape_cast %666 : vector<1x1x1x32xf32> to vector<1x32xf32>
    %668 = vector.broadcast %667 : vector<1x32xf32> to vector<16x32xf32>
    %669 = arith.addf %665, %668 : vector<16x32xf32>
    %c3_434 = arith.constant 3 : index
    %c1_435 = arith.constant 1 : index
    %c0_436 = arith.constant 0 : index
    %c0_437 = arith.constant 0 : index
    %670 = vector.load %arg9[%c3_434, %c1_435, %c0_436, %c0_437] : memref<6x2x64x32xbf16, #tpu.memory_space<vmem>>, vector<1x1x64x32xbf16>
    %671 = vector.shape_cast %670 : vector<1x1x64x32xbf16> to vector<64x32xbf16>
    %cst_438 = arith.constant dense<0.000000e+00> : vector<16x32xf32>
    %672 = tpu.matmul %608, %671, %cst_438 {dimension_numbers = #tpu.dot_dimension_numbers<[1], [0], [0], [1], [0, 0, 1, 1], [], []>} : vector<16x64xbf16>, vector<64x32xbf16>, vector<16x32xf32> -> vector<16x32xf32>
    %c3_439 = arith.constant 3 : index
    %c1_440 = arith.constant 1 : index
    %c0_441 = arith.constant 0 : index
    %c0_442 = arith.constant 0 : index
    %673 = vector.load %arg10[%c3_439, %c1_440, %c0_441, %c0_442] : memref<6x2x1x32xf32, #tpu.memory_space<vmem>>, vector<1x1x1x32xf32>
    %674 = vector.shape_cast %673 : vector<1x1x1x32xf32> to vector<1x32xf32>
    %675 = vector.broadcast %674 : vector<1x32xf32> to vector<16x32xf32>
    %676 = arith.addf %672, %675 : vector<16x32xf32>
    %677 = arith.truncf %662 : vector<16x32xf32> to vector<16x32xbf16>
    %678 = arith.truncf %669 : vector<16x32xf32> to vector<16x32xbf16>
    %cst_443 = arith.constant dense<0.000000e+00> : vector<16x16xf32>
    %679 = tpu.matmul %677, %678, %cst_443 {dimension_numbers = #tpu.dot_dimension_numbers<[1], [1], [0], [0], [0, 0, 1, 0], [], []>} : vector<16x32xbf16>, vector<16x32xbf16>, vector<16x16xf32> -> vector<16x16xf32>
    %cst_444 = arith.constant 0.176776692 : f32
    %680 = vector.broadcast %cst_444 : f32 to vector<16x16xf32>
    %681 = arith.mulf %679, %680 : vector<16x16xf32>
    %682 = vector.broadcast %581 : vector<1x16xf32> to vector<16x16xf32>
    %683 = arith.addf %681, %682 : vector<16x16xf32>
    %cst_445 = arith.constant dense<0xFF800000> : vector<16xf32>
    %684 = vector.multi_reduction <maximumf>, %683, %cst_445 [1] : vector<16x16xf32> to vector<16xf32>
    %685 = vector.shape_cast %684 : vector<16xf32> to vector<16x1xf32>
    %686 = vector.broadcast %685 : vector<16x1xf32> to vector<16x16xf32>
    %687 = arith.subf %683, %686 : vector<16x16xf32>
    %688 = math.exp %687 : vector<16x16xf32>
    %cst_446 = arith.constant dense<0.000000e+00> : vector<16xf32>
    %689 = vector.multi_reduction <add>, %688, %cst_446 [1] : vector<16x16xf32> to vector<16xf32>
    %690 = vector.shape_cast %689 : vector<16xf32> to vector<16x1xf32>
    %691 = arith.truncf %688 : vector<16x16xf32> to vector<16x16xbf16>
    %692 = arith.truncf %676 : vector<16x32xf32> to vector<16x32xbf16>
    %cst_447 = arith.constant dense<0.000000e+00> : vector<16x32xf32>
    %693 = tpu.matmul %691, %692, %cst_447 {dimension_numbers = #tpu.dot_dimension_numbers<[1], [0], [0], [1], [0, 0, 1, 1], [], []>} : vector<16x16xbf16>, vector<16x32xbf16>, vector<16x32xf32> -> vector<16x32xf32>
    %694 = tpu.reciprocal %690 {approx = true} : vector<16x1xf32> -> vector<16x1xf32>
    %695 = vector.broadcast %694 : vector<16x1xf32> to vector<16x32xf32>
    %696 = arith.mulf %693, %695 : vector<16x32xf32>
    %697 = arith.truncf %696 : vector<16x32xf32> to vector<16x32xbf16>
    %c3_448 = arith.constant 3 : index
    %c1_449 = arith.constant 1 : index
    %c0_450 = arith.constant 0 : index
    %c0_451 = arith.constant 0 : index
    %698 = vector.load %arg11[%c3_448, %c1_449, %c0_450, %c0_451] : memref<6x2x32x64xbf16, #tpu.memory_space<vmem>>, vector<1x1x32x64xbf16>
    %699 = vector.shape_cast %698 : vector<1x1x32x64xbf16> to vector<32x64xbf16>
    %cst_452 = arith.constant dense<0.000000e+00> : vector<16x64xf32>
    %700 = tpu.matmul %697, %699, %cst_452 {dimension_numbers = #tpu.dot_dimension_numbers<[1], [0], [0], [1], [0, 0, 1, 1], [], []>} : vector<16x32xbf16>, vector<32x64xbf16>, vector<16x64xf32> -> vector<16x64xf32>
    %701 = arith.addf %655, %700 : vector<16x64xf32>
    %702 = arith.addf %571, %701 : vector<16x64xf32>
    %c3_453 = arith.constant 3 : index
    %c0_454 = arith.constant 0 : index
    %c0_455 = arith.constant 0 : index
    %703 = vector.load %arg12[%c3_453, %c0_454, %c0_455] : memref<6x1x64xf32, #tpu.memory_space<vmem>>, vector<1x1x64xf32>
    %704 = vector.shape_cast %703 : vector<1x1x64xf32> to vector<1x64xf32>
    %705 = vector.broadcast %704 : vector<1x64xf32> to vector<16x64xf32>
    %706 = arith.addf %702, %705 : vector<16x64xf32>
    %c3_456 = arith.constant 3 : index
    %c0_457 = arith.constant 0 : index
    %c0_458 = arith.constant 0 : index
    %707 = vector.load %arg13[%c3_456, %c0_457, %c0_458] : memref<6x1x64xf32, #tpu.memory_space<vmem>>, vector<1x1x64xf32>
    %708 = vector.shape_cast %707 : vector<1x1x64xf32> to vector<1x64xf32>
    %c3_459 = arith.constant 3 : index
    %c0_460 = arith.constant 0 : index
    %c0_461 = arith.constant 0 : index
    %709 = vector.load %arg14[%c3_459, %c0_460, %c0_461] : memref<6x1x64xf32, #tpu.memory_space<vmem>>, vector<1x1x64xf32>
    %710 = vector.shape_cast %709 : vector<1x1x64xf32> to vector<1x64xf32>
    %cst_462 = arith.constant dense<0.000000e+00> : vector<16xf32>
    %711 = vector.multi_reduction <add>, %706, %cst_462 [1] : vector<16x64xf32> to vector<16xf32>
    %712 = vector.shape_cast %711 : vector<16xf32> to vector<16x1xf32>
    %cst_463 = arith.constant 6.400000e+01 : f32
    %713 = vector.broadcast %cst_463 : f32 to vector<16x1xf32>
    %714 = arith.divf %712, %713 : vector<16x1xf32>
    %715 = vector.broadcast %714 : vector<16x1xf32> to vector<16x64xf32>
    %716 = arith.subf %706, %715 : vector<16x64xf32>
    %717 = arith.mulf %716, %716 : vector<16x64xf32>
    %cst_464 = arith.constant dense<0.000000e+00> : vector<16xf32>
    %718 = vector.multi_reduction <add>, %717, %cst_464 [1] : vector<16x64xf32> to vector<16xf32>
    %719 = vector.shape_cast %718 : vector<16xf32> to vector<16x1xf32>
    %cst_465 = arith.constant 6.400000e+01 : f32
    %720 = vector.broadcast %cst_465 : f32 to vector<16x1xf32>
    %721 = arith.divf %719, %720 : vector<16x1xf32>
    %722 = vector.broadcast %714 : vector<16x1xf32> to vector<16x64xf32>
    %723 = arith.subf %706, %722 : vector<16x64xf32>
    %cst_466 = arith.constant 9.99999974E-6 : f32
    %724 = vector.broadcast %cst_466 : f32 to vector<16x1xf32>
    %725 = arith.addf %721, %724 : vector<16x1xf32>
    %726 = math.rsqrt %725 : vector<16x1xf32>
    %727 = vector.broadcast %726 : vector<16x1xf32> to vector<16x64xf32>
    %728 = arith.mulf %723, %727 : vector<16x64xf32>
    %729 = vector.broadcast %708 : vector<1x64xf32> to vector<16x64xf32>
    %730 = arith.mulf %728, %729 : vector<16x64xf32>
    %731 = vector.broadcast %710 : vector<1x64xf32> to vector<16x64xf32>
    %732 = arith.addf %730, %731 : vector<16x64xf32>
    %733 = arith.truncf %732 : vector<16x64xf32> to vector<16x64xbf16>
    %c3_467 = arith.constant 3 : index
    %c0_468 = arith.constant 0 : index
    %c0_469 = arith.constant 0 : index
    %734 = vector.load %arg15[%c3_467, %c0_468, %c0_469] : memref<6x64x256xbf16, #tpu.memory_space<vmem>>, vector<1x64x256xbf16>
    %735 = vector.shape_cast %734 : vector<1x64x256xbf16> to vector<64x256xbf16>
    %cst_470 = arith.constant dense<0.000000e+00> : vector<16x256xf32>
    %736 = tpu.matmul %733, %735, %cst_470 {dimension_numbers = #tpu.dot_dimension_numbers<[1], [0], [0], [1], [0, 0, 1, 1], [], []>} : vector<16x64xbf16>, vector<64x256xbf16>, vector<16x256xf32> -> vector<16x256xf32>
    %c3_471 = arith.constant 3 : index
    %c0_472 = arith.constant 0 : index
    %c0_473 = arith.constant 0 : index
    %737 = vector.load %arg16[%c3_471, %c0_472, %c0_473] : memref<6x1x256xf32, #tpu.memory_space<vmem>>, vector<1x1x256xf32>
    %738 = vector.shape_cast %737 : vector<1x1x256xf32> to vector<1x256xf32>
    %739 = vector.broadcast %738 : vector<1x256xf32> to vector<16x256xf32>
    %740 = arith.addf %736, %739 : vector<16x256xf32>
    %cst_474 = arith.constant 0.000000e+00 : f32
    %741 = vector.broadcast %cst_474 : f32 to vector<16x256xf32>
    %742 = arith.maximumf %740, %741 : vector<16x256xf32>
    %743 = arith.truncf %742 : vector<16x256xf32> to vector<16x256xbf16>
    %c3_475 = arith.constant 3 : index
    %c0_476 = arith.constant 0 : index
    %c0_477 = arith.constant 0 : index
    %744 = vector.load %arg17[%c3_475, %c0_476, %c0_477] : memref<6x256x64xbf16, #tpu.memory_space<vmem>>, vector<1x256x64xbf16>
    %745 = vector.shape_cast %744 : vector<1x256x64xbf16> to vector<256x64xbf16>
    %cst_478 = arith.constant dense<0.000000e+00> : vector<16x64xf32>
    %746 = tpu.matmul %743, %745, %cst_478 {dimension_numbers = #tpu.dot_dimension_numbers<[1], [0], [0], [1], [0, 0, 1, 1], [], []>} : vector<16x256xbf16>, vector<256x64xbf16>, vector<16x64xf32> -> vector<16x64xf32>
    %c3_479 = arith.constant 3 : index
    %c0_480 = arith.constant 0 : index
    %c0_481 = arith.constant 0 : index
    %747 = vector.load %arg18[%c3_479, %c0_480, %c0_481] : memref<6x1x64xf32, #tpu.memory_space<vmem>>, vector<1x1x64xf32>
    %748 = vector.shape_cast %747 : vector<1x1x64xf32> to vector<1x64xf32>
    %749 = vector.broadcast %748 : vector<1x64xf32> to vector<16x64xf32>
    %750 = arith.addf %746, %749 : vector<16x64xf32>
    %751 = arith.addf %706, %750 : vector<16x64xf32>
    %752 = vector.shape_cast %573 : vector<16x1xi1> to vector<16x1xi1>
    %753 = vector.broadcast %752 : vector<16x1xi1> to vector<16x64xi1>
    %754 = arith.select %753, %751, %571 : vector<16x64xi1>, vector<16x64xf32>
    %cst_482 = arith.constant 0.666666686 : f32
    %755 = vector.broadcast %cst_482 : f32 to vector<16x1xf32>
    %756 = arith.cmpf ogt, %13, %755 : vector<16x1xf32>
    %cst_483 = arith.constant 0.666666686 : f32
    %757 = vector.broadcast %cst_483 : f32 to vector<1x16xf32>
    %758 = arith.cmpf ogt, %21, %757 : vector<1x16xf32>
    %759 = arith.extui %758 : vector<1x16xi1> to vector<1x16xi32>
    %760 = arith.sitofp %759 : vector<1x16xi32> to vector<1x16xf32>
    %761 = arith.addf %578, %760 : vector<1x16xf32>
    %cst_484 = arith.constant 0.000000e+00 : f32
    %cst_485 = arith.constant -1.000000e+30 : f32
    %762 = vector.broadcast %cst_484 : f32 to vector<1x16xf32>
    %763 = vector.broadcast %cst_485 : f32 to vector<1x16xf32>
    %764 = arith.select %758, %762, %763 : vector<1x16xi1>, vector<1x16xf32>
    %c4 = arith.constant 4 : index
    %c0_486 = arith.constant 0 : index
    %c0_487 = arith.constant 0 : index
    %765 = vector.load %arg3[%c4, %c0_486, %c0_487] : memref<6x1x64xf32, #tpu.memory_space<vmem>>, vector<1x1x64xf32>
    %766 = vector.shape_cast %765 : vector<1x1x64xf32> to vector<1x64xf32>
    %c4_488 = arith.constant 4 : index
    %c0_489 = arith.constant 0 : index
    %c0_490 = arith.constant 0 : index
    %767 = vector.load %arg4[%c4_488, %c0_489, %c0_490] : memref<6x1x64xf32, #tpu.memory_space<vmem>>, vector<1x1x64xf32>
    %768 = vector.shape_cast %767 : vector<1x1x64xf32> to vector<1x64xf32>
    %cst_491 = arith.constant dense<0.000000e+00> : vector<16xf32>
    %769 = vector.multi_reduction <add>, %754, %cst_491 [1] : vector<16x64xf32> to vector<16xf32>
    %770 = vector.shape_cast %769 : vector<16xf32> to vector<16x1xf32>
    %cst_492 = arith.constant 6.400000e+01 : f32
    %771 = vector.broadcast %cst_492 : f32 to vector<16x1xf32>
    %772 = arith.divf %770, %771 : vector<16x1xf32>
    %773 = vector.broadcast %772 : vector<16x1xf32> to vector<16x64xf32>
    %774 = arith.subf %754, %773 : vector<16x64xf32>
    %775 = arith.mulf %774, %774 : vector<16x64xf32>
    %cst_493 = arith.constant dense<0.000000e+00> : vector<16xf32>
    %776 = vector.multi_reduction <add>, %775, %cst_493 [1] : vector<16x64xf32> to vector<16xf32>
    %777 = vector.shape_cast %776 : vector<16xf32> to vector<16x1xf32>
    %cst_494 = arith.constant 6.400000e+01 : f32
    %778 = vector.broadcast %cst_494 : f32 to vector<16x1xf32>
    %779 = arith.divf %777, %778 : vector<16x1xf32>
    %780 = vector.broadcast %772 : vector<16x1xf32> to vector<16x64xf32>
    %781 = arith.subf %754, %780 : vector<16x64xf32>
    %cst_495 = arith.constant 9.99999974E-6 : f32
    %782 = vector.broadcast %cst_495 : f32 to vector<16x1xf32>
    %783 = arith.addf %779, %782 : vector<16x1xf32>
    %784 = math.rsqrt %783 : vector<16x1xf32>
    %785 = vector.broadcast %784 : vector<16x1xf32> to vector<16x64xf32>
    %786 = arith.mulf %781, %785 : vector<16x64xf32>
    %787 = vector.broadcast %766 : vector<1x64xf32> to vector<16x64xf32>
    %788 = arith.mulf %786, %787 : vector<16x64xf32>
    %789 = vector.broadcast %768 : vector<1x64xf32> to vector<16x64xf32>
    %790 = arith.addf %788, %789 : vector<16x64xf32>
    %791 = arith.truncf %790 : vector<16x64xf32> to vector<16x64xbf16>
    %cst_496 = arith.constant 0.000000e+00 : f32
    %792 = vector.broadcast %cst_496 : f32 to vector<16x64xf32>
    %c4_497 = arith.constant 4 : index
    %c0_498 = arith.constant 0 : index
    %c0_499 = arith.constant 0 : index
    %c0_500 = arith.constant 0 : index
    %793 = vector.load %arg5[%c4_497, %c0_498, %c0_499, %c0_500] : memref<6x2x64x32xbf16, #tpu.memory_space<vmem>>, vector<1x1x64x32xbf16>
    %794 = vector.shape_cast %793 : vector<1x1x64x32xbf16> to vector<64x32xbf16>
    %cst_501 = arith.constant dense<0.000000e+00> : vector<16x32xf32>
    %795 = tpu.matmul %791, %794, %cst_501 {dimension_numbers = #tpu.dot_dimension_numbers<[1], [0], [0], [1], [0, 0, 1, 1], [], []>} : vector<16x64xbf16>, vector<64x32xbf16>, vector<16x32xf32> -> vector<16x32xf32>
    %c4_502 = arith.constant 4 : index
    %c0_503 = arith.constant 0 : index
    %c0_504 = arith.constant 0 : index
    %c0_505 = arith.constant 0 : index
    %796 = vector.load %arg6[%c4_502, %c0_503, %c0_504, %c0_505] : memref<6x2x1x32xf32, #tpu.memory_space<vmem>>, vector<1x1x1x32xf32>
    %797 = vector.shape_cast %796 : vector<1x1x1x32xf32> to vector<1x32xf32>
    %798 = vector.broadcast %797 : vector<1x32xf32> to vector<16x32xf32>
    %799 = arith.addf %795, %798 : vector<16x32xf32>
    %c4_506 = arith.constant 4 : index
    %c0_507 = arith.constant 0 : index
    %c0_508 = arith.constant 0 : index
    %c0_509 = arith.constant 0 : index
    %800 = vector.load %arg7[%c4_506, %c0_507, %c0_508, %c0_509] : memref<6x2x64x32xbf16, #tpu.memory_space<vmem>>, vector<1x1x64x32xbf16>
    %801 = vector.shape_cast %800 : vector<1x1x64x32xbf16> to vector<64x32xbf16>
    %cst_510 = arith.constant dense<0.000000e+00> : vector<16x32xf32>
    %802 = tpu.matmul %791, %801, %cst_510 {dimension_numbers = #tpu.dot_dimension_numbers<[1], [0], [0], [1], [0, 0, 1, 1], [], []>} : vector<16x64xbf16>, vector<64x32xbf16>, vector<16x32xf32> -> vector<16x32xf32>
    %c4_511 = arith.constant 4 : index
    %c0_512 = arith.constant 0 : index
    %c0_513 = arith.constant 0 : index
    %c0_514 = arith.constant 0 : index
    %803 = vector.load %arg8[%c4_511, %c0_512, %c0_513, %c0_514] : memref<6x2x1x32xf32, #tpu.memory_space<vmem>>, vector<1x1x1x32xf32>
    %804 = vector.shape_cast %803 : vector<1x1x1x32xf32> to vector<1x32xf32>
    %805 = vector.broadcast %804 : vector<1x32xf32> to vector<16x32xf32>
    %806 = arith.addf %802, %805 : vector<16x32xf32>
    %c4_515 = arith.constant 4 : index
    %c0_516 = arith.constant 0 : index
    %c0_517 = arith.constant 0 : index
    %c0_518 = arith.constant 0 : index
    %807 = vector.load %arg9[%c4_515, %c0_516, %c0_517, %c0_518] : memref<6x2x64x32xbf16, #tpu.memory_space<vmem>>, vector<1x1x64x32xbf16>
    %808 = vector.shape_cast %807 : vector<1x1x64x32xbf16> to vector<64x32xbf16>
    %cst_519 = arith.constant dense<0.000000e+00> : vector<16x32xf32>
    %809 = tpu.matmul %791, %808, %cst_519 {dimension_numbers = #tpu.dot_dimension_numbers<[1], [0], [0], [1], [0, 0, 1, 1], [], []>} : vector<16x64xbf16>, vector<64x32xbf16>, vector<16x32xf32> -> vector<16x32xf32>
    %c4_520 = arith.constant 4 : index
    %c0_521 = arith.constant 0 : index
    %c0_522 = arith.constant 0 : index
    %c0_523 = arith.constant 0 : index
    %810 = vector.load %arg10[%c4_520, %c0_521, %c0_522, %c0_523] : memref<6x2x1x32xf32, #tpu.memory_space<vmem>>, vector<1x1x1x32xf32>
    %811 = vector.shape_cast %810 : vector<1x1x1x32xf32> to vector<1x32xf32>
    %812 = vector.broadcast %811 : vector<1x32xf32> to vector<16x32xf32>
    %813 = arith.addf %809, %812 : vector<16x32xf32>
    %814 = arith.truncf %799 : vector<16x32xf32> to vector<16x32xbf16>
    %815 = arith.truncf %806 : vector<16x32xf32> to vector<16x32xbf16>
    %cst_524 = arith.constant dense<0.000000e+00> : vector<16x16xf32>
    %816 = tpu.matmul %814, %815, %cst_524 {dimension_numbers = #tpu.dot_dimension_numbers<[1], [1], [0], [0], [0, 0, 1, 0], [], []>} : vector<16x32xbf16>, vector<16x32xbf16>, vector<16x16xf32> -> vector<16x16xf32>
    %cst_525 = arith.constant 0.176776692 : f32
    %817 = vector.broadcast %cst_525 : f32 to vector<16x16xf32>
    %818 = arith.mulf %816, %817 : vector<16x16xf32>
    %819 = vector.broadcast %764 : vector<1x16xf32> to vector<16x16xf32>
    %820 = arith.addf %818, %819 : vector<16x16xf32>
    %cst_526 = arith.constant dense<0xFF800000> : vector<16xf32>
    %821 = vector.multi_reduction <maximumf>, %820, %cst_526 [1] : vector<16x16xf32> to vector<16xf32>
    %822 = vector.shape_cast %821 : vector<16xf32> to vector<16x1xf32>
    %823 = vector.broadcast %822 : vector<16x1xf32> to vector<16x16xf32>
    %824 = arith.subf %820, %823 : vector<16x16xf32>
    %825 = math.exp %824 : vector<16x16xf32>
    %cst_527 = arith.constant dense<0.000000e+00> : vector<16xf32>
    %826 = vector.multi_reduction <add>, %825, %cst_527 [1] : vector<16x16xf32> to vector<16xf32>
    %827 = vector.shape_cast %826 : vector<16xf32> to vector<16x1xf32>
    %828 = arith.truncf %825 : vector<16x16xf32> to vector<16x16xbf16>
    %829 = arith.truncf %813 : vector<16x32xf32> to vector<16x32xbf16>
    %cst_528 = arith.constant dense<0.000000e+00> : vector<16x32xf32>
    %830 = tpu.matmul %828, %829, %cst_528 {dimension_numbers = #tpu.dot_dimension_numbers<[1], [0], [0], [1], [0, 0, 1, 1], [], []>} : vector<16x16xbf16>, vector<16x32xbf16>, vector<16x32xf32> -> vector<16x32xf32>
    %831 = tpu.reciprocal %827 {approx = true} : vector<16x1xf32> -> vector<16x1xf32>
    %832 = vector.broadcast %831 : vector<16x1xf32> to vector<16x32xf32>
    %833 = arith.mulf %830, %832 : vector<16x32xf32>
    %834 = arith.truncf %833 : vector<16x32xf32> to vector<16x32xbf16>
    %c4_529 = arith.constant 4 : index
    %c0_530 = arith.constant 0 : index
    %c0_531 = arith.constant 0 : index
    %c0_532 = arith.constant 0 : index
    %835 = vector.load %arg11[%c4_529, %c0_530, %c0_531, %c0_532] : memref<6x2x32x64xbf16, #tpu.memory_space<vmem>>, vector<1x1x32x64xbf16>
    %836 = vector.shape_cast %835 : vector<1x1x32x64xbf16> to vector<32x64xbf16>
    %cst_533 = arith.constant dense<0.000000e+00> : vector<16x64xf32>
    %837 = tpu.matmul %834, %836, %cst_533 {dimension_numbers = #tpu.dot_dimension_numbers<[1], [0], [0], [1], [0, 0, 1, 1], [], []>} : vector<16x32xbf16>, vector<32x64xbf16>, vector<16x64xf32> -> vector<16x64xf32>
    %838 = arith.addf %792, %837 : vector<16x64xf32>
    %c4_534 = arith.constant 4 : index
    %c1_535 = arith.constant 1 : index
    %c0_536 = arith.constant 0 : index
    %c0_537 = arith.constant 0 : index
    %839 = vector.load %arg5[%c4_534, %c1_535, %c0_536, %c0_537] : memref<6x2x64x32xbf16, #tpu.memory_space<vmem>>, vector<1x1x64x32xbf16>
    %840 = vector.shape_cast %839 : vector<1x1x64x32xbf16> to vector<64x32xbf16>
    %cst_538 = arith.constant dense<0.000000e+00> : vector<16x32xf32>
    %841 = tpu.matmul %791, %840, %cst_538 {dimension_numbers = #tpu.dot_dimension_numbers<[1], [0], [0], [1], [0, 0, 1, 1], [], []>} : vector<16x64xbf16>, vector<64x32xbf16>, vector<16x32xf32> -> vector<16x32xf32>
    %c4_539 = arith.constant 4 : index
    %c1_540 = arith.constant 1 : index
    %c0_541 = arith.constant 0 : index
    %c0_542 = arith.constant 0 : index
    %842 = vector.load %arg6[%c4_539, %c1_540, %c0_541, %c0_542] : memref<6x2x1x32xf32, #tpu.memory_space<vmem>>, vector<1x1x1x32xf32>
    %843 = vector.shape_cast %842 : vector<1x1x1x32xf32> to vector<1x32xf32>
    %844 = vector.broadcast %843 : vector<1x32xf32> to vector<16x32xf32>
    %845 = arith.addf %841, %844 : vector<16x32xf32>
    %c4_543 = arith.constant 4 : index
    %c1_544 = arith.constant 1 : index
    %c0_545 = arith.constant 0 : index
    %c0_546 = arith.constant 0 : index
    %846 = vector.load %arg7[%c4_543, %c1_544, %c0_545, %c0_546] : memref<6x2x64x32xbf16, #tpu.memory_space<vmem>>, vector<1x1x64x32xbf16>
    %847 = vector.shape_cast %846 : vector<1x1x64x32xbf16> to vector<64x32xbf16>
    %cst_547 = arith.constant dense<0.000000e+00> : vector<16x32xf32>
    %848 = tpu.matmul %791, %847, %cst_547 {dimension_numbers = #tpu.dot_dimension_numbers<[1], [0], [0], [1], [0, 0, 1, 1], [], []>} : vector<16x64xbf16>, vector<64x32xbf16>, vector<16x32xf32> -> vector<16x32xf32>
    %c4_548 = arith.constant 4 : index
    %c1_549 = arith.constant 1 : index
    %c0_550 = arith.constant 0 : index
    %c0_551 = arith.constant 0 : index
    %849 = vector.load %arg8[%c4_548, %c1_549, %c0_550, %c0_551] : memref<6x2x1x32xf32, #tpu.memory_space<vmem>>, vector<1x1x1x32xf32>
    %850 = vector.shape_cast %849 : vector<1x1x1x32xf32> to vector<1x32xf32>
    %851 = vector.broadcast %850 : vector<1x32xf32> to vector<16x32xf32>
    %852 = arith.addf %848, %851 : vector<16x32xf32>
    %c4_552 = arith.constant 4 : index
    %c1_553 = arith.constant 1 : index
    %c0_554 = arith.constant 0 : index
    %c0_555 = arith.constant 0 : index
    %853 = vector.load %arg9[%c4_552, %c1_553, %c0_554, %c0_555] : memref<6x2x64x32xbf16, #tpu.memory_space<vmem>>, vector<1x1x64x32xbf16>
    %854 = vector.shape_cast %853 : vector<1x1x64x32xbf16> to vector<64x32xbf16>
    %cst_556 = arith.constant dense<0.000000e+00> : vector<16x32xf32>
    %855 = tpu.matmul %791, %854, %cst_556 {dimension_numbers = #tpu.dot_dimension_numbers<[1], [0], [0], [1], [0, 0, 1, 1], [], []>} : vector<16x64xbf16>, vector<64x32xbf16>, vector<16x32xf32> -> vector<16x32xf32>
    %c4_557 = arith.constant 4 : index
    %c1_558 = arith.constant 1 : index
    %c0_559 = arith.constant 0 : index
    %c0_560 = arith.constant 0 : index
    %856 = vector.load %arg10[%c4_557, %c1_558, %c0_559, %c0_560] : memref<6x2x1x32xf32, #tpu.memory_space<vmem>>, vector<1x1x1x32xf32>
    %857 = vector.shape_cast %856 : vector<1x1x1x32xf32> to vector<1x32xf32>
    %858 = vector.broadcast %857 : vector<1x32xf32> to vector<16x32xf32>
    %859 = arith.addf %855, %858 : vector<16x32xf32>
    %860 = arith.truncf %845 : vector<16x32xf32> to vector<16x32xbf16>
    %861 = arith.truncf %852 : vector<16x32xf32> to vector<16x32xbf16>
    %cst_561 = arith.constant dense<0.000000e+00> : vector<16x16xf32>
    %862 = tpu.matmul %860, %861, %cst_561 {dimension_numbers = #tpu.dot_dimension_numbers<[1], [1], [0], [0], [0, 0, 1, 0], [], []>} : vector<16x32xbf16>, vector<16x32xbf16>, vector<16x16xf32> -> vector<16x16xf32>
    %cst_562 = arith.constant 0.176776692 : f32
    %863 = vector.broadcast %cst_562 : f32 to vector<16x16xf32>
    %864 = arith.mulf %862, %863 : vector<16x16xf32>
    %865 = vector.broadcast %764 : vector<1x16xf32> to vector<16x16xf32>
    %866 = arith.addf %864, %865 : vector<16x16xf32>
    %cst_563 = arith.constant dense<0xFF800000> : vector<16xf32>
    %867 = vector.multi_reduction <maximumf>, %866, %cst_563 [1] : vector<16x16xf32> to vector<16xf32>
    %868 = vector.shape_cast %867 : vector<16xf32> to vector<16x1xf32>
    %869 = vector.broadcast %868 : vector<16x1xf32> to vector<16x16xf32>
    %870 = arith.subf %866, %869 : vector<16x16xf32>
    %871 = math.exp %870 : vector<16x16xf32>
    %cst_564 = arith.constant dense<0.000000e+00> : vector<16xf32>
    %872 = vector.multi_reduction <add>, %871, %cst_564 [1] : vector<16x16xf32> to vector<16xf32>
    %873 = vector.shape_cast %872 : vector<16xf32> to vector<16x1xf32>
    %874 = arith.truncf %871 : vector<16x16xf32> to vector<16x16xbf16>
    %875 = arith.truncf %859 : vector<16x32xf32> to vector<16x32xbf16>
    %cst_565 = arith.constant dense<0.000000e+00> : vector<16x32xf32>
    %876 = tpu.matmul %874, %875, %cst_565 {dimension_numbers = #tpu.dot_dimension_numbers<[1], [0], [0], [1], [0, 0, 1, 1], [], []>} : vector<16x16xbf16>, vector<16x32xbf16>, vector<16x32xf32> -> vector<16x32xf32>
    %877 = tpu.reciprocal %873 {approx = true} : vector<16x1xf32> -> vector<16x1xf32>
    %878 = vector.broadcast %877 : vector<16x1xf32> to vector<16x32xf32>
    %879 = arith.mulf %876, %878 : vector<16x32xf32>
    %880 = arith.truncf %879 : vector<16x32xf32> to vector<16x32xbf16>
    %c4_566 = arith.constant 4 : index
    %c1_567 = arith.constant 1 : index
    %c0_568 = arith.constant 0 : index
    %c0_569 = arith.constant 0 : index
    %881 = vector.load %arg11[%c4_566, %c1_567, %c0_568, %c0_569] : memref<6x2x32x64xbf16, #tpu.memory_space<vmem>>, vector<1x1x32x64xbf16>
    %882 = vector.shape_cast %881 : vector<1x1x32x64xbf16> to vector<32x64xbf16>
    %cst_570 = arith.constant dense<0.000000e+00> : vector<16x64xf32>
    %883 = tpu.matmul %880, %882, %cst_570 {dimension_numbers = #tpu.dot_dimension_numbers<[1], [0], [0], [1], [0, 0, 1, 1], [], []>} : vector<16x32xbf16>, vector<32x64xbf16>, vector<16x64xf32> -> vector<16x64xf32>
    %884 = arith.addf %838, %883 : vector<16x64xf32>
    %885 = arith.addf %754, %884 : vector<16x64xf32>
    %c4_571 = arith.constant 4 : index
    %c0_572 = arith.constant 0 : index
    %c0_573 = arith.constant 0 : index
    %886 = vector.load %arg12[%c4_571, %c0_572, %c0_573] : memref<6x1x64xf32, #tpu.memory_space<vmem>>, vector<1x1x64xf32>
    %887 = vector.shape_cast %886 : vector<1x1x64xf32> to vector<1x64xf32>
    %888 = vector.broadcast %887 : vector<1x64xf32> to vector<16x64xf32>
    %889 = arith.addf %885, %888 : vector<16x64xf32>
    %c4_574 = arith.constant 4 : index
    %c0_575 = arith.constant 0 : index
    %c0_576 = arith.constant 0 : index
    %890 = vector.load %arg13[%c4_574, %c0_575, %c0_576] : memref<6x1x64xf32, #tpu.memory_space<vmem>>, vector<1x1x64xf32>
    %891 = vector.shape_cast %890 : vector<1x1x64xf32> to vector<1x64xf32>
    %c4_577 = arith.constant 4 : index
    %c0_578 = arith.constant 0 : index
    %c0_579 = arith.constant 0 : index
    %892 = vector.load %arg14[%c4_577, %c0_578, %c0_579] : memref<6x1x64xf32, #tpu.memory_space<vmem>>, vector<1x1x64xf32>
    %893 = vector.shape_cast %892 : vector<1x1x64xf32> to vector<1x64xf32>
    %cst_580 = arith.constant dense<0.000000e+00> : vector<16xf32>
    %894 = vector.multi_reduction <add>, %889, %cst_580 [1] : vector<16x64xf32> to vector<16xf32>
    %895 = vector.shape_cast %894 : vector<16xf32> to vector<16x1xf32>
    %cst_581 = arith.constant 6.400000e+01 : f32
    %896 = vector.broadcast %cst_581 : f32 to vector<16x1xf32>
    %897 = arith.divf %895, %896 : vector<16x1xf32>
    %898 = vector.broadcast %897 : vector<16x1xf32> to vector<16x64xf32>
    %899 = arith.subf %889, %898 : vector<16x64xf32>
    %900 = arith.mulf %899, %899 : vector<16x64xf32>
    %cst_582 = arith.constant dense<0.000000e+00> : vector<16xf32>
    %901 = vector.multi_reduction <add>, %900, %cst_582 [1] : vector<16x64xf32> to vector<16xf32>
    %902 = vector.shape_cast %901 : vector<16xf32> to vector<16x1xf32>
    %cst_583 = arith.constant 6.400000e+01 : f32
    %903 = vector.broadcast %cst_583 : f32 to vector<16x1xf32>
    %904 = arith.divf %902, %903 : vector<16x1xf32>
    %905 = vector.broadcast %897 : vector<16x1xf32> to vector<16x64xf32>
    %906 = arith.subf %889, %905 : vector<16x64xf32>
    %cst_584 = arith.constant 9.99999974E-6 : f32
    %907 = vector.broadcast %cst_584 : f32 to vector<16x1xf32>
    %908 = arith.addf %904, %907 : vector<16x1xf32>
    %909 = math.rsqrt %908 : vector<16x1xf32>
    %910 = vector.broadcast %909 : vector<16x1xf32> to vector<16x64xf32>
    %911 = arith.mulf %906, %910 : vector<16x64xf32>
    %912 = vector.broadcast %891 : vector<1x64xf32> to vector<16x64xf32>
    %913 = arith.mulf %911, %912 : vector<16x64xf32>
    %914 = vector.broadcast %893 : vector<1x64xf32> to vector<16x64xf32>
    %915 = arith.addf %913, %914 : vector<16x64xf32>
    %916 = arith.truncf %915 : vector<16x64xf32> to vector<16x64xbf16>
    %c4_585 = arith.constant 4 : index
    %c0_586 = arith.constant 0 : index
    %c0_587 = arith.constant 0 : index
    %917 = vector.load %arg15[%c4_585, %c0_586, %c0_587] : memref<6x64x256xbf16, #tpu.memory_space<vmem>>, vector<1x64x256xbf16>
    %918 = vector.shape_cast %917 : vector<1x64x256xbf16> to vector<64x256xbf16>
    %cst_588 = arith.constant dense<0.000000e+00> : vector<16x256xf32>
    %919 = tpu.matmul %916, %918, %cst_588 {dimension_numbers = #tpu.dot_dimension_numbers<[1], [0], [0], [1], [0, 0, 1, 1], [], []>} : vector<16x64xbf16>, vector<64x256xbf16>, vector<16x256xf32> -> vector<16x256xf32>
    %c4_589 = arith.constant 4 : index
    %c0_590 = arith.constant 0 : index
    %c0_591 = arith.constant 0 : index
    %920 = vector.load %arg16[%c4_589, %c0_590, %c0_591] : memref<6x1x256xf32, #tpu.memory_space<vmem>>, vector<1x1x256xf32>
    %921 = vector.shape_cast %920 : vector<1x1x256xf32> to vector<1x256xf32>
    %922 = vector.broadcast %921 : vector<1x256xf32> to vector<16x256xf32>
    %923 = arith.addf %919, %922 : vector<16x256xf32>
    %cst_592 = arith.constant 0.000000e+00 : f32
    %924 = vector.broadcast %cst_592 : f32 to vector<16x256xf32>
    %925 = arith.maximumf %923, %924 : vector<16x256xf32>
    %926 = arith.truncf %925 : vector<16x256xf32> to vector<16x256xbf16>
    %c4_593 = arith.constant 4 : index
    %c0_594 = arith.constant 0 : index
    %c0_595 = arith.constant 0 : index
    %927 = vector.load %arg17[%c4_593, %c0_594, %c0_595] : memref<6x256x64xbf16, #tpu.memory_space<vmem>>, vector<1x256x64xbf16>
    %928 = vector.shape_cast %927 : vector<1x256x64xbf16> to vector<256x64xbf16>
    %cst_596 = arith.constant dense<0.000000e+00> : vector<16x64xf32>
    %929 = tpu.matmul %926, %928, %cst_596 {dimension_numbers = #tpu.dot_dimension_numbers<[1], [0], [0], [1], [0, 0, 1, 1], [], []>} : vector<16x256xbf16>, vector<256x64xbf16>, vector<16x64xf32> -> vector<16x64xf32>
    %c4_597 = arith.constant 4 : index
    %c0_598 = arith.constant 0 : index
    %c0_599 = arith.constant 0 : index
    %930 = vector.load %arg18[%c4_597, %c0_598, %c0_599] : memref<6x1x64xf32, #tpu.memory_space<vmem>>, vector<1x1x64xf32>
    %931 = vector.shape_cast %930 : vector<1x1x64xf32> to vector<1x64xf32>
    %932 = vector.broadcast %931 : vector<1x64xf32> to vector<16x64xf32>
    %933 = arith.addf %929, %932 : vector<16x64xf32>
    %934 = arith.addf %889, %933 : vector<16x64xf32>
    %935 = vector.shape_cast %756 : vector<16x1xi1> to vector<16x1xi1>
    %936 = vector.broadcast %935 : vector<16x1xi1> to vector<16x64xi1>
    %937 = arith.select %936, %934, %754 : vector<16x64xi1>, vector<16x64xf32>
    %cst_600 = arith.constant 0.833333313 : f32
    %938 = vector.broadcast %cst_600 : f32 to vector<16x1xf32>
    %939 = arith.cmpf ogt, %13, %938 : vector<16x1xf32>
    %cst_601 = arith.constant 0.833333313 : f32
    %940 = vector.broadcast %cst_601 : f32 to vector<1x16xf32>
    %941 = arith.cmpf ogt, %21, %940 : vector<1x16xf32>
    %942 = arith.extui %941 : vector<1x16xi1> to vector<1x16xi32>
    %943 = arith.sitofp %942 : vector<1x16xi32> to vector<1x16xf32>
    %944 = arith.addf %761, %943 : vector<1x16xf32>
    %cst_602 = arith.constant 0.000000e+00 : f32
    %cst_603 = arith.constant -1.000000e+30 : f32
    %945 = vector.broadcast %cst_602 : f32 to vector<1x16xf32>
    %946 = vector.broadcast %cst_603 : f32 to vector<1x16xf32>
    %947 = arith.select %941, %945, %946 : vector<1x16xi1>, vector<1x16xf32>
    %c5 = arith.constant 5 : index
    %c0_604 = arith.constant 0 : index
    %c0_605 = arith.constant 0 : index
    %948 = vector.load %arg3[%c5, %c0_604, %c0_605] : memref<6x1x64xf32, #tpu.memory_space<vmem>>, vector<1x1x64xf32>
    %949 = vector.shape_cast %948 : vector<1x1x64xf32> to vector<1x64xf32>
    %c5_606 = arith.constant 5 : index
    %c0_607 = arith.constant 0 : index
    %c0_608 = arith.constant 0 : index
    %950 = vector.load %arg4[%c5_606, %c0_607, %c0_608] : memref<6x1x64xf32, #tpu.memory_space<vmem>>, vector<1x1x64xf32>
    %951 = vector.shape_cast %950 : vector<1x1x64xf32> to vector<1x64xf32>
    %cst_609 = arith.constant dense<0.000000e+00> : vector<16xf32>
    %952 = vector.multi_reduction <add>, %937, %cst_609 [1] : vector<16x64xf32> to vector<16xf32>
    %953 = vector.shape_cast %952 : vector<16xf32> to vector<16x1xf32>
    %cst_610 = arith.constant 6.400000e+01 : f32
    %954 = vector.broadcast %cst_610 : f32 to vector<16x1xf32>
    %955 = arith.divf %953, %954 : vector<16x1xf32>
    %956 = vector.broadcast %955 : vector<16x1xf32> to vector<16x64xf32>
    %957 = arith.subf %937, %956 : vector<16x64xf32>
    %958 = arith.mulf %957, %957 : vector<16x64xf32>
    %cst_611 = arith.constant dense<0.000000e+00> : vector<16xf32>
    %959 = vector.multi_reduction <add>, %958, %cst_611 [1] : vector<16x64xf32> to vector<16xf32>
    %960 = vector.shape_cast %959 : vector<16xf32> to vector<16x1xf32>
    %cst_612 = arith.constant 6.400000e+01 : f32
    %961 = vector.broadcast %cst_612 : f32 to vector<16x1xf32>
    %962 = arith.divf %960, %961 : vector<16x1xf32>
    %963 = vector.broadcast %955 : vector<16x1xf32> to vector<16x64xf32>
    %964 = arith.subf %937, %963 : vector<16x64xf32>
    %cst_613 = arith.constant 9.99999974E-6 : f32
    %965 = vector.broadcast %cst_613 : f32 to vector<16x1xf32>
    %966 = arith.addf %962, %965 : vector<16x1xf32>
    %967 = math.rsqrt %966 : vector<16x1xf32>
    %968 = vector.broadcast %967 : vector<16x1xf32> to vector<16x64xf32>
    %969 = arith.mulf %964, %968 : vector<16x64xf32>
    %970 = vector.broadcast %949 : vector<1x64xf32> to vector<16x64xf32>
    %971 = arith.mulf %969, %970 : vector<16x64xf32>
    %972 = vector.broadcast %951 : vector<1x64xf32> to vector<16x64xf32>
    %973 = arith.addf %971, %972 : vector<16x64xf32>
    %974 = arith.truncf %973 : vector<16x64xf32> to vector<16x64xbf16>
    %cst_614 = arith.constant 0.000000e+00 : f32
    %975 = vector.broadcast %cst_614 : f32 to vector<16x64xf32>
    %c5_615 = arith.constant 5 : index
    %c0_616 = arith.constant 0 : index
    %c0_617 = arith.constant 0 : index
    %c0_618 = arith.constant 0 : index
    %976 = vector.load %arg5[%c5_615, %c0_616, %c0_617, %c0_618] : memref<6x2x64x32xbf16, #tpu.memory_space<vmem>>, vector<1x1x64x32xbf16>
    %977 = vector.shape_cast %976 : vector<1x1x64x32xbf16> to vector<64x32xbf16>
    %cst_619 = arith.constant dense<0.000000e+00> : vector<16x32xf32>
    %978 = tpu.matmul %974, %977, %cst_619 {dimension_numbers = #tpu.dot_dimension_numbers<[1], [0], [0], [1], [0, 0, 1, 1], [], []>} : vector<16x64xbf16>, vector<64x32xbf16>, vector<16x32xf32> -> vector<16x32xf32>
    %c5_620 = arith.constant 5 : index
    %c0_621 = arith.constant 0 : index
    %c0_622 = arith.constant 0 : index
    %c0_623 = arith.constant 0 : index
    %979 = vector.load %arg6[%c5_620, %c0_621, %c0_622, %c0_623] : memref<6x2x1x32xf32, #tpu.memory_space<vmem>>, vector<1x1x1x32xf32>
    %980 = vector.shape_cast %979 : vector<1x1x1x32xf32> to vector<1x32xf32>
    %981 = vector.broadcast %980 : vector<1x32xf32> to vector<16x32xf32>
    %982 = arith.addf %978, %981 : vector<16x32xf32>
    %c5_624 = arith.constant 5 : index
    %c0_625 = arith.constant 0 : index
    %c0_626 = arith.constant 0 : index
    %c0_627 = arith.constant 0 : index
    %983 = vector.load %arg7[%c5_624, %c0_625, %c0_626, %c0_627] : memref<6x2x64x32xbf16, #tpu.memory_space<vmem>>, vector<1x1x64x32xbf16>
    %984 = vector.shape_cast %983 : vector<1x1x64x32xbf16> to vector<64x32xbf16>
    %cst_628 = arith.constant dense<0.000000e+00> : vector<16x32xf32>
    %985 = tpu.matmul %974, %984, %cst_628 {dimension_numbers = #tpu.dot_dimension_numbers<[1], [0], [0], [1], [0, 0, 1, 1], [], []>} : vector<16x64xbf16>, vector<64x32xbf16>, vector<16x32xf32> -> vector<16x32xf32>
    %c5_629 = arith.constant 5 : index
    %c0_630 = arith.constant 0 : index
    %c0_631 = arith.constant 0 : index
    %c0_632 = arith.constant 0 : index
    %986 = vector.load %arg8[%c5_629, %c0_630, %c0_631, %c0_632] : memref<6x2x1x32xf32, #tpu.memory_space<vmem>>, vector<1x1x1x32xf32>
    %987 = vector.shape_cast %986 : vector<1x1x1x32xf32> to vector<1x32xf32>
    %988 = vector.broadcast %987 : vector<1x32xf32> to vector<16x32xf32>
    %989 = arith.addf %985, %988 : vector<16x32xf32>
    %c5_633 = arith.constant 5 : index
    %c0_634 = arith.constant 0 : index
    %c0_635 = arith.constant 0 : index
    %c0_636 = arith.constant 0 : index
    %990 = vector.load %arg9[%c5_633, %c0_634, %c0_635, %c0_636] : memref<6x2x64x32xbf16, #tpu.memory_space<vmem>>, vector<1x1x64x32xbf16>
    %991 = vector.shape_cast %990 : vector<1x1x64x32xbf16> to vector<64x32xbf16>
    %cst_637 = arith.constant dense<0.000000e+00> : vector<16x32xf32>
    %992 = tpu.matmul %974, %991, %cst_637 {dimension_numbers = #tpu.dot_dimension_numbers<[1], [0], [0], [1], [0, 0, 1, 1], [], []>} : vector<16x64xbf16>, vector<64x32xbf16>, vector<16x32xf32> -> vector<16x32xf32>
    %c5_638 = arith.constant 5 : index
    %c0_639 = arith.constant 0 : index
    %c0_640 = arith.constant 0 : index
    %c0_641 = arith.constant 0 : index
    %993 = vector.load %arg10[%c5_638, %c0_639, %c0_640, %c0_641] : memref<6x2x1x32xf32, #tpu.memory_space<vmem>>, vector<1x1x1x32xf32>
    %994 = vector.shape_cast %993 : vector<1x1x1x32xf32> to vector<1x32xf32>
    %995 = vector.broadcast %994 : vector<1x32xf32> to vector<16x32xf32>
    %996 = arith.addf %992, %995 : vector<16x32xf32>
    %997 = arith.truncf %982 : vector<16x32xf32> to vector<16x32xbf16>
    %998 = arith.truncf %989 : vector<16x32xf32> to vector<16x32xbf16>
    %cst_642 = arith.constant dense<0.000000e+00> : vector<16x16xf32>
    %999 = tpu.matmul %997, %998, %cst_642 {dimension_numbers = #tpu.dot_dimension_numbers<[1], [1], [0], [0], [0, 0, 1, 0], [], []>} : vector<16x32xbf16>, vector<16x32xbf16>, vector<16x16xf32> -> vector<16x16xf32>
    %cst_643 = arith.constant 0.176776692 : f32
    %1000 = vector.broadcast %cst_643 : f32 to vector<16x16xf32>
    %1001 = arith.mulf %999, %1000 : vector<16x16xf32>
    %1002 = vector.broadcast %947 : vector<1x16xf32> to vector<16x16xf32>
    %1003 = arith.addf %1001, %1002 : vector<16x16xf32>
    %cst_644 = arith.constant dense<0xFF800000> : vector<16xf32>
    %1004 = vector.multi_reduction <maximumf>, %1003, %cst_644 [1] : vector<16x16xf32> to vector<16xf32>
    %1005 = vector.shape_cast %1004 : vector<16xf32> to vector<16x1xf32>
    %1006 = vector.broadcast %1005 : vector<16x1xf32> to vector<16x16xf32>
    %1007 = arith.subf %1003, %1006 : vector<16x16xf32>
    %1008 = math.exp %1007 : vector<16x16xf32>
    %cst_645 = arith.constant dense<0.000000e+00> : vector<16xf32>
    %1009 = vector.multi_reduction <add>, %1008, %cst_645 [1] : vector<16x16xf32> to vector<16xf32>
    %1010 = vector.shape_cast %1009 : vector<16xf32> to vector<16x1xf32>
    %1011 = arith.truncf %1008 : vector<16x16xf32> to vector<16x16xbf16>
    %1012 = arith.truncf %996 : vector<16x32xf32> to vector<16x32xbf16>
    %cst_646 = arith.constant dense<0.000000e+00> : vector<16x32xf32>
    %1013 = tpu.matmul %1011, %1012, %cst_646 {dimension_numbers = #tpu.dot_dimension_numbers<[1], [0], [0], [1], [0, 0, 1, 1], [], []>} : vector<16x16xbf16>, vector<16x32xbf16>, vector<16x32xf32> -> vector<16x32xf32>
    %1014 = tpu.reciprocal %1010 {approx = true} : vector<16x1xf32> -> vector<16x1xf32>
    %1015 = vector.broadcast %1014 : vector<16x1xf32> to vector<16x32xf32>
    %1016 = arith.mulf %1013, %1015 : vector<16x32xf32>
    %1017 = arith.truncf %1016 : vector<16x32xf32> to vector<16x32xbf16>
    %c5_647 = arith.constant 5 : index
    %c0_648 = arith.constant 0 : index
    %c0_649 = arith.constant 0 : index
    %c0_650 = arith.constant 0 : index
    %1018 = vector.load %arg11[%c5_647, %c0_648, %c0_649, %c0_650] : memref<6x2x32x64xbf16, #tpu.memory_space<vmem>>, vector<1x1x32x64xbf16>
    %1019 = vector.shape_cast %1018 : vector<1x1x32x64xbf16> to vector<32x64xbf16>
    %cst_651 = arith.constant dense<0.000000e+00> : vector<16x64xf32>
    %1020 = tpu.matmul %1017, %1019, %cst_651 {dimension_numbers = #tpu.dot_dimension_numbers<[1], [0], [0], [1], [0, 0, 1, 1], [], []>} : vector<16x32xbf16>, vector<32x64xbf16>, vector<16x64xf32> -> vector<16x64xf32>
    %1021 = arith.addf %975, %1020 : vector<16x64xf32>
    %c5_652 = arith.constant 5 : index
    %c1_653 = arith.constant 1 : index
    %c0_654 = arith.constant 0 : index
    %c0_655 = arith.constant 0 : index
    %1022 = vector.load %arg5[%c5_652, %c1_653, %c0_654, %c0_655] : memref<6x2x64x32xbf16, #tpu.memory_space<vmem>>, vector<1x1x64x32xbf16>
    %1023 = vector.shape_cast %1022 : vector<1x1x64x32xbf16> to vector<64x32xbf16>
    %cst_656 = arith.constant dense<0.000000e+00> : vector<16x32xf32>
    %1024 = tpu.matmul %974, %1023, %cst_656 {dimension_numbers = #tpu.dot_dimension_numbers<[1], [0], [0], [1], [0, 0, 1, 1], [], []>} : vector<16x64xbf16>, vector<64x32xbf16>, vector<16x32xf32> -> vector<16x32xf32>
    %c5_657 = arith.constant 5 : index
    %c1_658 = arith.constant 1 : index
    %c0_659 = arith.constant 0 : index
    %c0_660 = arith.constant 0 : index
    %1025 = vector.load %arg6[%c5_657, %c1_658, %c0_659, %c0_660] : memref<6x2x1x32xf32, #tpu.memory_space<vmem>>, vector<1x1x1x32xf32>
    %1026 = vector.shape_cast %1025 : vector<1x1x1x32xf32> to vector<1x32xf32>
    %1027 = vector.broadcast %1026 : vector<1x32xf32> to vector<16x32xf32>
    %1028 = arith.addf %1024, %1027 : vector<16x32xf32>
    %c5_661 = arith.constant 5 : index
    %c1_662 = arith.constant 1 : index
    %c0_663 = arith.constant 0 : index
    %c0_664 = arith.constant 0 : index
    %1029 = vector.load %arg7[%c5_661, %c1_662, %c0_663, %c0_664] : memref<6x2x64x32xbf16, #tpu.memory_space<vmem>>, vector<1x1x64x32xbf16>
    %1030 = vector.shape_cast %1029 : vector<1x1x64x32xbf16> to vector<64x32xbf16>
    %cst_665 = arith.constant dense<0.000000e+00> : vector<16x32xf32>
    %1031 = tpu.matmul %974, %1030, %cst_665 {dimension_numbers = #tpu.dot_dimension_numbers<[1], [0], [0], [1], [0, 0, 1, 1], [], []>} : vector<16x64xbf16>, vector<64x32xbf16>, vector<16x32xf32> -> vector<16x32xf32>
    %c5_666 = arith.constant 5 : index
    %c1_667 = arith.constant 1 : index
    %c0_668 = arith.constant 0 : index
    %c0_669 = arith.constant 0 : index
    %1032 = vector.load %arg8[%c5_666, %c1_667, %c0_668, %c0_669] : memref<6x2x1x32xf32, #tpu.memory_space<vmem>>, vector<1x1x1x32xf32>
    %1033 = vector.shape_cast %1032 : vector<1x1x1x32xf32> to vector<1x32xf32>
    %1034 = vector.broadcast %1033 : vector<1x32xf32> to vector<16x32xf32>
    %1035 = arith.addf %1031, %1034 : vector<16x32xf32>
    %c5_670 = arith.constant 5 : index
    %c1_671 = arith.constant 1 : index
    %c0_672 = arith.constant 0 : index
    %c0_673 = arith.constant 0 : index
    %1036 = vector.load %arg9[%c5_670, %c1_671, %c0_672, %c0_673] : memref<6x2x64x32xbf16, #tpu.memory_space<vmem>>, vector<1x1x64x32xbf16>
    %1037 = vector.shape_cast %1036 : vector<1x1x64x32xbf16> to vector<64x32xbf16>
    %cst_674 = arith.constant dense<0.000000e+00> : vector<16x32xf32>
    %1038 = tpu.matmul %974, %1037, %cst_674 {dimension_numbers = #tpu.dot_dimension_numbers<[1], [0], [0], [1], [0, 0, 1, 1], [], []>} : vector<16x64xbf16>, vector<64x32xbf16>, vector<16x32xf32> -> vector<16x32xf32>
    %c5_675 = arith.constant 5 : index
    %c1_676 = arith.constant 1 : index
    %c0_677 = arith.constant 0 : index
    %c0_678 = arith.constant 0 : index
    %1039 = vector.load %arg10[%c5_675, %c1_676, %c0_677, %c0_678] : memref<6x2x1x32xf32, #tpu.memory_space<vmem>>, vector<1x1x1x32xf32>
    %1040 = vector.shape_cast %1039 : vector<1x1x1x32xf32> to vector<1x32xf32>
    %1041 = vector.broadcast %1040 : vector<1x32xf32> to vector<16x32xf32>
    %1042 = arith.addf %1038, %1041 : vector<16x32xf32>
    %1043 = arith.truncf %1028 : vector<16x32xf32> to vector<16x32xbf16>
    %1044 = arith.truncf %1035 : vector<16x32xf32> to vector<16x32xbf16>
    %cst_679 = arith.constant dense<0.000000e+00> : vector<16x16xf32>
    %1045 = tpu.matmul %1043, %1044, %cst_679 {dimension_numbers = #tpu.dot_dimension_numbers<[1], [1], [0], [0], [0, 0, 1, 0], [], []>} : vector<16x32xbf16>, vector<16x32xbf16>, vector<16x16xf32> -> vector<16x16xf32>
    %cst_680 = arith.constant 0.176776692 : f32
    %1046 = vector.broadcast %cst_680 : f32 to vector<16x16xf32>
    %1047 = arith.mulf %1045, %1046 : vector<16x16xf32>
    %1048 = vector.broadcast %947 : vector<1x16xf32> to vector<16x16xf32>
    %1049 = arith.addf %1047, %1048 : vector<16x16xf32>
    %cst_681 = arith.constant dense<0xFF800000> : vector<16xf32>
    %1050 = vector.multi_reduction <maximumf>, %1049, %cst_681 [1] : vector<16x16xf32> to vector<16xf32>
    %1051 = vector.shape_cast %1050 : vector<16xf32> to vector<16x1xf32>
    %1052 = vector.broadcast %1051 : vector<16x1xf32> to vector<16x16xf32>
    %1053 = arith.subf %1049, %1052 : vector<16x16xf32>
    %1054 = math.exp %1053 : vector<16x16xf32>
    %cst_682 = arith.constant dense<0.000000e+00> : vector<16xf32>
    %1055 = vector.multi_reduction <add>, %1054, %cst_682 [1] : vector<16x16xf32> to vector<16xf32>
    %1056 = vector.shape_cast %1055 : vector<16xf32> to vector<16x1xf32>
    %1057 = arith.truncf %1054 : vector<16x16xf32> to vector<16x16xbf16>
    %1058 = arith.truncf %1042 : vector<16x32xf32> to vector<16x32xbf16>
    %cst_683 = arith.constant dense<0.000000e+00> : vector<16x32xf32>
    %1059 = tpu.matmul %1057, %1058, %cst_683 {dimension_numbers = #tpu.dot_dimension_numbers<[1], [0], [0], [1], [0, 0, 1, 1], [], []>} : vector<16x16xbf16>, vector<16x32xbf16>, vector<16x32xf32> -> vector<16x32xf32>
    %1060 = tpu.reciprocal %1056 {approx = true} : vector<16x1xf32> -> vector<16x1xf32>
    %1061 = vector.broadcast %1060 : vector<16x1xf32> to vector<16x32xf32>
    %1062 = arith.mulf %1059, %1061 : vector<16x32xf32>
    %1063 = arith.truncf %1062 : vector<16x32xf32> to vector<16x32xbf16>
    %c5_684 = arith.constant 5 : index
    %c1_685 = arith.constant 1 : index
    %c0_686 = arith.constant 0 : index
    %c0_687 = arith.constant 0 : index
    %1064 = vector.load %arg11[%c5_684, %c1_685, %c0_686, %c0_687] : memref<6x2x32x64xbf16, #tpu.memory_space<vmem>>, vector<1x1x32x64xbf16>
    %1065 = vector.shape_cast %1064 : vector<1x1x32x64xbf16> to vector<32x64xbf16>
    %cst_688 = arith.constant dense<0.000000e+00> : vector<16x64xf32>
    %1066 = tpu.matmul %1063, %1065, %cst_688 {dimension_numbers = #tpu.dot_dimension_numbers<[1], [0], [0], [1], [0, 0, 1, 1], [], []>} : vector<16x32xbf16>, vector<32x64xbf16>, vector<16x64xf32> -> vector<16x64xf32>
    %1067 = arith.addf %1021, %1066 : vector<16x64xf32>
    %1068 = arith.addf %937, %1067 : vector<16x64xf32>
    %c5_689 = arith.constant 5 : index
    %c0_690 = arith.constant 0 : index
    %c0_691 = arith.constant 0 : index
    %1069 = vector.load %arg12[%c5_689, %c0_690, %c0_691] : memref<6x1x64xf32, #tpu.memory_space<vmem>>, vector<1x1x64xf32>
    %1070 = vector.shape_cast %1069 : vector<1x1x64xf32> to vector<1x64xf32>
    %1071 = vector.broadcast %1070 : vector<1x64xf32> to vector<16x64xf32>
    %1072 = arith.addf %1068, %1071 : vector<16x64xf32>
    %c5_692 = arith.constant 5 : index
    %c0_693 = arith.constant 0 : index
    %c0_694 = arith.constant 0 : index
    %1073 = vector.load %arg13[%c5_692, %c0_693, %c0_694] : memref<6x1x64xf32, #tpu.memory_space<vmem>>, vector<1x1x64xf32>
    %1074 = vector.shape_cast %1073 : vector<1x1x64xf32> to vector<1x64xf32>
    %c5_695 = arith.constant 5 : index
    %c0_696 = arith.constant 0 : index
    %c0_697 = arith.constant 0 : index
    %1075 = vector.load %arg14[%c5_695, %c0_696, %c0_697] : memref<6x1x64xf32, #tpu.memory_space<vmem>>, vector<1x1x64xf32>
    %1076 = vector.shape_cast %1075 : vector<1x1x64xf32> to vector<1x64xf32>
    %cst_698 = arith.constant dense<0.000000e+00> : vector<16xf32>
    %1077 = vector.multi_reduction <add>, %1072, %cst_698 [1] : vector<16x64xf32> to vector<16xf32>
    %1078 = vector.shape_cast %1077 : vector<16xf32> to vector<16x1xf32>
    %cst_699 = arith.constant 6.400000e+01 : f32
    %1079 = vector.broadcast %cst_699 : f32 to vector<16x1xf32>
    %1080 = arith.divf %1078, %1079 : vector<16x1xf32>
    %1081 = vector.broadcast %1080 : vector<16x1xf32> to vector<16x64xf32>
    %1082 = arith.subf %1072, %1081 : vector<16x64xf32>
    %1083 = arith.mulf %1082, %1082 : vector<16x64xf32>
    %cst_700 = arith.constant dense<0.000000e+00> : vector<16xf32>
    %1084 = vector.multi_reduction <add>, %1083, %cst_700 [1] : vector<16x64xf32> to vector<16xf32>
    %1085 = vector.shape_cast %1084 : vector<16xf32> to vector<16x1xf32>
    %cst_701 = arith.constant 6.400000e+01 : f32
    %1086 = vector.broadcast %cst_701 : f32 to vector<16x1xf32>
    %1087 = arith.divf %1085, %1086 : vector<16x1xf32>
    %1088 = vector.broadcast %1080 : vector<16x1xf32> to vector<16x64xf32>
    %1089 = arith.subf %1072, %1088 : vector<16x64xf32>
    %cst_702 = arith.constant 9.99999974E-6 : f32
    %1090 = vector.broadcast %cst_702 : f32 to vector<16x1xf32>
    %1091 = arith.addf %1087, %1090 : vector<16x1xf32>
    %1092 = math.rsqrt %1091 : vector<16x1xf32>
    %1093 = vector.broadcast %1092 : vector<16x1xf32> to vector<16x64xf32>
    %1094 = arith.mulf %1089, %1093 : vector<16x64xf32>
    %1095 = vector.broadcast %1074 : vector<1x64xf32> to vector<16x64xf32>
    %1096 = arith.mulf %1094, %1095 : vector<16x64xf32>
    %1097 = vector.broadcast %1076 : vector<1x64xf32> to vector<16x64xf32>
    %1098 = arith.addf %1096, %1097 : vector<16x64xf32>
    %1099 = arith.truncf %1098 : vector<16x64xf32> to vector<16x64xbf16>
    %c5_703 = arith.constant 5 : index
    %c0_704 = arith.constant 0 : index
    %c0_705 = arith.constant 0 : index
    %1100 = vector.load %arg15[%c5_703, %c0_704, %c0_705] : memref<6x64x256xbf16, #tpu.memory_space<vmem>>, vector<1x64x256xbf16>
    %1101 = vector.shape_cast %1100 : vector<1x64x256xbf16> to vector<64x256xbf16>
    %cst_706 = arith.constant dense<0.000000e+00> : vector<16x256xf32>
    %1102 = tpu.matmul %1099, %1101, %cst_706 {dimension_numbers = #tpu.dot_dimension_numbers<[1], [0], [0], [1], [0, 0, 1, 1], [], []>} : vector<16x64xbf16>, vector<64x256xbf16>, vector<16x256xf32> -> vector<16x256xf32>
    %c5_707 = arith.constant 5 : index
    %c0_708 = arith.constant 0 : index
    %c0_709 = arith.constant 0 : index
    %1103 = vector.load %arg16[%c5_707, %c0_708, %c0_709] : memref<6x1x256xf32, #tpu.memory_space<vmem>>, vector<1x1x256xf32>
    %1104 = vector.shape_cast %1103 : vector<1x1x256xf32> to vector<1x256xf32>
    %1105 = vector.broadcast %1104 : vector<1x256xf32> to vector<16x256xf32>
    %1106 = arith.addf %1102, %1105 : vector<16x256xf32>
    %cst_710 = arith.constant 0.000000e+00 : f32
    %1107 = vector.broadcast %cst_710 : f32 to vector<16x256xf32>
    %1108 = arith.maximumf %1106, %1107 : vector<16x256xf32>
    %1109 = arith.truncf %1108 : vector<16x256xf32> to vector<16x256xbf16>
    %c5_711 = arith.constant 5 : index
    %c0_712 = arith.constant 0 : index
    %c0_713 = arith.constant 0 : index
    %1110 = vector.load %arg17[%c5_711, %c0_712, %c0_713] : memref<6x256x64xbf16, #tpu.memory_space<vmem>>, vector<1x256x64xbf16>
    %1111 = vector.shape_cast %1110 : vector<1x256x64xbf16> to vector<256x64xbf16>
    %cst_714 = arith.constant dense<0.000000e+00> : vector<16x64xf32>
    %1112 = tpu.matmul %1109, %1111, %cst_714 {dimension_numbers = #tpu.dot_dimension_numbers<[1], [0], [0], [1], [0, 0, 1, 1], [], []>} : vector<16x256xbf16>, vector<256x64xbf16>, vector<16x64xf32> -> vector<16x64xf32>
    %c5_715 = arith.constant 5 : index
    %c0_716 = arith.constant 0 : index
    %c0_717 = arith.constant 0 : index
    %1113 = vector.load %arg18[%c5_715, %c0_716, %c0_717] : memref<6x1x64xf32, #tpu.memory_space<vmem>>, vector<1x1x64xf32>
    %1114 = vector.shape_cast %1113 : vector<1x1x64xf32> to vector<1x64xf32>
    %1115 = vector.broadcast %1114 : vector<1x64xf32> to vector<16x64xf32>
    %1116 = arith.addf %1112, %1115 : vector<16x64xf32>
    %1117 = arith.addf %1072, %1116 : vector<16x64xf32>
    %1118 = vector.shape_cast %939 : vector<16x1xi1> to vector<16x1xi1>
    %1119 = vector.broadcast %1118 : vector<16x1xi1> to vector<16x64xi1>
    %1120 = arith.select %1119, %1117, %937 : vector<16x64xi1>, vector<16x64xf32>
    %c0_718 = arith.constant 0 : index
    %c0_719 = arith.constant 0 : index
    %1121 = vector.load %arg24[%c0_718, %c0_719] : memref<1x16xf32, #tpu.memory_space<vmem>>, vector<1x16xf32>
    tpu.vector_store %arg24[%c0_718, %c0_719], %944 {strides = array<i32>} : memref<1x16xf32, #tpu.memory_space<vmem>>, vector<1x16xf32>,
    %c0_720 = arith.constant 0 : index
    %c0_721 = arith.constant 0 : index
    %1122 = vector.load %arg19[%c0_720, %c0_721] : memref<1x64xf32, #tpu.memory_space<vmem>>, vector<1x64xf32>
    %c0_722 = arith.constant 0 : index
    %c0_723 = arith.constant 0 : index
    %1123 = vector.load %arg20[%c0_722, %c0_723] : memref<1x64xf32, #tpu.memory_space<vmem>>, vector<1x64xf32>
    %cst_724 = arith.constant dense<0.000000e+00> : vector<16xf32>
    %1124 = vector.multi_reduction <add>, %1120, %cst_724 [1] : vector<16x64xf32> to vector<16xf32>
    %1125 = vector.shape_cast %1124 : vector<16xf32> to vector<16x1xf32>
    %cst_725 = arith.constant 6.400000e+01 : f32
    %1126 = vector.broadcast %cst_725 : f32 to vector<16x1xf32>
    %1127 = arith.divf %1125, %1126 : vector<16x1xf32>
    %1128 = vector.broadcast %1127 : vector<16x1xf32> to vector<16x64xf32>
    %1129 = arith.subf %1120, %1128 : vector<16x64xf32>
    %1130 = arith.mulf %1129, %1129 : vector<16x64xf32>
    %cst_726 = arith.constant dense<0.000000e+00> : vector<16xf32>
    %1131 = vector.multi_reduction <add>, %1130, %cst_726 [1] : vector<16x64xf32> to vector<16xf32>
    %1132 = vector.shape_cast %1131 : vector<16xf32> to vector<16x1xf32>
    %cst_727 = arith.constant 6.400000e+01 : f32
    %1133 = vector.broadcast %cst_727 : f32 to vector<16x1xf32>
    %1134 = arith.divf %1132, %1133 : vector<16x1xf32>
    %1135 = vector.broadcast %1127 : vector<16x1xf32> to vector<16x64xf32>
    %1136 = arith.subf %1120, %1135 : vector<16x64xf32>
    %cst_728 = arith.constant 9.99999974E-6 : f32
    %1137 = vector.broadcast %cst_728 : f32 to vector<16x1xf32>
    %1138 = arith.addf %1134, %1137 : vector<16x1xf32>
    %1139 = math.rsqrt %1138 : vector<16x1xf32>
    %1140 = vector.broadcast %1139 : vector<16x1xf32> to vector<16x64xf32>
    %1141 = arith.mulf %1136, %1140 : vector<16x64xf32>
    %1142 = vector.broadcast %1122 : vector<1x64xf32> to vector<16x64xf32>
    %1143 = arith.mulf %1141, %1142 : vector<16x64xf32>
    %1144 = vector.broadcast %1123 : vector<1x64xf32> to vector<16x64xf32>
    %1145 = arith.addf %1143, %1144 : vector<16x64xf32>
    %1146 = arith.truncf %1145 : vector<16x64xf32> to vector<16x64xbf16>
    %c0_729 = arith.constant 0 : index
    %c0_730 = arith.constant 0 : index
    %1147 = vector.load %arg21[%c0_729, %c0_730] : memref<64x256xbf16, #tpu.memory_space<vmem>>, vector<64x256xbf16>
    %cst_731 = arith.constant dense<0.000000e+00> : vector<16x256xf32>
    %1148 = tpu.matmul %1146, %1147, %cst_731 {dimension_numbers = #tpu.dot_dimension_numbers<[1], [0], [0], [1], [0, 0, 1, 1], [], []>} : vector<16x64xbf16>, vector<64x256xbf16>, vector<16x256xf32> -> vector<16x256xf32>
    %c0_732 = arith.constant 0 : index
    %c0_733 = arith.constant 0 : index
    %1149 = vector.load %arg22[%c0_732, %c0_733] : memref<1x256xf32, #tpu.memory_space<vmem>>, vector<1x256xf32>
    %1150 = vector.broadcast %1149 : vector<1x256xf32> to vector<16x256xf32>
    %1151 = arith.addf %1148, %1150 : vector<16x256xf32>
    %c0_734 = arith.constant 0 : index
    %c0_735 = arith.constant 0 : index
    %1152 = vector.load %arg23[%c0_734, %c0_735] : memref<16x256xf32, #tpu.memory_space<vmem>>, vector<16x256xf32>
    tpu.vector_store %arg23[%c0_734, %c0_735], %1151 {strides = array<i32>} : memref<16x256xf32, #tpu.memory_space<vmem>>, vector<16x256xf32>,
    return
  }
}

</mosaic_0001>

<llo_original>
// kernel: tpu_custom_call.1
$region0: #{tpu_custom_call.1}
  #allocation0 [shape = 'u32[]', space=smem, size = 0x4, offset = 0x4, fixed_abs, tag = 'smem constant byte address 0x4 - core index']
  #allocation1 [shape = 'u32[144,128]{1,0:T(1,128)}', space=vmem, size = 0x12000, scoped, tag = 'internal scratch']
  #allocation2 [shape = 'f32[1,1]{1,0:T(1,128)S(1)}', space=vmem, size = 0x200, scoped, tag = 'scoped memory for tpu_custom_call.1']
  %s0 = inlined_call_operand.vmem [shape: f32[16,64], index: 0, kind: input, shape index: {}]
  %s1 = inlined_call_operand.vmem [shape: f32[1,64], index: 1, kind: input, shape index: {}]
  %s2 = inlined_call_operand.<no memory space> [shape: f32[1,1], index: 2, kind: input, shape index: {}]
  %s3 = inlined_call_operand.vmem [shape: f32[6,1,64], index: 3, kind: input, shape index: {}]
  %s4 = inlined_call_operand.vmem [shape: f32[6,1,64], index: 4, kind: input, shape index: {}]
  %s5 = inlined_call_operand.vmem [shape: bf16[6,2,64,32], index: 5, kind: input, shape index: {}]
  %s6 = inlined_call_operand.vmem [shape: f32[6,2,1,32], index: 6, kind: input, shape index: {}]
  %s7 = inlined_call_operand.vmem [shape: bf16[6,2,64,32], index: 7, kind: input, shape index: {}]
  %s8 = inlined_call_operand.vmem [shape: f32[6,2,1,32], index: 8, kind: input, shape index: {}]
  %s9 = inlined_call_operand.vmem [shape: bf16[6,2,64,32], index: 9, kind: input, shape index: {}]
  %s10 = inlined_call_operand.vmem [shape: f32[6,2,1,32], index: 10, kind: input, shape index: {}]
  %s11 = inlined_call_operand.vmem [shape: bf16[6,2,32,64], index: 11, kind: input, shape index: {}]
  %s12 = inlined_call_operand.vmem [shape: f32[6,1,64], index: 12, kind: input, shape index: {}]
  %s13 = inlined_call_operand.vmem [shape: f32[6,1,64], index: 13, kind: input, shape index: {}]
  %s14 = inlined_call_operand.vmem [shape: f32[6,1,64], index: 14, kind: input, shape index: {}]
  %s15 = inlined_call_operand.vmem [shape: bf16[6,64,256], index: 15, kind: input, shape index: {}]
  %s16 = inlined_call_operand.vmem [shape: f32[6,1,256], index: 16, kind: input, shape index: {}]
  %s17 = inlined_call_operand.vmem [shape: bf16[6,256,64], index: 17, kind: input, shape index: {}]
  %s18 = inlined_call_operand.vmem [shape: f32[6,1,64], index: 18, kind: input, shape index: {}]
  %s19 = inlined_call_operand.vmem [shape: f32[1,64], index: 19, kind: input, shape index: {}]
  %s20 = inlined_call_operand.vmem [shape: f32[1,64], index: 20, kind: input, shape index: {}]
  %s21 = inlined_call_operand.vmem [shape: bf16[64,256], index: 21, kind: input, shape index: {}]
  %s22 = inlined_call_operand.vmem [shape: f32[1,256], index: 22, kind: input, shape index: {}]
  %s23 = inlined_call_operand.hbm [shape: f32[16,256], index: 23, kind: output, shape index: {0}]
  %s24 = inlined_call_operand.hbm [shape: f32[1,16], index: 24, kind: output, shape index: {1}]
  %25 = xla_tuple %s23, %s24
  %s26 = sld [smem:[#allocation0]]
  $region110: #{tpu_custom_call.1} parent=0
    _
  %s28 = ssub.s32 1, %s26
  %s29 = scalar_select 0, %s28, %s26
  %v30 = vstv %s2
  %31 = vst [vmem:[#allocation2] sm:$0x1] %v30
  $region1: #{tpu_custom_call.1} parent=0
    #allocation3 [shape = 'u8[16384]{0}', space=vmem, size = 0x4000, scoped, tag = 'output window, operand 0, single buffered']
    #allocation4 [shape = 's32[1]{0}', space=sflag, size = 0x4, scoped, tag = 'scoped memory for tpu_custom_call.1']
    #allocation5 [shape = 'u8[512]{0}', space=vmem, size = 0x400, scoped, tag = 'output window, operand 1, single buffered']
    #allocation6 [shape = 's32[1]{0}', space=sflag, size = 0x4, scoped, tag = 'scoped memory for tpu_custom_call.1']
    %32 = vsyncpa [#allocation4], 0
    %33 = vsyncpa [#allocation6], 0
    // Predicated region
    $region2: #{tpu_custom_call.1} parent=1 // pred_check
      _
    $region3: #{tpu_custom_call.1} parent=1 // pred_check_branch
      %35 = sbr.rel (0) target = $region5
    $region4: #{tpu_custom_call.1} parent=1 // pred_region
      _
    $region5: #{tpu_custom_call.1} parent=1 // pred_fallthru
      _
    // Predicated region
    $region6: #{tpu_custom_call.1} parent=1 // pred_check
      _
    $region7: #{tpu_custom_call.1} parent=1 // pred_check_branch
      %37 = sbr.rel (0) target = $region9
    $region8: #{tpu_custom_call.1} parent=1 // pred_region
      _
    $region9: #{tpu_custom_call.1} parent=1 // pred_fallthru
      _
    // Predicated region
    $region10: #{tpu_custom_call.1} parent=1 // pred_check
      _
    $region11: #{tpu_custom_call.1} parent=1 // pred_check_branch
      %39 = sbr.rel (0) target = $region13
    $region12: #{tpu_custom_call.1} parent=1 // pred_region
      _
    $region13: #{tpu_custom_call.1} parent=1 // pred_fallthru
      _
    // Predicated region
    $region14: #{tpu_custom_call.1} parent=1 // pred_check
      _
    $region15: #{tpu_custom_call.1} parent=1 // pred_check_branch
      %41 = sbr.rel (0) target = $region17
    $region16: #{tpu_custom_call.1} parent=1 // pred_region
      _
    $region17: #{tpu_custom_call.1} parent=1 // pred_fallthru
      _
    // Predicated region
    $region18: #{tpu_custom_call.1} parent=1 // pred_check
      _
    $region19: #{tpu_custom_call.1} parent=1 // pred_check_branch
      %43 = sbr.rel (0) target = $region21
    $region20: #{tpu_custom_call.1} parent=1 // pred_region
      _
    $region21: #{tpu_custom_call.1} parent=1 // pred_fallthru
      _
    // Predicated region
    $region22: #{tpu_custom_call.1} parent=1 // pred_check
      _
    $region23: #{tpu_custom_call.1} parent=1 // pred_check_branch
      %45 = sbr.rel (0) target = $region25
    $region24: #{tpu_custom_call.1} parent=1 // pred_region
      _
    $region25: #{tpu_custom_call.1} parent=1 // pred_fallthru
      _
    // Predicated region
    $region26: #{tpu_custom_call.1} parent=1 // pred_check
      _
    $region27: #{tpu_custom_call.1} parent=1 // pred_check_branch
      %47 = sbr.rel (0) target = $region29
    $region28: #{tpu_custom_call.1} parent=1 // pred_region
      _
    $region29: #{tpu_custom_call.1} parent=1 // pred_fallthru
      _
    // Predicated region
    $region30: #{tpu_custom_call.1} parent=1 // pred_check
      _
    $region31: #{tpu_custom_call.1} parent=1 // pred_check_branch
      %49 = sbr.rel (0) target = $region33
    $region32: #{tpu_custom_call.1} parent=1 // pred_region
      _
    $region33: #{tpu_custom_call.1} parent=1 // pred_fallthru
      _
    // Predicated region
    $region34: #{tpu_custom_call.1} parent=1 // pred_check
      _
    $region35: #{tpu_custom_call.1} parent=1 // pred_check_branch
      %51 = sbr.rel (0) target = $region37
    $region36: #{tpu_custom_call.1} parent=1 // pred_region
      _
    $region37: #{tpu_custom_call.1} parent=1 // pred_fallthru
      _
    // Predicated region
    $region38: #{tpu_custom_call.1} parent=1 // pred_check
      _
    $region39: #{tpu_custom_call.1} parent=1 // pred_check_branch
      %53 = sbr.rel (0) target = $region41
    $region40: #{tpu_custom_call.1} parent=1 // pred_region
      _
    $region41: #{tpu_custom_call.1} parent=1 // pred_fallthru
      _
    // Predicated region
    $region42: #{tpu_custom_call.1} parent=1 // pred_check
      _
    $region43: #{tpu_custom_call.1} parent=1 // pred_check_branch
      %55 = sbr.rel (0) target = $region45
    $region44: #{tpu_custom_call.1} parent=1 // pred_region
      _
    $region45: #{tpu_custom_call.1} parent=1 // pred_fallthru
      _
    // Predicated region
    $region46: #{tpu_custom_call.1} parent=1 // pred_check
      _
    $region47: #{tpu_custom_call.1} parent=1 // pred_check_branch
      %57 = sbr.rel (0) target = $region49
    $region48: #{tpu_custom_call.1} parent=1 // pred_region
      _
    $region49: #{tpu_custom_call.1} parent=1 // pred_fallthru
      _
    // Predicated region
    $region50: #{tpu_custom_call.1} parent=1 // pred_check
      _
    $region51: #{tpu_custom_call.1} parent=1 // pred_check_branch
      %59 = sbr.rel (0) target = $region53
    $region52: #{tpu_custom_call.1} parent=1 // pred_region
      _
    $region53: #{tpu_custom_call.1} parent=1 // pred_fallthru
      _
    // Predicated region
    $region54: #{tpu_custom_call.1} parent=1 // pred_check
      _
    $region55: #{tpu_custom_call.1} parent=1 // pred_check_branch
      %61 = sbr.rel (0) target = $region57
    $region56: #{tpu_custom_call.1} parent=1 // pred_region
      _
    $region57: #{tpu_custom_call.1} parent=1 // pred_fallthru
      _
    // Predicated region
    $region58: #{tpu_custom_call.1} parent=1 // pred_check
      _
    $region59: #{tpu_custom_call.1} parent=1 // pred_check_branch
      %63 = sbr.rel (0) target = $region61
    $region60: #{tpu_custom_call.1} parent=1 // pred_region
      _
    $region61: #{tpu_custom_call.1} parent=1 // pred_fallthru
      _
    // Predicated region
    $region62: #{tpu_custom_call.1} parent=1 // pred_check
      _
    $region63: #{tpu_custom_call.1} parent=1 // pred_check_branch
      %65 = sbr.rel (0) target = $region65
    $region64: #{tpu_custom_call.1} parent=1 // pred_region
      _
    $region65: #{tpu_custom_call.1} parent=1 // pred_fallthru
      _
    // Predicated region
    $region66: #{tpu_custom_call.1} parent=1 // pred_check
      _
    $region67: #{tpu_custom_call.1} parent=1 // pred_check_branch
      %67 = sbr.rel (0) target = $region69
    $region68: #{tpu_custom_call.1} parent=1 // pred_region
      _
    $region69: #{tpu_custom_call.1} parent=1 // pred_fallthru
      _
    // Predicated region
    $region70: #{tpu_custom_call.1} parent=1 // pred_check
      _
    $region71: #{tpu_custom_call.1} parent=1 // pred_check_branch
      %69 = sbr.rel (0) target = $region73
    $region72: #{tpu_custom_call.1} parent=1 // pred_region
      _
    $region73: #{tpu_custom_call.1} parent=1 // pred_fallthru
      _
    // Predicated region
    $region74: #{tpu_custom_call.1} parent=1 // pred_check
      _
    $region75: #{tpu_custom_call.1} parent=1 // pred_check_branch
      %71 = sbr.rel (0) target = $region77
    $region76: #{tpu_custom_call.1} parent=1 // pred_region
      _
    $region77: #{tpu_custom_call.1} parent=1 // pred_fallthru
      _
    // Predicated region
    $region78: #{tpu_custom_call.1} parent=1 // pred_check
      _
    $region79: #{tpu_custom_call.1} parent=1 // pred_check_branch
      %73 = sbr.rel (0) target = $region81
    $region80: #{tpu_custom_call.1} parent=1 // pred_region
      _
    $region81: #{tpu_custom_call.1} parent=1 // pred_fallthru
      _
    // Predicated region
    $region82: #{tpu_custom_call.1} parent=1 // pred_check
      _
    $region83: #{tpu_custom_call.1} parent=1 // pred_check_branch
      %75 = sbr.rel (0) target = $region85
    $region84: #{tpu_custom_call.1} parent=1 // pred_region
      _
    $region85: #{tpu_custom_call.1} parent=1 // pred_fallthru
      _
    // Predicated region
    $region86: #{tpu_custom_call.1} parent=1 // pred_check
      _
    $region87: #{tpu_custom_call.1} parent=1 // pred_check_branch
      %77 = sbr.rel (0) target = $region89
    $region88: #{tpu_custom_call.1} parent=1 // pred_region
      _
    $region89: #{tpu_custom_call.1} parent=1 // pred_fallthru
      _
    // Predicated region
    $region90: #{tpu_custom_call.1} parent=1 // pred_check
      _
    $region91: #{tpu_custom_call.1} parent=1 // pred_check_branch
      %79 = sbr.rel (0) target = $region93
    $region92: #{tpu_custom_call.1} parent=1 // pred_region
      _
    $region93: #{tpu_custom_call.1} parent=1 // pred_fallthru
      _
    %v81 = vld [vmem:[%s0] sm:$0xff]
    %v82 = vld [vmem:[%s0 + $0x8] sm:$0xff]
    %v83 = vld [vmem:[%s1] sm:$0x1]
    %v84 = vld [vmem:[#allocation2] sm:$0x1]
    %v86 = vlaneseq
    %v87 = vshrl.u32 %v86, 7
    %v88 = vsub.s32 0, %v87
    %v89 = vrot.slane %v83, %v88
    %v91 = vmul.f32 %v81, %v89
    %v92 = vmul.f32 %v82, %v89
    %vm93 = vcmask 523264
    %v94 = vsel %vm93, %v91, 0.0
    %95 = vadd.xlane.f32.xlu0 %v94
    %v96 = vpop.xlane.xlu0 %95
    %v97 = vsel %vm93, %v92, 0.0
    %98 = vadd.xlane.f32.xlu0 %v97
    %v99 = vpop.xlane.xlu0 %98
    %v101 = vlaneseq
    %v102 = vshrl.u32 %v101, 7
    %v103 = vsub.s32 0, %v102
    %v104 = vrot.slane %v84, %v103
    %v106 = vadd.f32 %v96, %v104
    %v107 = vadd.f32 %v99, %v104
    %v108 = vxor.u32 %v106, 2147483648
    %v109 = vxor.u32 %v107, 2147483648
    %v110 = vmul.f32 %v108, 1.442695
    %v111 = vpow.pop %v110
    %v112 = vmul.f32 %v109, 1.442695
    %v113 = vpow.pop %v112
    %v114 = vadd.f32 %v111, 1.0
    %v115 = vadd.f32 %v113, 1.0
    %v116 = vrcp.pop %v114
    %v117 = vmul.f32 1.0, %v116
    %v118 = vrcp.pop %v115
    %v119 = vmul.f32 1.0, %v118
    %120 = vset.pattern.permute.xlu0 0
    %121 = vperm.xlu0 %120, %v84
    %v122 = vpop.permute.xlu0 %121
    %v124 = vlaneseq
    %v125 = vshrl.u32 %v124, 7
    %v126 = vsub.s32 0, %v125
    %v127 = vrot.slane %v122, %v126
    %v128 = vsel %vm93, %v83, 0
    %v131 = vsel %vm93, %v81, 0
    %v134 = vsel %vm93, %v82, 0
    %136 = vmatprep.subr.mxu0 0.0
    %137 = vmatpush1.xpose.msra.mxu0 0.0
    %138 = vmatprep.subr.mxu0 0.0
    %139 = vmatpush1.xpose.msra.mxu0 0.0
    %140 = vmatprep.subr.mxu0 0.0
    %141 = vmatpush1.xpose.msra.mxu0 0.0
    %142 = vmatprep.subr.mxu0 0.0
    %143 = vmatpush1.xpose.msra.mxu0 0.0
    %144 = vmatprep.subr.mxu0 0.0
    %145 = vmatpush1.xpose.msra.mxu0 0.0
    %146 = vmatprep.subr.mxu0 0.0
    %147 = vmatpush1.xpose.msra.mxu0 0.0
    %148 = vmatprep.subr.mxu0 0.0
    %149 = vmatpush1.xpose.msra.mxu0 0.0
    %150 = vmatprep.subr.mxu0 0.0
    %151 = vmatpush1.xpose.msra.mxu0 0.0
    %152 = vmatprep.subr.mxu0 0.0
    %153 = vmatpush1.xpose.msra.mxu0 0.0
    %154 = vmatprep.subr.mxu0 0.0
    %155 = vmatpush1.xpose.msra.mxu0 0.0
    %156 = vmatprep.subr.mxu0 0.0
    %157 = vmatpush1.xpose.msra.mxu0 0.0
    %158 = vmatprep.subr.mxu0 0.0
    %159 = vmatpush1.xpose.msra.mxu0 0.0
    %160 = vmatprep.subr.mxu0 0.0
    %161 = vmatpush1.xpose.msra.mxu0 0.0
    %162 = vmatprep.subr.mxu0 0.0
    %163 = vmatpush1.xpose.msra.mxu0 0.0
    %164 = vmatprep.subr.mxu0 0.0
    %165 = vmatpush1.xpose.msra.mxu0 %v134
    %166 = vmatprep.subr.mxu0 0.0
    %167 = vmatpush1.xpose.msra.mxu0 %v131
    %168 = vmatprep.subr.mxu0 0.0
    %169 = vmatpush2.xpose.msra.mxu0 0.0
    %170 = vmatprep.subr.mxu0 0.0
    %171 = vmatpush2.xpose.msra.mxu0 0.0
    %172 = vmatprep.subr.mxu0 0.0
    %173 = vmatpush2.xpose.msra.mxu0 0.0
    %174 = vmatprep.subr.mxu0 0.0
    %175 = vmatpush2.xpose.msra.mxu0 0.0
    %176 = vmatprep.subr.mxu0 0.0
    %177 = vmatpush2.xpose.msra.mxu0 0.0
    %178 = vmatprep.subr.mxu0 0.0
    %179 = vmatpush2.xpose.msra.mxu0 0.0
    %180 = vmatprep.subr.mxu0 0.0
    %181 = vmatpush2.xpose.msra.mxu0 0.0
    %182 = vmatprep.subr.mxu0 0.0
    %183 = vmatpush2.xpose.msra.mxu0 0.0
    %184 = vmatprep.subr.mxu0 0.0
    %185 = vmatpush2.xpose.msra.mxu0 0.0
    %186 = vmatprep.subr.mxu0 0.0
    %187 = vmatpush2.xpose.msra.mxu0 0.0
    %188 = vmatprep.subr.mxu0 0.0
    %189 = vmatpush2.xpose.msra.mxu0 0.0
    %190 = vmatprep.subr.mxu0 0.0
    %191 = vmatpush2.xpose.msra.mxu0 0.0
    %192 = vmatprep.subr.mxu0 0.0
    %193 = vmatpush2.xpose.msra.mxu0 0.0
    %194 = vmatprep.subr.mxu0 0.0
    %195 = vmatpush2.xpose.msra.mxu0 0.0
    %196 = vmatprep.subr.mxu0 0.0
    %197 = vmatpush2.xpose.msra.mxu0 0.0
    %198 = vmatprep.subr.mxu0 0.0
    %199 = vmatpush2.xpose.msra.mxu0 0.0
    %200 = vmatprep.mubr.f32.mxu0 0.0
    %201 = vmatmul.mubr.f32.gmra.mxu0 %v128
    %v202 = vpop.f32.mrf.mxu0
    %v203 = vadd.f32 %v127, %v202
    %v204 = vpop.f32.mrf.mxu0
    %205 = vdwg.mxu0
    %v206 = vxor.u32 %v203, 2147483648
    %v207 = vmul.f32 %v206, 1.442695
    %v208 = vpow.pop %v207
    %v209 = vadd.f32 %v208, 1.0
    %v210 = vrcp.pop %v209
    %v211 = vmul.f32 1.0, %v210
    %vm212 = vcmp.gt.f32.partialorder %v117, 0.0
    %vm213 = vcmp.gt.f32.partialorder %v119, 0.0
    %vm214 = vcmp.gt.f32.partialorder %v211, 0.0
    %v215 = vsel %vm214, 1, 0
    %v216 = vcvt.s32.f32 %v215
    %v217 = vadd.f32 %v216, 0.0
    %v218 = vsel %vm214, 0.0, -1e+30
    %v219 = vld [vmem:[%s3] sm:$0x1]
    %v220 = vld [vmem:[%s4] sm:$0x1]
    %v221 = vsel %vm93, %v81, 0.0
    %222 = vadd.xlane.f32.xlu0 %v221
    %v223 = vpop.xlane.xlu0 %222
    %v224 = vsel %vm93, %v82, 0.0
    %225 = vadd.xlane.f32.xlu0 %v224
    %v226 = vpop.xlane.xlu0 %225
    %v227 = vrcp.pop 64.0
    %v228 = vmul.f32 %v223, %v227
    %v229 = vmul.f32 %v226, %v227
    %v230 = vsub.f32 %v81, %v228
    %v231 = vsub.f32 %v82, %v229
    %v232 = vmul.f32 %v230, %v230
    %v233 = vmul.f32 %v231, %v231
    %v234 = vsel %vm93, %v232, 0.0
    %235 = vadd.xlane.f32.xlu0 %v234
    %v236 = vpop.xlane.xlu0 %235
    %v237 = vsel %vm93, %v233, 0.0
    %238 = vadd.xlane.f32.xlu0 %v237
    %v239 = vpop.xlane.xlu0 %238
    %v240 = vmul.f32 %v236, %v227
    %v241 = vmul.f32 %v239, %v227
    %v242 = vadd.f32 %v240, 1e-05
    %v243 = vadd.f32 %v241, 1e-05
    %v244 = vrsqrt.pop %v242
    %v245 = vrsqrt.pop %v243
    %v246 = vmul.f32 %v230, %v244
    %v247 = vmul.f32 %v231, %v245
    %v249 = vlaneseq
    %v250 = vshrl.u32 %v249, 7
    %v251 = vsub.s32 0, %v250
    %v252 = vrot.slane %v219, %v251
    %v254 = vmul.f32 %v246, %v252
    %v255 = vmul.f32 %v247, %v252
    %v257 = vlaneseq
    %v258 = vshrl.u32 %v257, 7
    %v259 = vsub.s32 0, %v258
    %v260 = vrot.slane %v220, %v259
    %v262 = vadd.f32 %v254, %v260
    %v263 = vadd.f32 %v255, %v260
    %v264 = vpack.c.bf16 %v263, %v262
    %v265 = vld [vmem:[%s5] sm:$0xf]
    %v266 = vld [vmem:[%s5 + $0x4] sm:$0xf]
    %v267 = vld [vmem:[%s5 + $0x8] sm:$0xf]
    %v268 = vld [vmem:[%s5 + $0xc] sm:$0xf]
    %v269 = vld [vmem:[%s5 + $0x10] sm:$0xf]
    %v270 = vld [vmem:[%s5 + $0x14] sm:$0xf]
    %v271 = vld [vmem:[%s5 + $0x18] sm:$0xf]
    %v272 = vld [vmem:[%s5 + $0x1c] sm:$0xf]
    %v273 = vld [vmem:[%s6] sm:$0x1]
    %v275 = vlaneseq
    %v276 = vshrl.u32 %v275, 7
    %v277 = vsub.s32 0, %v276
    %v278 = vrot.slane %v273, %v277
    %v288 = vunpack.c.l.b16 %v265
    %v289 = vunpack.c.l.b16 %v266
    %v290 = vunpack.c.l.b16 %v267
    %v291 = vunpack.c.l.b16 %v268
    %v292 = vunpack.c.l.b16 %v269
    %v293 = vunpack.c.l.b16 %v270
    %v294 = vunpack.c.l.b16 %v271
    %v295 = vunpack.c.l.b16 %v272
    %v296 = vpack.c.b16 %v289, %v288
    %v297 = vpack.c.b16 %v291, %v290
    %v298 = vpack.c.b16 %v293, %v292
    %v299 = vpack.c.b16 %v295, %v294
    %v305 = vsel %vm93, %v264, 0
    %307 = vmatprep.subr.bf16.mxu0 0
    %308 = vmatpush1.bf16.msra.mxu0 0
    %309 = vmatprep.subr.bf16.mxu0 0
    %310 = vmatpush1.bf16.msra.mxu0 0
    %311 = vmatprep.subr.bf16.mxu0 0
    %312 = vmatpush1.bf16.msra.mxu0 0
    %313 = vmatprep.subr.bf16.mxu0 0
    %314 = vmatpush1.bf16.msra.mxu0 0
    %315 = vmatprep.subr.bf16.mxu0 0
    %316 = vmatpush1.bf16.msra.mxu0 %v299
    %317 = vmatprep.subr.bf16.mxu0 0
    %318 = vmatpush1.bf16.msra.mxu0 %v298
    %319 = vmatprep.subr.bf16.mxu0 0
    %320 = vmatpush1.bf16.msra.mxu0 %v297
    %321 = vmatprep.subr.bf16.mxu0 0
    %322 = vmatpush1.bf16.msra.mxu0 %v296
    %323 = vmatprep.subr.bf16.mxu0 0
    %324 = vmatpush2.bf16.msra.mxu0 0
    %325 = vmatprep.subr.bf16.mxu0 0
    %326 = vmatpush2.bf16.msra.mxu0 0
    %327 = vmatprep.subr.bf16.mxu0 0
    %328 = vmatpush2.bf16.msra.mxu0 0
    %329 = vmatprep.subr.bf16.mxu0 0
    %330 = vmatpush2.bf16.msra.mxu0 0
    %331 = vmatprep.subr.bf16.mxu0 0
    %332 = vmatpush2.bf16.msra.mxu0 0
    %333 = vmatprep.subr.bf16.mxu0 0
    %334 = vmatpush2.bf16.msra.mxu0 0
    %335 = vmatprep.subr.bf16.mxu0 0
    %336 = vmatpush2.bf16.msra.mxu0 0
    %337 = vmatprep.subr.bf16.mxu0 0
    %338 = vmatpush2.bf16.msra.mxu0 0
    %339 = vmatprep.mubr.bf16.mxu0 0
    %340 = vmatmul.mubr.bf16.gmra.mxu0 %v305
    %v341 = vpop.f32.mrf.mxu0
    %v342 = vadd.f32 %v278, %v341
    %v343 = vpop.f32.mrf.mxu0
    %v344 = vpop.f32.mrf.mxu0
    %v345 = vadd.f32 %v278, %v344
    %v346 = vpop.f32.mrf.mxu0
    %347 = vdwg.mxu0
    %v348 = vld [vmem:[%s7] sm:$0xf]
    %v349 = vld [vmem:[%s7 + $0x4] sm:$0xf]
    %v350 = vld [vmem:[%s7 + $0x8] sm:$0xf]
    %v351 = vld [vmem:[%s7 + $0xc] sm:$0xf]
    %v352 = vld [vmem:[%s7 + $0x10] sm:$0xf]
    %v353 = vld [vmem:[%s7 + $0x14] sm:$0xf]
    %v354 = vld [vmem:[%s7 + $0x18] sm:$0xf]
    %v355 = vld [vmem:[%s7 + $0x1c] sm:$0xf]
    %v356 = vld [vmem:[%s8] sm:$0x1]
    %v358 = vlaneseq
    %v359 = vshrl.u32 %v358, 7
    %v360 = vsub.s32 0, %v359
    %v361 = vrot.slane %v356, %v360
    %v371 = vunpack.c.l.b16 %v348
    %v372 = vunpack.c.l.b16 %v349
    %v373 = vunpack.c.l.b16 %v350
    %v374 = vunpack.c.l.b16 %v351
    %v375 = vunpack.c.l.b16 %v352
    %v376 = vunpack.c.l.b16 %v353
    %v377 = vunpack.c.l.b16 %v354
    %v378 = vunpack.c.l.b16 %v355
    %v379 = vpack.c.b16 %v372, %v371
    %v380 = vpack.c.b16 %v374, %v373
    %v381 = vpack.c.b16 %v376, %v375
    %v382 = vpack.c.b16 %v378, %v377
    %387 = vmatprep.subr.bf16.mxu0 0
    %388 = vmatpush1.bf16.msra.mxu0 0
    %389 = vmatprep.subr.bf16.mxu0 0
    %390 = vmatpush1.bf16.msra.mxu0 0
    %391 = vmatprep.subr.bf16.mxu0 0
    %392 = vmatpush1.bf16.msra.mxu0 0
    %393 = vmatprep.subr.bf16.mxu0 0
    %394 = vmatpush1.bf16.msra.mxu0 0
    %395 = vmatprep.subr.bf16.mxu0 0
    %396 = vmatpush1.bf16.msra.mxu0 %v382
    %397 = vmatprep.subr.bf16.mxu0 0
    %398 = vmatpush1.bf16.msra.mxu0 %v381
    %399 = vmatprep.subr.bf16.mxu0 0
    %400 = vmatpush1.bf16.msra.mxu0 %v380
    %401 = vmatprep.subr.bf16.mxu0 0
    %402 = vmatpush1.bf16.msra.mxu0 %v379
    %403 = vmatprep.subr.bf16.mxu0 0
    %404 = vmatpush2.bf16.msra.mxu0 0
    %405 = vmatprep.subr.bf16.mxu0 0
    %406 = vmatpush2.bf16.msra.mxu0 0
    %407 = vmatprep.subr.bf16.mxu0 0
    %408 = vmatpush2.bf16.msra.mxu0 0
    %409 = vmatprep.subr.bf16.mxu0 0
    %410 = vmatpush2.bf16.msra.mxu0 0
    %411 = vmatprep.subr.bf16.mxu0 0
    %412 = vmatpush2.bf16.msra.mxu0 0
    %413 = vmatprep.subr.bf16.mxu0 0
    %414 = vmatpush2.bf16.msra.mxu0 0
    %415 = vmatprep.subr.bf16.mxu0 0
    %416 = vmatpush2.bf16.msra.mxu0 0
    %417 = vmatprep.subr.bf16.mxu0 0
    %418 = vmatpush2.bf16.msra.mxu0 0
    %419 = vmatprep.mubr.bf16.mxu0 0
    %420 = vmatmul.mubr.bf16.gmra.mxu0 %v305
    %v421 = vpop.f32.mrf.mxu0
    %v422 = vadd.f32 %v361, %v421
    %v423 = vpop.f32.mrf.mxu0
    %v424 = vpop.f32.mrf.mxu0
    %v425 = vadd.f32 %v361, %v424
    %v426 = vpop.f32.mrf.mxu0
    %427 = vdwg.mxu0
    %v428 = vld [vmem:[%s9] sm:$0xf]
    %v429 = vld [vmem:[%s9 + $0x4] sm:$0xf]
    %v430 = vld [vmem:[%s9 + $0x8] sm:$0xf]
    %v431 = vld [vmem:[%s9 + $0xc] sm:$0xf]
    %v432 = vld [vmem:[%s9 + $0x10] sm:$0xf]
    %v433 = vld [vmem:[%s9 + $0x14] sm:$0xf]
    %v434 = vld [vmem:[%s9 + $0x18] sm:$0xf]
    %v435 = vld [vmem:[%s9 + $0x1c] sm:$0xf]
    %v436 = vld [vmem:[%s10] sm:$0x1]
    %v438 = vlaneseq
    %v439 = vshrl.u32 %v438, 7
    %v440 = vsub.s32 0, %v439
    %v441 = vrot.slane %v436, %v440
    %v451 = vunpack.c.l.b16 %v428
    %v452 = vunpack.c.l.b16 %v429
    %v453 = vunpack.c.l.b16 %v430
    %v454 = vunpack.c.l.b16 %v431
    %v455 = vunpack.c.l.b16 %v432
    %v456 = vunpack.c.l.b16 %v433
    %v457 = vunpack.c.l.b16 %v434
    %v458 = vunpack.c.l.b16 %v435
    %v459 = vpack.c.b16 %v452, %v451
    %v460 = vpack.c.b16 %v454, %v453
    %v461 = vpack.c.b16 %v456, %v455
    %v462 = vpack.c.b16 %v458, %v457
    %467 = vmatprep.subr.bf16.mxu0 0
    %468 = vmatpush1.bf16.msra.mxu0 0
    %469 = vmatprep.subr.bf16.mxu0 0
    %470 = vmatpush1.bf16.msra.mxu0 0
    %471 = vmatprep.subr.bf16.mxu0 0
    %472 = vmatpush1.bf16.msra.mxu0 0
    %473 = vmatprep.subr.bf16.mxu0 0
    %474 = vmatpush1.bf16.msra.mxu0 0
    %475 = vmatprep.subr.bf16.mxu0 0
    %476 = vmatpush1.bf16.msra.mxu0 %v462
    %477 = vmatprep.subr.bf16.mxu0 0
    %478 = vmatpush1.bf16.msra.mxu0 %v461
    %479 = vmatprep.subr.bf16.mxu0 0
    %480 = vmatpush1.bf16.msra.mxu0 %v460
    %481 = vmatprep.subr.bf16.mxu0 0
    %482 = vmatpush1.bf16.msra.mxu0 %v459
    %483 = vmatprep.subr.bf16.mxu0 0
    %484 = vmatpush2.bf16.msra.mxu0 0
    %485 = vmatprep.subr.bf16.mxu0 0
    %486 = vmatpush2.bf16.msra.mxu0 0
    %487 = vmatprep.subr.bf16.mxu0 0
    %488 = vmatpush2.bf16.msra.mxu0 0
    %489 = vmatprep.subr.bf16.mxu0 0
    %490 = vmatpush2.bf16.msra.mxu0 0
    %491 = vmatprep.subr.bf16.mxu0 0
    %492 = vmatpush2.bf16.msra.mxu0 0
    %493 = vmatprep.subr.bf16.mxu0 0
    %494 = vmatpush2.bf16.msra.mxu0 0
    %495 = vmatprep.subr.bf16.mxu0 0
    %496 = vmatpush2.bf16.msra.mxu0 0
    %497 = vmatprep.subr.bf16.mxu0 0
    %498 = vmatpush2.bf16.msra.mxu0 0
    %499 = vmatprep.mubr.bf16.mxu0 0
    %500 = vmatmul.mubr.bf16.gmra.mxu0 %v305
    %v501 = vpop.f32.mrf.mxu0
    %v502 = vadd.f32 %v441, %v501
    %v503 = vpop.f32.mrf.mxu0
    %v504 = vpop.f32.mrf.mxu0
    %v505 = vadd.f32 %v441, %v504
    %v506 = vpop.f32.mrf.mxu0
    %507 = vdwg.mxu0
    %v508 = vpack.c.bf16 %v345, %v342
    %v509 = vpack.c.bf16 %v425, %v422
    %vm510 = vcmask 261120
    %v512 = vsel %vm510, %v508, 0
    %v515 = vsel %vm510, %v509, 0
    %517 = vmatprep.subr.bf16.mxu0 0
    %518 = vmatpush1.bf16.xpose.msra.mxu0 0
    %519 = vmatprep.subr.bf16.mxu0 0
    %520 = vmatpush1.bf16.xpose.msra.mxu0 0
    %521 = vmatprep.subr.bf16.mxu0 0
    %522 = vmatpush1.bf16.xpose.msra.mxu0 0
    %523 = vmatprep.subr.bf16.mxu0 0
    %524 = vmatpush1.bf16.xpose.msra.mxu0 0
    %525 = vmatprep.subr.bf16.mxu0 0
    %526 = vmatpush1.bf16.xpose.msra.mxu0 0
    %527 = vmatprep.subr.bf16.mxu0 0
    %528 = vmatpush1.bf16.xpose.msra.mxu0 0
    %529 = vmatprep.subr.bf16.mxu0 0
    %530 = vmatpush1.bf16.xpose.msra.mxu0 0
    %531 = vmatprep.subr.bf16.mxu0 0
    %532 = vmatpush1.bf16.xpose.msra.mxu0 %v515
    %533 = vmatprep.subr.bf16.mxu0 0
    %534 = vmatpush2.bf16.xpose.msra.mxu0 0
    %535 = vmatprep.subr.bf16.mxu0 0
    %536 = vmatpush2.bf16.xpose.msra.mxu0 0
    %537 = vmatprep.subr.bf16.mxu0 0
    %538 = vmatpush2.bf16.xpose.msra.mxu0 0
    %539 = vmatprep.subr.bf16.mxu0 0
    %540 = vmatpush2.bf16.xpose.msra.mxu0 0
    %541 = vmatprep.subr.bf16.mxu0 0
    %542 = vmatpush2.bf16.xpose.msra.mxu0 0
    %543 = vmatprep.subr.bf16.mxu0 0
    %544 = vmatpush2.bf16.xpose.msra.mxu0 0
    %545 = vmatprep.subr.bf16.mxu0 0
    %546 = vmatpush2.bf16.xpose.msra.mxu0 0
    %547 = vmatprep.subr.bf16.mxu0 0
    %548 = vmatpush2.bf16.xpose.msra.mxu0 0
    %549 = vmatprep.mubr.bf16.mxu0 0
    %550 = vmatmul.mubr.bf16.gmra.mxu0 %v512
    %v551 = vpop.f32.mrf.mxu0
    %v552 = vadd.f32 0.0, %v551
    %v553 = vpop.f32.mrf.mxu0
    %v554 = vpop.f32.mrf.mxu0
    %v555 = vadd.f32 0.0, %v554
    %v556 = vpop.f32.mrf.mxu0
    %557 = vdwg.mxu0
    %v558 = vmul.f32 %v552, 0.17677669
    %v559 = vmul.f32 %v555, 0.17677669
    %v560 = vlaneseq
    %v561 = vshrl.u32 %v560, 7
    %v562 = vsub.s32 0, %v561
    %v563 = vrot.slane %v218, %v562
    %v564 = vadd.f32 %v558, %v563
    %v565 = vadd.f32 %v559, %v563
    %vm566 = vcmask 130048
    %v567 = vsel %vm566, %v564, -inf
    %568 = vmax.xlane.f32.xlu0 %v567
    %v569 = vpop.xlane.xlu0 %568
    %v570 = vsel %vm566, %v565, -inf
    %571 = vmax.xlane.f32.xlu0 %v570
    %v572 = vpop.xlane.xlu0 %571
    %v573 = vsub.f32 %v564, %v569
    %v574 = vsub.f32 %v565, %v572
    %v575 = vmul.f32 %v573, 1.442695
    %v576 = vpow.pop %v575
    %v577 = vmul.f32 %v574, 1.442695
    %v578 = vpow.pop %v577
    %v579 = vsel %vm566, %v576, 0.0
    %580 = vadd.xlane.f32.xlu0 %v579
    %v581 = vpop.xlane.xlu0 %580
    %v582 = vsel %vm566, %v578, 0.0
    %583 = vadd.xlane.f32.xlu0 %v582
    %v584 = vpop.xlane.xlu0 %583
    %v585 = vpack.c.bf16 %v578, %v576
    %v586 = vpack.c.bf16 %v505, %v502
    %v588 = vsel %vm566, %v585, 0
    %590 = vmatprep.subr.bf16.mxu0 0
    %591 = vmatpush1.bf16.msra.mxu0 0
    %592 = vmatprep.subr.bf16.mxu0 0
    %593 = vmatpush1.bf16.msra.mxu0 0
    %594 = vmatprep.subr.bf16.mxu0 0
    %595 = vmatpush1.bf16.msra.mxu0 0
    %596 = vmatprep.subr.bf16.mxu0 0
    %597 = vmatpush1.bf16.msra.mxu0 0
    %598 = vmatprep.subr.bf16.mxu0 0
    %599 = vmatpush1.bf16.msra.mxu0 0
    %600 = vmatprep.subr.bf16.mxu0 0
    %601 = vmatpush1.bf16.msra.mxu0 0
    %602 = vmatprep.subr.bf16.mxu0 0
    %603 = vmatpush1.bf16.msra.mxu0 0
    %604 = vmatprep.subr.bf16.mxu0 0
    %605 = vmatpush1.bf16.msra.mxu0 %v586
    %606 = vmatprep.subr.bf16.mxu0 0
    %607 = vmatpush2.bf16.msra.mxu0 0
    %608 = vmatprep.subr.bf16.mxu0 0
    %609 = vmatpush2.bf16.msra.mxu0 0
    %610 = vmatprep.subr.bf16.mxu0 0
    %611 = vmatpush2.bf16.msra.mxu0 0
    %612 = vmatprep.subr.bf16.mxu0 0
    %613 = vmatpush2.bf16.msra.mxu0 0
    %614 = vmatprep.subr.bf16.mxu0 0
    %615 = vmatpush2.bf16.msra.mxu0 0
    %616 = vmatprep.subr.bf16.mxu0 0
    %617 = vmatpush2.bf16.msra.mxu0 0
    %618 = vmatprep.subr.bf16.mxu0 0
    %619 = vmatpush2.bf16.msra.mxu0 0
    %620 = vmatprep.subr.bf16.mxu0 0
    %621 = vmatpush2.bf16.msra.mxu0 0
    %622 = vmatprep.mubr.bf16.mxu0 0
    %623 = vmatmul.mubr.bf16.gmra.mxu0 %v588
    %v624 = vpop.f32.mrf.mxu0
    %v625 = vadd.f32 0.0, %v624
    %v626 = vpop.f32.mrf.mxu0
    %v627 = vpop.f32.mrf.mxu0
    %v628 = vadd.f32 0.0, %v627
    %v629 = vpop.f32.mrf.mxu0
    %630 = vdwg.mxu0
    %v631 = vrcp.pop %v581
    %v632 = vrcp.pop %v584
    %v633 = vmul.f32 %v625, %v631
    %v634 = vmul.f32 %v628, %v632
    %v635 = vpack.c.bf16 %v634, %v633
    %v636 = vld [vmem:[%s11] sm:$0xf]
    %v637 = vld [vmem:[%s11 + $0x4] sm:$0xf]
    %v638 = vld [vmem:[%s11 + $0x8] sm:$0xf]
    %v639 = vld [vmem:[%s11 + $0xc] sm:$0xf]
    %s640 = scalar_lea.vmem %s5, 32
    %v641 = vld [vmem:[%s640] sm:$0xf]
    %v642 = vld [vmem:[%s640 + $0x4] sm:$0xf]
    %v643 = vld [vmem:[%s640 + $0x8] sm:$0xf]
    %v644 = vld [vmem:[%s640 + $0xc] sm:$0xf]
    %v645 = vld [vmem:[%s640 + $0x10] sm:$0xf]
    %v646 = vld [vmem:[%s640 + $0x14] sm:$0xf]
    %v647 = vld [vmem:[%s640 + $0x18] sm:$0xf]
    %v648 = vld [vmem:[%s640 + $0x1c] sm:$0xf]
    %s649 = scalar_lea.vmem %s6, 1
    %v650 = vld [vmem:[%s649] sm:$0x1]
    %v652 = vlaneseq
    %v653 = vshrl.u32 %v652, 7
    %v654 = vsub.s32 0, %v653
    %v655 = vrot.slane %v650, %v654
    %v665 = vunpack.c.l.b16 %v641
    %v666 = vunpack.c.l.b16 %v642
    %v667 = vunpack.c.l.b16 %v643
    %v668 = vunpack.c.l.b16 %v644
    %v669 = vunpack.c.l.b16 %v645
    %v670 = vunpack.c.l.b16 %v646
    %v671 = vunpack.c.l.b16 %v647
    %v672 = vunpack.c.l.b16 %v648
    %v673 = vpack.c.b16 %v666, %v665
    %v674 = vpack.c.b16 %v668, %v667
    %v675 = vpack.c.b16 %v670, %v669
    %v676 = vpack.c.b16 %v672, %v671
    %681 = vmatprep.subr.bf16.mxu0 0
    %682 = vmatpush1.bf16.msra.mxu0 0
    %683 = vmatprep.subr.bf16.mxu0 0
    %684 = vmatpush1.bf16.msra.mxu0 0
    %685 = vmatprep.subr.bf16.mxu0 0
    %686 = vmatpush1.bf16.msra.mxu0 0
    %687 = vmatprep.subr.bf16.mxu0 0
    %688 = vmatpush1.bf16.msra.mxu0 0
    %689 = vmatprep.subr.bf16.mxu0 0
    %690 = vmatpush1.bf16.msra.mxu0 %v676
    %691 = vmatprep.subr.bf16.mxu0 0
    %692 = vmatpush1.bf16.msra.mxu0 %v675
    %693 = vmatprep.subr.bf16.mxu0 0
    %694 = vmatpush1.bf16.msra.mxu0 %v674
    %695 = vmatprep.subr.bf16.mxu0 0
    %696 = vmatpush1.bf16.msra.mxu0 %v673
    %697 = vmatprep.subr.bf16.mxu0 0
    %698 = vmatpush2.bf16.msra.mxu0 0
    %699 = vmatprep.subr.bf16.mxu0 0
    %700 = vmatpush2.bf16.msra.mxu0 0
    %701 = vmatprep.subr.bf16.mxu0 0
    %702 = vmatpush2.bf16.msra.mxu0 0
    %703 = vmatprep.subr.bf16.mxu0 0
    %704 = vmatpush2.bf16.msra.mxu0 0
    %705 = vmatprep.subr.bf16.mxu0 0
    %706 = vmatpush2.bf16.msra.mxu0 0
    %707 = vmatprep.subr.bf16.mxu0 0
    %708 = vmatpush2.bf16.msra.mxu0 0
    %709 = vmatprep.subr.bf16.mxu0 0
    %710 = vmatpush2.bf16.msra.mxu0 0
    %711 = vmatprep.subr.bf16.mxu0 0
    %712 = vmatpush2.bf16.msra.mxu0 0
    %713 = vmatprep.mubr.bf16.mxu0 0
    %714 = vmatmul.mubr.bf16.gmra.mxu0 %v305
    %v715 = vpop.f32.mrf.mxu0
    %v716 = vadd.f32 %v655, %v715
    %v717 = vpop.f32.mrf.mxu0
    %v718 = vpop.f32.mrf.mxu0
    %v719 = vadd.f32 %v655, %v718
    %v720 = vpop.f32.mrf.mxu0
    %721 = vdwg.mxu0
    %s722 = scalar_lea.vmem %s7, 32
    %v723 = vld [vmem:[%s722] sm:$0xf]
    %v724 = vld [vmem:[%s722 + $0x4] sm:$0xf]
    %v725 = vld [vmem:[%s722 + $0x8] sm:$0xf]
    %v726 = vld [vmem:[%s722 + $0xc] sm:$0xf]
    %v727 = vld [vmem:[%s722 + $0x10] sm:$0xf]
    %v728 = vld [vmem:[%s722 + $0x14] sm:$0xf]
    %v729 = vld [vmem:[%s722 + $0x18] sm:$0xf]
    %v730 = vld [vmem:[%s722 + $0x1c] sm:$0xf]
    %s731 = scalar_lea.vmem %s8, 1
    %v732 = vld [vmem:[%s731] sm:$0x1]
    %v734 = vlaneseq
    %v735 = vshrl.u32 %v734, 7
    %v736 = vsub.s32 0, %v735
    %v737 = vrot.slane %v732, %v736
    %v747 = vunpack.c.l.b16 %v723
    %v748 = vunpack.c.l.b16 %v724
    %v749 = vunpack.c.l.b16 %v725
    %v750 = vunpack.c.l.b16 %v726
    %v751 = vunpack.c.l.b16 %v727
    %v752 = vunpack.c.l.b16 %v728
    %v753 = vunpack.c.l.b16 %v729
    %v754 = vunpack.c.l.b16 %v730
    %v755 = vpack.c.b16 %v748, %v747
    %v756 = vpack.c.b16 %v750, %v749
    %v757 = vpack.c.b16 %v752, %v751
    %v758 = vpack.c.b16 %v754, %v753
    %763 = vmatprep.subr.bf16.mxu0 0
    %764 = vmatpush1.bf16.msra.mxu0 0
    %765 = vmatprep.subr.bf16.mxu0 0
    %766 = vmatpush1.bf16.msra.mxu0 0
    %767 = vmatprep.subr.bf16.mxu0 0
    %768 = vmatpush1.bf16.msra.mxu0 0
    %769 = vmatprep.subr.bf16.mxu0 0
    %770 = vmatpush1.bf16.msra.mxu0 0
    %771 = vmatprep.subr.bf16.mxu0 0
    %772 = vmatpush1.bf16.msra.mxu0 %v758
    %773 = vmatprep.subr.bf16.mxu0 0
    %774 = vmatpush1.bf16.msra.mxu0 %v757
    %775 = vmatprep.subr.bf16.mxu0 0
    %776 = vmatpush1.bf16.msra.mxu0 %v756
    %777 = vmatprep.subr.bf16.mxu0 0
    %778 = vmatpush1.bf16.msra.mxu0 %v755
    %779 = vmatprep.subr.bf16.mxu0 0
    %780 = vmatpush2.bf16.msra.mxu0 0
    %781 = vmatprep.subr.bf16.mxu0 0
    %782 = vmatpush2.bf16.msra.mxu0 0
    %783 = vmatprep.subr.bf16.mxu0 0
    %784 = vmatpush2.bf16.msra.mxu0 0
    %785 = vmatprep.subr.bf16.mxu0 0
    %786 = vmatpush2.bf16.msra.mxu0 0
    %787 = vmatprep.subr.bf16.mxu0 0
    %788 = vmatpush2.bf16.msra.mxu0 0
    %789 = vmatprep.subr.bf16.mxu0 0
    %790 = vmatpush2.bf16.msra.mxu0 0
    %791 = vmatprep.subr.bf16.mxu0 0
    %792 = vmatpush2.bf16.msra.mxu0 0
    %793 = vmatprep.subr.bf16.mxu0 0
    %794 = vmatpush2.bf16.msra.mxu0 0
    %795 = vmatprep.mubr.bf16.mxu0 0
    %796 = vmatmul.mubr.bf16.gmra.mxu0 %v305
    %v797 = vpop.f32.mrf.mxu0
    %v798 = vadd.f32 %v737, %v797
    %v799 = vpop.f32.mrf.mxu0
    %v800 = vpop.f32.mrf.mxu0
    %v801 = vadd.f32 %v737, %v800
    %v802 = vpop.f32.mrf.mxu0
    %803 = vdwg.mxu0
    %s804 = scalar_lea.vmem %s9, 32
    %v805 = vld [vmem:[%s804] sm:$0xf]
    %v806 = vld [vmem:[%s804 + $0x4] sm:$0xf]
    %v807 = vld [vmem:[%s804 + $0x8] sm:$0xf]
    %v808 = vld [vmem:[%s804 + $0xc] sm:$0xf]
    %v809 = vld [vmem:[%s804 + $0x10] sm:$0xf]
    %v810 = vld [vmem:[%s804 + $0x14] sm:$0xf]
    %v811 = vld [vmem:[%s804 + $0x18] sm:$0xf]
    %v812 = vld [vmem:[%s804 + $0x1c] sm:$0xf]
    %s813 = scalar_lea.vmem %s10, 1
    %v814 = vld [vmem:[%s813] sm:$0x1]
    %v816 = vlaneseq
    %v817 = vshrl.u32 %v816, 7
    %v818 = vsub.s32 0, %v817
    %v819 = vrot.slane %v814, %v818
    %v829 = vunpack.c.l.b16 %v805
    %v830 = vunpack.c.l.b16 %v806
    %v831 = vunpack.c.l.b16 %v807
    %v832 = vunpack.c.l.b16 %v808
    %v833 = vunpack.c.l.b16 %v809
    %v834 = vunpack.c.l.b16 %v810
    %v835 = vunpack.c.l.b16 %v811
    %v836 = vunpack.c.l.b16 %v812
    %v837 = vpack.c.b16 %v830, %v829
    %v838 = vpack.c.b16 %v832, %v831
    %v839 = vpack.c.b16 %v834, %v833
    %v840 = vpack.c.b16 %v836, %v835
    %845 = vmatprep.subr.bf16.mxu0 0
    %846 = vmatpush1.bf16.msra.mxu0 0
    %847 = vmatprep.subr.bf16.mxu0 0
    %848 = vmatpush1.bf16.msra.mxu0 0
    %849 = vmatprep.subr.bf16.mxu0 0
    %850 = vmatpush1.bf16.msra.mxu0 0
    %851 = vmatprep.subr.bf16.mxu0 0
    %852 = vmatpush1.bf16.msra.mxu0 0
    %853 = vmatprep.subr.bf16.mxu0 0
    %854 = vmatpush1.bf16.msra.mxu0 %v840
    %855 = vmatprep.subr.bf16.mxu0 0
    %856 = vmatpush1.bf16.msra.mxu0 %v839
    %857 = vmatprep.subr.bf16.mxu0 0
    %858 = vmatpush1.bf16.msra.mxu0 %v838
    %859 = vmatprep.subr.bf16.mxu0 0
    %860 = vmatpush1.bf16.msra.mxu0 %v837
    %861 = vmatprep.subr.bf16.mxu0 0
    %862 = vmatpush2.bf16.msra.mxu0 0
    %863 = vmatprep.subr.bf16.mxu0 0
    %864 = vmatpush2.bf16.msra.mxu0 0
    %865 = vmatprep.subr.bf16.mxu0 0
    %866 = vmatpush2.bf16.msra.mxu0 0
    %867 = vmatprep.subr.bf16.mxu0 0
    %868 = vmatpush2.bf16.msra.mxu0 0
    %869 = vmatprep.subr.bf16.mxu0 0
    %870 = vmatpush2.bf16.msra.mxu0 0
    %871 = vmatprep.subr.bf16.mxu0 0
    %872 = vmatpush2.bf16.msra.mxu0 0
    %873 = vmatprep.subr.bf16.mxu0 0
    %874 = vmatpush2.bf16.msra.mxu0 0
    %875 = vmatprep.subr.bf16.mxu0 0
    %876 = vmatpush2.bf16.msra.mxu0 0
    %877 = vmatprep.mubr.bf16.mxu0 0
    %878 = vmatmul.mubr.bf16.gmra.mxu0 %v305
    %v879 = vpop.f32.mrf.mxu0
    %v880 = vadd.f32 %v819, %v879
    %v881 = vpop.f32.mrf.mxu0
    %v882 = vpop.f32.mrf.mxu0
    %v883 = vadd.f32 %v819, %v882
    %v884 = vpop.f32.mrf.mxu0
    %885 = vdwg.mxu0
    %v886 = vpack.c.bf16 %v719, %v716
    %v887 = vpack.c.bf16 %v801, %v798
    %v889 = vsel %vm510, %v886, 0
    %v892 = vsel %vm510, %v887, 0
    %894 = vmatprep.subr.bf16.mxu0 0
    %895 = vmatpush1.bf16.xpose.msra.mxu0 0
    %896 = vmatprep.subr.bf16.mxu0 0
    %897 = vmatpush1.bf16.xpose.msra.mxu0 0
    %898 = vmatprep.subr.bf16.mxu0 0
    %899 = vmatpush1.bf16.xpose.msra.mxu0 0
    %900 = vmatprep.subr.bf16.mxu0 0
    %901 = vmatpush1.bf16.xpose.msra.mxu0 0
    %902 = vmatprep.subr.bf16.mxu0 0
    %903 = vmatpush1.bf16.xpose.msra.mxu0 0
    %904 = vmatprep.subr.bf16.mxu0 0
    %905 = vmatpush1.bf16.xpose.msra.mxu0 0
    %906 = vmatprep.subr.bf16.mxu0 0
    %907 = vmatpush1.bf16.xpose.msra.mxu0 0
    %908 = vmatprep.subr.bf16.mxu0 0
    %909 = vmatpush1.bf16.xpose.msra.mxu0 %v892
    %910 = vmatprep.subr.bf16.mxu0 0
    %911 = vmatpush2.bf16.xpose.msra.mxu0 0
    %912 = vmatprep.subr.bf16.mxu0 0
    %913 = vmatpush2.bf16.xpose.msra.mxu0 0
    %914 = vmatprep.subr.bf16.mxu0 0
    %915 = vmatpush2.bf16.xpose.msra.mxu0 0
    %916 = vmatprep.subr.bf16.mxu0 0
    %917 = vmatpush2.bf16.xpose.msra.mxu0 0
    %918 = vmatprep.subr.bf16.mxu0 0
    %919 = vmatpush2.bf16.xpose.msra.mxu0 0
    %920 = vmatprep.subr.bf16.mxu0 0
    %921 = vmatpush2.bf16.xpose.msra.mxu0 0
    %922 = vmatprep.subr.bf16.mxu0 0
    %923 = vmatpush2.bf16.xpose.msra.mxu0 0
    %924 = vmatprep.subr.bf16.mxu0 0
    %925 = vmatpush2.bf16.xpose.msra.mxu0 0
    %926 = vmatprep.mubr.bf16.mxu0 0
    %927 = vmatmul.mubr.bf16.gmra.mxu0 %v889
    %v928 = vpop.f32.mrf.mxu0
    %v929 = vadd.f32 0.0, %v928
    %v930 = vpop.f32.mrf.mxu0
    %v931 = vpop.f32.mrf.mxu0
    %v932 = vadd.f32 0.0, %v931
    %v933 = vpop.f32.mrf.mxu0
    %934 = vdwg.mxu0
    %v935 = vmul.f32 %v929, 0.17677669
    %v936 = vmul.f32 %v932, 0.17677669
    %v937 = vadd.f32 %v935, %v563
    %v938 = vadd.f32 %v936, %v563
    %v939 = vsel %vm566, %v937, -inf
    %940 = vmax.xlane.f32.xlu0 %v939
    %v941 = vpop.xlane.xlu0 %940
    %v942 = vsel %vm566, %v938, -inf
    %943 = vmax.xlane.f32.xlu0 %v942
    %v944 = vpop.xlane.xlu0 %943
    %v945 = vsub.f32 %v937, %v941
    %v946 = vsub.f32 %v938, %v944
    %v947 = vmul.f32 %v945, 1.442695
    %v948 = vpow.pop %v947
    %v949 = vmul.f32 %v946, 1.442695
    %v950 = vpow.pop %v949
    %v951 = vsel %vm566, %v948, 0.0
    %952 = vadd.xlane.f32.xlu0 %v951
    %v953 = vpop.xlane.xlu0 %952
    %v954 = vsel %vm566, %v950, 0.0
    %955 = vadd.xlane.f32.xlu0 %v954
    %v956 = vpop.xlane.xlu0 %955
    %v957 = vpack.c.bf16 %v950, %v948
    %v958 = vpack.c.bf16 %v883, %v880
    %v960 = vsel %vm566, %v957, 0
    %962 = vmatprep.subr.bf16.mxu0 0
    %963 = vmatpush1.bf16.msra.mxu0 0
    %964 = vmatprep.subr.bf16.mxu0 0
    %965 = vmatpush1.bf16.msra.mxu0 0
    %966 = vmatprep.subr.bf16.mxu0 0
    %967 = vmatpush1.bf16.msra.mxu0 0
    %968 = vmatprep.subr.bf16.mxu0 0
    %969 = vmatpush1.bf16.msra.mxu0 0
    %970 = vmatprep.subr.bf16.mxu0 0
    %971 = vmatpush1.bf16.msra.mxu0 0
    %972 = vmatprep.subr.bf16.mxu0 0
    %973 = vmatpush1.bf16.msra.mxu0 0
    %974 = vmatprep.subr.bf16.mxu0 0
    %975 = vmatpush1.bf16.msra.mxu0 0
    %976 = vmatprep.subr.bf16.mxu0 0
    %977 = vmatpush1.bf16.msra.mxu0 %v958
    %978 = vmatprep.subr.bf16.mxu0 0
    %979 = vmatpush2.bf16.msra.mxu0 0
    %980 = vmatprep.subr.bf16.mxu0 0
    %981 = vmatpush2.bf16.msra.mxu0 0
    %982 = vmatprep.subr.bf16.mxu0 0
    %983 = vmatpush2.bf16.msra.mxu0 0
    %984 = vmatprep.subr.bf16.mxu0 0
    %985 = vmatpush2.bf16.msra.mxu0 0
    %986 = vmatprep.subr.bf16.mxu0 0
    %987 = vmatpush2.bf16.msra.mxu0 0
    %988 = vmatprep.subr.bf16.mxu0 0
    %989 = vmatpush2.bf16.msra.mxu0 0
    %990 = vmatprep.subr.bf16.mxu0 0
    %991 = vmatpush2.bf16.msra.mxu0 0
    %992 = vmatprep.subr.bf16.mxu0 0
    %993 = vmatpush2.bf16.msra.mxu0 0
    %994 = vmatprep.mubr.bf16.mxu0 0
    %995 = vmatmul.mubr.bf16.gmra.mxu0 %v960
    %v996 = vpop.f32.mrf.mxu0
    %v997 = vadd.f32 0.0, %v996
    %v998 = vpop.f32.mrf.mxu0
    %v999 = vpop.f32.mrf.mxu0
    %v1000 = vadd.f32 0.0, %v999
    %v1001 = vpop.f32.mrf.mxu0
    %1002 = vdwg.mxu0
    %v1003 = vrcp.pop %v953
    %v1004 = vrcp.pop %v956
    %v1005 = vmul.f32 %v997, %v1003
    %v1006 = vmul.f32 %v1000, %v1004
    %v1007 = vpack.c.bf16 %v1006, %v1005
    %s1008 = scalar_lea.vmem %s11, 16
    %v1009 = vld [vmem:[%s1008] sm:$0xf]
    %v1010 = vld [vmem:[%s1008 + $0x4] sm:$0xf]
    %v1011 = vld [vmem:[%s1008 + $0x8] sm:$0xf]
    %v1012 = vld [vmem:[%s1008 + $0xc] sm:$0xf]
    %v1017 = vunpack.c.l.b16 %v1009
    %v1018 = vunpack.c.l.b16 %v1010
    %v1019 = vunpack.c.l.b16 %v1011
    %v1020 = vunpack.c.l.b16 %v1012
    %v1021 = vpack.c.b16 %v1018, %v1017
    %v1022 = vpack.c.b16 %v1020, %v1019
    %v1026 = vsel %vm510, %v1007, 0
    %1028 = vmatprep.subr.bf16.mxu0 0
    %1029 = vmatpush1.bf16.msra.mxu0 0
    %1030 = vmatprep.subr.bf16.mxu0 0
    %1031 = vmatpush1.bf16.msra.mxu0 0
    %1032 = vmatprep.subr.bf16.mxu0 0
    %1033 = vmatpush1.bf16.msra.mxu0 0
    %1034 = vmatprep.subr.bf16.mxu0 0
    %1035 = vmatpush1.bf16.msra.mxu0 0
    %1036 = vmatprep.subr.bf16.mxu0 0
    %1037 = vmatpush1.bf16.msra.mxu0 0
    %1038 = vmatprep.subr.bf16.mxu0 0
    %1039 = vmatpush1.bf16.msra.mxu0 0
    %1040 = vmatprep.subr.bf16.mxu0 0
    %1041 = vmatpush1.bf16.msra.mxu0 %v1022
    %1042 = vmatprep.subr.bf16.mxu0 0
    %1043 = vmatpush1.bf16.msra.mxu0 %v1021
    %1044 = vmatprep.subr.bf16.mxu0 0
    %1045 = vmatpush2.bf16.msra.mxu0 0
    %1046 = vmatprep.subr.bf16.mxu0 0
    %1047 = vmatpush2.bf16.msra.mxu0 0
    %1048 = vmatprep.subr.bf16.mxu0 0
    %1049 = vmatpush2.bf16.msra.mxu0 0
    %1050 = vmatprep.subr.bf16.mxu0 0
    %1051 = vmatpush2.bf16.msra.mxu0 0
    %1052 = vmatprep.subr.bf16.mxu0 0
    %1053 = vmatpush2.bf16.msra.mxu0 0
    %1054 = vmatprep.subr.bf16.mxu0 0
    %1055 = vmatpush2.bf16.msra.mxu0 0
    %1056 = vmatprep.subr.bf16.mxu0 0
    %1057 = vmatpush2.bf16.msra.mxu0 0
    %1058 = vmatprep.subr.bf16.mxu0 0
    %1059 = vmatpush2.bf16.msra.mxu0 0
    %1060 = vmatprep.mubr.bf16.mxu0 0
    %1061 = vmatmul.mubr.bf16.gmra.mxu0 %v1026
    %v1062 = vpop.f32.mrf.mxu0
    %v1063 = vadd.f32 0.0, %v1062
    %v1064 = vpop.f32.mrf.mxu0
    %v1065 = vpop.f32.mrf.mxu0
    %v1066 = vadd.f32 0.0, %v1065
    %v1067 = vpop.f32.mrf.mxu0
    %1068 = vdwg.mxu0
    %v1073 = vunpack.c.l.b16 %v636
    %v1074 = vunpack.c.l.b16 %v637
    %v1075 = vunpack.c.l.b16 %v638
    %v1076 = vunpack.c.l.b16 %v639
    %v1077 = vpack.c.b16 %v1074, %v1073
    %v1078 = vpack.c.b16 %v1076, %v1075
    %v1082 = vsel %vm510, %v635, 0
    %1084 = vmatprep.subr.bf16.mxu0 0
    %1085 = vmatpush1.bf16.msra.mxu0 0
    %1086 = vmatprep.subr.bf16.mxu0 0
    %1087 = vmatpush1.bf16.msra.mxu0 0
    %1088 = vmatprep.subr.bf16.mxu0 0
    %1089 = vmatpush1.bf16.msra.mxu0 0
    %1090 = vmatprep.subr.bf16.mxu0 0
    %1091 = vmatpush1.bf16.msra.mxu0 0
    %1092 = vmatprep.subr.bf16.mxu0 0
    %1093 = vmatpush1.bf16.msra.mxu0 0
    %1094 = vmatprep.subr.bf16.mxu0 0
    %1095 = vmatpush1.bf16.msra.mxu0 0
    %1096 = vmatprep.subr.bf16.mxu0 0
    %1097 = vmatpush1.bf16.msra.mxu0 %v1078
    %1098 = vmatprep.subr.bf16.mxu0 0
    %1099 = vmatpush1.bf16.msra.mxu0 %v1077
    %1100 = vmatprep.subr.bf16.mxu0 0
    %1101 = vmatpush2.bf16.msra.mxu0 0
    %1102 = vmatprep.subr.bf16.mxu0 0
    %1103 = vmatpush2.bf16.msra.mxu0 0
    %1104 = vmatprep.subr.bf16.mxu0 0
    %1105 = vmatpush2.bf16.msra.mxu0 0
    %1106 = vmatprep.subr.bf16.mxu0 0
    %1107 = vmatpush2.bf16.msra.mxu0 0
    %1108 = vmatprep.subr.bf16.mxu0 0
    %1109 = vmatpush2.bf16.msra.mxu0 0
    %1110 = vmatprep.subr.bf16.mxu0 0
    %1111 = vmatpush2.bf16.msra.mxu0 0
    %1112 = vmatprep.subr.bf16.mxu0 0
    %1113 = vmatpush2.bf16.msra.mxu0 0
    %1114 = vmatprep.subr.bf16.mxu0 0
    %1115 = vmatpush2.bf16.msra.mxu0 0
    %1116 = vmatprep.mubr.bf16.mxu0 0
    %1117 = vmatmul.mubr.bf16.gmra.mxu0 %v1082
    %v1118 = vpop.f32.mrf.mxu0
    %v1119 = vadd.f32 %v1063, %v1118
    %v1120 = vpop.f32.mrf.mxu0
    %v1121 = vpop.f32.mrf.mxu0
    %v1122 = vadd.f32 %v1066, %v1121
    %v1123 = vpop.f32.mrf.mxu0
    %1124 = vdwg.mxu0
    %v1125 = vadd.f32 %v81, %v1119
    %v1126 = vadd.f32 %v82, %v1122
    %v1127 = vld [vmem:[%s12] sm:$0x1]
    %v1129 = vlaneseq
    %v1130 = vshrl.u32 %v1129, 7
    %v1131 = vsub.s32 0, %v1130
    %v1132 = vrot.slane %v1127, %v1131
    %v1134 = vadd.f32 %v1125, %v1132
    %v1135 = vadd.f32 %v1126, %v1132
    %v1136 = vld [vmem:[%s13] sm:$0x1]
    %v1137 = vld [vmem:[%s14] sm:$0x1]
    %v1138 = vsel %vm93, %v1134, 0.0
    %1139 = vadd.xlane.f32.xlu0 %v1138
    %v1140 = vpop.xlane.xlu0 %1139
    %v1141 = vsel %vm93, %v1135, 0.0
    %1142 = vadd.xlane.f32.xlu0 %v1141
    %v1143 = vpop.xlane.xlu0 %1142
    %v1144 = vmul.f32 %v1140, %v227
    %v1145 = vmul.f32 %v1143, %v227
    %v1146 = vsub.f32 %v1134, %v1144
    %v1147 = vsub.f32 %v1135, %v1145
    %v1148 = vmul.f32 %v1146, %v1146
    %v1149 = vmul.f32 %v1147, %v1147
    %v1150 = vsel %vm93, %v1148, 0.0
    %1151 = vadd.xlane.f32.xlu0 %v1150
    %v1152 = vpop.xlane.xlu0 %1151
    %v1153 = vsel %vm93, %v1149, 0.0
    %1154 = vadd.xlane.f32.xlu0 %v1153
    %v1155 = vpop.xlane.xlu0 %1154
    %v1156 = vmul.f32 %v1152, %v227
    %v1157 = vmul.f32 %v1155, %v227
    %v1158 = vadd.f32 %v1156, 1e-05
    %v1159 = vadd.f32 %v1157, 1e-05
    %v1160 = vrsqrt.pop %v1158
    %v1161 = vrsqrt.pop %v1159
    %v1162 = vmul.f32 %v1146, %v1160
    %v1163 = vmul.f32 %v1147, %v1161
    %v1165 = vlaneseq
    %v1166 = vshrl.u32 %v1165, 7
    %v1167 = vsub.s32 0, %v1166
    %v1168 = vrot.slane %v1136, %v1167
    %v1170 = vmul.f32 %v1162, %v1168
    %v1171 = vmul.f32 %v1163, %v1168
    %v1173 = vlaneseq
    %v1174 = vshrl.u32 %v1173, 7
    %v1175 = vsub.s32 0, %v1174
    %v1176 = vrot.slane %v1137, %v1175
    %v1178 = vadd.f32 %v1170, %v1176
    %v1179 = vadd.f32 %v1171, %v1176
    %v1180 = vpack.c.bf16 %v1179, %v1178
    %v1181 = vld [vmem:[%s15] sm:$0xff]
    %v1182 = vld [vmem:[%s15 + $0x8] sm:$0xff]
    %v1183 = vld [vmem:[%s15 + $0x10] sm:$0xff]
    %v1184 = vld [vmem:[%s15 + $0x18] sm:$0xff]
    %v1185 = vld [vmem:[%s15 + $0x20] sm:$0xff]
    %v1186 = vld [vmem:[%s15 + $0x28] sm:$0xff]
    %v1187 = vld [vmem:[%s15 + $0x30] sm:$0xff]
    %v1188 = vld [vmem:[%s15 + $0x38] sm:$0xff]
    %v1189 = vld [vmem:[%s16] sm:$0x3]
    %v1191 = vlaneseq
    %v1192 = vshrl.u32 %v1191, 7
    %v1193 = vsub.s32 0, %v1192
    %v1194 = vrot.slane %v1189, %v1193
    %v1195 = vlaneseq
    %v1196 = vshrl.u32 %v1195, 7
    %v1197 = vsub.s32 1, %v1196
    %v1198 = vrot.slane %v1189, %v1197
    %v1209 = vunpack.c.l.b16 %v1181
    %v1210 = vunpack.c.h.b16 %v1181
    %v1211 = vunpack.c.l.b16 %v1182
    %v1212 = vunpack.c.h.b16 %v1182
    %v1213 = vunpack.c.l.b16 %v1183
    %v1214 = vunpack.c.h.b16 %v1183
    %v1215 = vunpack.c.l.b16 %v1184
    %v1216 = vunpack.c.h.b16 %v1184
    %v1217 = vunpack.c.l.b16 %v1185
    %v1218 = vunpack.c.h.b16 %v1185
    %v1219 = vunpack.c.l.b16 %v1186
    %v1220 = vunpack.c.h.b16 %v1186
    %v1221 = vunpack.c.l.b16 %v1187
    %v1222 = vunpack.c.h.b16 %v1187
    %v1223 = vunpack.c.l.b16 %v1188
    %v1224 = vunpack.c.h.b16 %v1188
    %v1225 = vpack.c.b16 %v1211, %v1209
    %v1226 = vpack.c.b16 %v1212, %v1210
    %v1227 = vpack.c.b16 %v1215, %v1213
    %v1228 = vpack.c.b16 %v1216, %v1214
    %v1229 = vpack.c.b16 %v1219, %v1217
    %v1230 = vpack.c.b16 %v1220, %v1218
    %v1231 = vpack.c.b16 %v1223, %v1221
    %v1232 = vpack.c.b16 %v1224, %v1222
    %v1242 = vsel %vm93, %v1180, 0
    %1244 = vmatprep.subr.bf16.mxu0 0
    %1245 = vmatpush1.bf16.msra.mxu0 0
    %1246 = vmatprep.subr.bf16.mxu0 0
    %1247 = vmatpush1.bf16.msra.mxu0 0
    %1248 = vmatprep.subr.bf16.mxu0 0
    %1249 = vmatpush1.bf16.msra.mxu0 0
    %1250 = vmatprep.subr.bf16.mxu0 0
    %1251 = vmatpush1.bf16.msra.mxu0 0
    %1252 = vmatprep.subr.bf16.mxu0 %v1232
    %1253 = vmatpush1.bf16.msra.mxu0 %v1231
    %1254 = vmatprep.subr.bf16.mxu0 %v1230
    %1255 = vmatpush1.bf16.msra.mxu0 %v1229
    %1256 = vmatprep.subr.bf16.mxu0 %v1228
    %1257 = vmatpush1.bf16.msra.mxu0 %v1227
    %1258 = vmatprep.subr.bf16.mxu0 %v1226
    %1259 = vmatpush1.bf16.msra.mxu0 %v1225
    %1260 = vmatprep.subr.bf16.mxu0 0
    %1261 = vmatpush2.bf16.msra.mxu0 0
    %1262 = vmatprep.subr.bf16.mxu0 0
    %1263 = vmatpush2.bf16.msra.mxu0 0
    %1264 = vmatprep.subr.bf16.mxu0 0
    %1265 = vmatpush2.bf16.msra.mxu0 0
    %1266 = vmatprep.subr.bf16.mxu0 0
    %1267 = vmatpush2.bf16.msra.mxu0 0
    %1268 = vmatprep.subr.bf16.mxu0 0
    %1269 = vmatpush2.bf16.msra.mxu0 0
    %1270 = vmatprep.subr.bf16.mxu0 0
    %1271 = vmatpush2.bf16.msra.mxu0 0
    %1272 = vmatprep.subr.bf16.mxu0 0
    %1273 = vmatpush2.bf16.msra.mxu0 0
    %1274 = vmatprep.subr.bf16.mxu0 0
    %1275 = vmatpush2.bf16.msra.mxu0 0
    %1276 = vmatprep.mubr.bf16.mxu0 0
    %1277 = vmatmul.mubr.bf16.gmra.mxu0 %v1242
    %v1278 = vpop.f32.mrf.mxu0
    %v1279 = vadd.f32 %v1194, %v1278
    %v1280 = vpop.f32.mrf.mxu0
    %v1281 = vadd.f32 %v1198, %v1280
    %v1282 = vpop.f32.mrf.mxu0
    %v1283 = vadd.f32 %v1194, %v1282
    %v1284 = vpop.f32.mrf.mxu0
    %v1285 = vadd.f32 %v1198, %v1284
    %1286 = vdwg.mxu0
    %v1287 = vmax.f32 %v1279, 0.0
    %v1288 = vmax.f32 %v1281, 0.0
    %v1289 = vmax.f32 %v1283, 0.0
    %v1290 = vmax.f32 %v1285, 0.0
    %v1291 = vpack.c.bf16 %v1289, %v1287
    %v1292 = vpack.c.bf16 %v1290, %v1288
    %v1293 = vld [vmem:[%s17] sm:$0xf]
    %v1294 = vld [vmem:[%s17 + $0x4] sm:$0xf]
    %v1295 = vld [vmem:[%s17 + $0x8] sm:$0xf]
    %v1296 = vld [vmem:[%s17 + $0xc] sm:$0xf]
    %v1297 = vld [vmem:[%s17 + $0x10] sm:$0xf]
    %v1298 = vld [vmem:[%s17 + $0x14] sm:$0xf]
    %v1299 = vld [vmem:[%s17 + $0x18] sm:$0xf]
    %v1300 = vld [vmem:[%s17 + $0x1c] sm:$0xf]
    %v1301 = vld [vmem:[%s17 + $0x20] sm:$0xf]
    %v1302 = vld [vmem:[%s17 + $0x24] sm:$0xf]
    %v1303 = vld [vmem:[%s17 + $0x28] sm:$0xf]
    %v1304 = vld [vmem:[%s17 + $0x2c] sm:$0xf]
    %v1305 = vld [vmem:[%s17 + $0x30] sm:$0xf]
    %v1306 = vld [vmem:[%s17 + $0x34] sm:$0xf]
    %v1307 = vld [vmem:[%s17 + $0x38] sm:$0xf]
    %v1308 = vld [vmem:[%s17 + $0x3c] sm:$0xf]
    %v1309 = vld [vmem:[%s17 + $0x40] sm:$0xf]
    %v1310 = vld [vmem:[%s17 + $0x44] sm:$0xf]
    %v1311 = vld [vmem:[%s17 + $0x48] sm:$0xf]
    %v1312 = vld [vmem:[%s17 + $0x4c] sm:$0xf]
    %v1313 = vld [vmem:[%s17 + $0x50] sm:$0xf]
    %v1314 = vld [vmem:[%s17 + $0x54] sm:$0xf]
    %v1315 = vld [vmem:[%s17 + $0x58] sm:$0xf]
    %v1316 = vld [vmem:[%s17 + $0x5c] sm:$0xf]
    %v1317 = vld [vmem:[%s17 + $0x60] sm:$0xf]
    %v1318 = vld [vmem:[%s17 + $0x64] sm:$0xf]
    %v1319 = vld [vmem:[%s17 + $0x68] sm:$0xf]
    %v1320 = vld [vmem:[%s17 + $0x6c] sm:$0xf]
    %v1321 = vld [vmem:[%s17 + $0x70] sm:$0xf]
    %v1322 = vld [vmem:[%s17 + $0x74] sm:$0xf]
    %v1323 = vld [vmem:[%s17 + $0x78] sm:$0xf]
    %v1324 = vld [vmem:[%s17 + $0x7c] sm:$0xf]
    %v1325 = vld [vmem:[%s18] sm:$0x1]
    %v1327 = vlaneseq
    %v1328 = vshrl.u32 %v1327, 7
    %v1329 = vsub.s32 0, %v1328
    %v1330 = vrot.slane %v1325, %v1329
    %v1364 = vunpack.c.l.b16 %v1293
    %v1365 = vunpack.c.l.b16 %v1294
    %v1366 = vunpack.c.l.b16 %v1295
    %v1367 = vunpack.c.l.b16 %v1296
    %v1368 = vunpack.c.l.b16 %v1297
    %v1369 = vunpack.c.l.b16 %v1298
    %v1370 = vunpack.c.l.b16 %v1299
    %v1371 = vunpack.c.l.b16 %v1300
    %v1372 = vunpack.c.l.b16 %v1301
    %v1373 = vunpack.c.l.b16 %v1302
    %v1374 = vunpack.c.l.b16 %v1303
    %v1375 = vunpack.c.l.b16 %v1304
    %v1376 = vunpack.c.l.b16 %v1305
    %v1377 = vunpack.c.l.b16 %v1306
    %v1378 = vunpack.c.l.b16 %v1307
    %v1379 = vunpack.c.l.b16 %v1308
    %v1380 = vunpack.c.l.b16 %v1309
    %v1381 = vunpack.c.l.b16 %v1310
    %v1382 = vunpack.c.l.b16 %v1311
    %v1383 = vunpack.c.l.b16 %v1312
    %v1384 = vunpack.c.l.b16 %v1313
    %v1385 = vunpack.c.l.b16 %v1314
    %v1386 = vunpack.c.l.b16 %v1315
    %v1387 = vunpack.c.l.b16 %v1316
    %v1388 = vunpack.c.l.b16 %v1317
    %v1389 = vunpack.c.l.b16 %v1318
    %v1390 = vunpack.c.l.b16 %v1319
    %v1391 = vunpack.c.l.b16 %v1320
    %v1392 = vunpack.c.l.b16 %v1321
    %v1393 = vunpack.c.l.b16 %v1322
    %v1394 = vunpack.c.l.b16 %v1323
    %v1395 = vunpack.c.l.b16 %v1324
    %v1396 = vpack.c.b16 %v1365, %v1364
    %v1397 = vpack.c.b16 %v1367, %v1366
    %v1398 = vpack.c.b16 %v1369, %v1368
    %v1399 = vpack.c.b16 %v1371, %v1370
    %v1400 = vpack.c.b16 %v1373, %v1372
    %v1401 = vpack.c.b16 %v1375, %v1374
    %v1402 = vpack.c.b16 %v1377, %v1376
    %v1403 = vpack.c.b16 %v1379, %v1378
    %v1404 = vpack.c.b16 %v1381, %v1380
    %v1405 = vpack.c.b16 %v1383, %v1382
    %v1406 = vpack.c.b16 %v1385, %v1384
    %v1407 = vpack.c.b16 %v1387, %v1386
    %v1408 = vpack.c.b16 %v1389, %v1388
    %v1409 = vpack.c.b16 %v1391, %v1390
    %v1410 = vpack.c.b16 %v1393, %v1392
    %v1411 = vpack.c.b16 %v1395, %v1394
    %1428 = vmatprep.subr.bf16.mxu0 0
    %1429 = vmatpush1.bf16.msra.mxu0 %v1403
    %1430 = vmatprep.subr.bf16.mxu0 0
    %1431 = vmatpush1.bf16.msra.mxu0 %v1402
    %1432 = vmatprep.subr.bf16.mxu0 0
    %1433 = vmatpush1.bf16.msra.mxu0 %v1401
    %1434 = vmatprep.subr.bf16.mxu0 0
    %1435 = vmatpush1.bf16.msra.mxu0 %v1400
    %1436 = vmatprep.subr.bf16.mxu0 0
    %1437 = vmatpush1.bf16.msra.mxu0 %v1399
    %1438 = vmatprep.subr.bf16.mxu0 0
    %1439 = vmatpush1.bf16.msra.mxu0 %v1398
    %1440 = vmatprep.subr.bf16.mxu0 0
    %1441 = vmatpush1.bf16.msra.mxu0 %v1397
    %1442 = vmatprep.subr.bf16.mxu0 0
    %1443 = vmatpush1.bf16.msra.mxu0 %v1396
    %1444 = vmatprep.subr.bf16.mxu0 0
    %1445 = vmatpush2.bf16.msra.mxu0 %v1411
    %1446 = vmatprep.subr.bf16.mxu0 0
    %1447 = vmatpush2.bf16.msra.mxu0 %v1410
    %1448 = vmatprep.subr.bf16.mxu0 0
    %1449 = vmatpush2.bf16.msra.mxu0 %v1409
    %1450 = vmatprep.subr.bf16.mxu0 0
    %1451 = vmatpush2.bf16.msra.mxu0 %v1408
    %1452 = vmatprep.subr.bf16.mxu0 0
    %1453 = vmatpush2.bf16.msra.mxu0 %v1407
    %1454 = vmatprep.subr.bf16.mxu0 0
    %1455 = vmatpush2.bf16.msra.mxu0 %v1406
    %1456 = vmatprep.subr.bf16.mxu0 0
    %1457 = vmatpush2.bf16.msra.mxu0 %v1405
    %1458 = vmatprep.subr.bf16.mxu0 0
    %1459 = vmatpush2.bf16.msra.mxu0 %v1404
    %1460 = vmatprep.mubr.bf16.mxu0 %v1292
    %1461 = vmatmul.mubr.bf16.gmra.mxu0 %v1291
    %v1462 = vpop.f32.mrf.mxu0
    %v1463 = vadd.f32 %v1330, %v1462
    %v1464 = vpop.f32.mrf.mxu0
    %v1465 = vpop.f32.mrf.mxu0
    %v1466 = vadd.f32 %v1330, %v1465
    %v1467 = vpop.f32.mrf.mxu0
    %1468 = vdwg.mxu0
    %v1469 = vadd.f32 %v1134, %v1463
    %v1470 = vadd.f32 %v1135, %v1466
    %v1471 = vsel %vm212, 1, 0
    %v1472 = vsel %vm213, 1, 0
    %1473 = vset.pattern.permute.xlu0 0
    %1474 = vperm.xlu0 %1473, %v1471
    %v1475 = vpop.permute.xlu0 %1474
    %1476 = vset.pattern.permute.xlu0 0
    %1477 = vperm.xlu0 %1476, %v1472
    %v1478 = vpop.permute.xlu0 %1477
    %vm1479 = vcmp.eq.s32.totalorder %v1475, 1
    %vm1480 = vcmp.eq.s32.totalorder %v1478, 1
    %v1481 = vsel %vm1479, %v1469, %v81
    %v1482 = vsel %vm1480, %v1470, %v82
    %vm1483 = vcmp.gt.f32.partialorder %v117, 0.16666667
    %vm1484 = vcmp.gt.f32.partialorder %v119, 0.16666667
    %vm1485 = vcmp.gt.f32.partialorder %v211, 0.16666667
    %v1486 = vsel %vm1485, 1, 0
    %v1487 = vcvt.s32.f32 %v1486
    %v1488 = vadd.f32 %v217, %v1487
    %v1489 = vsel %vm1485, 0.0, -1e+30
    %s1490 = scalar_lea.vmem %s3, 1
    %v1491 = vld [vmem:[%s1490] sm:$0x1]
    %s1492 = scalar_lea.vmem %s4, 1
    %v1493 = vld [vmem:[%s1492] sm:$0x1]
    %v1494 = vsel %vm93, %v1481, 0.0
    %1495 = vadd.xlane.f32.xlu0 %v1494
    %v1496 = vpop.xlane.xlu0 %1495
    %v1497 = vsel %vm93, %v1482, 0.0
    %1498 = vadd.xlane.f32.xlu0 %v1497
    %v1499 = vpop.xlane.xlu0 %1498
    %v1500 = vmul.f32 %v1496, %v227
    %v1501 = vmul.f32 %v1499, %v227
    %v1502 = vsub.f32 %v1481, %v1500
    %v1503 = vsub.f32 %v1482, %v1501
    %v1504 = vmul.f32 %v1502, %v1502
    %v1505 = vmul.f32 %v1503, %v1503
    %v1506 = vsel %vm93, %v1504, 0.0
    %1507 = vadd.xlane.f32.xlu0 %v1506
    %v1508 = vpop.xlane.xlu0 %1507
    %v1509 = vsel %vm93, %v1505, 0.0
    %1510 = vadd.xlane.f32.xlu0 %v1509
    %v1511 = vpop.xlane.xlu0 %1510
    %v1512 = vmul.f32 %v1508, %v227
    %v1513 = vmul.f32 %v1511, %v227
    %v1514 = vadd.f32 %v1512, 1e-05
    %v1515 = vadd.f32 %v1513, 1e-05
    %v1516 = vrsqrt.pop %v1514
    %v1517 = vrsqrt.pop %v1515
    %v1518 = vmul.f32 %v1502, %v1516
    %v1519 = vmul.f32 %v1503, %v1517
    %v1521 = vlaneseq
    %v1522 = vshrl.u32 %v1521, 7
    %v1523 = vsub.s32 0, %v1522
    %v1524 = vrot.slane %v1491, %v1523
    %v1526 = vmul.f32 %v1518, %v1524
    %v1527 = vmul.f32 %v1519, %v1524
    %v1529 = vlaneseq
    %v1530 = vshrl.u32 %v1529, 7
    %v1531 = vsub.s32 0, %v1530
    %v1532 = vrot.slane %v1493, %v1531
    %v1534 = vadd.f32 %v1526, %v1532
    %v1535 = vadd.f32 %v1527, %v1532
    %v1536 = vpack.c.bf16 %v1535, %v1534
    %s1537 = scalar_lea.vmem %s5, 64
    %v1538 = vld [vmem:[%s1537] sm:$0xf]
    %v1539 = vld [vmem:[%s1537 + $0x4] sm:$0xf]
    %v1540 = vld [vmem:[%s1537 + $0x8] sm:$0xf]
    %v1541 = vld [vmem:[%s1537 + $0xc] sm:$0xf]
    %v1542 = vld [vmem:[%s1537 + $0x10] sm:$0xf]
    %v1543 = vld [vmem:[%s1537 + $0x14] sm:$0xf]
    %v1544 = vld [vmem:[%s1537 + $0x18] sm:$0xf]
    %v1545 = vld [vmem:[%s1537 + $0x1c] sm:$0xf]
    %s1546 = scalar_lea.vmem %s6, 2
    %v1547 = vld [vmem:[%s1546] sm:$0x1]
    %v1549 = vlaneseq
    %v1550 = vshrl.u32 %v1549, 7
    %v1551 = vsub.s32 0, %v1550
    %v1552 = vrot.slane %v1547, %v1551
    %v1562 = vunpack.c.l.b16 %v1538
    %v1563 = vunpack.c.l.b16 %v1539
    %v1564 = vunpack.c.l.b16 %v1540
    %v1565 = vunpack.c.l.b16 %v1541
    %v1566 = vunpack.c.l.b16 %v1542
    %v1567 = vunpack.c.l.b16 %v1543
    %v1568 = vunpack.c.l.b16 %v1544
    %v1569 = vunpack.c.l.b16 %v1545
    %v1570 = vpack.c.b16 %v1563, %v1562
    %v1571 = vpack.c.b16 %v1565, %v1564
    %v1572 = vpack.c.b16 %v1567, %v1566
    %v1573 = vpack.c.b16 %v1569, %v1568
    %v1579 = vsel %vm93, %v1536, 0
    %1581 = vmatprep.subr.bf16.mxu0 0
    %1582 = vmatpush1.bf16.msra.mxu0 0
    %1583 = vmatprep.subr.bf16.mxu0 0
    %1584 = vmatpush1.bf16.msra.mxu0 0
    %1585 = vmatprep.subr.bf16.mxu0 0
    %1586 = vmatpush1.bf16.msra.mxu0 0
    %1587 = vmatprep.subr.bf16.mxu0 0
    %1588 = vmatpush1.bf16.msra.mxu0 0
    %1589 = vmatprep.subr.bf16.mxu0 0
    %1590 = vmatpush1.bf16.msra.mxu0 %v1573
    %1591 = vmatprep.subr.bf16.mxu0 0
    %1592 = vmatpush1.bf16.msra.mxu0 %v1572
    %1593 = vmatprep.subr.bf16.mxu0 0
    %1594 = vmatpush1.bf16.msra.mxu0 %v1571
    %1595 = vmatprep.subr.bf16.mxu0 0
    %1596 = vmatpush1.bf16.msra.mxu0 %v1570
    %1597 = vmatprep.subr.bf16.mxu0 0
    %1598 = vmatpush2.bf16.msra.mxu0 0
    %1599 = vmatprep.subr.bf16.mxu0 0
    %1600 = vmatpush2.bf16.msra.mxu0 0
    %1601 = vmatprep.subr.bf16.mxu0 0
    %1602 = vmatpush2.bf16.msra.mxu0 0
    %1603 = vmatprep.subr.bf16.mxu0 0
    %1604 = vmatpush2.bf16.msra.mxu0 0
    %1605 = vmatprep.subr.bf16.mxu0 0
    %1606 = vmatpush2.bf16.msra.mxu0 0
    %1607 = vmatprep.subr.bf16.mxu0 0
    %1608 = vmatpush2.bf16.msra.mxu0 0
    %1609 = vmatprep.subr.bf16.mxu0 0
    %1610 = vmatpush2.bf16.msra.mxu0 0
    %1611 = vmatprep.subr.bf16.mxu0 0
    %1612 = vmatpush2.bf16.msra.mxu0 0
    %1613 = vmatprep.mubr.bf16.mxu0 0
    %1614 = vmatmul.mubr.bf16.gmra.mxu0 %v1579
    %v1615 = vpop.f32.mrf.mxu0
    %v1616 = vadd.f32 %v1552, %v1615
    %v1617 = vpop.f32.mrf.mxu0
    %v1618 = vpop.f32.mrf.mxu0
    %v1619 = vadd.f32 %v1552, %v1618
    %v1620 = vpop.f32.mrf.mxu0
    %1621 = vdwg.mxu0
    %s1622 = scalar_lea.vmem %s7, 64
    %v1623 = vld [vmem:[%s1622] sm:$0xf]
    %v1624 = vld [vmem:[%s1622 + $0x4] sm:$0xf]
    %v1625 = vld [vmem:[%s1622 + $0x8] sm:$0xf]
    %v1626 = vld [vmem:[%s1622 + $0xc] sm:$0xf]
    %v1627 = vld [vmem:[%s1622 + $0x10] sm:$0xf]
    %v1628 = vld [vmem:[%s1622 + $0x14] sm:$0xf]
    %v1629 = vld [vmem:[%s1622 + $0x18] sm:$0xf]
    %v1630 = vld [vmem:[%s1622 + $0x1c] sm:$0xf]
    %s1631 = scalar_lea.vmem %s8, 2
    %v1632 = vld [vmem:[%s1631] sm:$0x1]
    %v1634 = vlaneseq
    %v1635 = vshrl.u32 %v1634, 7
    %v1636 = vsub.s32 0, %v1635
    %v1637 = vrot.slane %v1632, %v1636
    %v1647 = vunpack.c.l.b16 %v1623
    %v1648 = vunpack.c.l.b16 %v1624
    %v1649 = vunpack.c.l.b16 %v1625
    %v1650 = vunpack.c.l.b16 %v1626
    %v1651 = vunpack.c.l.b16 %v1627
    %v1652 = vunpack.c.l.b16 %v1628
    %v1653 = vunpack.c.l.b16 %v1629
    %v1654 = vunpack.c.l.b16 %v1630
    %v1655 = vpack.c.b16 %v1648, %v1647
    %v1656 = vpack.c.b16 %v1650, %v1649
    %v1657 = vpack.c.b16 %v1652, %v1651
    %v1658 = vpack.c.b16 %v1654, %v1653
    %1663 = vmatprep.subr.bf16.mxu0 0
    %1664 = vmatpush1.bf16.msra.mxu0 0
    %1665 = vmatprep.subr.bf16.mxu0 0
    %1666 = vmatpush1.bf16.msra.mxu0 0
    %1667 = vmatprep.subr.bf16.mxu0 0
    %1668 = vmatpush1.bf16.msra.mxu0 0
    %1669 = vmatprep.subr.bf16.mxu0 0
    %1670 = vmatpush1.bf16.msra.mxu0 0
    %1671 = vmatprep.subr.bf16.mxu0 0
    %1672 = vmatpush1.bf16.msra.mxu0 %v1658
    %1673 = vmatprep.subr.bf16.mxu0 0
    %1674 = vmatpush1.bf16.msra.mxu0 %v1657
    %1675 = vmatprep.subr.bf16.mxu0 0
    %1676 = vmatpush1.bf16.msra.mxu0 %v1656
    %1677 = vmatprep.subr.bf16.mxu0 0
    %1678 = vmatpush1.bf16.msra.mxu0 %v1655
    %1679 = vmatprep.subr.bf16.mxu0 0
    %1680 = vmatpush2.bf16.msra.mxu0 0
    %1681 = vmatprep.subr.bf16.mxu0 0
    %1682 = vmatpush2.bf16.msra.mxu0 0
    %1683 = vmatprep.subr.bf16.mxu0 0
    %1684 = vmatpush2.bf16.msra.mxu0 0
    %1685 = vmatprep.subr.bf16.mxu0 0
    %1686 = vmatpush2.bf16.msra.mxu0 0
    %1687 = vmatprep.subr.bf16.mxu0 0
    %1688 = vmatpush2.bf16.msra.mxu0 0
    %1689 = vmatprep.subr.bf16.mxu0 0
    %1690 = vmatpush2.bf16.msra.mxu0 0
    %1691 = vmatprep.subr.bf16.mxu0 0
    %1692 = vmatpush2.bf16.msra.mxu0 0
    %1693 = vmatprep.subr.bf16.mxu0 0
    %1694 = vmatpush2.bf16.msra.mxu0 0
    %1695 = vmatprep.mubr.bf16.mxu0 0
    %1696 = vmatmul.mubr.bf16.gmra.mxu0 %v1579
    %v1697 = vpop.f32.mrf.mxu0
    %v1698 = vadd.f32 %v1637, %v1697
    %v1699 = vpop.f32.mrf.mxu0
    %v1700 = vpop.f32.mrf.mxu0
    %v1701 = vadd.f32 %v1637, %v1700
    %v1702 = vpop.f32.mrf.mxu0
    %1703 = vdwg.mxu0
    %s1704 = scalar_lea.vmem %s9, 64
    %v1705 = vld [vmem:[%s1704] sm:$0xf]
    %v1706 = vld [vmem:[%s1704 + $0x4] sm:$0xf]
    %v1707 = vld [vmem:[%s1704 + $0x8] sm:$0xf]
    %v1708 = vld [vmem:[%s1704 + $0xc] sm:$0xf]
    %v1709 = vld [vmem:[%s1704 + $0x10] sm:$0xf]
    %v1710 = vld [vmem:[%s1704 + $0x14] sm:$0xf]
    %v1711 = vld [vmem:[%s1704 + $0x18] sm:$0xf]
    %v1712 = vld [vmem:[%s1704 + $0x1c] sm:$0xf]
    %s1713 = scalar_lea.vmem %s10, 2
    %v1714 = vld [vmem:[%s1713] sm:$0x1]
    %v1716 = vlaneseq
    %v1717 = vshrl.u32 %v1716, 7
    %v1718 = vsub.s32 0, %v1717
    %v1719 = vrot.slane %v1714, %v1718
    %v1729 = vunpack.c.l.b16 %v1705
    %v1730 = vunpack.c.l.b16 %v1706
    %v1731 = vunpack.c.l.b16 %v1707
    %v1732 = vunpack.c.l.b16 %v1708
    %v1733 = vunpack.c.l.b16 %v1709
    %v1734 = vunpack.c.l.b16 %v1710
    %v1735 = vunpack.c.l.b16 %v1711
    %v1736 = vunpack.c.l.b16 %v1712
    %v1737 = vpack.c.b16 %v1730, %v1729
    %v1738 = vpack.c.b16 %v1732, %v1731
    %v1739 = vpack.c.b16 %v1734, %v1733
    %v1740 = vpack.c.b16 %v1736, %v1735
    %1745 = vmatprep.subr.bf16.mxu0 0
    %1746 = vmatpush1.bf16.msra.mxu0 0
    %1747 = vmatprep.subr.bf16.mxu0 0
    %1748 = vmatpush1.bf16.msra.mxu0 0
    %1749 = vmatprep.subr.bf16.mxu0 0
    %1750 = vmatpush1.bf16.msra.mxu0 0
    %1751 = vmatprep.subr.bf16.mxu0 0
    %1752 = vmatpush1.bf16.msra.mxu0 0
    %1753 = vmatprep.subr.bf16.mxu0 0
    %1754 = vmatpush1.bf16.msra.mxu0 %v1740
    %1755 = vmatprep.subr.bf16.mxu0 0
    %1756 = vmatpush1.bf16.msra.mxu0 %v1739
    %1757 = vmatprep.subr.bf16.mxu0 0
    %1758 = vmatpush1.bf16.msra.mxu0 %v1738
    %1759 = vmatprep.subr.bf16.mxu0 0
    %1760 = vmatpush1.bf16.msra.mxu0 %v1737
    %1761 = vmatprep.subr.bf16.mxu0 0
    %1762 = vmatpush2.bf16.msra.mxu0 0
    %1763 = vmatprep.subr.bf16.mxu0 0
    %1764 = vmatpush2.bf16.msra.mxu0 0
    %1765 = vmatprep.subr.bf16.mxu0 0
    %1766 = vmatpush2.bf16.msra.mxu0 0
    %1767 = vmatprep.subr.bf16.mxu0 0
    %1768 = vmatpush2.bf16.msra.mxu0 0
    %1769 = vmatprep.subr.bf16.mxu0 0
    %1770 = vmatpush2.bf16.msra.mxu0 0
    %1771 = vmatprep.subr.bf16.mxu0 0
    %1772 = vmatpush2.bf16.msra.mxu0 0
    %1773 = vmatprep.subr.bf16.mxu0 0
    %1774 = vmatpush2.bf16.msra.mxu0 0
    %1775 = vmatprep.subr.bf16.mxu0 0
    %1776 = vmatpush2.bf16.msra.mxu0 0
    %1777 = vmatprep.mubr.bf16.mxu0 0
    %1778 = vmatmul.mubr.bf16.gmra.mxu0 %v1579
    %v1779 = vpop.f32.mrf.mxu0
    %v1780 = vadd.f32 %v1719, %v1779
    %v1781 = vpop.f32.mrf.mxu0
    %v1782 = vpop.f32.mrf.mxu0
    %v1783 = vadd.f32 %v1719, %v1782
    %v1784 = vpop.f32.mrf.mxu0
    %1785 = vdwg.mxu0
    %v1786 = vpack.c.bf16 %v1619, %v1616
    %v1787 = vpack.c.bf16 %v1701, %v1698
    %v1789 = vsel %vm510, %v1786, 0
    %v1792 = vsel %vm510, %v1787, 0
    %1794 = vmatprep.subr.bf16.mxu0 0
    %1795 = vmatpush1.bf16.xpose.msra.mxu0 0
    %1796 = vmatprep.subr.bf16.mxu0 0
    %1797 = vmatpush1.bf16.xpose.msra.mxu0 0
    %1798 = vmatprep.subr.bf16.mxu0 0
    %1799 = vmatpush1.bf16.xpose.msra.mxu0 0
    %1800 = vmatprep.subr.bf16.mxu0 0
    %1801 = vmatpush1.bf16.xpose.msra.mxu0 0
    %1802 = vmatprep.subr.bf16.mxu0 0
    %1803 = vmatpush1.bf16.xpose.msra.mxu0 0
    %1804 = vmatprep.subr.bf16.mxu0 0
    %1805 = vmatpush1.bf16.xpose.msra.mxu0 0
    %1806 = vmatprep.subr.bf16.mxu0 0
    %1807 = vmatpush1.bf16.xpose.msra.mxu0 0
    %1808 = vmatprep.subr.bf16.mxu0 0
    %1809 = vmatpush1.bf16.xpose.msra.mxu0 %v1792
    %1810 = vmatprep.subr.bf16.mxu0 0
    %1811 = vmatpush2.bf16.xpose.msra.mxu0 0
    %1812 = vmatprep.subr.bf16.mxu0 0
    %1813 = vmatpush2.bf16.xpose.msra.mxu0 0
    %1814 = vmatprep.subr.bf16.mxu0 0
    %1815 = vmatpush2.bf16.xpose.msra.mxu0 0
    %1816 = vmatprep.subr.bf16.mxu0 0
    %1817 = vmatpush2.bf16.xpose.msra.mxu0 0
    %1818 = vmatprep.subr.bf16.mxu0 0
    %1819 = vmatpush2.bf16.xpose.msra.mxu0 0
    %1820 = vmatprep.subr.bf16.mxu0 0
    %1821 = vmatpush2.bf16.xpose.msra.mxu0 0
    %1822 = vmatprep.subr.bf16.mxu0 0
    %1823 = vmatpush2.bf16.xpose.msra.mxu0 0
    %1824 = vmatprep.subr.bf16.mxu0 0
    %1825 = vmatpush2.bf16.xpose.msra.mxu0 0
    %1826 = vmatprep.mubr.bf16.mxu0 0
    %1827 = vmatmul.mubr.bf16.gmra.mxu0 %v1789
    %v1828 = vpop.f32.mrf.mxu0
    %v1829 = vadd.f32 0.0, %v1828
    %v1830 = vpop.f32.mrf.mxu0
    %v1831 = vpop.f32.mrf.mxu0
    %v1832 = vadd.f32 0.0, %v1831
    %v1833 = vpop.f32.mrf.mxu0
    %1834 = vdwg.mxu0
    %v1835 = vmul.f32 %v1829, 0.17677669
    %v1836 = vmul.f32 %v1832, 0.17677669
    %v1837 = vlaneseq
    %v1838 = vshrl.u32 %v1837, 7
    %v1839 = vsub.s32 0, %v1838
    %v1840 = vrot.slane %v1489, %v1839
    %v1841 = vadd.f32 %v1835, %v1840
    %v1842 = vadd.f32 %v1836, %v1840
    %v1843 = vsel %vm566, %v1841, -inf
    %1844 = vmax.xlane.f32.xlu0 %v1843
    %v1845 = vpop.xlane.xlu0 %1844
    %v1846 = vsel %vm566, %v1842, -inf
    %1847 = vmax.xlane.f32.xlu0 %v1846
    %v1848 = vpop.xlane.xlu0 %1847
    %v1849 = vsub.f32 %v1841, %v1845
    %v1850 = vsub.f32 %v1842, %v1848
    %v1851 = vmul.f32 %v1849, 1.442695
    %v1852 = vpow.pop %v1851
    %v1853 = vmul.f32 %v1850, 1.442695
    %v1854 = vpow.pop %v1853
    %v1855 = vsel %vm566, %v1852, 0.0
    %1856 = vadd.xlane.f32.xlu0 %v1855
    %v1857 = vpop.xlane.xlu0 %1856
    %v1858 = vsel %vm566, %v1854, 0.0
    %1859 = vadd.xlane.f32.xlu0 %v1858
    %v1860 = vpop.xlane.xlu0 %1859
    %v1861 = vpack.c.bf16 %v1854, %v1852
    %v1862 = vpack.c.bf16 %v1783, %v1780
    %v1864 = vsel %vm566, %v1861, 0
    %1866 = vmatprep.subr.bf16.mxu0 0
    %1867 = vmatpush1.bf16.msra.mxu0 0
    %1868 = vmatprep.subr.bf16.mxu0 0
    %1869 = vmatpush1.bf16.msra.mxu0 0
    %1870 = vmatprep.subr.bf16.mxu0 0
    %1871 = vmatpush1.bf16.msra.mxu0 0
    %1872 = vmatprep.subr.bf16.mxu0 0
    %1873 = vmatpush1.bf16.msra.mxu0 0
    %1874 = vmatprep.subr.bf16.mxu0 0
    %1875 = vmatpush1.bf16.msra.mxu0 0
    %1876 = vmatprep.subr.bf16.mxu0 0
    %1877 = vmatpush1.bf16.msra.mxu0 0
    %1878 = vmatprep.subr.bf16.mxu0 0
    %1879 = vmatpush1.bf16.msra.mxu0 0
    %1880 = vmatprep.subr.bf16.mxu0 0
    %1881 = vmatpush1.bf16.msra.mxu0 %v1862
    %1882 = vmatprep.subr.bf16.mxu0 0
    %1883 = vmatpush2.bf16.msra.mxu0 0
    %1884 = vmatprep.subr.bf16.mxu0 0
    %1885 = vmatpush2.bf16.msra.mxu0 0
    %1886 = vmatprep.subr.bf16.mxu0 0
    %1887 = vmatpush2.bf16.msra.mxu0 0
    %1888 = vmatprep.subr.bf16.mxu0 0
    %1889 = vmatpush2.bf16.msra.mxu0 0
    %1890 = vmatprep.subr.bf16.mxu0 0
    %1891 = vmatpush2.bf16.msra.mxu0 0
    %1892 = vmatprep.subr.bf16.mxu0 0
    %1893 = vmatpush2.bf16.msra.mxu0 0
    %1894 = vmatprep.subr.bf16.mxu0 0
    %1895 = vmatpush2.bf16.msra.mxu0 0
    %1896 = vmatprep.subr.bf16.mxu0 0
    %1897 = vmatpush2.bf16.msra.mxu0 0
    %1898 = vmatprep.mubr.bf16.mxu0 0
    %1899 = vmatmul.mubr.bf16.gmra.mxu0 %v1864
    %v1900 = vpop.f32.mrf.mxu0
    %v1901 = vadd.f32 0.0, %v1900
    %v1902 = vpop.f32.mrf.mxu0
    %v1903 = vpop.f32.mrf.mxu0
    %v1904 = vadd.f32 0.0, %v1903
    %v1905 = vpop.f32.mrf.mxu0
    %1906 = vdwg.mxu0
    %v1907 = vrcp.pop %v1857
    %v1908 = vrcp.pop %v1860
    %v1909 = vmul.f32 %v1901, %v1907
    %v1910 = vmul.f32 %v1904, %v1908
    %v1911 = vpack.c.bf16 %v1910, %v1909
    %s1912 = scalar_lea.vmem %s11, 32
    %v1913 = vld [vmem:[%s1912] sm:$0xf]
    %v1914 = vld [vmem:[%s1912 + $0x4] sm:$0xf]
    %v1915 = vld [vmem:[%s1912 + $0x8] sm:$0xf]
    %v1916 = vld [vmem:[%s1912 + $0xc] sm:$0xf]
    %s1917 = scalar_lea.vmem %s5, 96
    %v1918 = vld [vmem:[%s1917] sm:$0xf]
    %v1919 = vld [vmem:[%s1917 + $0x4] sm:$0xf]
    %v1920 = vld [vmem:[%s1917 + $0x8] sm:$0xf]
    %v1921 = vld [vmem:[%s1917 + $0xc] sm:$0xf]
    %v1922 = vld [vmem:[%s1917 + $0x10] sm:$0xf]
    %v1923 = vld [vmem:[%s1917 + $0x14] sm:$0xf]
    %v1924 = vld [vmem:[%s1917 + $0x18] sm:$0xf]
    %v1925 = vld [vmem:[%s1917 + $0x1c] sm:$0xf]
    %s1926 = scalar_lea.vmem %s6, 3
    %v1927 = vld [vmem:[%s1926] sm:$0x1]
    %v1929 = vlaneseq
    %v1930 = vshrl.u32 %v1929, 7
    %v1931 = vsub.s32 0, %v1930
    %v1932 = vrot.slane %v1927, %v1931
    %v1942 = vunpack.c.l.b16 %v1918
    %v1943 = vunpack.c.l.b16 %v1919
    %v1944 = vunpack.c.l.b16 %v1920
    %v1945 = vunpack.c.l.b16 %v1921
    %v1946 = vunpack.c.l.b16 %v1922
    %v1947 = vunpack.c.l.b16 %v1923
    %v1948 = vunpack.c.l.b16 %v1924
    %v1949 = vunpack.c.l.b16 %v1925
    %v1950 = vpack.c.b16 %v1943, %v1942
    %v1951 = vpack.c.b16 %v1945, %v1944
    %v1952 = vpack.c.b16 %v1947, %v1946
    %v1953 = vpack.c.b16 %v1949, %v1948
    %1958 = vmatprep.subr.bf16.mxu0 0
    %1959 = vmatpush1.bf16.msra.mxu0 0
    %1960 = vmatprep.subr.bf16.mxu0 0
    %1961 = vmatpush1.bf16.msra.mxu0 0
    %1962 = vmatprep.subr.bf16.mxu0 0
    %1963 = vmatpush1.bf16.msra.mxu0 0
    %1964 = vmatprep.subr.bf16.mxu0 0
    %1965 = vmatpush1.bf16.msra.mxu0 0
    %1966 = vmatprep.subr.bf16.mxu0 0
    %1967 = vmatpush1.bf16.msra.mxu0 %v1953
    %1968 = vmatprep.subr.bf16.mxu0 0
    %1969 = vmatpush1.bf16.msra.mxu0 %v1952
    %1970 = vmatprep.subr.bf16.mxu0 0
    %1971 = vmatpush1.bf16.msra.mxu0 %v1951
    %1972 = vmatprep.subr.bf16.mxu0 0
    %1973 = vmatpush1.bf16.msra.mxu0 %v1950
    %1974 = vmatprep.subr.bf16.mxu0 0
    %1975 = vmatpush2.bf16.msra.mxu0 0
    %1976 = vmatprep.subr.bf16.mxu0 0
    %1977 = vmatpush2.bf16.msra.mxu0 0
    %1978 = vmatprep.subr.bf16.mxu0 0
    %1979 = vmatpush2.bf16.msra.mxu0 0
    %1980 = vmatprep.subr.bf16.mxu0 0
    %1981 = vmatpush2.bf16.msra.mxu0 0
    %1982 = vmatprep.subr.bf16.mxu0 0
    %1983 = vmatpush2.bf16.msra.mxu0 0
    %1984 = vmatprep.subr.bf16.mxu0 0
    %1985 = vmatpush2.bf16.msra.mxu0 0
    %1986 = vmatprep.subr.bf16.mxu0 0
    %1987 = vmatpush2.bf16.msra.mxu0 0
    %1988 = vmatprep.subr.bf16.mxu0 0
    %1989 = vmatpush2.bf16.msra.mxu0 0
    %1990 = vmatprep.mubr.bf16.mxu0 0
    %1991 = vmatmul.mubr.bf16.gmra.mxu0 %v1579
    %v1992 = vpop.f32.mrf.mxu0
    %v1993 = vadd.f32 %v1932, %v1992
    %v1994 = vpop.f32.mrf.mxu0
    %v1995 = vpop.f32.mrf.mxu0
    %v1996 = vadd.f32 %v1932, %v1995
    %v1997 = vpop.f32.mrf.mxu0
    %1998 = vdwg.mxu0
    %s1999 = scalar_lea.vmem %s7, 96
    %v2000 = vld [vmem:[%s1999] sm:$0xf]
    %v2001 = vld [vmem:[%s1999 + $0x4] sm:$0xf]
    %v2002 = vld [vmem:[%s1999 + $0x8] sm:$0xf]
    %v2003 = vld [vmem:[%s1999 + $0xc] sm:$0xf]
    %v2004 = vld [vmem:[%s1999 + $0x10] sm:$0xf]
    %v2005 = vld [vmem:[%s1999 + $0x14] sm:$0xf]
    %v2006 = vld [vmem:[%s1999 + $0x18] sm:$0xf]
    %v2007 = vld [vmem:[%s1999 + $0x1c] sm:$0xf]
    %s2008 = scalar_lea.vmem %s8, 3
    %v2009 = vld [vmem:[%s2008] sm:$0x1]
    %v2011 = vlaneseq
    %v2012 = vshrl.u32 %v2011, 7
    %v2013 = vsub.s32 0, %v2012
    %v2014 = vrot.slane %v2009, %v2013
    %v2024 = vunpack.c.l.b16 %v2000
    %v2025 = vunpack.c.l.b16 %v2001
    %v2026 = vunpack.c.l.b16 %v2002
    %v2027 = vunpack.c.l.b16 %v2003
    %v2028 = vunpack.c.l.b16 %v2004
    %v2029 = vunpack.c.l.b16 %v2005
    %v2030 = vunpack.c.l.b16 %v2006
    %v2031 = vunpack.c.l.b16 %v2007
    %v2032 = vpack.c.b16 %v2025, %v2024
    %v2033 = vpack.c.b16 %v2027, %v2026
    %v2034 = vpack.c.b16 %v2029, %v2028
    %v2035 = vpack.c.b16 %v2031, %v2030
    %2040 = vmatprep.subr.bf16.mxu0 0
    %2041 = vmatpush1.bf16.msra.mxu0 0
    %2042 = vmatprep.subr.bf16.mxu0 0
    %2043 = vmatpush1.bf16.msra.mxu0 0
    %2044 = vmatprep.subr.bf16.mxu0 0
    %2045 = vmatpush1.bf16.msra.mxu0 0
    %2046 = vmatprep.subr.bf16.mxu0 0
    %2047 = vmatpush1.bf16.msra.mxu0 0
    %2048 = vmatprep.subr.bf16.mxu0 0
    %2049 = vmatpush1.bf16.msra.mxu0 %v2035
    %2050 = vmatprep.subr.bf16.mxu0 0
    %2051 = vmatpush1.bf16.msra.mxu0 %v2034
    %2052 = vmatprep.subr.bf16.mxu0 0
    %2053 = vmatpush1.bf16.msra.mxu0 %v2033
    %2054 = vmatprep.subr.bf16.mxu0 0
    %2055 = vmatpush1.bf16.msra.mxu0 %v2032
    %2056 = vmatprep.subr.bf16.mxu0 0
    %2057 = vmatpush2.bf16.msra.mxu0 0
    %2058 = vmatprep.subr.bf16.mxu0 0
    %2059 = vmatpush2.bf16.msra.mxu0 0
    %2060 = vmatprep.subr.bf16.mxu0 0
    %2061 = vmatpush2.bf16.msra.mxu0 0
    %2062 = vmatprep.subr.bf16.mxu0 0
    %2063 = vmatpush2.bf16.msra.mxu0 0
    %2064 = vmatprep.subr.bf16.mxu0 0
    %2065 = vmatpush2.bf16.msra.mxu0 0
    %2066 = vmatprep.subr.bf16.mxu0 0
    %2067 = vmatpush2.bf16.msra.mxu0 0
    %2068 = vmatprep.subr.bf16.mxu0 0
    %2069 = vmatpush2.bf16.msra.mxu0 0
    %2070 = vmatprep.subr.bf16.mxu0 0
    %2071 = vmatpush2.bf16.msra.mxu0 0
    %2072 = vmatprep.mubr.bf16.mxu0 0
    %2073 = vmatmul.mubr.bf16.gmra.mxu0 %v1579
    %v2074 = vpop.f32.mrf.mxu0
    %v2075 = vadd.f32 %v2014, %v2074
    %v2076 = vpop.f32.mrf.mxu0
    %v2077 = vpop.f32.mrf.mxu0
    %v2078 = vadd.f32 %v2014, %v2077
    %v2079 = vpop.f32.mrf.mxu0
    %2080 = vdwg.mxu0
    %s2081 = scalar_lea.vmem %s9, 96
    %v2082 = vld [vmem:[%s2081] sm:$0xf]
    %v2083 = vld [vmem:[%s2081 + $0x4] sm:$0xf]
    %v2084 = vld [vmem:[%s2081 + $0x8] sm:$0xf]
    %v2085 = vld [vmem:[%s2081 + $0xc] sm:$0xf]
    %v2086 = vld [vmem:[%s2081 + $0x10] sm:$0xf]
    %v2087 = vld [vmem:[%s2081 + $0x14] sm:$0xf]
    %v2088 = vld [vmem:[%s2081 + $0x18] sm:$0xf]
    %v2089 = vld [vmem:[%s2081 + $0x1c] sm:$0xf]
    %s2090 = scalar_lea.vmem %s10, 3
    %v2091 = vld [vmem:[%s2090] sm:$0x1]
    %v2093 = vlaneseq
    %v2094 = vshrl.u32 %v2093, 7
    %v2095 = vsub.s32 0, %v2094
    %v2096 = vrot.slane %v2091, %v2095
    %v2106 = vunpack.c.l.b16 %v2082
    %v2107 = vunpack.c.l.b16 %v2083
    %v2108 = vunpack.c.l.b16 %v2084
    %v2109 = vunpack.c.l.b16 %v2085
    %v2110 = vunpack.c.l.b16 %v2086
    %v2111 = vunpack.c.l.b16 %v2087
    %v2112 = vunpack.c.l.b16 %v2088
    %v2113 = vunpack.c.l.b16 %v2089
    %v2114 = vpack.c.b16 %v2107, %v2106
    %v2115 = vpack.c.b16 %v2109, %v2108
    %v2116 = vpack.c.b16 %v2111, %v2110
    %v2117 = vpack.c.b16 %v2113, %v2112
    %2122 = vmatprep.subr.bf16.mxu0 0
    %2123 = vmatpush1.bf16.msra.mxu0 0
    %2124 = vmatprep.subr.bf16.mxu0 0
    %2125 = vmatpush1.bf16.msra.mxu0 0
    %2126 = vmatprep.subr.bf16.mxu0 0
    %2127 = vmatpush1.bf16.msra.mxu0 0
    %2128 = vmatprep.subr.bf16.mxu0 0
    %2129 = vmatpush1.bf16.msra.mxu0 0
    %2130 = vmatprep.subr.bf16.mxu0 0
    %2131 = vmatpush1.bf16.msra.mxu0 %v2117
    %2132 = vmatprep.subr.bf16.mxu0 0
    %2133 = vmatpush1.bf16.msra.mxu0 %v2116
    %2134 = vmatprep.subr.bf16.mxu0 0
    %2135 = vmatpush1.bf16.msra.mxu0 %v2115
    %2136 = vmatprep.subr.bf16.mxu0 0
    %2137 = vmatpush1.bf16.msra.mxu0 %v2114
    %2138 = vmatprep.subr.bf16.mxu0 0
    %2139 = vmatpush2.bf16.msra.mxu0 0
    %2140 = vmatprep.subr.bf16.mxu0 0
    %2141 = vmatpush2.bf16.msra.mxu0 0
    %2142 = vmatprep.subr.bf16.mxu0 0
    %2143 = vmatpush2.bf16.msra.mxu0 0
    %2144 = vmatprep.subr.bf16.mxu0 0
    %2145 = vmatpush2.bf16.msra.mxu0 0
    %2146 = vmatprep.subr.bf16.mxu0 0
    %2147 = vmatpush2.bf16.msra.mxu0 0
    %2148 = vmatprep.subr.bf16.mxu0 0
    %2149 = vmatpush2.bf16.msra.mxu0 0
    %2150 = vmatprep.subr.bf16.mxu0 0
    %2151 = vmatpush2.bf16.msra.mxu0 0
    %2152 = vmatprep.subr.bf16.mxu0 0
    %2153 = vmatpush2.bf16.msra.mxu0 0
    %2154 = vmatprep.mubr.bf16.mxu0 0
    %2155 = vmatmul.mubr.bf16.gmra.mxu0 %v1579
    %v2156 = vpop.f32.mrf.mxu0
    %v2157 = vadd.f32 %v2096, %v2156
    %v2158 = vpop.f32.mrf.mxu0
    %v2159 = vpop.f32.mrf.mxu0
    %v2160 = vadd.f32 %v2096, %v2159
    %v2161 = vpop.f32.mrf.mxu0
    %2162 = vdwg.mxu0
    %v2163 = vpack.c.bf16 %v1996, %v1993
    %v2164 = vpack.c.bf16 %v2078, %v2075
    %v2166 = vsel %vm510, %v2163, 0
    %v2169 = vsel %vm510, %v2164, 0
    %2171 = vmatprep.subr.bf16.mxu0 0
    %2172 = vmatpush1.bf16.xpose.msra.mxu0 0
    %2173 = vmatprep.subr.bf16.mxu0 0
    %2174 = vmatpush1.bf16.xpose.msra.mxu0 0
    %2175 = vmatprep.subr.bf16.mxu0 0
    %2176 = vmatpush1.bf16.xpose.msra.mxu0 0
    %2177 = vmatprep.subr.bf16.mxu0 0
    %2178 = vmatpush1.bf16.xpose.msra.mxu0 0
    %2179 = vmatprep.subr.bf16.mxu0 0
    %2180 = vmatpush1.bf16.xpose.msra.mxu0 0
    %2181 = vmatprep.subr.bf16.mxu0 0
    %2182 = vmatpush1.bf16.xpose.msra.mxu0 0
    %2183 = vmatprep.subr.bf16.mxu0 0
    %2184 = vmatpush1.bf16.xpose.msra.mxu0 0
    %2185 = vmatprep.subr.bf16.mxu0 0
    %2186 = vmatpush1.bf16.xpose.msra.mxu0 %v2169
    %2187 = vmatprep.subr.bf16.mxu0 0
    %2188 = vmatpush2.bf16.xpose.msra.mxu0 0
    %2189 = vmatprep.subr.bf16.mxu0 0
    %2190 = vmatpush2.bf16.xpose.msra.mxu0 0
    %2191 = vmatprep.subr.bf16.mxu0 0
    %2192 = vmatpush2.bf16.xpose.msra.mxu0 0
    %2193 = vmatprep.subr.bf16.mxu0 0
    %2194 = vmatpush2.bf16.xpose.msra.mxu0 0
    %2195 = vmatprep.subr.bf16.mxu0 0
    %2196 = vmatpush2.bf16.xpose.msra.mxu0 0
    %2197 = vmatprep.subr.bf16.mxu0 0
    %2198 = vmatpush2.bf16.xpose.msra.mxu0 0
    %2199 = vmatprep.subr.bf16.mxu0 0
    %2200 = vmatpush2.bf16.xpose.msra.mxu0 0
    %2201 = vmatprep.subr.bf16.mxu0 0
    %2202 = vmatpush2.bf16.xpose.msra.mxu0 0
    %2203 = vmatprep.mubr.bf16.mxu0 0
    %2204 = vmatmul.mubr.bf16.gmra.mxu0 %v2166
    %v2205 = vpop.f32.mrf.mxu0
    %v2206 = vadd.f32 0.0, %v2205
    %v2207 = vpop.f32.mrf.mxu0
    %v2208 = vpop.f32.mrf.mxu0
    %v2209 = vadd.f32 0.0, %v2208
    %v2210 = vpop.f32.mrf.mxu0
    %2211 = vdwg.mxu0
    %v2212 = vmul.f32 %v2206, 0.17677669
    %v2213 = vmul.f32 %v2209, 0.17677669
    %v2214 = vadd.f32 %v2212, %v1840
    %v2215 = vadd.f32 %v2213, %v1840
    %v2216 = vsel %vm566, %v2214, -inf
    %2217 = vmax.xlane.f32.xlu0 %v2216
    %v2218 = vpop.xlane.xlu0 %2217
    %v2219 = vsel %vm566, %v2215, -inf
    %2220 = vmax.xlane.f32.xlu0 %v2219
    %v2221 = vpop.xlane.xlu0 %2220
    %v2222 = vsub.f32 %v2214, %v2218
    %v2223 = vsub.f32 %v2215, %v2221
    %v2224 = vmul.f32 %v2222, 1.442695
    %v2225 = vpow.pop %v2224
    %v2226 = vmul.f32 %v2223, 1.442695
    %v2227 = vpow.pop %v2226
    %v2228 = vsel %vm566, %v2225, 0.0
    %2229 = vadd.xlane.f32.xlu0 %v2228
    %v2230 = vpop.xlane.xlu0 %2229
    %v2231 = vsel %vm566, %v2227, 0.0
    %2232 = vadd.xlane.f32.xlu0 %v2231
    %v2233 = vpop.xlane.xlu0 %2232
    %v2234 = vpack.c.bf16 %v2227, %v2225
    %v2235 = vpack.c.bf16 %v2160, %v2157
    %v2237 = vsel %vm566, %v2234, 0
    %2239 = vmatprep.subr.bf16.mxu0 0
    %2240 = vmatpush1.bf16.msra.mxu0 0
    %2241 = vmatprep.subr.bf16.mxu0 0
    %2242 = vmatpush1.bf16.msra.mxu0 0
    %2243 = vmatprep.subr.bf16.mxu0 0
    %2244 = vmatpush1.bf16.msra.mxu0 0
    %2245 = vmatprep.subr.bf16.mxu0 0
    %2246 = vmatpush1.bf16.msra.mxu0 0
    %2247 = vmatprep.subr.bf16.mxu0 0
    %2248 = vmatpush1.bf16.msra.mxu0 0
    %2249 = vmatprep.subr.bf16.mxu0 0
    %2250 = vmatpush1.bf16.msra.mxu0 0
    %2251 = vmatprep.subr.bf16.mxu0 0
    %2252 = vmatpush1.bf16.msra.mxu0 0
    %2253 = vmatprep.subr.bf16.mxu0 0
    %2254 = vmatpush1.bf16.msra.mxu0 %v2235
    %2255 = vmatprep.subr.bf16.mxu0 0
    %2256 = vmatpush2.bf16.msra.mxu0 0
    %2257 = vmatprep.subr.bf16.mxu0 0
    %2258 = vmatpush2.bf16.msra.mxu0 0
    %2259 = vmatprep.subr.bf16.mxu0 0
    %2260 = vmatpush2.bf16.msra.mxu0 0
    %2261 = vmatprep.subr.bf16.mxu0 0
    %2262 = vmatpush2.bf16.msra.mxu0 0
    %2263 = vmatprep.subr.bf16.mxu0 0
    %2264 = vmatpush2.bf16.msra.mxu0 0
    %2265 = vmatprep.subr.bf16.mxu0 0
    %2266 = vmatpush2.bf16.msra.mxu0 0
    %2267 = vmatprep.subr.bf16.mxu0 0
    %2268 = vmatpush2.bf16.msra.mxu0 0
    %2269 = vmatprep.subr.bf16.mxu0 0
    %2270 = vmatpush2.bf16.msra.mxu0 0
    %2271 = vmatprep.mubr.bf16.mxu0 0
    %2272 = vmatmul.mubr.bf16.gmra.mxu0 %v2237
    %v2273 = vpop.f32.mrf.mxu0
    %v2274 = vadd.f32 0.0, %v2273
    %v2275 = vpop.f32.mrf.mxu0
    %v2276 = vpop.f32.mrf.mxu0
    %v2277 = vadd.f32 0.0, %v2276
    %v2278 = vpop.f32.mrf.mxu0
    %2279 = vdwg.mxu0
    %v2280 = vrcp.pop %v2230
    %v2281 = vrcp.pop %v2233
    %v2282 = vmul.f32 %v2274, %v2280
    %v2283 = vmul.f32 %v2277, %v2281
    %v2284 = vpack.c.bf16 %v2283, %v2282
    %s2285 = scalar_lea.vmem %s11, 48
    %v2286 = vld [vmem:[%s2285] sm:$0xf]
    %v2287 = vld [vmem:[%s2285 + $0x4] sm:$0xf]
    %v2288 = vld [vmem:[%s2285 + $0x8] sm:$0xf]
    %v2289 = vld [vmem:[%s2285 + $0xc] sm:$0xf]
    %v2294 = vunpack.c.l.b16 %v2286
    %v2295 = vunpack.c.l.b16 %v2287
    %v2296 = vunpack.c.l.b16 %v2288
    %v2297 = vunpack.c.l.b16 %v2289
    %v2298 = vpack.c.b16 %v2295, %v2294
    %v2299 = vpack.c.b16 %v2297, %v2296
    %v2303 = vsel %vm510, %v2284, 0
    %2305 = vmatprep.subr.bf16.mxu0 0
    %2306 = vmatpush1.bf16.msra.mxu0 0
    %2307 = vmatprep.subr.bf16.mxu0 0
    %2308 = vmatpush1.bf16.msra.mxu0 0
    %2309 = vmatprep.subr.bf16.mxu0 0
    %2310 = vmatpush1.bf16.msra.mxu0 0
    %2311 = vmatprep.subr.bf16.mxu0 0
    %2312 = vmatpush1.bf16.msra.mxu0 0
    %2313 = vmatprep.subr.bf16.mxu0 0
    %2314 = vmatpush1.bf16.msra.mxu0 0
    %2315 = vmatprep.subr.bf16.mxu0 0
    %2316 = vmatpush1.bf16.msra.mxu0 0
    %2317 = vmatprep.subr.bf16.mxu0 0
    %2318 = vmatpush1.bf16.msra.mxu0 %v2299
    %2319 = vmatprep.subr.bf16.mxu0 0
    %2320 = vmatpush1.bf16.msra.mxu0 %v2298
    %2321 = vmatprep.subr.bf16.mxu0 0
    %2322 = vmatpush2.bf16.msra.mxu0 0
    %2323 = vmatprep.subr.bf16.mxu0 0
    %2324 = vmatpush2.bf16.msra.mxu0 0
    %2325 = vmatprep.subr.bf16.mxu0 0
    %2326 = vmatpush2.bf16.msra.mxu0 0
    %2327 = vmatprep.subr.bf16.mxu0 0
    %2328 = vmatpush2.bf16.msra.mxu0 0
    %2329 = vmatprep.subr.bf16.mxu0 0
    %2330 = vmatpush2.bf16.msra.mxu0 0
    %2331 = vmatprep.subr.bf16.mxu0 0
    %2332 = vmatpush2.bf16.msra.mxu0 0
    %2333 = vmatprep.subr.bf16.mxu0 0
    %2334 = vmatpush2.bf16.msra.mxu0 0
    %2335 = vmatprep.subr.bf16.mxu0 0
    %2336 = vmatpush2.bf16.msra.mxu0 0
    %2337 = vmatprep.mubr.bf16.mxu0 0
    %2338 = vmatmul.mubr.bf16.gmra.mxu0 %v2303
    %v2339 = vpop.f32.mrf.mxu0
    %v2340 = vadd.f32 0.0, %v2339
    %v2341 = vpop.f32.mrf.mxu0
    %v2342 = vpop.f32.mrf.mxu0
    %v2343 = vadd.f32 0.0, %v2342
    %v2344 = vpop.f32.mrf.mxu0
    %2345 = vdwg.mxu0
    %v2350 = vunpack.c.l.b16 %v1913
    %v2351 = vunpack.c.l.b16 %v1914
    %v2352 = vunpack.c.l.b16 %v1915
    %v2353 = vunpack.c.l.b16 %v1916
    %v2354 = vpack.c.b16 %v2351, %v2350
    %v2355 = vpack.c.b16 %v2353, %v2352
    %v2359 = vsel %vm510, %v1911, 0
    %2361 = vmatprep.subr.bf16.mxu0 0
    %2362 = vmatpush1.bf16.msra.mxu0 0
    %2363 = vmatprep.subr.bf16.mxu0 0
    %2364 = vmatpush1.bf16.msra.mxu0 0
    %2365 = vmatprep.subr.bf16.mxu0 0
    %2366 = vmatpush1.bf16.msra.mxu0 0
    %2367 = vmatprep.subr.bf16.mxu0 0
    %2368 = vmatpush1.bf16.msra.mxu0 0
    %2369 = vmatprep.subr.bf16.mxu0 0
    %2370 = vmatpush1.bf16.msra.mxu0 0
    %2371 = vmatprep.subr.bf16.mxu0 0
    %2372 = vmatpush1.bf16.msra.mxu0 0
    %2373 = vmatprep.subr.bf16.mxu0 0
    %2374 = vmatpush1.bf16.msra.mxu0 %v2355
    %2375 = vmatprep.subr.bf16.mxu0 0
    %2376 = vmatpush1.bf16.msra.mxu0 %v2354
    %2377 = vmatprep.subr.bf16.mxu0 0
    %2378 = vmatpush2.bf16.msra.mxu0 0
    %2379 = vmatprep.subr.bf16.mxu0 0
    %2380 = vmatpush2.bf16.msra.mxu0 0
    %2381 = vmatprep.subr.bf16.mxu0 0
    %2382 = vmatpush2.bf16.msra.mxu0 0
    %2383 = vmatprep.subr.bf16.mxu0 0
    %2384 = vmatpush2.bf16.msra.mxu0 0
    %2385 = vmatprep.subr.bf16.mxu0 0
    %2386 = vmatpush2.bf16.msra.mxu0 0
    %2387 = vmatprep.subr.bf16.mxu0 0
    %2388 = vmatpush2.bf16.msra.mxu0 0
    %2389 = vmatprep.subr.bf16.mxu0 0
    %2390 = vmatpush2.bf16.msra.mxu0 0
    %2391 = vmatprep.subr.bf16.mxu0 0
    %2392 = vmatpush2.bf16.msra.mxu0 0
    %2393 = vmatprep.mubr.bf16.mxu0 0
    %2394 = vmatmul.mubr.bf16.gmra.mxu0 %v2359
    %v2395 = vpop.f32.mrf.mxu0
    %v2396 = vadd.f32 %v2340, %v2395
    %v2397 = vpop.f32.mrf.mxu0
    %v2398 = vpop.f32.mrf.mxu0
    %v2399 = vadd.f32 %v2343, %v2398
    %v2400 = vpop.f32.mrf.mxu0
    %2401 = vdwg.mxu0
    %v2402 = vadd.f32 %v1481, %v2396
    %v2403 = vadd.f32 %v1482, %v2399
    %s2404 = scalar_lea.vmem %s12, 1
    %v2405 = vld [vmem:[%s2404] sm:$0x1]
    %v2407 = vlaneseq
    %v2408 = vshrl.u32 %v2407, 7
    %v2409 = vsub.s32 0, %v2408
    %v2410 = vrot.slane %v2405, %v2409
    %v2412 = vadd.f32 %v2402, %v2410
    %v2413 = vadd.f32 %v2403, %v2410
    %s2414 = scalar_lea.vmem %s13, 1
    %v2415 = vld [vmem:[%s2414] sm:$0x1]
    %s2416 = scalar_lea.vmem %s14, 1
    %v2417 = vld [vmem:[%s2416] sm:$0x1]
    %v2418 = vsel %vm93, %v2412, 0.0
    %2419 = vadd.xlane.f32.xlu0 %v2418
    %v2420 = vpop.xlane.xlu0 %2419
    %v2421 = vsel %vm93, %v2413, 0.0
    %2422 = vadd.xlane.f32.xlu0 %v2421
    %v2423 = vpop.xlane.xlu0 %2422
    %v2424 = vmul.f32 %v2420, %v227
    %v2425 = vmul.f32 %v2423, %v227
    %v2426 = vsub.f32 %v2412, %v2424
    %v2427 = vsub.f32 %v2413, %v2425
    %v2428 = vmul.f32 %v2426, %v2426
    %v2429 = vmul.f32 %v2427, %v2427
    %v2430 = vsel %vm93, %v2428, 0.0
    %2431 = vadd.xlane.f32.xlu0 %v2430
    %v2432 = vpop.xlane.xlu0 %2431
    %v2433 = vsel %vm93, %v2429, 0.0
    %2434 = vadd.xlane.f32.xlu0 %v2433
    %v2435 = vpop.xlane.xlu0 %2434
    %v2436 = vmul.f32 %v2432, %v227
    %v2437 = vmul.f32 %v2435, %v227
    %v2438 = vadd.f32 %v2436, 1e-05
    %v2439 = vadd.f32 %v2437, 1e-05
    %v2440 = vrsqrt.pop %v2438
    %v2441 = vrsqrt.pop %v2439
    %v2442 = vmul.f32 %v2426, %v2440
    %v2443 = vmul.f32 %v2427, %v2441
    %v2445 = vlaneseq
    %v2446 = vshrl.u32 %v2445, 7
    %v2447 = vsub.s32 0, %v2446
    %v2448 = vrot.slane %v2415, %v2447
    %v2450 = vmul.f32 %v2442, %v2448
    %v2451 = vmul.f32 %v2443, %v2448
    %v2453 = vlaneseq
    %v2454 = vshrl.u32 %v2453, 7
    %v2455 = vsub.s32 0, %v2454
    %v2456 = vrot.slane %v2417, %v2455
    %v2458 = vadd.f32 %v2450, %v2456
    %v2459 = vadd.f32 %v2451, %v2456
    %v2460 = vpack.c.bf16 %v2459, %v2458
    %s2461 = scalar_lea.vmem %s15, 64
    %v2462 = vld [vmem:[%s2461] sm:$0xff]
    %v2463 = vld [vmem:[%s2461 + $0x8] sm:$0xff]
    %v2464 = vld [vmem:[%s2461 + $0x10] sm:$0xff]
    %v2465 = vld [vmem:[%s2461 + $0x18] sm:$0xff]
    %v2466 = vld [vmem:[%s2461 + $0x20] sm:$0xff]
    %v2467 = vld [vmem:[%s2461 + $0x28] sm:$0xff]
    %v2468 = vld [vmem:[%s2461 + $0x30] sm:$0xff]
    %v2469 = vld [vmem:[%s2461 + $0x38] sm:$0xff]
    %s2470 = scalar_lea.vmem %s16, 2
    %v2471 = vld [vmem:[%s2470] sm:$0x3]
    %v2473 = vlaneseq
    %v2474 = vshrl.u32 %v2473, 7
    %v2475 = vsub.s32 0, %v2474
    %v2476 = vrot.slane %v2471, %v2475
    %v2477 = vlaneseq
    %v2478 = vshrl.u32 %v2477, 7
    %v2479 = vsub.s32 1, %v2478
    %v2480 = vrot.slane %v2471, %v2479
    %v2491 = vunpack.c.l.b16 %v2462
    %v2492 = vunpack.c.h.b16 %v2462
    %v2493 = vunpack.c.l.b16 %v2463
    %v2494 = vunpack.c.h.b16 %v2463
    %v2495 = vunpack.c.l.b16 %v2464
    %v2496 = vunpack.c.h.b16 %v2464
    %v2497 = vunpack.c.l.b16 %v2465
    %v2498 = vunpack.c.h.b16 %v2465
    %v2499 = vunpack.c.l.b16 %v2466
    %v2500 = vunpack.c.h.b16 %v2466
    %v2501 = vunpack.c.l.b16 %v2467
    %v2502 = vunpack.c.h.b16 %v2467
    %v2503 = vunpack.c.l.b16 %v2468
    %v2504 = vunpack.c.h.b16 %v2468
    %v2505 = vunpack.c.l.b16 %v2469
    %v2506 = vunpack.c.h.b16 %v2469
    %v2507 = vpack.c.b16 %v2493, %v2491
    %v2508 = vpack.c.b16 %v2494, %v2492
    %v2509 = vpack.c.b16 %v2497, %v2495
    %v2510 = vpack.c.b16 %v2498, %v2496
    %v2511 = vpack.c.b16 %v2501, %v2499
    %v2512 = vpack.c.b16 %v2502, %v2500
    %v2513 = vpack.c.b16 %v2505, %v2503
    %v2514 = vpack.c.b16 %v2506, %v2504
    %v2524 = vsel %vm93, %v2460, 0
    %2526 = vmatprep.subr.bf16.mxu0 0
    %2527 = vmatpush1.bf16.msra.mxu0 0
    %2528 = vmatprep.subr.bf16.mxu0 0
    %2529 = vmatpush1.bf16.msra.mxu0 0
    %2530 = vmatprep.subr.bf16.mxu0 0
    %2531 = vmatpush1.bf16.msra.mxu0 0
    %2532 = vmatprep.subr.bf16.mxu0 0
    %2533 = vmatpush1.bf16.msra.mxu0 0
    %2534 = vmatprep.subr.bf16.mxu0 %v2514
    %2535 = vmatpush1.bf16.msra.mxu0 %v2513
    %2536 = vmatprep.subr.bf16.mxu0 %v2512
    %2537 = vmatpush1.bf16.msra.mxu0 %v2511
    %2538 = vmatprep.subr.bf16.mxu0 %v2510
    %2539 = vmatpush1.bf16.msra.mxu0 %v2509
    %2540 = vmatprep.subr.bf16.mxu0 %v2508
    %2541 = vmatpush1.bf16.msra.mxu0 %v2507
    %2542 = vmatprep.subr.bf16.mxu0 0
    %2543 = vmatpush2.bf16.msra.mxu0 0
    %2544 = vmatprep.subr.bf16.mxu0 0
    %2545 = vmatpush2.bf16.msra.mxu0 0
    %2546 = vmatprep.subr.bf16.mxu0 0
    %2547 = vmatpush2.bf16.msra.mxu0 0
    %2548 = vmatprep.subr.bf16.mxu0 0
    %2549 = vmatpush2.bf16.msra.mxu0 0
    %2550 = vmatprep.subr.bf16.mxu0 0
    %2551 = vmatpush2.bf16.msra.mxu0 0
    %2552 = vmatprep.subr.bf16.mxu0 0
    %2553 = vmatpush2.bf16.msra.mxu0 0
    %2554 = vmatprep.subr.bf16.mxu0 0
    %2555 = vmatpush2.bf16.msra.mxu0 0
    %2556 = vmatprep.subr.bf16.mxu0 0
    %2557 = vmatpush2.bf16.msra.mxu0 0
    %2558 = vmatprep.mubr.bf16.mxu0 0
    %2559 = vmatmul.mubr.bf16.gmra.mxu0 %v2524
    %v2560 = vpop.f32.mrf.mxu0
    %v2561 = vadd.f32 %v2476, %v2560
    %v2562 = vpop.f32.mrf.mxu0
    %v2563 = vadd.f32 %v2480, %v2562
    %v2564 = vpop.f32.mrf.mxu0
    %v2565 = vadd.f32 %v2476, %v2564
    %v2566 = vpop.f32.mrf.mxu0
    %v2567 = vadd.f32 %v2480, %v2566
    %2568 = vdwg.mxu0
    %v2569 = vmax.f32 %v2561, 0.0
    %v2570 = vmax.f32 %v2563, 0.0
    %v2571 = vmax.f32 %v2565, 0.0
    %v2572 = vmax.f32 %v2567, 0.0
    %v2573 = vpack.c.bf16 %v2571, %v2569
    %v2574 = vpack.c.bf16 %v2572, %v2570
    %s2575 = scalar_lea.vmem %s17, 128
    %v2576 = vld [vmem:[%s2575] sm:$0xf]
    %v2577 = vld [vmem:[%s2575 + $0x4] sm:$0xf]
    %v2578 = vld [vmem:[%s2575 + $0x8] sm:$0xf]
    %v2579 = vld [vmem:[%s2575 + $0xc] sm:$0xf]
    %v2580 = vld [vmem:[%s2575 + $0x10] sm:$0xf]
    %v2581 = vld [vmem:[%s2575 + $0x14] sm:$0xf]
    %v2582 = vld [vmem:[%s2575 + $0x18] sm:$0xf]
    %v2583 = vld [vmem:[%s2575 + $0x1c] sm:$0xf]
    %v2584 = vld [vmem:[%s2575 + $0x20] sm:$0xf]
    %v2585 = vld [vmem:[%s2575 + $0x24] sm:$0xf]
    %v2586 = vld [vmem:[%s2575 + $0x28] sm:$0xf]
    %v2587 = vld [vmem:[%s2575 + $0x2c] sm:$0xf]
    %v2588 = vld [vmem:[%s2575 + $0x30] sm:$0xf]
    %v2589 = vld [vmem:[%s2575 + $0x34] sm:$0xf]
    %v2590 = vld [vmem:[%s2575 + $0x38] sm:$0xf]
    %v2591 = vld [vmem:[%s2575 + $0x3c] sm:$0xf]
    %v2592 = vld [vmem:[%s2575 + $0x40] sm:$0xf]
    %v2593 = vld [vmem:[%s2575 + $0x44] sm:$0xf]
    %v2594 = vld [vmem:[%s2575 + $0x48] sm:$0xf]
    %v2595 = vld [vmem:[%s2575 + $0x4c] sm:$0xf]
    %v2596 = vld [vmem:[%s2575 + $0x50] sm:$0xf]
    %v2597 = vld [vmem:[%s2575 + $0x54] sm:$0xf]
    %v2598 = vld [vmem:[%s2575 + $0x58] sm:$0xf]
    %v2599 = vld [vmem:[%s2575 + $0x5c] sm:$0xf]
    %v2600 = vld [vmem:[%s2575 + $0x60] sm:$0xf]
    %v2601 = vld [vmem:[%s2575 + $0x64] sm:$0xf]
    %v2602 = vld [vmem:[%s2575 + $0x68] sm:$0xf]
    %v2603 = vld [vmem:[%s2575 + $0x6c] sm:$0xf]
    %v2604 = vld [vmem:[%s2575 + $0x70] sm:$0xf]
    %v2605 = vld [vmem:[%s2575 + $0x74] sm:$0xf]
    %v2606 = vld [vmem:[%s2575 + $0x78] sm:$0xf]
    %v2607 = vld [vmem:[%s2575 + $0x7c] sm:$0xf]
    %s2608 = scalar_lea.vmem %s18, 1
    %v2609 = vld [vmem:[%s2608] sm:$0x1]
    %v2611 = vlaneseq
    %v2612 = vshrl.u32 %v2611, 7
    %v2613 = vsub.s32 0, %v2612
    %v2614 = vrot.slane %v2609, %v2613
    %v2648 = vunpack.c.l.b16 %v2576
    %v2649 = vunpack.c.l.b16 %v2577
    %v2650 = vunpack.c.l.b16 %v2578
    %v2651 = vunpack.c.l.b16 %v2579
    %v2652 = vunpack.c.l.b16 %v2580
    %v2653 = vunpack.c.l.b16 %v2581
    %v2654 = vunpack.c.l.b16 %v2582
    %v2655 = vunpack.c.l.b16 %v2583
    %v2656 = vunpack.c.l.b16 %v2584
    %v2657 = vunpack.c.l.b16 %v2585
    %v2658 = vunpack.c.l.b16 %v2586
    %v2659 = vunpack.c.l.b16 %v2587
    %v2660 = vunpack.c.l.b16 %v2588
    %v2661 = vunpack.c.l.b16 %v2589
    %v2662 = vunpack.c.l.b16 %v2590
    %v2663 = vunpack.c.l.b16 %v2591
    %v2664 = vunpack.c.l.b16 %v2592
    %v2665 = vunpack.c.l.b16 %v2593
    %v2666 = vunpack.c.l.b16 %v2594
    %v2667 = vunpack.c.l.b16 %v2595
    %v2668 = vunpack.c.l.b16 %v2596
    %v2669 = vunpack.c.l.b16 %v2597
    %v2670 = vunpack.c.l.b16 %v2598
    %v2671 = vunpack.c.l.b16 %v2599
    %v2672 = vunpack.c.l.b16 %v2600
    %v2673 = vunpack.c.l.b16 %v2601
    %v2674 = vunpack.c.l.b16 %v2602
    %v2675 = vunpack.c.l.b16 %v2603
    %v2676 = vunpack.c.l.b16 %v2604
    %v2677 = vunpack.c.l.b16 %v2605
    %v2678 = vunpack.c.l.b16 %v2606
    %v2679 = vunpack.c.l.b16 %v2607
    %v2680 = vpack.c.b16 %v2649, %v2648
    %v2681 = vpack.c.b16 %v2651, %v2650
    %v2682 = vpack.c.b16 %v2653, %v2652
    %v2683 = vpack.c.b16 %v2655, %v2654
    %v2684 = vpack.c.b16 %v2657, %v2656
    %v2685 = vpack.c.b16 %v2659, %v2658
    %v2686 = vpack.c.b16 %v2661, %v2660
    %v2687 = vpack.c.b16 %v2663, %v2662
    %v2688 = vpack.c.b16 %v2665, %v2664
    %v2689 = vpack.c.b16 %v2667, %v2666
    %v2690 = vpack.c.b16 %v2669, %v2668
    %v2691 = vpack.c.b16 %v2671, %v2670
    %v2692 = vpack.c.b16 %v2673, %v2672
    %v2693 = vpack.c.b16 %v2675, %v2674
    %v2694 = vpack.c.b16 %v2677, %v2676
    %v2695 = vpack.c.b16 %v2679, %v2678
    %2712 = vmatprep.subr.bf16.mxu0 0
    %2713 = vmatpush1.bf16.msra.mxu0 %v2687
    %2714 = vmatprep.subr.bf16.mxu0 0
    %2715 = vmatpush1.bf16.msra.mxu0 %v2686
    %2716 = vmatprep.subr.bf16.mxu0 0
    %2717 = vmatpush1.bf16.msra.mxu0 %v2685
    %2718 = vmatprep.subr.bf16.mxu0 0
    %2719 = vmatpush1.bf16.msra.mxu0 %v2684
    %2720 = vmatprep.subr.bf16.mxu0 0
    %2721 = vmatpush1.bf16.msra.mxu0 %v2683
    %2722 = vmatprep.subr.bf16.mxu0 0
    %2723 = vmatpush1.bf16.msra.mxu0 %v2682
    %2724 = vmatprep.subr.bf16.mxu0 0
    %2725 = vmatpush1.bf16.msra.mxu0 %v2681
    %2726 = vmatprep.subr.bf16.mxu0 0
    %2727 = vmatpush1.bf16.msra.mxu0 %v2680
    %2728 = vmatprep.subr.bf16.mxu0 0
    %2729 = vmatpush2.bf16.msra.mxu0 %v2695
    %2730 = vmatprep.subr.bf16.mxu0 0
    %2731 = vmatpush2.bf16.msra.mxu0 %v2694
    %2732 = vmatprep.subr.bf16.mxu0 0
    %2733 = vmatpush2.bf16.msra.mxu0 %v2693
    %2734 = vmatprep.subr.bf16.mxu0 0
    %2735 = vmatpush2.bf16.msra.mxu0 %v2692
    %2736 = vmatprep.subr.bf16.mxu0 0
    %2737 = vmatpush2.bf16.msra.mxu0 %v2691
    %2738 = vmatprep.subr.bf16.mxu0 0
    %2739 = vmatpush2.bf16.msra.mxu0 %v2690
    %2740 = vmatprep.subr.bf16.mxu0 0
    %2741 = vmatpush2.bf16.msra.mxu0 %v2689
    %2742 = vmatprep.subr.bf16.mxu0 0
    %2743 = vmatpush2.bf16.msra.mxu0 %v2688
    %2744 = vmatprep.mubr.bf16.mxu0 %v2574
    %2745 = vmatmul.mubr.bf16.gmra.mxu0 %v2573
    %v2746 = vpop.f32.mrf.mxu0
    %v2747 = vadd.f32 %v2614, %v2746
    %v2748 = vpop.f32.mrf.mxu0
    %v2749 = vpop.f32.mrf.mxu0
    %v2750 = vadd.f32 %v2614, %v2749
    %v2751 = vpop.f32.mrf.mxu0
    %2752 = vdwg.mxu0
    %v2753 = vadd.f32 %v2412, %v2747
    %v2754 = vadd.f32 %v2413, %v2750
    %v2755 = vsel %vm1483, 1, 0
    %v2756 = vsel %vm1484, 1, 0
    %2757 = vset.pattern.permute.xlu0 0
    %2758 = vperm.xlu0 %2757, %v2755
    %v2759 = vpop.permute.xlu0 %2758
    %2760 = vset.pattern.permute.xlu0 0
    %2761 = vperm.xlu0 %2760, %v2756
    %v2762 = vpop.permute.xlu0 %2761
    %vm2763 = vcmp.eq.s32.totalorder %v2759, 1
    %vm2764 = vcmp.eq.s32.totalorder %v2762, 1
    %v2765 = vsel %vm2763, %v2753, %v1481
    %v2766 = vsel %vm2764, %v2754, %v1482
    %vm2767 = vcmp.gt.f32.partialorder %v117, 0.33333334
    %vm2768 = vcmp.gt.f32.partialorder %v119, 0.33333334
    %vm2769 = vcmp.gt.f32.partialorder %v211, 0.33333334
    %v2770 = vsel %vm2769, 1, 0
    %v2771 = vcvt.s32.f32 %v2770
    %v2772 = vadd.f32 %v1488, %v2771
    %v2773 = vsel %vm2769, 0.0, -1e+30
    %s2774 = scalar_lea.vmem %s3, 2
    %v2775 = vld [vmem:[%s2774] sm:$0x1]
    %s2776 = scalar_lea.vmem %s4, 2
    %v2777 = vld [vmem:[%s2776] sm:$0x1]
    %v2778 = vsel %vm93, %v2765, 0.0
    %2779 = vadd.xlane.f32.xlu0 %v2778
    %v2780 = vpop.xlane.xlu0 %2779
    %v2781 = vsel %vm93, %v2766, 0.0
    %2782 = vadd.xlane.f32.xlu0 %v2781
    %v2783 = vpop.xlane.xlu0 %2782
    %v2784 = vmul.f32 %v2780, %v227
    %v2785 = vmul.f32 %v2783, %v227
    %v2786 = vsub.f32 %v2765, %v2784
    %v2787 = vsub.f32 %v2766, %v2785
    %v2788 = vmul.f32 %v2786, %v2786
    %v2789 = vmul.f32 %v2787, %v2787
    %v2790 = vsel %vm93, %v2788, 0.0
    %2791 = vadd.xlane.f32.xlu0 %v2790
    %v2792 = vpop.xlane.xlu0 %2791
    %v2793 = vsel %vm93, %v2789, 0.0
    %2794 = vadd.xlane.f32.xlu0 %v2793
    %v2795 = vpop.xlane.xlu0 %2794
    %v2796 = vmul.f32 %v2792, %v227
    %v2797 = vmul.f32 %v2795, %v227
    %v2798 = vadd.f32 %v2796, 1e-05
    %v2799 = vadd.f32 %v2797, 1e-05
    %v2800 = vrsqrt.pop %v2798
    %v2801 = vrsqrt.pop %v2799
    %v2802 = vmul.f32 %v2786, %v2800
    %v2803 = vmul.f32 %v2787, %v2801
    %v2805 = vlaneseq
    %v2806 = vshrl.u32 %v2805, 7
    %v2807 = vsub.s32 0, %v2806
    %v2808 = vrot.slane %v2775, %v2807
    %v2810 = vmul.f32 %v2802, %v2808
    %v2811 = vmul.f32 %v2803, %v2808
    %v2813 = vlaneseq
    %v2814 = vshrl.u32 %v2813, 7
    %v2815 = vsub.s32 0, %v2814
    %v2816 = vrot.slane %v2777, %v2815
    %v2818 = vadd.f32 %v2810, %v2816
    %v2819 = vadd.f32 %v2811, %v2816
    %v2820 = vpack.c.bf16 %v2819, %v2818
    %s2821 = scalar_lea.vmem %s5, 128
    %v2822 = vld [vmem:[%s2821] sm:$0xf]
    %v2823 = vld [vmem:[%s2821 + $0x4] sm:$0xf]
    %v2824 = vld [vmem:[%s2821 + $0x8] sm:$0xf]
    %v2825 = vld [vmem:[%s2821 + $0xc] sm:$0xf]
    %v2826 = vld [vmem:[%s2821 + $0x10] sm:$0xf]
    %v2827 = vld [vmem:[%s2821 + $0x14] sm:$0xf]
    %v2828 = vld [vmem:[%s2821 + $0x18] sm:$0xf]
    %v2829 = vld [vmem:[%s2821 + $0x1c] sm:$0xf]
    %s2830 = scalar_lea.vmem %s6, 4
    %v2831 = vld [vmem:[%s2830] sm:$0x1]
    %v2833 = vlaneseq
    %v2834 = vshrl.u32 %v2833, 7
    %v2835 = vsub.s32 0, %v2834
    %v2836 = vrot.slane %v2831, %v2835
    %v2846 = vunpack.c.l.b16 %v2822
    %v2847 = vunpack.c.l.b16 %v2823
    %v2848 = vunpack.c.l.b16 %v2824
    %v2849 = vunpack.c.l.b16 %v2825
    %v2850 = vunpack.c.l.b16 %v2826
    %v2851 = vunpack.c.l.b16 %v2827
    %v2852 = vunpack.c.l.b16 %v2828
    %v2853 = vunpack.c.l.b16 %v2829
    %v2854 = vpack.c.b16 %v2847, %v2846
    %v2855 = vpack.c.b16 %v2849, %v2848
    %v2856 = vpack.c.b16 %v2851, %v2850
    %v2857 = vpack.c.b16 %v2853, %v2852
    %v2863 = vsel %vm93, %v2820, 0
    %2865 = vmatprep.subr.bf16.mxu0 0
    %2866 = vmatpush1.bf16.msra.mxu0 0
    %2867 = vmatprep.subr.bf16.mxu0 0
    %2868 = vmatpush1.bf16.msra.mxu0 0
    %2869 = vmatprep.subr.bf16.mxu0 0
    %2870 = vmatpush1.bf16.msra.mxu0 0
    %2871 = vmatprep.subr.bf16.mxu0 0
    %2872 = vmatpush1.bf16.msra.mxu0 0
    %2873 = vmatprep.subr.bf16.mxu0 0
    %2874 = vmatpush1.bf16.msra.mxu0 %v2857
    %2875 = vmatprep.subr.bf16.mxu0 0
    %2876 = vmatpush1.bf16.msra.mxu0 %v2856
    %2877 = vmatprep.subr.bf16.mxu0 0
    %2878 = vmatpush1.bf16.msra.mxu0 %v2855
    %2879 = vmatprep.subr.bf16.mxu0 0
    %2880 = vmatpush1.bf16.msra.mxu0 %v2854
    %2881 = vmatprep.subr.bf16.mxu0 0
    %2882 = vmatpush2.bf16.msra.mxu0 0
    %2883 = vmatprep.subr.bf16.mxu0 0
    %2884 = vmatpush2.bf16.msra.mxu0 0
    %2885 = vmatprep.subr.bf16.mxu0 0
    %2886 = vmatpush2.bf16.msra.mxu0 0
    %2887 = vmatprep.subr.bf16.mxu0 0
    %2888 = vmatpush2.bf16.msra.mxu0 0
    %2889 = vmatprep.subr.bf16.mxu0 0
    %2890 = vmatpush2.bf16.msra.mxu0 0
    %2891 = vmatprep.subr.bf16.mxu0 0
    %2892 = vmatpush2.bf16.msra.mxu0 0
    %2893 = vmatprep.subr.bf16.mxu0 0
    %2894 = vmatpush2.bf16.msra.mxu0 0
    %2895 = vmatprep.subr.bf16.mxu0 0
    %2896 = vmatpush2.bf16.msra.mxu0 0
    %2897 = vmatprep.mubr.bf16.mxu0 0
    %2898 = vmatmul.mubr.bf16.gmra.mxu0 %v2863
    %v2899 = vpop.f32.mrf.mxu0
    %v2900 = vadd.f32 %v2836, %v2899
    %v2901 = vpop.f32.mrf.mxu0
    %v2902 = vpop.f32.mrf.mxu0
    %v2903 = vadd.f32 %v2836, %v2902
    %v2904 = vpop.f32.mrf.mxu0
    %2905 = vdwg.mxu0
    %s2906 = scalar_lea.vmem %s7, 128
    %v2907 = vld [vmem:[%s2906] sm:$0xf]
    %v2908 = vld [vmem:[%s2906 + $0x4] sm:$0xf]
    %v2909 = vld [vmem:[%s2906 + $0x8] sm:$0xf]
    %v2910 = vld [vmem:[%s2906 + $0xc] sm:$0xf]
    %v2911 = vld [vmem:[%s2906 + $0x10] sm:$0xf]
    %v2912 = vld [vmem:[%s2906 + $0x14] sm:$0xf]
    %v2913 = vld [vmem:[%s2906 + $0x18] sm:$0xf]
    %v2914 = vld [vmem:[%s2906 + $0x1c] sm:$0xf]
    %s2915 = scalar_lea.vmem %s8, 4
    %v2916 = vld [vmem:[%s2915] sm:$0x1]
    %v2918 = vlaneseq
    %v2919 = vshrl.u32 %v2918, 7
    %v2920 = vsub.s32 0, %v2919
    %v2921 = vrot.slane %v2916, %v2920
    %v2931 = vunpack.c.l.b16 %v2907
    %v2932 = vunpack.c.l.b16 %v2908
    %v2933 = vunpack.c.l.b16 %v2909
    %v2934 = vunpack.c.l.b16 %v2910
    %v2935 = vunpack.c.l.b16 %v2911
    %v2936 = vunpack.c.l.b16 %v2912
    %v2937 = vunpack.c.l.b16 %v2913
    %v2938 = vunpack.c.l.b16 %v2914
    %v2939 = vpack.c.b16 %v2932, %v2931
    %v2940 = vpack.c.b16 %v2934, %v2933
    %v2941 = vpack.c.b16 %v2936, %v2935
    %v2942 = vpack.c.b16 %v2938, %v2937
    %2947 = vmatprep.subr.bf16.mxu0 0
    %2948 = vmatpush1.bf16.msra.mxu0 0
    %2949 = vmatprep.subr.bf16.mxu0 0
    %2950 = vmatpush1.bf16.msra.mxu0 0
    %2951 = vmatprep.subr.bf16.mxu0 0
    %2952 = vmatpush1.bf16.msra.mxu0 0
    %2953 = vmatprep.subr.bf16.mxu0 0
    %2954 = vmatpush1.bf16.msra.mxu0 0
    %2955 = vmatprep.subr.bf16.mxu0 0
    %2956 = vmatpush1.bf16.msra.mxu0 %v2942
    %2957 = vmatprep.subr.bf16.mxu0 0
    %2958 = vmatpush1.bf16.msra.mxu0 %v2941
    %2959 = vmatprep.subr.bf16.mxu0 0
    %2960 = vmatpush1.bf16.msra.mxu0 %v2940
    %2961 = vmatprep.subr.bf16.mxu0 0
    %2962 = vmatpush1.bf16.msra.mxu0 %v2939
    %2963 = vmatprep.subr.bf16.mxu0 0
    %2964 = vmatpush2.bf16.msra.mxu0 0
    %2965 = vmatprep.subr.bf16.mxu0 0
    %2966 = vmatpush2.bf16.msra.mxu0 0
    %2967 = vmatprep.subr.bf16.mxu0 0
    %2968 = vmatpush2.bf16.msra.mxu0 0
    %2969 = vmatprep.subr.bf16.mxu0 0
    %2970 = vmatpush2.bf16.msra.mxu0 0
    %2971 = vmatprep.subr.bf16.mxu0 0
    %2972 = vmatpush2.bf16.msra.mxu0 0
    %2973 = vmatprep.subr.bf16.mxu0 0
    %2974 = vmatpush2.bf16.msra.mxu0 0
    %2975 = vmatprep.subr.bf16.mxu0 0
    %2976 = vmatpush2.bf16.msra.mxu0 0
    %2977 = vmatprep.subr.bf16.mxu0 0
    %2978 = vmatpush2.bf16.msra.mxu0 0
    %2979 = vmatprep.mubr.bf16.mxu0 0
    %2980 = vmatmul.mubr.bf16.gmra.mxu0 %v2863
    %v2981 = vpop.f32.mrf.mxu0
    %v2982 = vadd.f32 %v2921, %v2981
    %v2983 = vpop.f32.mrf.mxu0
    %v2984 = vpop.f32.mrf.mxu0
    %v2985 = vadd.f32 %v2921, %v2984
    %v2986 = vpop.f32.mrf.mxu0
    %2987 = vdwg.mxu0
    %s2988 = scalar_lea.vmem %s9, 128
    %v2989 = vld [vmem:[%s2988] sm:$0xf]
    %v2990 = vld [vmem:[%s2988 + $0x4] sm:$0xf]
    %v2991 = vld [vmem:[%s2988 + $0x8] sm:$0xf]
    %v2992 = vld [vmem:[%s2988 + $0xc] sm:$0xf]
    %v2993 = vld [vmem:[%s2988 + $0x10] sm:$0xf]
    %v2994 = vld [vmem:[%s2988 + $0x14] sm:$0xf]
    %v2995 = vld [vmem:[%s2988 + $0x18] sm:$0xf]
    %v2996 = vld [vmem:[%s2988 + $0x1c] sm:$0xf]
    %s2997 = scalar_lea.vmem %s10, 4
    %v2998 = vld [vmem:[%s2997] sm:$0x1]
    %v3000 = vlaneseq
    %v3001 = vshrl.u32 %v3000, 7
    %v3002 = vsub.s32 0, %v3001
    %v3003 = vrot.slane %v2998, %v3002
    %v3013 = vunpack.c.l.b16 %v2989
    %v3014 = vunpack.c.l.b16 %v2990
    %v3015 = vunpack.c.l.b16 %v2991
    %v3016 = vunpack.c.l.b16 %v2992
    %v3017 = vunpack.c.l.b16 %v2993
    %v3018 = vunpack.c.l.b16 %v2994
    %v3019 = vunpack.c.l.b16 %v2995
    %v3020 = vunpack.c.l.b16 %v2996
    %v3021 = vpack.c.b16 %v3014, %v3013
    %v3022 = vpack.c.b16 %v3016, %v3015
    %v3023 = vpack.c.b16 %v3018, %v3017
    %v3024 = vpack.c.b16 %v3020, %v3019
    %3029 = vmatprep.subr.bf16.mxu0 0
    %3030 = vmatpush1.bf16.msra.mxu0 0
    %3031 = vmatprep.subr.bf16.mxu0 0
    %3032 = vmatpush1.bf16.msra.mxu0 0
    %3033 = vmatprep.subr.bf16.mxu0 0
    %3034 = vmatpush1.bf16.msra.mxu0 0
    %3035 = vmatprep.subr.bf16.mxu0 0
    %3036 = vmatpush1.bf16.msra.mxu0 0
    %3037 = vmatprep.subr.bf16.mxu0 0
    %3038 = vmatpush1.bf16.msra.mxu0 %v3024
    %3039 = vmatprep.subr.bf16.mxu0 0
    %3040 = vmatpush1.bf16.msra.mxu0 %v3023
    %3041 = vmatprep.subr.bf16.mxu0 0
    %3042 = vmatpush1.bf16.msra.mxu0 %v3022
    %3043 = vmatprep.subr.bf16.mxu0 0
    %3044 = vmatpush1.bf16.msra.mxu0 %v3021
    %3045 = vmatprep.subr.bf16.mxu0 0
    %3046 = vmatpush2.bf16.msra.mxu0 0
    %3047 = vmatprep.subr.bf16.mxu0 0
    %3048 = vmatpush2.bf16.msra.mxu0 0
    %3049 = vmatprep.subr.bf16.mxu0 0
    %3050 = vmatpush2.bf16.msra.mxu0 0
    %3051 = vmatprep.subr.bf16.mxu0 0
    %3052 = vmatpush2.bf16.msra.mxu0 0
    %3053 = vmatprep.subr.bf16.mxu0 0
    %3054 = vmatpush2.bf16.msra.mxu0 0
    %3055 = vmatprep.subr.bf16.mxu0 0
    %3056 = vmatpush2.bf16.msra.mxu0 0
    %3057 = vmatprep.subr.bf16.mxu0 0
    %3058 = vmatpush2.bf16.msra.mxu0 0
    %3059 = vmatprep.subr.bf16.mxu0 0
    %3060 = vmatpush2.bf16.msra.mxu0 0
    %3061 = vmatprep.mubr.bf16.mxu0 0
    %3062 = vmatmul.mubr.bf16.gmra.mxu0 %v2863
    %v3063 = vpop.f32.mrf.mxu0
    %v3064 = vadd.f32 %v3003, %v3063
    %v3065 = vpop.f32.mrf.mxu0
    %v3066 = vpop.f32.mrf.mxu0
    %v3067 = vadd.f32 %v3003, %v3066
    %v3068 = vpop.f32.mrf.mxu0
    %3069 = vdwg.mxu0
    %v3070 = vpack.c.bf16 %v2903, %v2900
    %v3071 = vpack.c.bf16 %v2985, %v2982
    %v3073 = vsel %vm510, %v3070, 0
    %v3076 = vsel %vm510, %v3071, 0
    %3078 = vmatprep.subr.bf16.mxu0 0
    %3079 = vmatpush1.bf16.xpose.msra.mxu0 0
    %3080 = vmatprep.subr.bf16.mxu0 0
    %3081 = vmatpush1.bf16.xpose.msra.mxu0 0
    %3082 = vmatprep.subr.bf16.mxu0 0
    %3083 = vmatpush1.bf16.xpose.msra.mxu0 0
    %3084 = vmatprep.subr.bf16.mxu0 0
    %3085 = vmatpush1.bf16.xpose.msra.mxu0 0
    %3086 = vmatprep.subr.bf16.mxu0 0
    %3087 = vmatpush1.bf16.xpose.msra.mxu0 0
    %3088 = vmatprep.subr.bf16.mxu0 0
    %3089 = vmatpush1.bf16.xpose.msra.mxu0 0
    %3090 = vmatprep.subr.bf16.mxu0 0
    %3091 = vmatpush1.bf16.xpose.msra.mxu0 0
    %3092 = vmatprep.subr.bf16.mxu0 0
    %3093 = vmatpush1.bf16.xpose.msra.mxu0 %v3076
    %3094 = vmatprep.subr.bf16.mxu0 0
    %3095 = vmatpush2.bf16.xpose.msra.mxu0 0
    %3096 = vmatprep.subr.bf16.mxu0 0
    %3097 = vmatpush2.bf16.xpose.msra.mxu0 0
    %3098 = vmatprep.subr.bf16.mxu0 0
    %3099 = vmatpush2.bf16.xpose.msra.mxu0 0
    %3100 = vmatprep.subr.bf16.mxu0 0
    %3101 = vmatpush2.bf16.xpose.msra.mxu0 0
    %3102 = vmatprep.subr.bf16.mxu0 0
    %3103 = vmatpush2.bf16.xpose.msra.mxu0 0
    %3104 = vmatprep.subr.bf16.mxu0 0
    %3105 = vmatpush2.bf16.xpose.msra.mxu0 0
    %3106 = vmatprep.subr.bf16.mxu0 0
    %3107 = vmatpush2.bf16.xpose.msra.mxu0 0
    %3108 = vmatprep.subr.bf16.mxu0 0
    %3109 = vmatpush2.bf16.xpose.msra.mxu0 0
    %3110 = vmatprep.mubr.bf16.mxu0 0
    %3111 = vmatmul.mubr.bf16.gmra.mxu0 %v3073
    %v3112 = vpop.f32.mrf.mxu0
    %v3113 = vadd.f32 0.0, %v3112
    %v3114 = vpop.f32.mrf.mxu0
    %v3115 = vpop.f32.mrf.mxu0
    %v3116 = vadd.f32 0.0, %v3115
    %v3117 = vpop.f32.mrf.mxu0
    %3118 = vdwg.mxu0
    %v3119 = vmul.f32 %v3113, 0.17677669
    %v3120 = vmul.f32 %v3116, 0.17677669
    %v3121 = vlaneseq
    %v3122 = vshrl.u32 %v3121, 7
    %v3123 = vsub.s32 0, %v3122
    %v3124 = vrot.slane %v2773, %v3123
    %v3125 = vadd.f32 %v3119, %v3124
    %v3126 = vadd.f32 %v3120, %v3124
    %v3127 = vsel %vm566, %v3125, -inf
    %3128 = vmax.xlane.f32.xlu0 %v3127
    %v3129 = vpop.xlane.xlu0 %3128
    %v3130 = vsel %vm566, %v3126, -inf
    %3131 = vmax.xlane.f32.xlu0 %v3130
    %v3132 = vpop.xlane.xlu0 %3131
    %v3133 = vsub.f32 %v3125, %v3129
    %v3134 = vsub.f32 %v3126, %v3132
    %v3135 = vmul.f32 %v3133, 1.442695
    %v3136 = vpow.pop %v3135
    %v3137 = vmul.f32 %v3134, 1.442695
    %v3138 = vpow.pop %v3137
    %v3139 = vsel %vm566, %v3136, 0.0
    %3140 = vadd.xlane.f32.xlu0 %v3139
    %v3141 = vpop.xlane.xlu0 %3140
    %v3142 = vsel %vm566, %v3138, 0.0
    %3143 = vadd.xlane.f32.xlu0 %v3142
    %v3144 = vpop.xlane.xlu0 %3143
    %v3145 = vpack.c.bf16 %v3138, %v3136
    %v3146 = vpack.c.bf16 %v3067, %v3064
    %v3148 = vsel %vm566, %v3145, 0
    %3150 = vmatprep.subr.bf16.mxu0 0
    %3151 = vmatpush1.bf16.msra.mxu0 0
    %3152 = vmatprep.subr.bf16.mxu0 0
    %3153 = vmatpush1.bf16.msra.mxu0 0
    %3154 = vmatprep.subr.bf16.mxu0 0
    %3155 = vmatpush1.bf16.msra.mxu0 0
    %3156 = vmatprep.subr.bf16.mxu0 0
    %3157 = vmatpush1.bf16.msra.mxu0 0
    %3158 = vmatprep.subr.bf16.mxu0 0
    %3159 = vmatpush1.bf16.msra.mxu0 0
    %3160 = vmatprep.subr.bf16.mxu0 0
    %3161 = vmatpush1.bf16.msra.mxu0 0
    %3162 = vmatprep.subr.bf16.mxu0 0
    %3163 = vmatpush1.bf16.msra.mxu0 0
    %3164 = vmatprep.subr.bf16.mxu0 0
    %3165 = vmatpush1.bf16.msra.mxu0 %v3146
    %3166 = vmatprep.subr.bf16.mxu0 0
    %3167 = vmatpush2.bf16.msra.mxu0 0
    %3168 = vmatprep.subr.bf16.mxu0 0
    %3169 = vmatpush2.bf16.msra.mxu0 0
    %3170 = vmatprep.subr.bf16.mxu0 0
    %3171 = vmatpush2.bf16.msra.mxu0 0
    %3172 = vmatprep.subr.bf16.mxu0 0
    %3173 = vmatpush2.bf16.msra.mxu0 0
    %3174 = vmatprep.subr.bf16.mxu0 0
    %3175 = vmatpush2.bf16.msra.mxu0 0
    %3176 = vmatprep.subr.bf16.mxu0 0
    %3177 = vmatpush2.bf16.msra.mxu0 0
    %3178 = vmatprep.subr.bf16.mxu0 0
    %3179 = vmatpush2.bf16.msra.mxu0 0
    %3180 = vmatprep.subr.bf16.mxu0 0
    %3181 = vmatpush2.bf16.msra.mxu0 0
    %3182 = vmatprep.mubr.bf16.mxu0 0
    %3183 = vmatmul.mubr.bf16.gmra.mxu0 %v3148
    %v3184 = vpop.f32.mrf.mxu0
    %v3185 = vadd.f32 0.0, %v3184
    %v3186 = vpop.f32.mrf.mxu0
    %v3187 = vpop.f32.mrf.mxu0
    %v3188 = vadd.f32 0.0, %v3187
    %v3189 = vpop.f32.mrf.mxu0
    %3190 = vdwg.mxu0
    %v3191 = vrcp.pop %v3141
    %v3192 = vrcp.pop %v3144
    %v3193 = vmul.f32 %v3185, %v3191
    %v3194 = vmul.f32 %v3188, %v3192
    %v3195 = vpack.c.bf16 %v3194, %v3193
    %s3196 = scalar_lea.vmem %s11, 64
    %v3197 = vld [vmem:[%s3196] sm:$0xf]
    %v3198 = vld [vmem:[%s3196 + $0x4] sm:$0xf]
    %v3199 = vld [vmem:[%s3196 + $0x8] sm:$0xf]
    %v3200 = vld [vmem:[%s3196 + $0xc] sm:$0xf]
    %s3201 = scalar_lea.vmem %s5, 160
    %v3202 = vld [vmem:[%s3201] sm:$0xf]
    %v3203 = vld [vmem:[%s3201 + $0x4] sm:$0xf]
    %v3204 = vld [vmem:[%s3201 + $0x8] sm:$0xf]
    %v3205 = vld [vmem:[%s3201 + $0xc] sm:$0xf]
    %v3206 = vld [vmem:[%s3201 + $0x10] sm:$0xf]
    %v3207 = vld [vmem:[%s3201 + $0x14] sm:$0xf]
    %v3208 = vld [vmem:[%s3201 + $0x18] sm:$0xf]
    %v3209 = vld [vmem:[%s3201 + $0x1c] sm:$0xf]
    %s3210 = scalar_lea.vmem %s6, 5
    %v3211 = vld [vmem:[%s3210] sm:$0x1]
    %v3213 = vlaneseq
    %v3214 = vshrl.u32 %v3213, 7
    %v3215 = vsub.s32 0, %v3214
    %v3216 = vrot.slane %v3211, %v3215
    %v3226 = vunpack.c.l.b16 %v3202
    %v3227 = vunpack.c.l.b16 %v3203
    %v3228 = vunpack.c.l.b16 %v3204
    %v3229 = vunpack.c.l.b16 %v3205
    %v3230 = vunpack.c.l.b16 %v3206
    %v3231 = vunpack.c.l.b16 %v3207
    %v3232 = vunpack.c.l.b16 %v3208
    %v3233 = vunpack.c.l.b16 %v3209
    %v3234 = vpack.c.b16 %v3227, %v3226
    %v3235 = vpack.c.b16 %v3229, %v3228
    %v3236 = vpack.c.b16 %v3231, %v3230
    %v3237 = vpack.c.b16 %v3233, %v3232
    %3242 = vmatprep.subr.bf16.mxu0 0
    %3243 = vmatpush1.bf16.msra.mxu0 0
    %3244 = vmatprep.subr.bf16.mxu0 0
    %3245 = vmatpush1.bf16.msra.mxu0 0
    %3246 = vmatprep.subr.bf16.mxu0 0
    %3247 = vmatpush1.bf16.msra.mxu0 0
    %3248 = vmatprep.subr.bf16.mxu0 0
    %3249 = vmatpush1.bf16.msra.mxu0 0
    %3250 = vmatprep.subr.bf16.mxu0 0
    %3251 = vmatpush1.bf16.msra.mxu0 %v3237
    %3252 = vmatprep.subr.bf16.mxu0 0
    %3253 = vmatpush1.bf16.msra.mxu0 %v3236
    %3254 = vmatprep.subr.bf16.mxu0 0
    %3255 = vmatpush1.bf16.msra.mxu0 %v3235
    %3256 = vmatprep.subr.bf16.mxu0 0
    %3257 = vmatpush1.bf16.msra.mxu0 %v3234
    %3258 = vmatprep.subr.bf16.mxu0 0
    %3259 = vmatpush2.bf16.msra.mxu0 0
    %3260 = vmatprep.subr.bf16.mxu0 0
    %3261 = vmatpush2.bf16.msra.mxu0 0
    %3262 = vmatprep.subr.bf16.mxu0 0
    %3263 = vmatpush2.bf16.msra.mxu0 0
    %3264 = vmatprep.subr.bf16.mxu0 0
    %3265 = vmatpush2.bf16.msra.mxu0 0
    %3266 = vmatprep.subr.bf16.mxu0 0
    %3267 = vmatpush2.bf16.msra.mxu0 0
    %3268 = vmatprep.subr.bf16.mxu0 0
    %3269 = vmatpush2.bf16.msra.mxu0 0
    %3270 = vmatprep.subr.bf16.mxu0 0
    %3271 = vmatpush2.bf16.msra.mxu0 0
    %3272 = vmatprep.subr.bf16.mxu0 0
    %3273 = vmatpush2.bf16.msra.mxu0 0
    %3274 = vmatprep.mubr.bf16.mxu0 0
    %3275 = vmatmul.mubr.bf16.gmra.mxu0 %v2863
    %v3276 = vpop.f32.mrf.mxu0
    %v3277 = vadd.f32 %v3216, %v3276
    %v3278 = vpop.f32.mrf.mxu0
    %v3279 = vpop.f32.mrf.mxu0
    %v3280 = vadd.f32 %v3216, %v3279
    %v3281 = vpop.f32.mrf.mxu0
    %3282 = vdwg.mxu0
    %s3283 = scalar_lea.vmem %s7, 160
    %v3284 = vld [vmem:[%s3283] sm:$0xf]
    %v3285 = vld [vmem:[%s3283 + $0x4] sm:$0xf]
    %v3286 = vld [vmem:[%s3283 + $0x8] sm:$0xf]
    %v3287 = vld [vmem:[%s3283 + $0xc] sm:$0xf]
    %v3288 = vld [vmem:[%s3283 + $0x10] sm:$0xf]
    %v3289 = vld [vmem:[%s3283 + $0x14] sm:$0xf]
    %v3290 = vld [vmem:[%s3283 + $0x18] sm:$0xf]
    %v3291 = vld [vmem:[%s3283 + $0x1c] sm:$0xf]
    %s3292 = scalar_lea.vmem %s8, 5
    %v3293 = vld [vmem:[%s3292] sm:$0x1]
    %v3295 = vlaneseq
    %v3296 = vshrl.u32 %v3295, 7
    %v3297 = vsub.s32 0, %v3296
    %v3298 = vrot.slane %v3293, %v3297
    %v3308 = vunpack.c.l.b16 %v3284
    %v3309 = vunpack.c.l.b16 %v3285
    %v3310 = vunpack.c.l.b16 %v3286
    %v3311 = vunpack.c.l.b16 %v3287
    %v3312 = vunpack.c.l.b16 %v3288
    %v3313 = vunpack.c.l.b16 %v3289
    %v3314 = vunpack.c.l.b16 %v3290
    %v3315 = vunpack.c.l.b16 %v3291
    %v3316 = vpack.c.b16 %v3309, %v3308
    %v3317 = vpack.c.b16 %v3311, %v3310
    %v3318 = vpack.c.b16 %v3313, %v3312
    %v3319 = vpack.c.b16 %v3315, %v3314
    %3324 = vmatprep.subr.bf16.mxu0 0
    %3325 = vmatpush1.bf16.msra.mxu0 0
    %3326 = vmatprep.subr.bf16.mxu0 0
    %3327 = vmatpush1.bf16.msra.mxu0 0
    %3328 = vmatprep.subr.bf16.mxu0 0
    %3329 = vmatpush1.bf16.msra.mxu0 0
    %3330 = vmatprep.subr.bf16.mxu0 0
    %3331 = vmatpush1.bf16.msra.mxu0 0
    %3332 = vmatprep.subr.bf16.mxu0 0
    %3333 = vmatpush1.bf16.msra.mxu0 %v3319
    %3334 = vmatprep.subr.bf16.mxu0 0
    %3335 = vmatpush1.bf16.msra.mxu0 %v3318
    %3336 = vmatprep.subr.bf16.mxu0 0
    %3337 = vmatpush1.bf16.msra.mxu0 %v3317
    %3338 = vmatprep.subr.bf16.mxu0 0
    %3339 = vmatpush1.bf16.msra.mxu0 %v3316
    %3340 = vmatprep.subr.bf16.mxu0 0
    %3341 = vmatpush2.bf16.msra.mxu0 0
    %3342 = vmatprep.subr.bf16.mxu0 0
    %3343 = vmatpush2.bf16.msra.mxu0 0
    %3344 = vmatprep.subr.bf16.mxu0 0
    %3345 = vmatpush2.bf16.msra.mxu0 0
    %3346 = vmatprep.subr.bf16.mxu0 0
    %3347 = vmatpush2.bf16.msra.mxu0 0
    %3348 = vmatprep.subr.bf16.mxu0 0
    %3349 = vmatpush2.bf16.msra.mxu0 0
    %3350 = vmatprep.subr.bf16.mxu0 0
    %3351 = vmatpush2.bf16.msra.mxu0 0
    %3352 = vmatprep.subr.bf16.mxu0 0
    %3353 = vmatpush2.bf16.msra.mxu0 0
    %3354 = vmatprep.subr.bf16.mxu0 0
    %3355 = vmatpush2.bf16.msra.mxu0 0
    %3356 = vmatprep.mubr.bf16.mxu0 0
    %3357 = vmatmul.mubr.bf16.gmra.mxu0 %v2863
    %v3358 = vpop.f32.mrf.mxu0
    %v3359 = vadd.f32 %v3298, %v3358
    %v3360 = vpop.f32.mrf.mxu0
    %v3361 = vpop.f32.mrf.mxu0
    %v3362 = vadd.f32 %v3298, %v3361
    %v3363 = vpop.f32.mrf.mxu0
    %3364 = vdwg.mxu0
    %s3365 = scalar_lea.vmem %s9, 160
    %v3366 = vld [vmem:[%s3365] sm:$0xf]
    %v3367 = vld [vmem:[%s3365 + $0x4] sm:$0xf]
    %v3368 = vld [vmem:[%s3365 + $0x8] sm:$0xf]
    %v3369 = vld [vmem:[%s3365 + $0xc] sm:$0xf]
    %v3370 = vld [vmem:[%s3365 + $0x10] sm:$0xf]
    %v3371 = vld [vmem:[%s3365 + $0x14] sm:$0xf]
    %v3372 = vld [vmem:[%s3365 + $0x18] sm:$0xf]
    %v3373 = vld [vmem:[%s3365 + $0x1c] sm:$0xf]
    %s3374 = scalar_lea.vmem %s10, 5
    %v3375 = vld [vmem:[%s3374] sm:$0x1]
    %v3377 = vlaneseq
    %v3378 = vshrl.u32 %v3377, 7
    %v3379 = vsub.s32 0, %v3378
    %v3380 = vrot.slane %v3375, %v3379
    %v3390 = vunpack.c.l.b16 %v3366
    %v3391 = vunpack.c.l.b16 %v3367
    %v3392 = vunpack.c.l.b16 %v3368
    %v3393 = vunpack.c.l.b16 %v3369
    %v3394 = vunpack.c.l.b16 %v3370
    %v3395 = vunpack.c.l.b16 %v3371
    %v3396 = vunpack.c.l.b16 %v3372
    %v3397 = vunpack.c.l.b16 %v3373
    %v3398 = vpack.c.b16 %v3391, %v3390
    %v3399 = vpack.c.b16 %v3393, %v3392
    %v3400 = vpack.c.b16 %v3395, %v3394
    %v3401 = vpack.c.b16 %v3397, %v3396
    %3406 = vmatprep.subr.bf16.mxu0 0
    %3407 = vmatpush1.bf16.msra.mxu0 0
    %3408 = vmatprep.subr.bf16.mxu0 0
    %3409 = vmatpush1.bf16.msra.mxu0 0
    %3410 = vmatprep.subr.bf16.mxu0 0
    %3411 = vmatpush1.bf16.msra.mxu0 0
    %3412 = vmatprep.subr.bf16.mxu0 0
    %3413 = vmatpush1.bf16.msra.mxu0 0
    %3414 = vmatprep.subr.bf16.mxu0 0
    %3415 = vmatpush1.bf16.msra.mxu0 %v3401
    %3416 = vmatprep.subr.bf16.mxu0 0
    %3417 = vmatpush1.bf16.msra.mxu0 %v3400
    %3418 = vmatprep.subr.bf16.mxu0 0
    %3419 = vmatpush1.bf16.msra.mxu0 %v3399
    %3420 = vmatprep.subr.bf16.mxu0 0
    %3421 = vmatpush1.bf16.msra.mxu0 %v3398
    %3422 = vmatprep.subr.bf16.mxu0 0
    %3423 = vmatpush2.bf16.msra.mxu0 0
    %3424 = vmatprep.subr.bf16.mxu0 0
    %3425 = vmatpush2.bf16.msra.mxu0 0
    %3426 = vmatprep.subr.bf16.mxu0 0
    %3427 = vmatpush2.bf16.msra.mxu0 0
    %3428 = vmatprep.subr.bf16.mxu0 0
    %3429 = vmatpush2.bf16.msra.mxu0 0
    %3430 = vmatprep.subr.bf16.mxu0 0
    %3431 = vmatpush2.bf16.msra.mxu0 0
    %3432 = vmatprep.subr.bf16.mxu0 0
    %3433 = vmatpush2.bf16.msra.mxu0 0
    %3434 = vmatprep.subr.bf16.mxu0 0
    %3435 = vmatpush2.bf16.msra.mxu0 0
    %3436 = vmatprep.subr.bf16.mxu0 0
    %3437 = vmatpush2.bf16.msra.mxu0 0
    %3438 = vmatprep.mubr.bf16.mxu0 0
    %3439 = vmatmul.mubr.bf16.gmra.mxu0 %v2863
    %v3440 = vpop.f32.mrf.mxu0
    %v3441 = vadd.f32 %v3380, %v3440
    %v3442 = vpop.f32.mrf.mxu0
    %v3443 = vpop.f32.mrf.mxu0
    %v3444 = vadd.f32 %v3380, %v3443
    %v3445 = vpop.f32.mrf.mxu0
    %3446 = vdwg.mxu0
    %v3447 = vpack.c.bf16 %v3280, %v3277
    %v3448 = vpack.c.bf16 %v3362, %v3359
    %v3450 = vsel %vm510, %v3447, 0
    %v3453 = vsel %vm510, %v3448, 0
    %3455 = vmatprep.subr.bf16.mxu0 0
    %3456 = vmatpush1.bf16.xpose.msra.mxu0 0
    %3457 = vmatprep.subr.bf16.mxu0 0
    %3458 = vmatpush1.bf16.xpose.msra.mxu0 0
    %3459 = vmatprep.subr.bf16.mxu0 0
    %3460 = vmatpush1.bf16.xpose.msra.mxu0 0
    %3461 = vmatprep.subr.bf16.mxu0 0
    %3462 = vmatpush1.bf16.xpose.msra.mxu0 0
    %3463 = vmatprep.subr.bf16.mxu0 0
    %3464 = vmatpush1.bf16.xpose.msra.mxu0 0
    %3465 = vmatprep.subr.bf16.mxu0 0
    %3466 = vmatpush1.bf16.xpose.msra.mxu0 0
    %3467 = vmatprep.subr.bf16.mxu0 0
    %3468 = vmatpush1.bf16.xpose.msra.mxu0 0
    %3469 = vmatprep.subr.bf16.mxu0 0
    %3470 = vmatpush1.bf16.xpose.msra.mxu0 %v3453
    %3471 = vmatprep.subr.bf16.mxu0 0
    %3472 = vmatpush2.bf16.xpose.msra.mxu0 0
    %3473 = vmatprep.subr.bf16.mxu0 0
    %3474 = vmatpush2.bf16.xpose.msra.mxu0 0
    %3475 = vmatprep.subr.bf16.mxu0 0
    %3476 = vmatpush2.bf16.xpose.msra.mxu0 0
    %3477 = vmatprep.subr.bf16.mxu0 0
    %3478 = vmatpush2.bf16.xpose.msra.mxu0 0
    %3479 = vmatprep.subr.bf16.mxu0 0
    %3480 = vmatpush2.bf16.xpose.msra.mxu0 0
    %3481 = vmatprep.subr.bf16.mxu0 0
    %3482 = vmatpush2.bf16.xpose.msra.mxu0 0
    %3483 = vmatprep.subr.bf16.mxu0 0
    %3484 = vmatpush2.bf16.xpose.msra.mxu0 0
    %3485 = vmatprep.subr.bf16.mxu0 0
    %3486 = vmatpush2.bf16.xpose.msra.mxu0 0
    %3487 = vmatprep.mubr.bf16.mxu0 0
    %3488 = vmatmul.mubr.bf16.gmra.mxu0 %v3450
    %v3489 = vpop.f32.mrf.mxu0
    %v3490 = vadd.f32 0.0, %v3489
    %v3491 = vpop.f32.mrf.mxu0
    %v3492 = vpop.f32.mrf.mxu0
    %v3493 = vadd.f32 0.0, %v3492
    %v3494 = vpop.f32.mrf.mxu0
    %3495 = vdwg.mxu0
    %v3496 = vmul.f32 %v3490, 0.17677669
    %v3497 = vmul.f32 %v3493, 0.17677669
    %v3498 = vadd.f32 %v3496, %v3124
    %v3499 = vadd.f32 %v3497, %v3124
    %v3500 = vsel %vm566, %v3498, -inf
    %3501 = vmax.xlane.f32.xlu0 %v3500
    %v3502 = vpop.xlane.xlu0 %3501
    %v3503 = vsel %vm566, %v3499, -inf
    %3504 = vmax.xlane.f32.xlu0 %v3503
    %v3505 = vpop.xlane.xlu0 %3504
    %v3506 = vsub.f32 %v3498, %v3502
    %v3507 = vsub.f32 %v3499, %v3505
    %v3508 = vmul.f32 %v3506, 1.442695
    %v3509 = vpow.pop %v3508
    %v3510 = vmul.f32 %v3507, 1.442695
    %v3511 = vpow.pop %v3510
    %v3512 = vsel %vm566, %v3509, 0.0
    %3513 = vadd.xlane.f32.xlu0 %v3512
    %v3514 = vpop.xlane.xlu0 %3513
    %v3515 = vsel %vm566, %v3511, 0.0
    %3516 = vadd.xlane.f32.xlu0 %v3515
    %v3517 = vpop.xlane.xlu0 %3516
    %v3518 = vpack.c.bf16 %v3511, %v3509
    %v3519 = vpack.c.bf16 %v3444, %v3441
    %v3521 = vsel %vm566, %v3518, 0
    %3523 = vmatprep.subr.bf16.mxu0 0
    %3524 = vmatpush1.bf16.msra.mxu0 0
    %3525 = vmatprep.subr.bf16.mxu0 0
    %3526 = vmatpush1.bf16.msra.mxu0 0
    %3527 = vmatprep.subr.bf16.mxu0 0
    %3528 = vmatpush1.bf16.msra.mxu0 0
    %3529 = vmatprep.subr.bf16.mxu0 0
    %3530 = vmatpush1.bf16.msra.mxu0 0
    %3531 = vmatprep.subr.bf16.mxu0 0
    %3532 = vmatpush1.bf16.msra.mxu0 0
    %3533 = vmatprep.subr.bf16.mxu0 0
    %3534 = vmatpush1.bf16.msra.mxu0 0
    %3535 = vmatprep.subr.bf16.mxu0 0
    %3536 = vmatpush1.bf16.msra.mxu0 0
    %3537 = vmatprep.subr.bf16.mxu0 0
    %3538 = vmatpush1.bf16.msra.mxu0 %v3519
    %3539 = vmatprep.subr.bf16.mxu0 0
    %3540 = vmatpush2.bf16.msra.mxu0 0
    %3541 = vmatprep.subr.bf16.mxu0 0
    %3542 = vmatpush2.bf16.msra.mxu0 0
    %3543 = vmatprep.subr.bf16.mxu0 0
    %3544 = vmatpush2.bf16.msra.mxu0 0
    %3545 = vmatprep.subr.bf16.mxu0 0
    %3546 = vmatpush2.bf16.msra.mxu0 0
    %3547 = vmatprep.subr.bf16.mxu0 0
    %3548 = vmatpush2.bf16.msra.mxu0 0
    %3549 = vmatprep.subr.bf16.mxu0 0
    %3550 = vmatpush2.bf16.msra.mxu0 0
    %3551 = vmatprep.subr.bf16.mxu0 0
    %3552 = vmatpush2.bf16.msra.mxu0 0
    %3553 = vmatprep.subr.bf16.mxu0 0
    %3554 = vmatpush2.bf16.msra.mxu0 0
    %3555 = vmatprep.mubr.bf16.mxu0 0
    %3556 = vmatmul.mubr.bf16.gmra.mxu0 %v3521
    %v3557 = vpop.f32.mrf.mxu0
    %v3558 = vadd.f32 0.0, %v3557
    %v3559 = vpop.f32.mrf.mxu0
    %v3560 = vpop.f32.mrf.mxu0
    %v3561 = vadd.f32 0.0, %v3560
    %v3562 = vpop.f32.mrf.mxu0
    %3563 = vdwg.mxu0
    %v3564 = vrcp.pop %v3514
    %v3565 = vrcp.pop %v3517
    %v3566 = vmul.f32 %v3558, %v3564
    %v3567 = vmul.f32 %v3561, %v3565
    %v3568 = vpack.c.bf16 %v3567, %v3566
    %s3569 = scalar_lea.vmem %s11, 80
    %v3570 = vld [vmem:[%s3569] sm:$0xf]
    %v3571 = vld [vmem:[%s3569 + $0x4] sm:$0xf]
    %v3572 = vld [vmem:[%s3569 + $0x8] sm:$0xf]
    %v3573 = vld [vmem:[%s3569 + $0xc] sm:$0xf]
    %v3578 = vunpack.c.l.b16 %v3570
    %v3579 = vunpack.c.l.b16 %v3571
    %v3580 = vunpack.c.l.b16 %v3572
    %v3581 = vunpack.c.l.b16 %v3573
    %v3582 = vpack.c.b16 %v3579, %v3578
    %v3583 = vpack.c.b16 %v3581, %v3580
    %v3587 = vsel %vm510, %v3568, 0
    %3589 = vmatprep.subr.bf16.mxu0 0
    %3590 = vmatpush1.bf16.msra.mxu0 0
    %3591 = vmatprep.subr.bf16.mxu0 0
    %3592 = vmatpush1.bf16.msra.mxu0 0
    %3593 = vmatprep.subr.bf16.mxu0 0
    %3594 = vmatpush1.bf16.msra.mxu0 0
    %3595 = vmatprep.subr.bf16.mxu0 0
    %3596 = vmatpush1.bf16.msra.mxu0 0
    %3597 = vmatprep.subr.bf16.mxu0 0
    %3598 = vmatpush1.bf16.msra.mxu0 0
    %3599 = vmatprep.subr.bf16.mxu0 0
    %3600 = vmatpush1.bf16.msra.mxu0 0
    %3601 = vmatprep.subr.bf16.mxu0 0
    %3602 = vmatpush1.bf16.msra.mxu0 %v3583
    %3603 = vmatprep.subr.bf16.mxu0 0
    %3604 = vmatpush1.bf16.msra.mxu0 %v3582
    %3605 = vmatprep.subr.bf16.mxu0 0
    %3606 = vmatpush2.bf16.msra.mxu0 0
    %3607 = vmatprep.subr.bf16.mxu0 0
    %3608 = vmatpush2.bf16.msra.mxu0 0
    %3609 = vmatprep.subr.bf16.mxu0 0
    %3610 = vmatpush2.bf16.msra.mxu0 0
    %3611 = vmatprep.subr.bf16.mxu0 0
    %3612 = vmatpush2.bf16.msra.mxu0 0
    %3613 = vmatprep.subr.bf16.mxu0 0
    %3614 = vmatpush2.bf16.msra.mxu0 0
    %3615 = vmatprep.subr.bf16.mxu0 0
    %3616 = vmatpush2.bf16.msra.mxu0 0
    %3617 = vmatprep.subr.bf16.mxu0 0
    %3618 = vmatpush2.bf16.msra.mxu0 0
    %3619 = vmatprep.subr.bf16.mxu0 0
    %3620 = vmatpush2.bf16.msra.mxu0 0
    %3621 = vmatprep.mubr.bf16.mxu0 0
    %3622 = vmatmul.mubr.bf16.gmra.mxu0 %v3587
    %v3623 = vpop.f32.mrf.mxu0
    %v3624 = vadd.f32 0.0, %v3623
    %v3625 = vpop.f32.mrf.mxu0
    %v3626 = vpop.f32.mrf.mxu0
    %v3627 = vadd.f32 0.0, %v3626
    %v3628 = vpop.f32.mrf.mxu0
    %3629 = vdwg.mxu0
    %v3634 = vunpack.c.l.b16 %v3197
    %v3635 = vunpack.c.l.b16 %v3198
    %v3636 = vunpack.c.l.b16 %v3199
    %v3637 = vunpack.c.l.b16 %v3200
    %v3638 = vpack.c.b16 %v3635, %v3634
    %v3639 = vpack.c.b16 %v3637, %v3636
    %v3643 = vsel %vm510, %v3195, 0
    %3645 = vmatprep.subr.bf16.mxu0 0
    %3646 = vmatpush1.bf16.msra.mxu0 0
    %3647 = vmatprep.subr.bf16.mxu0 0
    %3648 = vmatpush1.bf16.msra.mxu0 0
    %3649 = vmatprep.subr.bf16.mxu0 0
    %3650 = vmatpush1.bf16.msra.mxu0 0
    %3651 = vmatprep.subr.bf16.mxu0 0
    %3652 = vmatpush1.bf16.msra.mxu0 0
    %3653 = vmatprep.subr.bf16.mxu0 0
    %3654 = vmatpush1.bf16.msra.mxu0 0
    %3655 = vmatprep.subr.bf16.mxu0 0
    %3656 = vmatpush1.bf16.msra.mxu0 0
    %3657 = vmatprep.subr.bf16.mxu0 0
    %3658 = vmatpush1.bf16.msra.mxu0 %v3639
    %3659 = vmatprep.subr.bf16.mxu0 0
    %3660 = vmatpush1.bf16.msra.mxu0 %v3638
    %3661 = vmatprep.subr.bf16.mxu0 0
    %3662 = vmatpush2.bf16.msra.mxu0 0
    %3663 = vmatprep.subr.bf16.mxu0 0
    %3664 = vmatpush2.bf16.msra.mxu0 0
    %3665 = vmatprep.subr.bf16.mxu0 0
    %3666 = vmatpush2.bf16.msra.mxu0 0
    %3667 = vmatprep.subr.bf16.mxu0 0
    %3668 = vmatpush2.bf16.msra.mxu0 0
    %3669 = vmatprep.subr.bf16.mxu0 0
    %3670 = vmatpush2.bf16.msra.mxu0 0
    %3671 = vmatprep.subr.bf16.mxu0 0
    %3672 = vmatpush2.bf16.msra.mxu0 0
    %3673 = vmatprep.subr.bf16.mxu0 0
    %3674 = vmatpush2.bf16.msra.mxu0 0
    %3675 = vmatprep.subr.bf16.mxu0 0
    %3676 = vmatpush2.bf16.msra.mxu0 0
    %3677 = vmatprep.mubr.bf16.mxu0 0
    %3678 = vmatmul.mubr.bf16.gmra.mxu0 %v3643
    %v3679 = vpop.f32.mrf.mxu0
    %v3680 = vadd.f32 %v3624, %v3679
    %v3681 = vpop.f32.mrf.mxu0
    %v3682 = vpop.f32.mrf.mxu0
    %v3683 = vadd.f32 %v3627, %v3682
    %v3684 = vpop.f32.mrf.mxu0
    %3685 = vdwg.mxu0
    %v3686 = vadd.f32 %v2765, %v3680
    %v3687 = vadd.f32 %v2766, %v3683
    %s3688 = scalar_lea.vmem %s12, 2
    %v3689 = vld [vmem:[%s3688] sm:$0x1]
    %v3691 = vlaneseq
    %v3692 = vshrl.u32 %v3691, 7
    %v3693 = vsub.s32 0, %v3692
    %v3694 = vrot.slane %v3689, %v3693
    %v3696 = vadd.f32 %v3686, %v3694
    %v3697 = vadd.f32 %v3687, %v3694
    %s3698 = scalar_lea.vmem %s13, 2
    %v3699 = vld [vmem:[%s3698] sm:$0x1]
    %s3700 = scalar_lea.vmem %s14, 2
    %v3701 = vld [vmem:[%s3700] sm:$0x1]
    %v3702 = vsel %vm93, %v3696, 0.0
    %3703 = vadd.xlane.f32.xlu0 %v3702
    %v3704 = vpop.xlane.xlu0 %3703
    %v3705 = vsel %vm93, %v3697, 0.0
    %3706 = vadd.xlane.f32.xlu0 %v3705
    %v3707 = vpop.xlane.xlu0 %3706
    %v3708 = vmul.f32 %v3704, %v227
    %v3709 = vmul.f32 %v3707, %v227
    %v3710 = vsub.f32 %v3696, %v3708
    %v3711 = vsub.f32 %v3697, %v3709
    %v3712 = vmul.f32 %v3710, %v3710
    %v3713 = vmul.f32 %v3711, %v3711
    %v3714 = vsel %vm93, %v3712, 0.0
    %3715 = vadd.xlane.f32.xlu0 %v3714
    %v3716 = vpop.xlane.xlu0 %3715
    %v3717 = vsel %vm93, %v3713, 0.0
    %3718 = vadd.xlane.f32.xlu0 %v3717
    %v3719 = vpop.xlane.xlu0 %3718
    %v3720 = vmul.f32 %v3716, %v227
    %v3721 = vmul.f32 %v3719, %v227
    %v3722 = vadd.f32 %v3720, 1e-05
    %v3723 = vadd.f32 %v3721, 1e-05
    %v3724 = vrsqrt.pop %v3722
    %v3725 = vrsqrt.pop %v3723
    %v3726 = vmul.f32 %v3710, %v3724
    %v3727 = vmul.f32 %v3711, %v3725
    %v3729 = vlaneseq
    %v3730 = vshrl.u32 %v3729, 7
    %v3731 = vsub.s32 0, %v3730
    %v3732 = vrot.slane %v3699, %v3731
    %v3734 = vmul.f32 %v3726, %v3732
    %v3735 = vmul.f32 %v3727, %v3732
    %v3737 = vlaneseq
    %v3738 = vshrl.u32 %v3737, 7
    %v3739 = vsub.s32 0, %v3738
    %v3740 = vrot.slane %v3701, %v3739
    %v3742 = vadd.f32 %v3734, %v3740
    %v3743 = vadd.f32 %v3735, %v3740
    %v3744 = vpack.c.bf16 %v3743, %v3742
    %s3745 = scalar_lea.vmem %s15, 128
    %v3746 = vld [vmem:[%s3745] sm:$0xff]
    %v3747 = vld [vmem:[%s3745 + $0x8] sm:$0xff]
    %v3748 = vld [vmem:[%s3745 + $0x10] sm:$0xff]
    %v3749 = vld [vmem:[%s3745 + $0x18] sm:$0xff]
    %v3750 = vld [vmem:[%s3745 + $0x20] sm:$0xff]
    %v3751 = vld [vmem:[%s3745 + $0x28] sm:$0xff]
    %v3752 = vld [vmem:[%s3745 + $0x30] sm:$0xff]
    %v3753 = vld [vmem:[%s3745 + $0x38] sm:$0xff]
    %s3754 = scalar_lea.vmem %s16, 4
    %v3755 = vld [vmem:[%s3754] sm:$0x3]
    %v3757 = vlaneseq
    %v3758 = vshrl.u32 %v3757, 7
    %v3759 = vsub.s32 0, %v3758
    %v3760 = vrot.slane %v3755, %v3759
    %v3761 = vlaneseq
    %v3762 = vshrl.u32 %v3761, 7
    %v3763 = vsub.s32 1, %v3762
    %v3764 = vrot.slane %v3755, %v3763
    %v3775 = vunpack.c.l.b16 %v3746
    %v3776 = vunpack.c.h.b16 %v3746
    %v3777 = vunpack.c.l.b16 %v3747
    %v3778 = vunpack.c.h.b16 %v3747
    %v3779 = vunpack.c.l.b16 %v3748
    %v3780 = vunpack.c.h.b16 %v3748
    %v3781 = vunpack.c.l.b16 %v3749
    %v3782 = vunpack.c.h.b16 %v3749
    %v3783 = vunpack.c.l.b16 %v3750
    %v3784 = vunpack.c.h.b16 %v3750
    %v3785 = vunpack.c.l.b16 %v3751
    %v3786 = vunpack.c.h.b16 %v3751
    %v3787 = vunpack.c.l.b16 %v3752
    %v3788 = vunpack.c.h.b16 %v3752
    %v3789 = vunpack.c.l.b16 %v3753
    %v3790 = vunpack.c.h.b16 %v3753
    %v3791 = vpack.c.b16 %v3777, %v3775
    %v3792 = vpack.c.b16 %v3778, %v3776
    %v3793 = vpack.c.b16 %v3781, %v3779
    %v3794 = vpack.c.b16 %v3782, %v3780
    %v3795 = vpack.c.b16 %v3785, %v3783
    %v3796 = vpack.c.b16 %v3786, %v3784
    %v3797 = vpack.c.b16 %v3789, %v3787
    %v3798 = vpack.c.b16 %v3790, %v3788
    %v3808 = vsel %vm93, %v3744, 0
    %3810 = vmatprep.subr.bf16.mxu0 0
    %3811 = vmatpush1.bf16.msra.mxu0 0
    %3812 = vmatprep.subr.bf16.mxu0 0
    %3813 = vmatpush1.bf16.msra.mxu0 0
    %3814 = vmatprep.subr.bf16.mxu0 0
    %3815 = vmatpush1.bf16.msra.mxu0 0
    %3816 = vmatprep.subr.bf16.mxu0 0
    %3817 = vmatpush1.bf16.msra.mxu0 0
    %3818 = vmatprep.subr.bf16.mxu0 %v3798
    %3819 = vmatpush1.bf16.msra.mxu0 %v3797
    %3820 = vmatprep.subr.bf16.mxu0 %v3796
    %3821 = vmatpush1.bf16.msra.mxu0 %v3795
    %3822 = vmatprep.subr.bf16.mxu0 %v3794
    %3823 = vmatpush1.bf16.msra.mxu0 %v3793
    %3824 = vmatprep.subr.bf16.mxu0 %v3792
    %3825 = vmatpush1.bf16.msra.mxu0 %v3791
    %3826 = vmatprep.subr.bf16.mxu0 0
    %3827 = vmatpush2.bf16.msra.mxu0 0
    %3828 = vmatprep.subr.bf16.mxu0 0
    %3829 = vmatpush2.bf16.msra.mxu0 0
    %3830 = vmatprep.subr.bf16.mxu0 0
    %3831 = vmatpush2.bf16.msra.mxu0 0
    %3832 = vmatprep.subr.bf16.mxu0 0
    %3833 = vmatpush2.bf16.msra.mxu0 0
    %3834 = vmatprep.subr.bf16.mxu0 0
    %3835 = vmatpush2.bf16.msra.mxu0 0
    %3836 = vmatprep.subr.bf16.mxu0 0
    %3837 = vmatpush2.bf16.msra.mxu0 0
    %3838 = vmatprep.subr.bf16.mxu0 0
    %3839 = vmatpush2.bf16.msra.mxu0 0
    %3840 = vmatprep.subr.bf16.mxu0 0
    %3841 = vmatpush2.bf16.msra.mxu0 0
    %3842 = vmatprep.mubr.bf16.mxu0 0
    %3843 = vmatmul.mubr.bf16.gmra.mxu0 %v3808
    %v3844 = vpop.f32.mrf.mxu0
    %v3845 = vadd.f32 %v3760, %v3844
    %v3846 = vpop.f32.mrf.mxu0
    %v3847 = vadd.f32 %v3764, %v3846
    %v3848 = vpop.f32.mrf.mxu0
    %v3849 = vadd.f32 %v3760, %v3848
    %v3850 = vpop.f32.mrf.mxu0
    %v3851 = vadd.f32 %v3764, %v3850
    %3852 = vdwg.mxu0
    %v3853 = vmax.f32 %v3845, 0.0
    %v3854 = vmax.f32 %v3847, 0.0
    %v3855 = vmax.f32 %v3849, 0.0
    %v3856 = vmax.f32 %v3851, 0.0
    %v3857 = vpack.c.bf16 %v3855, %v3853
    %v3858 = vpack.c.bf16 %v3856, %v3854
    %s3859 = scalar_lea.vmem %s17, 256
    %v3860 = vld [vmem:[%s3859] sm:$0xf]
    %v3861 = vld [vmem:[%s3859 + $0x4] sm:$0xf]
    %v3862 = vld [vmem:[%s3859 + $0x8] sm:$0xf]
    %v3863 = vld [vmem:[%s3859 + $0xc] sm:$0xf]
    %v3864 = vld [vmem:[%s3859 + $0x10] sm:$0xf]
    %v3865 = vld [vmem:[%s3859 + $0x14] sm:$0xf]
    %v3866 = vld [vmem:[%s3859 + $0x18] sm:$0xf]
    %v3867 = vld [vmem:[%s3859 + $0x1c] sm:$0xf]
    %v3868 = vld [vmem:[%s3859 + $0x20] sm:$0xf]
    %v3869 = vld [vmem:[%s3859 + $0x24] sm:$0xf]
    %v3870 = vld [vmem:[%s3859 + $0x28] sm:$0xf]
    %v3871 = vld [vmem:[%s3859 + $0x2c] sm:$0xf]
    %v3872 = vld [vmem:[%s3859 + $0x30] sm:$0xf]
    %v3873 = vld [vmem:[%s3859 + $0x34] sm:$0xf]
    %v3874 = vld [vmem:[%s3859 + $0x38] sm:$0xf]
    %v3875 = vld [vmem:[%s3859 + $0x3c] sm:$0xf]
    %v3876 = vld [vmem:[%s3859 + $0x40] sm:$0xf]
    %v3877 = vld [vmem:[%s3859 + $0x44] sm:$0xf]
    %v3878 = vld [vmem:[%s3859 + $0x48] sm:$0xf]
    %v3879 = vld [vmem:[%s3859 + $0x4c] sm:$0xf]
    %v3880 = vld [vmem:[%s3859 + $0x50] sm:$0xf]
    %v3881 = vld [vmem:[%s3859 + $0x54] sm:$0xf]
    %v3882 = vld [vmem:[%s3859 + $0x58] sm:$0xf]
    %v3883 = vld [vmem:[%s3859 + $0x5c] sm:$0xf]
    %v3884 = vld [vmem:[%s3859 + $0x60] sm:$0xf]
    %v3885 = vld [vmem:[%s3859 + $0x64] sm:$0xf]
    %v3886 = vld [vmem:[%s3859 + $0x68] sm:$0xf]
    %v3887 = vld [vmem:[%s3859 + $0x6c] sm:$0xf]
    %v3888 = vld [vmem:[%s3859 + $0x70] sm:$0xf]
    %v3889 = vld [vmem:[%s3859 + $0x74] sm:$0xf]
    %v3890 = vld [vmem:[%s3859 + $0x78] sm:$0xf]
    %v3891 = vld [vmem:[%s3859 + $0x7c] sm:$0xf]
    %s3892 = scalar_lea.vmem %s18, 2
    %v3893 = vld [vmem:[%s3892] sm:$0x1]
    %v3895 = vlaneseq
    %v3896 = vshrl.u32 %v3895, 7
    %v3897 = vsub.s32 0, %v3896
    %v3898 = vrot.slane %v3893, %v3897
    %v3932 = vunpack.c.l.b16 %v3860
    %v3933 = vunpack.c.l.b16 %v3861
    %v3934 = vunpack.c.l.b16 %v3862
    %v3935 = vunpack.c.l.b16 %v3863
    %v3936 = vunpack.c.l.b16 %v3864
    %v3937 = vunpack.c.l.b16 %v3865
    %v3938 = vunpack.c.l.b16 %v3866
    %v3939 = vunpack.c.l.b16 %v3867
    %v3940 = vunpack.c.l.b16 %v3868
    %v3941 = vunpack.c.l.b16 %v3869
    %v3942 = vunpack.c.l.b16 %v3870
    %v3943 = vunpack.c.l.b16 %v3871
    %v3944 = vunpack.c.l.b16 %v3872
    %v3945 = vunpack.c.l.b16 %v3873
    %v3946 = vunpack.c.l.b16 %v3874
    %v3947 = vunpack.c.l.b16 %v3875
    %v3948 = vunpack.c.l.b16 %v3876
    %v3949 = vunpack.c.l.b16 %v3877
    %v3950 = vunpack.c.l.b16 %v3878
    %v3951 = vunpack.c.l.b16 %v3879
    %v3952 = vunpack.c.l.b16 %v3880
    %v3953 = vunpack.c.l.b16 %v3881
    %v3954 = vunpack.c.l.b16 %v3882
    %v3955 = vunpack.c.l.b16 %v3883
    %v3956 = vunpack.c.l.b16 %v3884
    %v3957 = vunpack.c.l.b16 %v3885
    %v3958 = vunpack.c.l.b16 %v3886
    %v3959 = vunpack.c.l.b16 %v3887
    %v3960 = vunpack.c.l.b16 %v3888
    %v3961 = vunpack.c.l.b16 %v3889
    %v3962 = vunpack.c.l.b16 %v3890
    %v3963 = vunpack.c.l.b16 %v3891
    %v3964 = vpack.c.b16 %v3933, %v3932
    %v3965 = vpack.c.b16 %v3935, %v3934
    %v3966 = vpack.c.b16 %v3937, %v3936
    %v3967 = vpack.c.b16 %v3939, %v3938
    %v3968 = vpack.c.b16 %v3941, %v3940
    %v3969 = vpack.c.b16 %v3943, %v3942
    %v3970 = vpack.c.b16 %v3945, %v3944
    %v3971 = vpack.c.b16 %v3947, %v3946
    %v3972 = vpack.c.b16 %v3949, %v3948
    %v3973 = vpack.c.b16 %v3951, %v3950
    %v3974 = vpack.c.b16 %v3953, %v3952
    %v3975 = vpack.c.b16 %v3955, %v3954
    %v3976 = vpack.c.b16 %v3957, %v3956
    %v3977 = vpack.c.b16 %v3959, %v3958
    %v3978 = vpack.c.b16 %v3961, %v3960
    %v3979 = vpack.c.b16 %v3963, %v3962
    %3996 = vmatprep.subr.bf16.mxu0 0
    %3997 = vmatpush1.bf16.msra.mxu0 %v3971
    %3998 = vmatprep.subr.bf16.mxu0 0
    %3999 = vmatpush1.bf16.msra.mxu0 %v3970
    %4000 = vmatprep.subr.bf16.mxu0 0
    %4001 = vmatpush1.bf16.msra.mxu0 %v3969
    %4002 = vmatprep.subr.bf16.mxu0 0
    %4003 = vmatpush1.bf16.msra.mxu0 %v3968
    %4004 = vmatprep.subr.bf16.mxu0 0
    %4005 = vmatpush1.bf16.msra.mxu0 %v3967
    %4006 = vmatprep.subr.bf16.mxu0 0
    %4007 = vmatpush1.bf16.msra.mxu0 %v3966
    %4008 = vmatprep.subr.bf16.mxu0 0
    %4009 = vmatpush1.bf16.msra.mxu0 %v3965
    %4010 = vmatprep.subr.bf16.mxu0 0
    %4011 = vmatpush1.bf16.msra.mxu0 %v3964
    %4012 = vmatprep.subr.bf16.mxu0 0
    %4013 = vmatpush2.bf16.msra.mxu0 %v3979
    %4014 = vmatprep.subr.bf16.mxu0 0
    %4015 = vmatpush2.bf16.msra.mxu0 %v3978
    %4016 = vmatprep.subr.bf16.mxu0 0
    %4017 = vmatpush2.bf16.msra.mxu0 %v3977
    %4018 = vmatprep.subr.bf16.mxu0 0
    %4019 = vmatpush2.bf16.msra.mxu0 %v3976
    %4020 = vmatprep.subr.bf16.mxu0 0
    %4021 = vmatpush2.bf16.msra.mxu0 %v3975
    %4022 = vmatprep.subr.bf16.mxu0 0
    %4023 = vmatpush2.bf16.msra.mxu0 %v3974
    %4024 = vmatprep.subr.bf16.mxu0 0
    %4025 = vmatpush2.bf16.msra.mxu0 %v3973
    %4026 = vmatprep.subr.bf16.mxu0 0
    %4027 = vmatpush2.bf16.msra.mxu0 %v3972
    %4028 = vmatprep.mubr.bf16.mxu0 %v3858
    %4029 = vmatmul.mubr.bf16.gmra.mxu0 %v3857
    %v4030 = vpop.f32.mrf.mxu0
    %v4031 = vadd.f32 %v3898, %v4030
    %v4032 = vpop.f32.mrf.mxu0
    %v4033 = vpop.f32.mrf.mxu0
    %v4034 = vadd.f32 %v3898, %v4033
    %v4035 = vpop.f32.mrf.mxu0
    %4036 = vdwg.mxu0
    %v4037 = vadd.f32 %v3696, %v4031
    %v4038 = vadd.f32 %v3697, %v4034
    %v4039 = vsel %vm2767, 1, 0
    %v4040 = vsel %vm2768, 1, 0
    %4041 = vset.pattern.permute.xlu0 0
    %4042 = vperm.xlu0 %4041, %v4039
    %v4043 = vpop.permute.xlu0 %4042
    %4044 = vset.pattern.permute.xlu0 0
    %4045 = vperm.xlu0 %4044, %v4040
    %v4046 = vpop.permute.xlu0 %4045
    %vm4047 = vcmp.eq.s32.totalorder %v4043, 1
    %vm4048 = vcmp.eq.s32.totalorder %v4046, 1
    %v4049 = vsel %vm4047, %v4037, %v2765
    %v4050 = vsel %vm4048, %v4038, %v2766
    %vm4051 = vcmp.gt.f32.partialorder %v117, 0.5
    %vm4052 = vcmp.gt.f32.partialorder %v119, 0.5
    %vm4053 = vcmp.gt.f32.partialorder %v211, 0.5
    %v4054 = vsel %vm4053, 1, 0
    %v4055 = vcvt.s32.f32 %v4054
    %v4056 = vadd.f32 %v2772, %v4055
    %v4057 = vsel %vm4053, 0.0, -1e+30
    %s4058 = scalar_lea.vmem %s3, 3
    %v4059 = vld [vmem:[%s4058] sm:$0x1]
    %s4060 = scalar_lea.vmem %s4, 3
    %v4061 = vld [vmem:[%s4060] sm:$0x1]
    %v4062 = vsel %vm93, %v4049, 0.0
    %4063 = vadd.xlane.f32.xlu0 %v4062
    %v4064 = vpop.xlane.xlu0 %4063
    %v4065 = vsel %vm93, %v4050, 0.0
    %4066 = vadd.xlane.f32.xlu0 %v4065
    %v4067 = vpop.xlane.xlu0 %4066
    %v4068 = vmul.f32 %v4064, %v227
    %v4069 = vmul.f32 %v4067, %v227
    %v4070 = vsub.f32 %v4049, %v4068
    %v4071 = vsub.f32 %v4050, %v4069
    %v4072 = vmul.f32 %v4070, %v4070
    %v4073 = vmul.f32 %v4071, %v4071
    %v4074 = vsel %vm93, %v4072, 0.0
    %4075 = vadd.xlane.f32.xlu0 %v4074
    %v4076 = vpop.xlane.xlu0 %4075
    %v4077 = vsel %vm93, %v4073, 0.0
    %4078 = vadd.xlane.f32.xlu0 %v4077
    %v4079 = vpop.xlane.xlu0 %4078
    %v4080 = vmul.f32 %v4076, %v227
    %v4081 = vmul.f32 %v4079, %v227
    %v4082 = vadd.f32 %v4080, 1e-05
    %v4083 = vadd.f32 %v4081, 1e-05
    %v4084 = vrsqrt.pop %v4082
    %v4085 = vrsqrt.pop %v4083
    %v4086 = vmul.f32 %v4070, %v4084
    %v4087 = vmul.f32 %v4071, %v4085
    %v4089 = vlaneseq
    %v4090 = vshrl.u32 %v4089, 7
    %v4091 = vsub.s32 0, %v4090
    %v4092 = vrot.slane %v4059, %v4091
    %v4094 = vmul.f32 %v4086, %v4092
    %v4095 = vmul.f32 %v4087, %v4092
    %v4097 = vlaneseq
    %v4098 = vshrl.u32 %v4097, 7
    %v4099 = vsub.s32 0, %v4098
    %v4100 = vrot.slane %v4061, %v4099
    %v4102 = vadd.f32 %v4094, %v4100
    %v4103 = vadd.f32 %v4095, %v4100
    %v4104 = vpack.c.bf16 %v4103, %v4102
    %s4105 = scalar_lea.vmem %s5, 192
    %v4106 = vld [vmem:[%s4105] sm:$0xf]
    %v4107 = vld [vmem:[%s4105 + $0x4] sm:$0xf]
    %v4108 = vld [vmem:[%s4105 + $0x8] sm:$0xf]
    %v4109 = vld [vmem:[%s4105 + $0xc] sm:$0xf]
    %v4110 = vld [vmem:[%s4105 + $0x10] sm:$0xf]
    %v4111 = vld [vmem:[%s4105 + $0x14] sm:$0xf]
    %v4112 = vld [vmem:[%s4105 + $0x18] sm:$0xf]
    %v4113 = vld [vmem:[%s4105 + $0x1c] sm:$0xf]
    %s4114 = scalar_lea.vmem %s6, 6
    %v4115 = vld [vmem:[%s4114] sm:$0x1]
    %v4117 = vlaneseq
    %v4118 = vshrl.u32 %v4117, 7
    %v4119 = vsub.s32 0, %v4118
    %v4120 = vrot.slane %v4115, %v4119
    %v4130 = vunpack.c.l.b16 %v4106
    %v4131 = vunpack.c.l.b16 %v4107
    %v4132 = vunpack.c.l.b16 %v4108
    %v4133 = vunpack.c.l.b16 %v4109
    %v4134 = vunpack.c.l.b16 %v4110
    %v4135 = vunpack.c.l.b16 %v4111
    %v4136 = vunpack.c.l.b16 %v4112
    %v4137 = vunpack.c.l.b16 %v4113
    %v4138 = vpack.c.b16 %v4131, %v4130
    %v4139 = vpack.c.b16 %v4133, %v4132
    %v4140 = vpack.c.b16 %v4135, %v4134
    %v4141 = vpack.c.b16 %v4137, %v4136
    %v4147 = vsel %vm93, %v4104, 0
    %4149 = vmatprep.subr.bf16.mxu0 0
    %4150 = vmatpush1.bf16.msra.mxu0 0
    %4151 = vmatprep.subr.bf16.mxu0 0
    %4152 = vmatpush1.bf16.msra.mxu0 0
    %4153 = vmatprep.subr.bf16.mxu0 0
    %4154 = vmatpush1.bf16.msra.mxu0 0
    %4155 = vmatprep.subr.bf16.mxu0 0
    %4156 = vmatpush1.bf16.msra.mxu0 0
    %4157 = vmatprep.subr.bf16.mxu0 0
    %4158 = vmatpush1.bf16.msra.mxu0 %v4141
    %4159 = vmatprep.subr.bf16.mxu0 0
    %4160 = vmatpush1.bf16.msra.mxu0 %v4140
    %4161 = vmatprep.subr.bf16.mxu0 0
    %4162 = vmatpush1.bf16.msra.mxu0 %v4139
    %4163 = vmatprep.subr.bf16.mxu0 0
    %4164 = vmatpush1.bf16.msra.mxu0 %v4138
    %4165 = vmatprep.subr.bf16.mxu0 0
    %4166 = vmatpush2.bf16.msra.mxu0 0
    %4167 = vmatprep.subr.bf16.mxu0 0
    %4168 = vmatpush2.bf16.msra.mxu0 0
    %4169 = vmatprep.subr.bf16.mxu0 0
    %4170 = vmatpush2.bf16.msra.mxu0 0
    %4171 = vmatprep.subr.bf16.mxu0 0
    %4172 = vmatpush2.bf16.msra.mxu0 0
    %4173 = vmatprep.subr.bf16.mxu0 0
    %4174 = vmatpush2.bf16.msra.mxu0 0
    %4175 = vmatprep.subr.bf16.mxu0 0
    %4176 = vmatpush2.bf16.msra.mxu0 0
    %4177 = vmatprep.subr.bf16.mxu0 0
    %4178 = vmatpush2.bf16.msra.mxu0 0
    %4179 = vmatprep.subr.bf16.mxu0 0
    %4180 = vmatpush2.bf16.msra.mxu0 0
    %4181 = vmatprep.mubr.bf16.mxu0 0
    %4182 = vmatmul.mubr.bf16.gmra.mxu0 %v4147
    %v4183 = vpop.f32.mrf.mxu0
    %v4184 = vadd.f32 %v4120, %v4183
    %v4185 = vpop.f32.mrf.mxu0
    %v4186 = vpop.f32.mrf.mxu0
    %v4187 = vadd.f32 %v4120, %v4186
    %v4188 = vpop.f32.mrf.mxu0
    %4189 = vdwg.mxu0
    %s4190 = scalar_lea.vmem %s7, 192
    %v4191 = vld [vmem:[%s4190] sm:$0xf]
    %v4192 = vld [vmem:[%s4190 + $0x4] sm:$0xf]
    %v4193 = vld [vmem:[%s4190 + $0x8] sm:$0xf]
    %v4194 = vld [vmem:[%s4190 + $0xc] sm:$0xf]
    %v4195 = vld [vmem:[%s4190 + $0x10] sm:$0xf]
    %v4196 = vld [vmem:[%s4190 + $0x14] sm:$0xf]
    %v4197 = vld [vmem:[%s4190 + $0x18] sm:$0xf]
    %v4198 = vld [vmem:[%s4190 + $0x1c] sm:$0xf]
    %s4199 = scalar_lea.vmem %s8, 6
    %v4200 = vld [vmem:[%s4199] sm:$0x1]
    %v4202 = vlaneseq
    %v4203 = vshrl.u32 %v4202, 7
    %v4204 = vsub.s32 0, %v4203
    %v4205 = vrot.slane %v4200, %v4204
    %v4215 = vunpack.c.l.b16 %v4191
    %v4216 = vunpack.c.l.b16 %v4192
    %v4217 = vunpack.c.l.b16 %v4193
    %v4218 = vunpack.c.l.b16 %v4194
    %v4219 = vunpack.c.l.b16 %v4195
    %v4220 = vunpack.c.l.b16 %v4196
    %v4221 = vunpack.c.l.b16 %v4197
    %v4222 = vunpack.c.l.b16 %v4198
    %v4223 = vpack.c.b16 %v4216, %v4215
    %v4224 = vpack.c.b16 %v4218, %v4217
    %v4225 = vpack.c.b16 %v4220, %v4219
    %v4226 = vpack.c.b16 %v4222, %v4221
    %4231 = vmatprep.subr.bf16.mxu0 0
    %4232 = vmatpush1.bf16.msra.mxu0 0
    %4233 = vmatprep.subr.bf16.mxu0 0
    %4234 = vmatpush1.bf16.msra.mxu0 0
    %4235 = vmatprep.subr.bf16.mxu0 0
    %4236 = vmatpush1.bf16.msra.mxu0 0
    %4237 = vmatprep.subr.bf16.mxu0 0
    %4238 = vmatpush1.bf16.msra.mxu0 0
    %4239 = vmatprep.subr.bf16.mxu0 0
    %4240 = vmatpush1.bf16.msra.mxu0 %v4226
    %4241 = vmatprep.subr.bf16.mxu0 0
    %4242 = vmatpush1.bf16.msra.mxu0 %v4225
    %4243 = vmatprep.subr.bf16.mxu0 0
    %4244 = vmatpush1.bf16.msra.mxu0 %v4224
    %4245 = vmatprep.subr.bf16.mxu0 0
    %4246 = vmatpush1.bf16.msra.mxu0 %v4223
    %4247 = vmatprep.subr.bf16.mxu0 0
    %4248 = vmatpush2.bf16.msra.mxu0 0
    %4249 = vmatprep.subr.bf16.mxu0 0
    %4250 = vmatpush2.bf16.msra.mxu0 0
    %4251 = vmatprep.subr.bf16.mxu0 0
    %4252 = vmatpush2.bf16.msra.mxu0 0
    %4253 = vmatprep.subr.bf16.mxu0 0
    %4254 = vmatpush2.bf16.msra.mxu0 0
    %4255 = vmatprep.subr.bf16.mxu0 0
    %4256 = vmatpush2.bf16.msra.mxu0 0
    %4257 = vmatprep.subr.bf16.mxu0 0
    %4258 = vmatpush2.bf16.msra.mxu0 0
    %4259 = vmatprep.subr.bf16.mxu0 0
    %4260 = vmatpush2.bf16.msra.mxu0 0
    %4261 = vmatprep.subr.bf16.mxu0 0
    %4262 = vmatpush2.bf16.msra.mxu0 0
    %4263 = vmatprep.mubr.bf16.mxu0 0
    %4264 = vmatmul.mubr.bf16.gmra.mxu0 %v4147
    %v4265 = vpop.f32.mrf.mxu0
    %v4266 = vadd.f32 %v4205, %v4265
    %v4267 = vpop.f32.mrf.mxu0
    %v4268 = vpop.f32.mrf.mxu0
    %v4269 = vadd.f32 %v4205, %v4268
    %v4270 = vpop.f32.mrf.mxu0
    %4271 = vdwg.mxu0
    %s4272 = scalar_lea.vmem %s9, 192
    %v4273 = vld [vmem:[%s4272] sm:$0xf]
    %v4274 = vld [vmem:[%s4272 + $0x4] sm:$0xf]
    %v4275 = vld [vmem:[%s4272 + $0x8] sm:$0xf]
    %v4276 = vld [vmem:[%s4272 + $0xc] sm:$0xf]
    %v4277 = vld [vmem:[%s4272 + $0x10] sm:$0xf]
    %v4278 = vld [vmem:[%s4272 + $0x14] sm:$0xf]
    %v4279 = vld [vmem:[%s4272 + $0x18] sm:$0xf]
    %v4280 = vld [vmem:[%s4272 + $0x1c] sm:$0xf]
    %s4281 = scalar_lea.vmem %s10, 6
    %v4282 = vld [vmem:[%s4281] sm:$0x1]
    %v4284 = vlaneseq
    %v4285 = vshrl.u32 %v4284, 7
    %v4286 = vsub.s32 0, %v4285
    %v4287 = vrot.slane %v4282, %v4286
    %v4297 = vunpack.c.l.b16 %v4273
    %v4298 = vunpack.c.l.b16 %v4274
    %v4299 = vunpack.c.l.b16 %v4275
    %v4300 = vunpack.c.l.b16 %v4276
    %v4301 = vunpack.c.l.b16 %v4277
    %v4302 = vunpack.c.l.b16 %v4278
    %v4303 = vunpack.c.l.b16 %v4279
    %v4304 = vunpack.c.l.b16 %v4280
    %v4305 = vpack.c.b16 %v4298, %v4297
    %v4306 = vpack.c.b16 %v4300, %v4299
    %v4307 = vpack.c.b16 %v4302, %v4301
    %v4308 = vpack.c.b16 %v4304, %v4303
    %4313 = vmatprep.subr.bf16.mxu0 0
    %4314 = vmatpush1.bf16.msra.mxu0 0
    %4315 = vmatprep.subr.bf16.mxu0 0
    %4316 = vmatpush1.bf16.msra.mxu0 0
    %4317 = vmatprep.subr.bf16.mxu0 0
    %4318 = vmatpush1.bf16.msra.mxu0 0
    %4319 = vmatprep.subr.bf16.mxu0 0
    %4320 = vmatpush1.bf16.msra.mxu0 0
    %4321 = vmatprep.subr.bf16.mxu0 0
    %4322 = vmatpush1.bf16.msra.mxu0 %v4308
    %4323 = vmatprep.subr.bf16.mxu0 0
    %4324 = vmatpush1.bf16.msra.mxu0 %v4307
    %4325 = vmatprep.subr.bf16.mxu0 0
    %4326 = vmatpush1.bf16.msra.mxu0 %v4306
    %4327 = vmatprep.subr.bf16.mxu0 0
    %4328 = vmatpush1.bf16.msra.mxu0 %v4305
    %4329 = vmatprep.subr.bf16.mxu0 0
    %4330 = vmatpush2.bf16.msra.mxu0 0
    %4331 = vmatprep.subr.bf16.mxu0 0
    %4332 = vmatpush2.bf16.msra.mxu0 0
    %4333 = vmatprep.subr.bf16.mxu0 0
    %4334 = vmatpush2.bf16.msra.mxu0 0
    %4335 = vmatprep.subr.bf16.mxu0 0
    %4336 = vmatpush2.bf16.msra.mxu0 0
    %4337 = vmatprep.subr.bf16.mxu0 0
    %4338 = vmatpush2.bf16.msra.mxu0 0
    %4339 = vmatprep.subr.bf16.mxu0 0
    %4340 = vmatpush2.bf16.msra.mxu0 0
    %4341 = vmatprep.subr.bf16.mxu0 0
    %4342 = vmatpush2.bf16.msra.mxu0 0
    %4343 = vmatprep.subr.bf16.mxu0 0
    %4344 = vmatpush2.bf16.msra.mxu0 0
    %4345 = vmatprep.mubr.bf16.mxu0 0
    %4346 = vmatmul.mubr.bf16.gmra.mxu0 %v4147
    %v4347 = vpop.f32.mrf.mxu0
    %v4348 = vadd.f32 %v4287, %v4347
    %v4349 = vpop.f32.mrf.mxu0
    %v4350 = vpop.f32.mrf.mxu0
    %v4351 = vadd.f32 %v4287, %v4350
    %v4352 = vpop.f32.mrf.mxu0
    %4353 = vdwg.mxu0
    %v4354 = vpack.c.bf16 %v4187, %v4184
    %v4355 = vpack.c.bf16 %v4269, %v4266
    %v4357 = vsel %vm510, %v4354, 0
    %v4360 = vsel %vm510, %v4355, 0
    %4362 = vmatprep.subr.bf16.mxu0 0
    %4363 = vmatpush1.bf16.xpose.msra.mxu0 0
    %4364 = vmatprep.subr.bf16.mxu0 0
    %4365 = vmatpush1.bf16.xpose.msra.mxu0 0
    %4366 = vmatprep.subr.bf16.mxu0 0
    %4367 = vmatpush1.bf16.xpose.msra.mxu0 0
    %4368 = vmatprep.subr.bf16.mxu0 0
    %4369 = vmatpush1.bf16.xpose.msra.mxu0 0
    %4370 = vmatprep.subr.bf16.mxu0 0
    %4371 = vmatpush1.bf16.xpose.msra.mxu0 0
    %4372 = vmatprep.subr.bf16.mxu0 0
    %4373 = vmatpush1.bf16.xpose.msra.mxu0 0
    %4374 = vmatprep.subr.bf16.mxu0 0
    %4375 = vmatpush1.bf16.xpose.msra.mxu0 0
    %4376 = vmatprep.subr.bf16.mxu0 0
    %4377 = vmatpush1.bf16.xpose.msra.mxu0 %v4360
    %4378 = vmatprep.subr.bf16.mxu0 0
    %4379 = vmatpush2.bf16.xpose.msra.mxu0 0
    %4380 = vmatprep.subr.bf16.mxu0 0
    %4381 = vmatpush2.bf16.xpose.msra.mxu0 0
    %4382 = vmatprep.subr.bf16.mxu0 0
    %4383 = vmatpush2.bf16.xpose.msra.mxu0 0
    %4384 = vmatprep.subr.bf16.mxu0 0
    %4385 = vmatpush2.bf16.xpose.msra.mxu0 0
    %4386 = vmatprep.subr.bf16.mxu0 0
    %4387 = vmatpush2.bf16.xpose.msra.mxu0 0
    %4388 = vmatprep.subr.bf16.mxu0 0
    %4389 = vmatpush2.bf16.xpose.msra.mxu0 0
    %4390 = vmatprep.subr.bf16.mxu0 0
    %4391 = vmatpush2.bf16.xpose.msra.mxu0 0
    %4392 = vmatprep.subr.bf16.mxu0 0
    %4393 = vmatpush2.bf16.xpose.msra.mxu0 0
    %4394 = vmatprep.mubr.bf16.mxu0 0
    %4395 = vmatmul.mubr.bf16.gmra.mxu0 %v4357
    %v4396 = vpop.f32.mrf.mxu0
    %v4397 = vadd.f32 0.0, %v4396
    %v4398 = vpop.f32.mrf.mxu0
    %v4399 = vpop.f32.mrf.mxu0
    %v4400 = vadd.f32 0.0, %v4399
    %v4401 = vpop.f32.mrf.mxu0
    %4402 = vdwg.mxu0
    %v4403 = vmul.f32 %v4397, 0.17677669
    %v4404 = vmul.f32 %v4400, 0.17677669
    %v4405 = vlaneseq
    %v4406 = vshrl.u32 %v4405, 7
    %v4407 = vsub.s32 0, %v4406
    %v4408 = vrot.slane %v4057, %v4407
    %v4409 = vadd.f32 %v4403, %v4408
    %v4410 = vadd.f32 %v4404, %v4408
    %v4411 = vsel %vm566, %v4409, -inf
    %4412 = vmax.xlane.f32.xlu0 %v4411
    %v4413 = vpop.xlane.xlu0 %4412
    %v4414 = vsel %vm566, %v4410, -inf
    %4415 = vmax.xlane.f32.xlu0 %v4414
    %v4416 = vpop.xlane.xlu0 %4415
    %v4417 = vsub.f32 %v4409, %v4413
    %v4418 = vsub.f32 %v4410, %v4416
    %v4419 = vmul.f32 %v4417, 1.442695
    %v4420 = vpow.pop %v4419
    %v4421 = vmul.f32 %v4418, 1.442695
    %v4422 = vpow.pop %v4421
    %v4423 = vsel %vm566, %v4420, 0.0
    %4424 = vadd.xlane.f32.xlu0 %v4423
    %v4425 = vpop.xlane.xlu0 %4424
    %v4426 = vsel %vm566, %v4422, 0.0
    %4427 = vadd.xlane.f32.xlu0 %v4426
    %v4428 = vpop.xlane.xlu0 %4427
    %v4429 = vpack.c.bf16 %v4422, %v4420
    %v4430 = vpack.c.bf16 %v4351, %v4348
    %v4432 = vsel %vm566, %v4429, 0
    %4434 = vmatprep.subr.bf16.mxu0 0
    %4435 = vmatpush1.bf16.msra.mxu0 0
    %4436 = vmatprep.subr.bf16.mxu0 0
    %4437 = vmatpush1.bf16.msra.mxu0 0
    %4438 = vmatprep.subr.bf16.mxu0 0
    %4439 = vmatpush1.bf16.msra.mxu0 0
    %4440 = vmatprep.subr.bf16.mxu0 0
    %4441 = vmatpush1.bf16.msra.mxu0 0
    %4442 = vmatprep.subr.bf16.mxu0 0
    %4443 = vmatpush1.bf16.msra.mxu0 0
    %4444 = vmatprep.subr.bf16.mxu0 0
    %4445 = vmatpush1.bf16.msra.mxu0 0
    %4446 = vmatprep.subr.bf16.mxu0 0
    %4447 = vmatpush1.bf16.msra.mxu0 0
    %4448 = vmatprep.subr.bf16.mxu0 0
    %4449 = vmatpush1.bf16.msra.mxu0 %v4430
    %4450 = vmatprep.subr.bf16.mxu0 0
    %4451 = vmatpush2.bf16.msra.mxu0 0
    %4452 = vmatprep.subr.bf16.mxu0 0
    %4453 = vmatpush2.bf16.msra.mxu0 0
    %4454 = vmatprep.subr.bf16.mxu0 0
    %4455 = vmatpush2.bf16.msra.mxu0 0
    %4456 = vmatprep.subr.bf16.mxu0 0
    %4457 = vmatpush2.bf16.msra.mxu0 0
    %4458 = vmatprep.subr.bf16.mxu0 0
    %4459 = vmatpush2.bf16.msra.mxu0 0
    %4460 = vmatprep.subr.bf16.mxu0 0
    %4461 = vmatpush2.bf16.msra.mxu0 0
    %4462 = vmatprep.subr.bf16.mxu0 0
    %4463 = vmatpush2.bf16.msra.mxu0 0
    %4464 = vmatprep.subr.bf16.mxu0 0
    %4465 = vmatpush2.bf16.msra.mxu0 0
    %4466 = vmatprep.mubr.bf16.mxu0 0
    %4467 = vmatmul.mubr.bf16.gmra.mxu0 %v4432
    %v4468 = vpop.f32.mrf.mxu0
    %v4469 = vadd.f32 0.0, %v4468
    %v4470 = vpop.f32.mrf.mxu0
    %v4471 = vpop.f32.mrf.mxu0
    %v4472 = vadd.f32 0.0, %v4471
    %v4473 = vpop.f32.mrf.mxu0
    %4474 = vdwg.mxu0
    %v4475 = vrcp.pop %v4425
    %v4476 = vrcp.pop %v4428
    %v4477 = vmul.f32 %v4469, %v4475
    %v4478 = vmul.f32 %v4472, %v4476
    %v4479 = vpack.c.bf16 %v4478, %v4477
    %s4480 = scalar_lea.vmem %s11, 96
    %v4481 = vld [vmem:[%s4480] sm:$0xf]
    %v4482 = vld [vmem:[%s4480 + $0x4] sm:$0xf]
    %v4483 = vld [vmem:[%s4480 + $0x8] sm:$0xf]
    %v4484 = vld [vmem:[%s4480 + $0xc] sm:$0xf]
    %s4485 = scalar_lea.vmem %s5, 224
    %v4486 = vld [vmem:[%s4485] sm:$0xf]
    %v4487 = vld [vmem:[%s4485 + $0x4] sm:$0xf]
    %v4488 = vld [vmem:[%s4485 + $0x8] sm:$0xf]
    %v4489 = vld [vmem:[%s4485 + $0xc] sm:$0xf]
    %v4490 = vld [vmem:[%s4485 + $0x10] sm:$0xf]
    %v4491 = vld [vmem:[%s4485 + $0x14] sm:$0xf]
    %v4492 = vld [vmem:[%s4485 + $0x18] sm:$0xf]
    %v4493 = vld [vmem:[%s4485 + $0x1c] sm:$0xf]
    %s4494 = scalar_lea.vmem %s6, 7
    %v4495 = vld [vmem:[%s4494] sm:$0x1]
    %v4497 = vlaneseq
    %v4498 = vshrl.u32 %v4497, 7
    %v4499 = vsub.s32 0, %v4498
    %v4500 = vrot.slane %v4495, %v4499
    %v4510 = vunpack.c.l.b16 %v4486
    %v4511 = vunpack.c.l.b16 %v4487
    %v4512 = vunpack.c.l.b16 %v4488
    %v4513 = vunpack.c.l.b16 %v4489
    %v4514 = vunpack.c.l.b16 %v4490
    %v4515 = vunpack.c.l.b16 %v4491
    %v4516 = vunpack.c.l.b16 %v4492
    %v4517 = vunpack.c.l.b16 %v4493
    %v4518 = vpack.c.b16 %v4511, %v4510
    %v4519 = vpack.c.b16 %v4513, %v4512
    %v4520 = vpack.c.b16 %v4515, %v4514
    %v4521 = vpack.c.b16 %v4517, %v4516
    %4526 = vmatprep.subr.bf16.mxu0 0
    %4527 = vmatpush1.bf16.msra.mxu0 0
    %4528 = vmatprep.subr.bf16.mxu0 0
    %4529 = vmatpush1.bf16.msra.mxu0 0
    %4530 = vmatprep.subr.bf16.mxu0 0
    %4531 = vmatpush1.bf16.msra.mxu0 0
    %4532 = vmatprep.subr.bf16.mxu0 0
    %4533 = vmatpush1.bf16.msra.mxu0 0
    %4534 = vmatprep.subr.bf16.mxu0 0
    %4535 = vmatpush1.bf16.msra.mxu0 %v4521
    %4536 = vmatprep.subr.bf16.mxu0 0
    %4537 = vmatpush1.bf16.msra.mxu0 %v4520
    %4538 = vmatprep.subr.bf16.mxu0 0
    %4539 = vmatpush1.bf16.msra.mxu0 %v4519
    %4540 = vmatprep.subr.bf16.mxu0 0
    %4541 = vmatpush1.bf16.msra.mxu0 %v4518
    %4542 = vmatprep.subr.bf16.mxu0 0
    %4543 = vmatpush2.bf16.msra.mxu0 0
    %4544 = vmatprep.subr.bf16.mxu0 0
    %4545 = vmatpush2.bf16.msra.mxu0 0
    %4546 = vmatprep.subr.bf16.mxu0 0
    %4547 = vmatpush2.bf16.msra.mxu0 0
    %4548 = vmatprep.subr.bf16.mxu0 0
    %4549 = vmatpush2.bf16.msra.mxu0 0
    %4550 = vmatprep.subr.bf16.mxu0 0
    %4551 = vmatpush2.bf16.msra.mxu0 0
    %4552 = vmatprep.subr.bf16.mxu0 0
    %4553 = vmatpush2.bf16.msra.mxu0 0
    %4554 = vmatprep.subr.bf16.mxu0 0
    %4555 = vmatpush2.bf16.msra.mxu0 0
    %4556 = vmatprep.subr.bf16.mxu0 0
    %4557 = vmatpush2.bf16.msra.mxu0 0
    %4558 = vmatprep.mubr.bf16.mxu0 0
    %4559 = vmatmul.mubr.bf16.gmra.mxu0 %v4147
    %v4560 = vpop.f32.mrf.mxu0
    %v4561 = vadd.f32 %v4500, %v4560
    %v4562 = vpop.f32.mrf.mxu0
    %v4563 = vpop.f32.mrf.mxu0
    %v4564 = vadd.f32 %v4500, %v4563
    %v4565 = vpop.f32.mrf.mxu0
    %4566 = vdwg.mxu0
    %s4567 = scalar_lea.vmem %s7, 224
    %v4568 = vld [vmem:[%s4567] sm:$0xf]
    %v4569 = vld [vmem:[%s4567 + $0x4] sm:$0xf]
    %v4570 = vld [vmem:[%s4567 + $0x8] sm:$0xf]
    %v4571 = vld [vmem:[%s4567 + $0xc] sm:$0xf]
    %v4572 = vld [vmem:[%s4567 + $0x10] sm:$0xf]
    %v4573 = vld [vmem:[%s4567 + $0x14] sm:$0xf]
    %v4574 = vld [vmem:[%s4567 + $0x18] sm:$0xf]
    %v4575 = vld [vmem:[%s4567 + $0x1c] sm:$0xf]
    %s4576 = scalar_lea.vmem %s8, 7
    %v4577 = vld [vmem:[%s4576] sm:$0x1]
    %v4579 = vlaneseq
    %v4580 = vshrl.u32 %v4579, 7
    %v4581 = vsub.s32 0, %v4580
    %v4582 = vrot.slane %v4577, %v4581
    %v4592 = vunpack.c.l.b16 %v4568
    %v4593 = vunpack.c.l.b16 %v4569
    %v4594 = vunpack.c.l.b16 %v4570
    %v4595 = vunpack.c.l.b16 %v4571
    %v4596 = vunpack.c.l.b16 %v4572
    %v4597 = vunpack.c.l.b16 %v4573
    %v4598 = vunpack.c.l.b16 %v4574
    %v4599 = vunpack.c.l.b16 %v4575
    %v4600 = vpack.c.b16 %v4593, %v4592
    %v4601 = vpack.c.b16 %v4595, %v4594
    %v4602 = vpack.c.b16 %v4597, %v4596
    %v4603 = vpack.c.b16 %v4599, %v4598
    %4608 = vmatprep.subr.bf16.mxu0 0
    %4609 = vmatpush1.bf16.msra.mxu0 0
    %4610 = vmatprep.subr.bf16.mxu0 0
    %4611 = vmatpush1.bf16.msra.mxu0 0
    %4612 = vmatprep.subr.bf16.mxu0 0
    %4613 = vmatpush1.bf16.msra.mxu0 0
    %4614 = vmatprep.subr.bf16.mxu0 0
    %4615 = vmatpush1.bf16.msra.mxu0 0
    %4616 = vmatprep.subr.bf16.mxu0 0
    %4617 = vmatpush1.bf16.msra.mxu0 %v4603
    %4618 = vmatprep.subr.bf16.mxu0 0
    %4619 = vmatpush1.bf16.msra.mxu0 %v4602
    %4620 = vmatprep.subr.bf16.mxu0 0
    %4621 = vmatpush1.bf16.msra.mxu0 %v4601
    %4622 = vmatprep.subr.bf16.mxu0 0
    %4623 = vmatpush1.bf16.msra.mxu0 %v4600
    %4624 = vmatprep.subr.bf16.mxu0 0
    %4625 = vmatpush2.bf16.msra.mxu0 0
    %4626 = vmatprep.subr.bf16.mxu0 0
    %4627 = vmatpush2.bf16.msra.mxu0 0
    %4628 = vmatprep.subr.bf16.mxu0 0
    %4629 = vmatpush2.bf16.msra.mxu0 0
    %4630 = vmatprep.subr.bf16.mxu0 0
    %4631 = vmatpush2.bf16.msra.mxu0 0
    %4632 = vmatprep.subr.bf16.mxu0 0
    %4633 = vmatpush2.bf16.msra.mxu0 0
    %4634 = vmatprep.subr.bf16.mxu0 0
    %4635 = vmatpush2.bf16.msra.mxu0 0
    %4636 = vmatprep.subr.bf16.mxu0 0
    %4637 = vmatpush2.bf16.msra.mxu0 0
    %4638 = vmatprep.subr.bf16.mxu0 0
    %4639 = vmatpush2.bf16.msra.mxu0 0
    %4640 = vmatprep.mubr.bf16.mxu0 0
    %4641 = vmatmul.mubr.bf16.gmra.mxu0 %v4147
    %v4642 = vpop.f32.mrf.mxu0
    %v4643 = vadd.f32 %v4582, %v4642
    %v4644 = vpop.f32.mrf.mxu0
    %v4645 = vpop.f32.mrf.mxu0
    %v4646 = vadd.f32 %v4582, %v4645
    %v4647 = vpop.f32.mrf.mxu0
    %4648 = vdwg.mxu0
    %s4649 = scalar_lea.vmem %s9, 224
    %v4650 = vld [vmem:[%s4649] sm:$0xf]
    %v4651 = vld [vmem:[%s4649 + $0x4] sm:$0xf]
    %v4652 = vld [vmem:[%s4649 + $0x8] sm:$0xf]
    %v4653 = vld [vmem:[%s4649 + $0xc] sm:$0xf]
    %v4654 = vld [vmem:[%s4649 + $0x10] sm:$0xf]
    %v4655 = vld [vmem:[%s4649 + $0x14] sm:$0xf]
    %v4656 = vld [vmem:[%s4649 + $0x18] sm:$0xf]
    %v4657 = vld [vmem:[%s4649 + $0x1c] sm:$0xf]
    %s4658 = scalar_lea.vmem %s10, 7
    %v4659 = vld [vmem:[%s4658] sm:$0x1]
    %v4661 = vlaneseq
    %v4662 = vshrl.u32 %v4661, 7
    %v4663 = vsub.s32 0, %v4662
    %v4664 = vrot.slane %v4659, %v4663
    %v4674 = vunpack.c.l.b16 %v4650
    %v4675 = vunpack.c.l.b16 %v4651
    %v4676 = vunpack.c.l.b16 %v4652
    %v4677 = vunpack.c.l.b16 %v4653
    %v4678 = vunpack.c.l.b16 %v4654
    %v4679 = vunpack.c.l.b16 %v4655
    %v4680 = vunpack.c.l.b16 %v4656
    %v4681 = vunpack.c.l.b16 %v4657
    %v4682 = vpack.c.b16 %v4675, %v4674
    %v4683 = vpack.c.b16 %v4677, %v4676
    %v4684 = vpack.c.b16 %v4679, %v4678
    %v4685 = vpack.c.b16 %v4681, %v4680
    %4690 = vmatprep.subr.bf16.mxu0 0
    %4691 = vmatpush1.bf16.msra.mxu0 0
    %4692 = vmatprep.subr.bf16.mxu0 0
    %4693 = vmatpush1.bf16.msra.mxu0 0
    %4694 = vmatprep.subr.bf16.mxu0 0
    %4695 = vmatpush1.bf16.msra.mxu0 0
    %4696 = vmatprep.subr.bf16.mxu0 0
    %4697 = vmatpush1.bf16.msra.mxu0 0
    %4698 = vmatprep.subr.bf16.mxu0 0
    %4699 = vmatpush1.bf16.msra.mxu0 %v4685
    %4700 = vmatprep.subr.bf16.mxu0 0
    %4701 = vmatpush1.bf16.msra.mxu0 %v4684
    %4702 = vmatprep.subr.bf16.mxu0 0
    %4703 = vmatpush1.bf16.msra.mxu0 %v4683
    %4704 = vmatprep.subr.bf16.mxu0 0
    %4705 = vmatpush1.bf16.msra.mxu0 %v4682
    %4706 = vmatprep.subr.bf16.mxu0 0
    %4707 = vmatpush2.bf16.msra.mxu0 0
    %4708 = vmatprep.subr.bf16.mxu0 0
    %4709 = vmatpush2.bf16.msra.mxu0 0
    %4710 = vmatprep.subr.bf16.mxu0 0
    %4711 = vmatpush2.bf16.msra.mxu0 0
    %4712 = vmatprep.subr.bf16.mxu0 0
    %4713 = vmatpush2.bf16.msra.mxu0 0
    %4714 = vmatprep.subr.bf16.mxu0 0
    %4715 = vmatpush2.bf16.msra.mxu0 0
    %4716 = vmatprep.subr.bf16.mxu0 0
    %4717 = vmatpush2.bf16.msra.mxu0 0
    %4718 = vmatprep.subr.bf16.mxu0 0
    %4719 = vmatpush2.bf16.msra.mxu0 0
    %4720 = vmatprep.subr.bf16.mxu0 0
    %4721 = vmatpush2.bf16.msra.mxu0 0
    %4722 = vmatprep.mubr.bf16.mxu0 0
    %4723 = vmatmul.mubr.bf16.gmra.mxu0 %v4147
    %v4724 = vpop.f32.mrf.mxu0
    %v4725 = vadd.f32 %v4664, %v4724
    %v4726 = vpop.f32.mrf.mxu0
    %v4727 = vpop.f32.mrf.mxu0
    %v4728 = vadd.f32 %v4664, %v4727
    %v4729 = vpop.f32.mrf.mxu0
    %4730 = vdwg.mxu0
    %v4731 = vpack.c.bf16 %v4564, %v4561
    %v4732 = vpack.c.bf16 %v4646, %v4643
    %v4734 = vsel %vm510, %v4731, 0
    %v4737 = vsel %vm510, %v4732, 0
    %4739 = vmatprep.subr.bf16.mxu0 0
    %4740 = vmatpush1.bf16.xpose.msra.mxu0 0
    %4741 = vmatprep.subr.bf16.mxu0 0
    %4742 = vmatpush1.bf16.xpose.msra.mxu0 0
    %4743 = vmatprep.subr.bf16.mxu0 0
    %4744 = vmatpush1.bf16.xpose.msra.mxu0 0
    %4745 = vmatprep.subr.bf16.mxu0 0
    %4746 = vmatpush1.bf16.xpose.msra.mxu0 0
    %4747 = vmatprep.subr.bf16.mxu0 0
    %4748 = vmatpush1.bf16.xpose.msra.mxu0 0
    %4749 = vmatprep.subr.bf16.mxu0 0
    %4750 = vmatpush1.bf16.xpose.msra.mxu0 0
    %4751 = vmatprep.subr.bf16.mxu0 0
    %4752 = vmatpush1.bf16.xpose.msra.mxu0 0
    %4753 = vmatprep.subr.bf16.mxu0 0
    %4754 = vmatpush1.bf16.xpose.msra.mxu0 %v4737
    %4755 = vmatprep.subr.bf16.mxu0 0
    %4756 = vmatpush2.bf16.xpose.msra.mxu0 0
    %4757 = vmatprep.subr.bf16.mxu0 0
    %4758 = vmatpush2.bf16.xpose.msra.mxu0 0
    %4759 = vmatprep.subr.bf16.mxu0 0
    %4760 = vmatpush2.bf16.xpose.msra.mxu0 0
    %4761 = vmatprep.subr.bf16.mxu0 0
    %4762 = vmatpush2.bf16.xpose.msra.mxu0 0
    %4763 = vmatprep.subr.bf16.mxu0 0
    %4764 = vmatpush2.bf16.xpose.msra.mxu0 0
    %4765 = vmatprep.subr.bf16.mxu0 0
    %4766 = vmatpush2.bf16.xpose.msra.mxu0 0
    %4767 = vmatprep.subr.bf16.mxu0 0
    %4768 = vmatpush2.bf16.xpose.msra.mxu0 0
    %4769 = vmatprep.subr.bf16.mxu0 0
    %4770 = vmatpush2.bf16.xpose.msra.mxu0 0
    %4771 = vmatprep.mubr.bf16.mxu0 0
    %4772 = vmatmul.mubr.bf16.gmra.mxu0 %v4734
    %v4773 = vpop.f32.mrf.mxu0
    %v4774 = vadd.f32 0.0, %v4773
    %v4775 = vpop.f32.mrf.mxu0
    %v4776 = vpop.f32.mrf.mxu0
    %v4777 = vadd.f32 0.0, %v4776
    %v4778 = vpop.f32.mrf.mxu0
    %4779 = vdwg.mxu0
    %v4780 = vmul.f32 %v4774, 0.17677669
    %v4781 = vmul.f32 %v4777, 0.17677669
    %v4782 = vadd.f32 %v4780, %v4408
    %v4783 = vadd.f32 %v4781, %v4408
    %v4784 = vsel %vm566, %v4782, -inf
    %4785 = vmax.xlane.f32.xlu0 %v4784
    %v4786 = vpop.xlane.xlu0 %4785
    %v4787 = vsel %vm566, %v4783, -inf
    %4788 = vmax.xlane.f32.xlu0 %v4787
    %v4789 = vpop.xlane.xlu0 %4788
    %v4790 = vsub.f32 %v4782, %v4786
    %v4791 = vsub.f32 %v4783, %v4789
    %v4792 = vmul.f32 %v4790, 1.442695
    %v4793 = vpow.pop %v4792
    %v4794 = vmul.f32 %v4791, 1.442695
    %v4795 = vpow.pop %v4794
    %v4796 = vsel %vm566, %v4793, 0.0
    %4797 = vadd.xlane.f32.xlu0 %v4796
    %v4798 = vpop.xlane.xlu0 %4797
    %v4799 = vsel %vm566, %v4795, 0.0
    %4800 = vadd.xlane.f32.xlu0 %v4799
    %v4801 = vpop.xlane.xlu0 %4800
    %v4802 = vpack.c.bf16 %v4795, %v4793
    %v4803 = vpack.c.bf16 %v4728, %v4725
    %v4805 = vsel %vm566, %v4802, 0
    %4807 = vmatprep.subr.bf16.mxu0 0
    %4808 = vmatpush1.bf16.msra.mxu0 0
    %4809 = vmatprep.subr.bf16.mxu0 0
    %4810 = vmatpush1.bf16.msra.mxu0 0
    %4811 = vmatprep.subr.bf16.mxu0 0
    %4812 = vmatpush1.bf16.msra.mxu0 0
    %4813 = vmatprep.subr.bf16.mxu0 0
    %4814 = vmatpush1.bf16.msra.mxu0 0
    %4815 = vmatprep.subr.bf16.mxu0 0
    %4816 = vmatpush1.bf16.msra.mxu0 0
    %4817 = vmatprep.subr.bf16.mxu0 0
    %4818 = vmatpush1.bf16.msra.mxu0 0
    %4819 = vmatprep.subr.bf16.mxu0 0
    %4820 = vmatpush1.bf16.msra.mxu0 0
    %4821 = vmatprep.subr.bf16.mxu0 0
    %4822 = vmatpush1.bf16.msra.mxu0 %v4803
    %4823 = vmatprep.subr.bf16.mxu0 0
    %4824 = vmatpush2.bf16.msra.mxu0 0
    %4825 = vmatprep.subr.bf16.mxu0 0
    %4826 = vmatpush2.bf16.msra.mxu0 0
    %4827 = vmatprep.subr.bf16.mxu0 0
    %4828 = vmatpush2.bf16.msra.mxu0 0
    %4829 = vmatprep.subr.bf16.mxu0 0
    %4830 = vmatpush2.bf16.msra.mxu0 0
    %4831 = vmatprep.subr.bf16.mxu0 0
    %4832 = vmatpush2.bf16.msra.mxu0 0
    %4833 = vmatprep.subr.bf16.mxu0 0
    %4834 = vmatpush2.bf16.msra.mxu0 0
    %4835 = vmatprep.subr.bf16.mxu0 0
    %4836 = vmatpush2.bf16.msra.mxu0 0
    %4837 = vmatprep.subr.bf16.mxu0 0
    %4838 = vmatpush2.bf16.msra.mxu0 0
    %4839 = vmatprep.mubr.bf16.mxu0 0
    %4840 = vmatmul.mubr.bf16.gmra.mxu0 %v4805
    %v4841 = vpop.f32.mrf.mxu0
    %v4842 = vadd.f32 0.0, %v4841
    %v4843 = vpop.f32.mrf.mxu0
    %v4844 = vpop.f32.mrf.mxu0
    %v4845 = vadd.f32 0.0, %v4844
    %v4846 = vpop.f32.mrf.mxu0
    %4847 = vdwg.mxu0
    %v4848 = vrcp.pop %v4798
    %v4849 = vrcp.pop %v4801
    %v4850 = vmul.f32 %v4842, %v4848
    %v4851 = vmul.f32 %v4845, %v4849
    %v4852 = vpack.c.bf16 %v4851, %v4850
    %s4853 = scalar_lea.vmem %s11, 112
    %v4854 = vld [vmem:[%s4853] sm:$0xf]
    %v4855 = vld [vmem:[%s4853 + $0x4] sm:$0xf]
    %v4856 = vld [vmem:[%s4853 + $0x8] sm:$0xf]
    %v4857 = vld [vmem:[%s4853 + $0xc] sm:$0xf]
    %v4862 = vunpack.c.l.b16 %v4854
    %v4863 = vunpack.c.l.b16 %v4855
    %v4864 = vunpack.c.l.b16 %v4856
    %v4865 = vunpack.c.l.b16 %v4857
    %v4866 = vpack.c.b16 %v4863, %v4862
    %v4867 = vpack.c.b16 %v4865, %v4864
    %v4871 = vsel %vm510, %v4852, 0
    %4873 = vmatprep.subr.bf16.mxu0 0
    %4874 = vmatpush1.bf16.msra.mxu0 0
    %4875 = vmatprep.subr.bf16.mxu0 0
    %4876 = vmatpush1.bf16.msra.mxu0 0
    %4877 = vmatprep.subr.bf16.mxu0 0
    %4878 = vmatpush1.bf16.msra.mxu0 0
    %4879 = vmatprep.subr.bf16.mxu0 0
    %4880 = vmatpush1.bf16.msra.mxu0 0
    %4881 = vmatprep.subr.bf16.mxu0 0
    %4882 = vmatpush1.bf16.msra.mxu0 0
    %4883 = vmatprep.subr.bf16.mxu0 0
    %4884 = vmatpush1.bf16.msra.mxu0 0
    %4885 = vmatprep.subr.bf16.mxu0 0
    %4886 = vmatpush1.bf16.msra.mxu0 %v4867
    %4887 = vmatprep.subr.bf16.mxu0 0
    %4888 = vmatpush1.bf16.msra.mxu0 %v4866
    %4889 = vmatprep.subr.bf16.mxu0 0
    %4890 = vmatpush2.bf16.msra.mxu0 0
    %4891 = vmatprep.subr.bf16.mxu0 0
    %4892 = vmatpush2.bf16.msra.mxu0 0
    %4893 = vmatprep.subr.bf16.mxu0 0
    %4894 = vmatpush2.bf16.msra.mxu0 0
    %4895 = vmatprep.subr.bf16.mxu0 0
    %4896 = vmatpush2.bf16.msra.mxu0 0
    %4897 = vmatprep.subr.bf16.mxu0 0
    %4898 = vmatpush2.bf16.msra.mxu0 0
    %4899 = vmatprep.subr.bf16.mxu0 0
    %4900 = vmatpush2.bf16.msra.mxu0 0
    %4901 = vmatprep.subr.bf16.mxu0 0
    %4902 = vmatpush2.bf16.msra.mxu0 0
    %4903 = vmatprep.subr.bf16.mxu0 0
    %4904 = vmatpush2.bf16.msra.mxu0 0
    %4905 = vmatprep.mubr.bf16.mxu0 0
    %4906 = vmatmul.mubr.bf16.gmra.mxu0 %v4871
    %v4907 = vpop.f32.mrf.mxu0
    %v4908 = vadd.f32 0.0, %v4907
    %v4909 = vpop.f32.mrf.mxu0
    %v4910 = vpop.f32.mrf.mxu0
    %v4911 = vadd.f32 0.0, %v4910
    %v4912 = vpop.f32.mrf.mxu0
    %4913 = vdwg.mxu0
    %v4918 = vunpack.c.l.b16 %v4481
    %v4919 = vunpack.c.l.b16 %v4482
    %v4920 = vunpack.c.l.b16 %v4483
    %v4921 = vunpack.c.l.b16 %v4484
    %v4922 = vpack.c.b16 %v4919, %v4918
    %v4923 = vpack.c.b16 %v4921, %v4920
    %v4927 = vsel %vm510, %v4479, 0
    %4929 = vmatprep.subr.bf16.mxu0 0
    %4930 = vmatpush1.bf16.msra.mxu0 0
    %4931 = vmatprep.subr.bf16.mxu0 0
    %4932 = vmatpush1.bf16.msra.mxu0 0
    %4933 = vmatprep.subr.bf16.mxu0 0
    %4934 = vmatpush1.bf16.msra.mxu0 0
    %4935 = vmatprep.subr.bf16.mxu0 0
    %4936 = vmatpush1.bf16.msra.mxu0 0
    %4937 = vmatprep.subr.bf16.mxu0 0
    %4938 = vmatpush1.bf16.msra.mxu0 0
    %4939 = vmatprep.subr.bf16.mxu0 0
    %4940 = vmatpush1.bf16.msra.mxu0 0
    %4941 = vmatprep.subr.bf16.mxu0 0
    %4942 = vmatpush1.bf16.msra.mxu0 %v4923
    %4943 = vmatprep.subr.bf16.mxu0 0
    %4944 = vmatpush1.bf16.msra.mxu0 %v4922
    %4945 = vmatprep.subr.bf16.mxu0 0
    %4946 = vmatpush2.bf16.msra.mxu0 0
    %4947 = vmatprep.subr.bf16.mxu0 0
    %4948 = vmatpush2.bf16.msra.mxu0 0
    %4949 = vmatprep.subr.bf16.mxu0 0
    %4950 = vmatpush2.bf16.msra.mxu0 0
    %4951 = vmatprep.subr.bf16.mxu0 0
    %4952 = vmatpush2.bf16.msra.mxu0 0
    %4953 = vmatprep.subr.bf16.mxu0 0
    %4954 = vmatpush2.bf16.msra.mxu0 0
    %4955 = vmatprep.subr.bf16.mxu0 0
    %4956 = vmatpush2.bf16.msra.mxu0 0
    %4957 = vmatprep.subr.bf16.mxu0 0
    %4958 = vmatpush2.bf16.msra.mxu0 0
    %4959 = vmatprep.subr.bf16.mxu0 0
    %4960 = vmatpush2.bf16.msra.mxu0 0
    %4961 = vmatprep.mubr.bf16.mxu0 0
    %4962 = vmatmul.mubr.bf16.gmra.mxu0 %v4927
    %v4963 = vpop.f32.mrf.mxu0
    %v4964 = vadd.f32 %v4908, %v4963
    %v4965 = vpop.f32.mrf.mxu0
    %v4966 = vpop.f32.mrf.mxu0
    %v4967 = vadd.f32 %v4911, %v4966
    %v4968 = vpop.f32.mrf.mxu0
    %4969 = vdwg.mxu0
    %v4970 = vadd.f32 %v4049, %v4964
    %v4971 = vadd.f32 %v4050, %v4967
    %s4972 = scalar_lea.vmem %s12, 3
    %v4973 = vld [vmem:[%s4972] sm:$0x1]
    %v4975 = vlaneseq
    %v4976 = vshrl.u32 %v4975, 7
    %v4977 = vsub.s32 0, %v4976
    %v4978 = vrot.slane %v4973, %v4977
    %v4980 = vadd.f32 %v4970, %v4978
    %v4981 = vadd.f32 %v4971, %v4978
    %s4982 = scalar_lea.vmem %s13, 3
    %v4983 = vld [vmem:[%s4982] sm:$0x1]
    %s4984 = scalar_lea.vmem %s14, 3
    %v4985 = vld [vmem:[%s4984] sm:$0x1]
    %v4986 = vsel %vm93, %v4980, 0.0
    %4987 = vadd.xlane.f32.xlu0 %v4986
    %v4988 = vpop.xlane.xlu0 %4987
    %v4989 = vsel %vm93, %v4981, 0.0
    %4990 = vadd.xlane.f32.xlu0 %v4989
    %v4991 = vpop.xlane.xlu0 %4990
    %v4992 = vmul.f32 %v4988, %v227
    %v4993 = vmul.f32 %v4991, %v227
    %v4994 = vsub.f32 %v4980, %v4992
    %v4995 = vsub.f32 %v4981, %v4993
    %v4996 = vmul.f32 %v4994, %v4994
    %v4997 = vmul.f32 %v4995, %v4995
    %v4998 = vsel %vm93, %v4996, 0.0
    %4999 = vadd.xlane.f32.xlu0 %v4998
    %v5000 = vpop.xlane.xlu0 %4999
    %v5001 = vsel %vm93, %v4997, 0.0
    %5002 = vadd.xlane.f32.xlu0 %v5001
    %v5003 = vpop.xlane.xlu0 %5002
    %v5004 = vmul.f32 %v5000, %v227
    %v5005 = vmul.f32 %v5003, %v227
    %v5006 = vadd.f32 %v5004, 1e-05
    %v5007 = vadd.f32 %v5005, 1e-05
    %v5008 = vrsqrt.pop %v5006
    %v5009 = vrsqrt.pop %v5007
    %v5010 = vmul.f32 %v4994, %v5008
    %v5011 = vmul.f32 %v4995, %v5009
    %v5013 = vlaneseq
    %v5014 = vshrl.u32 %v5013, 7
    %v5015 = vsub.s32 0, %v5014
    %v5016 = vrot.slane %v4983, %v5015
    %v5018 = vmul.f32 %v5010, %v5016
    %v5019 = vmul.f32 %v5011, %v5016
    %v5021 = vlaneseq
    %v5022 = vshrl.u32 %v5021, 7
    %v5023 = vsub.s32 0, %v5022
    %v5024 = vrot.slane %v4985, %v5023
    %v5026 = vadd.f32 %v5018, %v5024
    %v5027 = vadd.f32 %v5019, %v5024
    %v5028 = vpack.c.bf16 %v5027, %v5026
    %s5029 = scalar_lea.vmem %s15, 192
    %v5030 = vld [vmem:[%s5029] sm:$0xff]
    %v5031 = vld [vmem:[%s5029 + $0x8] sm:$0xff]
    %v5032 = vld [vmem:[%s5029 + $0x10] sm:$0xff]
    %v5033 = vld [vmem:[%s5029 + $0x18] sm:$0xff]
    %v5034 = vld [vmem:[%s5029 + $0x20] sm:$0xff]
    %v5035 = vld [vmem:[%s5029 + $0x28] sm:$0xff]
    %v5036 = vld [vmem:[%s5029 + $0x30] sm:$0xff]
    %v5037 = vld [vmem:[%s5029 + $0x38] sm:$0xff]
    %s5038 = scalar_lea.vmem %s16, 6
    %v5039 = vld [vmem:[%s5038] sm:$0x3]
    %v5041 = vlaneseq
    %v5042 = vshrl.u32 %v5041, 7
    %v5043 = vsub.s32 0, %v5042
    %v5044 = vrot.slane %v5039, %v5043
    %v5045 = vlaneseq
    %v5046 = vshrl.u32 %v5045, 7
    %v5047 = vsub.s32 1, %v5046
    %v5048 = vrot.slane %v5039, %v5047
    %v5059 = vunpack.c.l.b16 %v5030
    %v5060 = vunpack.c.h.b16 %v5030
    %v5061 = vunpack.c.l.b16 %v5031
    %v5062 = vunpack.c.h.b16 %v5031
    %v5063 = vunpack.c.l.b16 %v5032
    %v5064 = vunpack.c.h.b16 %v5032
    %v5065 = vunpack.c.l.b16 %v5033
    %v5066 = vunpack.c.h.b16 %v5033
    %v5067 = vunpack.c.l.b16 %v5034
    %v5068 = vunpack.c.h.b16 %v5034
    %v5069 = vunpack.c.l.b16 %v5035
    %v5070 = vunpack.c.h.b16 %v5035
    %v5071 = vunpack.c.l.b16 %v5036
    %v5072 = vunpack.c.h.b16 %v5036
    %v5073 = vunpack.c.l.b16 %v5037
    %v5074 = vunpack.c.h.b16 %v5037
    %v5075 = vpack.c.b16 %v5061, %v5059
    %v5076 = vpack.c.b16 %v5062, %v5060
    %v5077 = vpack.c.b16 %v5065, %v5063
    %v5078 = vpack.c.b16 %v5066, %v5064
    %v5079 = vpack.c.b16 %v5069, %v5067
    %v5080 = vpack.c.b16 %v5070, %v5068
    %v5081 = vpack.c.b16 %v5073, %v5071
    %v5082 = vpack.c.b16 %v5074, %v5072
    %v5092 = vsel %vm93, %v5028, 0
    %5094 = vmatprep.subr.bf16.mxu0 0
    %5095 = vmatpush1.bf16.msra.mxu0 0
    %5096 = vmatprep.subr.bf16.mxu0 0
    %5097 = vmatpush1.bf16.msra.mxu0 0
    %5098 = vmatprep.subr.bf16.mxu0 0
    %5099 = vmatpush1.bf16.msra.mxu0 0
    %5100 = vmatprep.subr.bf16.mxu0 0
    %5101 = vmatpush1.bf16.msra.mxu0 0
    %5102 = vmatprep.subr.bf16.mxu0 %v5082
    %5103 = vmatpush1.bf16.msra.mxu0 %v5081
    %5104 = vmatprep.subr.bf16.mxu0 %v5080
    %5105 = vmatpush1.bf16.msra.mxu0 %v5079
    %5106 = vmatprep.subr.bf16.mxu0 %v5078
    %5107 = vmatpush1.bf16.msra.mxu0 %v5077
    %5108 = vmatprep.subr.bf16.mxu0 %v5076
    %5109 = vmatpush1.bf16.msra.mxu0 %v5075
    %5110 = vmatprep.subr.bf16.mxu0 0
    %5111 = vmatpush2.bf16.msra.mxu0 0
    %5112 = vmatprep.subr.bf16.mxu0 0
    %5113 = vmatpush2.bf16.msra.mxu0 0
    %5114 = vmatprep.subr.bf16.mxu0 0
    %5115 = vmatpush2.bf16.msra.mxu0 0
    %5116 = vmatprep.subr.bf16.mxu0 0
    %5117 = vmatpush2.bf16.msra.mxu0 0
    %5118 = vmatprep.subr.bf16.mxu0 0
    %5119 = vmatpush2.bf16.msra.mxu0 0
    %5120 = vmatprep.subr.bf16.mxu0 0
    %5121 = vmatpush2.bf16.msra.mxu0 0
    %5122 = vmatprep.subr.bf16.mxu0 0
    %5123 = vmatpush2.bf16.msra.mxu0 0
    %5124 = vmatprep.subr.bf16.mxu0 0
    %5125 = vmatpush2.bf16.msra.mxu0 0
    %5126 = vmatprep.mubr.bf16.mxu0 0
    %5127 = vmatmul.mubr.bf16.gmra.mxu0 %v5092
    %v5128 = vpop.f32.mrf.mxu0
    %v5129 = vadd.f32 %v5044, %v5128
    %v5130 = vpop.f32.mrf.mxu0
    %v5131 = vadd.f32 %v5048, %v5130
    %v5132 = vpop.f32.mrf.mxu0
    %v5133 = vadd.f32 %v5044, %v5132
    %v5134 = vpop.f32.mrf.mxu0
    %v5135 = vadd.f32 %v5048, %v5134
    %5136 = vdwg.mxu0
    %v5137 = vmax.f32 %v5129, 0.0
    %v5138 = vmax.f32 %v5131, 0.0
    %v5139 = vmax.f32 %v5133, 0.0
    %v5140 = vmax.f32 %v5135, 0.0
    %v5141 = vpack.c.bf16 %v5139, %v5137
    %v5142 = vpack.c.bf16 %v5140, %v5138
    %s5143 = scalar_lea.vmem %s17, 384
    %v5144 = vld [vmem:[%s5143] sm:$0xf]
    %v5145 = vld [vmem:[%s5143 + $0x4] sm:$0xf]
    %v5146 = vld [vmem:[%s5143 + $0x8] sm:$0xf]
    %v5147 = vld [vmem:[%s5143 + $0xc] sm:$0xf]
    %v5148 = vld [vmem:[%s5143 + $0x10] sm:$0xf]
    %v5149 = vld [vmem:[%s5143 + $0x14] sm:$0xf]
    %v5150 = vld [vmem:[%s5143 + $0x18] sm:$0xf]
    %v5151 = vld [vmem:[%s5143 + $0x1c] sm:$0xf]
    %v5152 = vld [vmem:[%s5143 + $0x20] sm:$0xf]
    %v5153 = vld [vmem:[%s5143 + $0x24] sm:$0xf]
    %v5154 = vld [vmem:[%s5143 + $0x28] sm:$0xf]
    %v5155 = vld [vmem:[%s5143 + $0x2c] sm:$0xf]
    %v5156 = vld [vmem:[%s5143 + $0x30] sm:$0xf]
    %v5157 = vld [vmem:[%s5143 + $0x34] sm:$0xf]
    %v5158 = vld [vmem:[%s5143 + $0x38] sm:$0xf]
    %v5159 = vld [vmem:[%s5143 + $0x3c] sm:$0xf]
    %v5160 = vld [vmem:[%s5143 + $0x40] sm:$0xf]
    %v5161 = vld [vmem:[%s5143 + $0x44] sm:$0xf]
    %v5162 = vld [vmem:[%s5143 + $0x48] sm:$0xf]
    %v5163 = vld [vmem:[%s5143 + $0x4c] sm:$0xf]
    %v5164 = vld [vmem:[%s5143 + $0x50] sm:$0xf]
    %v5165 = vld [vmem:[%s5143 + $0x54] sm:$0xf]
    %v5166 = vld [vmem:[%s5143 + $0x58] sm:$0xf]
    %v5167 = vld [vmem:[%s5143 + $0x5c] sm:$0xf]
    %v5168 = vld [vmem:[%s5143 + $0x60] sm:$0xf]
    %v5169 = vld [vmem:[%s5143 + $0x64] sm:$0xf]
    %v5170 = vld [vmem:[%s5143 + $0x68] sm:$0xf]
    %v5171 = vld [vmem:[%s5143 + $0x6c] sm:$0xf]
    %v5172 = vld [vmem:[%s5143 + $0x70] sm:$0xf]
    %v5173 = vld [vmem:[%s5143 + $0x74] sm:$0xf]
    %v5174 = vld [vmem:[%s5143 + $0x78] sm:$0xf]
    %v5175 = vld [vmem:[%s5143 + $0x7c] sm:$0xf]
    %s5176 = scalar_lea.vmem %s18, 3
    %v5177 = vld [vmem:[%s5176] sm:$0x1]
    %v5179 = vlaneseq
    %v5180 = vshrl.u32 %v5179, 7
    %v5181 = vsub.s32 0, %v5180
    %v5182 = vrot.slane %v5177, %v5181
    %v5216 = vunpack.c.l.b16 %v5144
    %v5217 = vunpack.c.l.b16 %v5145
    %v5218 = vunpack.c.l.b16 %v5146
    %v5219 = vunpack.c.l.b16 %v5147
    %v5220 = vunpack.c.l.b16 %v5148
    %v5221 = vunpack.c.l.b16 %v5149
    %v5222 = vunpack.c.l.b16 %v5150
    %v5223 = vunpack.c.l.b16 %v5151
    %v5224 = vunpack.c.l.b16 %v5152
    %v5225 = vunpack.c.l.b16 %v5153
    %v5226 = vunpack.c.l.b16 %v5154
    %v5227 = vunpack.c.l.b16 %v5155
    %v5228 = vunpack.c.l.b16 %v5156
    %v5229 = vunpack.c.l.b16 %v5157
    %v5230 = vunpack.c.l.b16 %v5158
    %v5231 = vunpack.c.l.b16 %v5159
    %v5232 = vunpack.c.l.b16 %v5160
    %v5233 = vunpack.c.l.b16 %v5161
    %v5234 = vunpack.c.l.b16 %v5162
    %v5235 = vunpack.c.l.b16 %v5163
    %v5236 = vunpack.c.l.b16 %v5164
    %v5237 = vunpack.c.l.b16 %v5165
    %v5238 = vunpack.c.l.b16 %v5166
    %v5239 = vunpack.c.l.b16 %v5167
    %v5240 = vunpack.c.l.b16 %v5168
    %v5241 = vunpack.c.l.b16 %v5169
    %v5242 = vunpack.c.l.b16 %v5170
    %v5243 = vunpack.c.l.b16 %v5171
    %v5244 = vunpack.c.l.b16 %v5172
    %v5245 = vunpack.c.l.b16 %v5173
    %v5246 = vunpack.c.l.b16 %v5174
    %v5247 = vunpack.c.l.b16 %v5175
    %v5248 = vpack.c.b16 %v5217, %v5216
    %v5249 = vpack.c.b16 %v5219, %v5218
    %v5250 = vpack.c.b16 %v5221, %v5220
    %v5251 = vpack.c.b16 %v5223, %v5222
    %v5252 = vpack.c.b16 %v5225, %v5224
    %v5253 = vpack.c.b16 %v5227, %v5226
    %v5254 = vpack.c.b16 %v5229, %v5228
    %v5255 = vpack.c.b16 %v5231, %v5230
    %v5256 = vpack.c.b16 %v5233, %v5232
    %v5257 = vpack.c.b16 %v5235, %v5234
    %v5258 = vpack.c.b16 %v5237, %v5236
    %v5259 = vpack.c.b16 %v5239, %v5238
    %v5260 = vpack.c.b16 %v5241, %v5240
    %v5261 = vpack.c.b16 %v5243, %v5242
    %v5262 = vpack.c.b16 %v5245, %v5244
    %v5263 = vpack.c.b16 %v5247, %v5246
    %5280 = vmatprep.subr.bf16.mxu0 0
    %5281 = vmatpush1.bf16.msra.mxu0 %v5255
    %5282 = vmatprep.subr.bf16.mxu0 0
    %5283 = vmatpush1.bf16.msra.mxu0 %v5254
    %5284 = vmatprep.subr.bf16.mxu0 0
    %5285 = vmatpush1.bf16.msra.mxu0 %v5253
    %5286 = vmatprep.subr.bf16.mxu0 0
    %5287 = vmatpush1.bf16.msra.mxu0 %v5252
    %5288 = vmatprep.subr.bf16.mxu0 0
    %5289 = vmatpush1.bf16.msra.mxu0 %v5251
    %5290 = vmatprep.subr.bf16.mxu0 0
    %5291 = vmatpush1.bf16.msra.mxu0 %v5250
    %5292 = vmatprep.subr.bf16.mxu0 0
    %5293 = vmatpush1.bf16.msra.mxu0 %v5249
    %5294 = vmatprep.subr.bf16.mxu0 0
    %5295 = vmatpush1.bf16.msra.mxu0 %v5248
    %5296 = vmatprep.subr.bf16.mxu0 0
    %5297 = vmatpush2.bf16.msra.mxu0 %v5263
    %5298 = vmatprep.subr.bf16.mxu0 0
    %5299 = vmatpush2.bf16.msra.mxu0 %v5262
    %5300 = vmatprep.subr.bf16.mxu0 0
    %5301 = vmatpush2.bf16.msra.mxu0 %v5261
    %5302 = vmatprep.subr.bf16.mxu0 0
    %5303 = vmatpush2.bf16.msra.mxu0 %v5260
    %5304 = vmatprep.subr.bf16.mxu0 0
    %5305 = vmatpush2.bf16.msra.mxu0 %v5259
    %5306 = vmatprep.subr.bf16.mxu0 0
    %5307 = vmatpush2.bf16.msra.mxu0 %v5258
    %5308 = vmatprep.subr.bf16.mxu0 0
    %5309 = vmatpush2.bf16.msra.mxu0 %v5257
    %5310 = vmatprep.subr.bf16.mxu0 0
    %5311 = vmatpush2.bf16.msra.mxu0 %v5256
    %5312 = vmatprep.mubr.bf16.mxu0 %v5142
    %5313 = vmatmul.mubr.bf16.gmra.mxu0 %v5141
    %v5314 = vpop.f32.mrf.mxu0
    %v5315 = vadd.f32 %v5182, %v5314
    %v5316 = vpop.f32.mrf.mxu0
    %v5317 = vpop.f32.mrf.mxu0
    %v5318 = vadd.f32 %v5182, %v5317
    %v5319 = vpop.f32.mrf.mxu0
    %5320 = vdwg.mxu0
    %v5321 = vadd.f32 %v4980, %v5315
    %v5322 = vadd.f32 %v4981, %v5318
    %v5323 = vsel %vm4051, 1, 0
    %v5324 = vsel %vm4052, 1, 0
    %5325 = vset.pattern.permute.xlu0 0
    %5326 = vperm.xlu0 %5325, %v5323
    %v5327 = vpop.permute.xlu0 %5326
    %5328 = vset.pattern.permute.xlu0 0
    %5329 = vperm.xlu0 %5328, %v5324
    %v5330 = vpop.permute.xlu0 %5329
    %vm5331 = vcmp.eq.s32.totalorder %v5327, 1
    %vm5332 = vcmp.eq.s32.totalorder %v5330, 1
    %v5333 = vsel %vm5331, %v5321, %v4049
    %v5334 = vsel %vm5332, %v5322, %v4050
    %vm5335 = vcmp.gt.f32.partialorder %v117, 0.6666667
    %vm5336 = vcmp.gt.f32.partialorder %v119, 0.6666667
    %vm5337 = vcmp.gt.f32.partialorder %v211, 0.6666667
    %v5338 = vsel %vm5337, 1, 0
    %v5339 = vcvt.s32.f32 %v5338
    %v5340 = vadd.f32 %v4056, %v5339
    %v5341 = vsel %vm5337, 0.0, -1e+30
    %s5342 = scalar_lea.vmem %s3, 4
    %v5343 = vld [vmem:[%s5342] sm:$0x1]
    %s5344 = scalar_lea.vmem %s4, 4
    %v5345 = vld [vmem:[%s5344] sm:$0x1]
    %v5346 = vsel %vm93, %v5333, 0.0
    %5347 = vadd.xlane.f32.xlu0 %v5346
    %v5348 = vpop.xlane.xlu0 %5347
    %v5349 = vsel %vm93, %v5334, 0.0
    %5350 = vadd.xlane.f32.xlu0 %v5349
    %v5351 = vpop.xlane.xlu0 %5350
    %v5352 = vmul.f32 %v5348, %v227
    %v5353 = vmul.f32 %v5351, %v227
    %v5354 = vsub.f32 %v5333, %v5352
    %v5355 = vsub.f32 %v5334, %v5353
    %v5356 = vmul.f32 %v5354, %v5354
    %v5357 = vmul.f32 %v5355, %v5355
    %v5358 = vsel %vm93, %v5356, 0.0
    %5359 = vadd.xlane.f32.xlu0 %v5358
    %v5360 = vpop.xlane.xlu0 %5359
    %v5361 = vsel %vm93, %v5357, 0.0
    %5362 = vadd.xlane.f32.xlu0 %v5361
    %v5363 = vpop.xlane.xlu0 %5362
    %v5364 = vmul.f32 %v5360, %v227
    %v5365 = vmul.f32 %v5363, %v227
    %v5366 = vadd.f32 %v5364, 1e-05
    %v5367 = vadd.f32 %v5365, 1e-05
    %v5368 = vrsqrt.pop %v5366
    %v5369 = vrsqrt.pop %v5367
    %v5370 = vmul.f32 %v5354, %v5368
    %v5371 = vmul.f32 %v5355, %v5369
    %v5373 = vlaneseq
    %v5374 = vshrl.u32 %v5373, 7
    %v5375 = vsub.s32 0, %v5374
    %v5376 = vrot.slane %v5343, %v5375
    %v5378 = vmul.f32 %v5370, %v5376
    %v5379 = vmul.f32 %v5371, %v5376
    %v5381 = vlaneseq
    %v5382 = vshrl.u32 %v5381, 7
    %v5383 = vsub.s32 0, %v5382
    %v5384 = vrot.slane %v5345, %v5383
    %v5386 = vadd.f32 %v5378, %v5384
    %v5387 = vadd.f32 %v5379, %v5384
    %v5388 = vpack.c.bf16 %v5387, %v5386
    %s5389 = scalar_lea.vmem %s5, 256
    %v5390 = vld [vmem:[%s5389] sm:$0xf]
    %v5391 = vld [vmem:[%s5389 + $0x4] sm:$0xf]
    %v5392 = vld [vmem:[%s5389 + $0x8] sm:$0xf]
    %v5393 = vld [vmem:[%s5389 + $0xc] sm:$0xf]
    %v5394 = vld [vmem:[%s5389 + $0x10] sm:$0xf]
    %v5395 = vld [vmem:[%s5389 + $0x14] sm:$0xf]
    %v5396 = vld [vmem:[%s5389 + $0x18] sm:$0xf]
    %v5397 = vld [vmem:[%s5389 + $0x1c] sm:$0xf]
    %s5398 = scalar_lea.vmem %s6, 8
    %v5399 = vld [vmem:[%s5398] sm:$0x1]
    %v5401 = vlaneseq
    %v5402 = vshrl.u32 %v5401, 7
    %v5403 = vsub.s32 0, %v5402
    %v5404 = vrot.slane %v5399, %v5403
    %v5414 = vunpack.c.l.b16 %v5390
    %v5415 = vunpack.c.l.b16 %v5391
    %v5416 = vunpack.c.l.b16 %v5392
    %v5417 = vunpack.c.l.b16 %v5393
    %v5418 = vunpack.c.l.b16 %v5394
    %v5419 = vunpack.c.l.b16 %v5395
    %v5420 = vunpack.c.l.b16 %v5396
    %v5421 = vunpack.c.l.b16 %v5397
    %v5422 = vpack.c.b16 %v5415, %v5414
    %v5423 = vpack.c.b16 %v5417, %v5416
    %v5424 = vpack.c.b16 %v5419, %v5418
    %v5425 = vpack.c.b16 %v5421, %v5420
    %v5431 = vsel %vm93, %v5388, 0
    %5433 = vmatprep.subr.bf16.mxu0 0
    %5434 = vmatpush1.bf16.msra.mxu0 0
    %5435 = vmatprep.subr.bf16.mxu0 0
    %5436 = vmatpush1.bf16.msra.mxu0 0
    %5437 = vmatprep.subr.bf16.mxu0 0
    %5438 = vmatpush1.bf16.msra.mxu0 0
    %5439 = vmatprep.subr.bf16.mxu0 0
    %5440 = vmatpush1.bf16.msra.mxu0 0
    %5441 = vmatprep.subr.bf16.mxu0 0
    %5442 = vmatpush1.bf16.msra.mxu0 %v5425
    %5443 = vmatprep.subr.bf16.mxu0 0
    %5444 = vmatpush1.bf16.msra.mxu0 %v5424
    %5445 = vmatprep.subr.bf16.mxu0 0
    %5446 = vmatpush1.bf16.msra.mxu0 %v5423
    %5447 = vmatprep.subr.bf16.mxu0 0
    %5448 = vmatpush1.bf16.msra.mxu0 %v5422
    %5449 = vmatprep.subr.bf16.mxu0 0
    %5450 = vmatpush2.bf16.msra.mxu0 0
    %5451 = vmatprep.subr.bf16.mxu0 0
    %5452 = vmatpush2.bf16.msra.mxu0 0
    %5453 = vmatprep.subr.bf16.mxu0 0
    %5454 = vmatpush2.bf16.msra.mxu0 0
    %5455 = vmatprep.subr.bf16.mxu0 0
    %5456 = vmatpush2.bf16.msra.mxu0 0
    %5457 = vmatprep.subr.bf16.mxu0 0
    %5458 = vmatpush2.bf16.msra.mxu0 0
    %5459 = vmatprep.subr.bf16.mxu0 0
    %5460 = vmatpush2.bf16.msra.mxu0 0
    %5461 = vmatprep.subr.bf16.mxu0 0
    %5462 = vmatpush2.bf16.msra.mxu0 0
    %5463 = vmatprep.subr.bf16.mxu0 0
    %5464 = vmatpush2.bf16.msra.mxu0 0
    %5465 = vmatprep.mubr.bf16.mxu0 0
    %5466 = vmatmul.mubr.bf16.gmra.mxu0 %v5431
    %v5467 = vpop.f32.mrf.mxu0
    %v5468 = vadd.f32 %v5404, %v5467
    %v5469 = vpop.f32.mrf.mxu0
    %v5470 = vpop.f32.mrf.mxu0
    %v5471 = vadd.f32 %v5404, %v5470
    %v5472 = vpop.f32.mrf.mxu0
    %5473 = vdwg.mxu0
    %s5474 = scalar_lea.vmem %s7, 256
    %v5475 = vld [vmem:[%s5474] sm:$0xf]
    %v5476 = vld [vmem:[%s5474 + $0x4] sm:$0xf]
    %v5477 = vld [vmem:[%s5474 + $0x8] sm:$0xf]
    %v5478 = vld [vmem:[%s5474 + $0xc] sm:$0xf]
    %v5479 = vld [vmem:[%s5474 + $0x10] sm:$0xf]
    %v5480 = vld [vmem:[%s5474 + $0x14] sm:$0xf]
    %v5481 = vld [vmem:[%s5474 + $0x18] sm:$0xf]
    %v5482 = vld [vmem:[%s5474 + $0x1c] sm:$0xf]
    %s5483 = scalar_lea.vmem %s8, 8
    %v5484 = vld [vmem:[%s5483] sm:$0x1]
    %v5486 = vlaneseq
    %v5487 = vshrl.u32 %v5486, 7
    %v5488 = vsub.s32 0, %v5487
    %v5489 = vrot.slane %v5484, %v5488
    %v5499 = vunpack.c.l.b16 %v5475
    %v5500 = vunpack.c.l.b16 %v5476
    %v5501 = vunpack.c.l.b16 %v5477
    %v5502 = vunpack.c.l.b16 %v5478
    %v5503 = vunpack.c.l.b16 %v5479
    %v5504 = vunpack.c.l.b16 %v5480
    %v5505 = vunpack.c.l.b16 %v5481
    %v5506 = vunpack.c.l.b16 %v5482
    %v5507 = vpack.c.b16 %v5500, %v5499
    %v5508 = vpack.c.b16 %v5502, %v5501
    %v5509 = vpack.c.b16 %v5504, %v5503
    %v5510 = vpack.c.b16 %v5506, %v5505
    %5515 = vmatprep.subr.bf16.mxu0 0
    %5516 = vmatpush1.bf16.msra.mxu0 0
    %5517 = vmatprep.subr.bf16.mxu0 0
    %5518 = vmatpush1.bf16.msra.mxu0 0
    %5519 = vmatprep.subr.bf16.mxu0 0
    %5520 = vmatpush1.bf16.msra.mxu0 0
    %5521 = vmatprep.subr.bf16.mxu0 0
    %5522 = vmatpush1.bf16.msra.mxu0 0
    %5523 = vmatprep.subr.bf16.mxu0 0
    %5524 = vmatpush1.bf16.msra.mxu0 %v5510
    %5525 = vmatprep.subr.bf16.mxu0 0
    %5526 = vmatpush1.bf16.msra.mxu0 %v5509
    %5527 = vmatprep.subr.bf16.mxu0 0
    %5528 = vmatpush1.bf16.msra.mxu0 %v5508
    %5529 = vmatprep.subr.bf16.mxu0 0
    %5530 = vmatpush1.bf16.msra.mxu0 %v5507
    %5531 = vmatprep.subr.bf16.mxu0 0
    %5532 = vmatpush2.bf16.msra.mxu0 0
    %5533 = vmatprep.subr.bf16.mxu0 0
    %5534 = vmatpush2.bf16.msra.mxu0 0
    %5535 = vmatprep.subr.bf16.mxu0 0
    %5536 = vmatpush2.bf16.msra.mxu0 0
    %5537 = vmatprep.subr.bf16.mxu0 0
    %5538 = vmatpush2.bf16.msra.mxu0 0
    %5539 = vmatprep.subr.bf16.mxu0 0
    %5540 = vmatpush2.bf16.msra.mxu0 0
    %5541 = vmatprep.subr.bf16.mxu0 0
    %5542 = vmatpush2.bf16.msra.mxu0 0
    %5543 = vmatprep.subr.bf16.mxu0 0
    %5544 = vmatpush2.bf16.msra.mxu0 0
    %5545 = vmatprep.subr.bf16.mxu0 0
    %5546 = vmatpush2.bf16.msra.mxu0 0
    %5547 = vmatprep.mubr.bf16.mxu0 0
    %5548 = vmatmul.mubr.bf16.gmra.mxu0 %v5431
    %v5549 = vpop.f32.mrf.mxu0
    %v5550 = vadd.f32 %v5489, %v5549
    %v5551 = vpop.f32.mrf.mxu0
    %v5552 = vpop.f32.mrf.mxu0
    %v5553 = vadd.f32 %v5489, %v5552
    %v5554 = vpop.f32.mrf.mxu0
    %5555 = vdwg.mxu0
    %s5556 = scalar_lea.vmem %s9, 256
    %v5557 = vld [vmem:[%s5556] sm:$0xf]
    %v5558 = vld [vmem:[%s5556 + $0x4] sm:$0xf]
    %v5559 = vld [vmem:[%s5556 + $0x8] sm:$0xf]
    %v5560 = vld [vmem:[%s5556 + $0xc] sm:$0xf]
    %v5561 = vld [vmem:[%s5556 + $0x10] sm:$0xf]
    %v5562 = vld [vmem:[%s5556 + $0x14] sm:$0xf]
    %v5563 = vld [vmem:[%s5556 + $0x18] sm:$0xf]
    %v5564 = vld [vmem:[%s5556 + $0x1c] sm:$0xf]
    %s5565 = scalar_lea.vmem %s10, 8
    %v5566 = vld [vmem:[%s5565] sm:$0x1]
    %v5568 = vlaneseq
    %v5569 = vshrl.u32 %v5568, 7
    %v5570 = vsub.s32 0, %v5569
    %v5571 = vrot.slane %v5566, %v5570
    %v5581 = vunpack.c.l.b16 %v5557
    %v5582 = vunpack.c.l.b16 %v5558
    %v5583 = vunpack.c.l.b16 %v5559
    %v5584 = vunpack.c.l.b16 %v5560
    %v5585 = vunpack.c.l.b16 %v5561
    %v5586 = vunpack.c.l.b16 %v5562
    %v5587 = vunpack.c.l.b16 %v5563
    %v5588 = vunpack.c.l.b16 %v5564
    %v5589 = vpack.c.b16 %v5582, %v5581
    %v5590 = vpack.c.b16 %v5584, %v5583
    %v5591 = vpack.c.b16 %v5586, %v5585
    %v5592 = vpack.c.b16 %v5588, %v5587
    %5597 = vmatprep.subr.bf16.mxu0 0
    %5598 = vmatpush1.bf16.msra.mxu0 0
    %5599 = vmatprep.subr.bf16.mxu0 0
    %5600 = vmatpush1.bf16.msra.mxu0 0
    %5601 = vmatprep.subr.bf16.mxu0 0
    %5602 = vmatpush1.bf16.msra.mxu0 0
    %5603 = vmatprep.subr.bf16.mxu0 0
    %5604 = vmatpush1.bf16.msra.mxu0 0
    %5605 = vmatprep.subr.bf16.mxu0 0
    %5606 = vmatpush1.bf16.msra.mxu0 %v5592
    %5607 = vmatprep.subr.bf16.mxu0 0
    %5608 = vmatpush1.bf16.msra.mxu0 %v5591
    %5609 = vmatprep.subr.bf16.mxu0 0
    %5610 = vmatpush1.bf16.msra.mxu0 %v5590
    %5611 = vmatprep.subr.bf16.mxu0 0
    %5612 = vmatpush1.bf16.msra.mxu0 %v5589
    %5613 = vmatprep.subr.bf16.mxu0 0
    %5614 = vmatpush2.bf16.msra.mxu0 0
    %5615 = vmatprep.subr.bf16.mxu0 0
    %5616 = vmatpush2.bf16.msra.mxu0 0
    %5617 = vmatprep.subr.bf16.mxu0 0
    %5618 = vmatpush2.bf16.msra.mxu0 0
    %5619 = vmatprep.subr.bf16.mxu0 0
    %5620 = vmatpush2.bf16.msra.mxu0 0
    %5621 = vmatprep.subr.bf16.mxu0 0
    %5622 = vmatpush2.bf16.msra.mxu0 0
    %5623 = vmatprep.subr.bf16.mxu0 0
    %5624 = vmatpush2.bf16.msra.mxu0 0
    %5625 = vmatprep.subr.bf16.mxu0 0
    %5626 = vmatpush2.bf16.msra.mxu0 0
    %5627 = vmatprep.subr.bf16.mxu0 0
    %5628 = vmatpush2.bf16.msra.mxu0 0
    %5629 = vmatprep.mubr.bf16.mxu0 0
    %5630 = vmatmul.mubr.bf16.gmra.mxu0 %v5431
    %v5631 = vpop.f32.mrf.mxu0
    %v5632 = vadd.f32 %v5571, %v5631
    %v5633 = vpop.f32.mrf.mxu0
    %v5634 = vpop.f32.mrf.mxu0
    %v5635 = vadd.f32 %v5571, %v5634
    %v5636 = vpop.f32.mrf.mxu0
    %5637 = vdwg.mxu0
    %v5638 = vpack.c.bf16 %v5471, %v5468
    %v5639 = vpack.c.bf16 %v5553, %v5550
    %v5641 = vsel %vm510, %v5638, 0
    %v5644 = vsel %vm510, %v5639, 0
    %5646 = vmatprep.subr.bf16.mxu0 0
    %5647 = vmatpush1.bf16.xpose.msra.mxu0 0
    %5648 = vmatprep.subr.bf16.mxu0 0
    %5649 = vmatpush1.bf16.xpose.msra.mxu0 0
    %5650 = vmatprep.subr.bf16.mxu0 0
    %5651 = vmatpush1.bf16.xpose.msra.mxu0 0
    %5652 = vmatprep.subr.bf16.mxu0 0
    %5653 = vmatpush1.bf16.xpose.msra.mxu0 0
    %5654 = vmatprep.subr.bf16.mxu0 0
    %5655 = vmatpush1.bf16.xpose.msra.mxu0 0
    %5656 = vmatprep.subr.bf16.mxu0 0
    %5657 = vmatpush1.bf16.xpose.msra.mxu0 0
    %5658 = vmatprep.subr.bf16.mxu0 0
    %5659 = vmatpush1.bf16.xpose.msra.mxu0 0
    %5660 = vmatprep.subr.bf16.mxu0 0
    %5661 = vmatpush1.bf16.xpose.msra.mxu0 %v5644
    %5662 = vmatprep.subr.bf16.mxu0 0
    %5663 = vmatpush2.bf16.xpose.msra.mxu0 0
    %5664 = vmatprep.subr.bf16.mxu0 0
    %5665 = vmatpush2.bf16.xpose.msra.mxu0 0
    %5666 = vmatprep.subr.bf16.mxu0 0
    %5667 = vmatpush2.bf16.xpose.msra.mxu0 0
    %5668 = vmatprep.subr.bf16.mxu0 0
    %5669 = vmatpush2.bf16.xpose.msra.mxu0 0
    %5670 = vmatprep.subr.bf16.mxu0 0
    %5671 = vmatpush2.bf16.xpose.msra.mxu0 0
    %5672 = vmatprep.subr.bf16.mxu0 0
    %5673 = vmatpush2.bf16.xpose.msra.mxu0 0
    %5674 = vmatprep.subr.bf16.mxu0 0
    %5675 = vmatpush2.bf16.xpose.msra.mxu0 0
    %5676 = vmatprep.subr.bf16.mxu0 0
    %5677 = vmatpush2.bf16.xpose.msra.mxu0 0
    %5678 = vmatprep.mubr.bf16.mxu0 0
    %5679 = vmatmul.mubr.bf16.gmra.mxu0 %v5641
    %v5680 = vpop.f32.mrf.mxu0
    %v5681 = vadd.f32 0.0, %v5680
    %v5682 = vpop.f32.mrf.mxu0
    %v5683 = vpop.f32.mrf.mxu0
    %v5684 = vadd.f32 0.0, %v5683
    %v5685 = vpop.f32.mrf.mxu0
    %5686 = vdwg.mxu0
    %v5687 = vmul.f32 %v5681, 0.17677669
    %v5688 = vmul.f32 %v5684, 0.17677669
    %v5689 = vlaneseq
    %v5690 = vshrl.u32 %v5689, 7
    %v5691 = vsub.s32 0, %v5690
    %v5692 = vrot.slane %v5341, %v5691
    %v5693 = vadd.f32 %v5687, %v5692
    %v5694 = vadd.f32 %v5688, %v5692
    %v5695 = vsel %vm566, %v5693, -inf
    %5696 = vmax.xlane.f32.xlu0 %v5695
    %v5697 = vpop.xlane.xlu0 %5696
    %v5698 = vsel %vm566, %v5694, -inf
    %5699 = vmax.xlane.f32.xlu0 %v5698
    %v5700 = vpop.xlane.xlu0 %5699
    %v5701 = vsub.f32 %v5693, %v5697
    %v5702 = vsub.f32 %v5694, %v5700
    %v5703 = vmul.f32 %v5701, 1.442695
    %v5704 = vpow.pop %v5703
    %v5705 = vmul.f32 %v5702, 1.442695
    %v5706 = vpow.pop %v5705
    %v5707 = vsel %vm566, %v5704, 0.0
    %5708 = vadd.xlane.f32.xlu0 %v5707
    %v5709 = vpop.xlane.xlu0 %5708
    %v5710 = vsel %vm566, %v5706, 0.0
    %5711 = vadd.xlane.f32.xlu0 %v5710
    %v5712 = vpop.xlane.xlu0 %5711
    %v5713 = vpack.c.bf16 %v5706, %v5704
    %v5714 = vpack.c.bf16 %v5635, %v5632
    %v5716 = vsel %vm566, %v5713, 0
    %5718 = vmatprep.subr.bf16.mxu0 0
    %5719 = vmatpush1.bf16.msra.mxu0 0
    %5720 = vmatprep.subr.bf16.mxu0 0
    %5721 = vmatpush1.bf16.msra.mxu0 0
    %5722 = vmatprep.subr.bf16.mxu0 0
    %5723 = vmatpush1.bf16.msra.mxu0 0
    %5724 = vmatprep.subr.bf16.mxu0 0
    %5725 = vmatpush1.bf16.msra.mxu0 0
    %5726 = vmatprep.subr.bf16.mxu0 0
    %5727 = vmatpush1.bf16.msra.mxu0 0
    %5728 = vmatprep.subr.bf16.mxu0 0
    %5729 = vmatpush1.bf16.msra.mxu0 0
    %5730 = vmatprep.subr.bf16.mxu0 0
    %5731 = vmatpush1.bf16.msra.mxu0 0
    %5732 = vmatprep.subr.bf16.mxu0 0
    %5733 = vmatpush1.bf16.msra.mxu0 %v5714
    %5734 = vmatprep.subr.bf16.mxu0 0
    %5735 = vmatpush2.bf16.msra.mxu0 0
    %5736 = vmatprep.subr.bf16.mxu0 0
    %5737 = vmatpush2.bf16.msra.mxu0 0
    %5738 = vmatprep.subr.bf16.mxu0 0
    %5739 = vmatpush2.bf16.msra.mxu0 0
    %5740 = vmatprep.subr.bf16.mxu0 0
    %5741 = vmatpush2.bf16.msra.mxu0 0
    %5742 = vmatprep.subr.bf16.mxu0 0
    %5743 = vmatpush2.bf16.msra.mxu0 0
    %5744 = vmatprep.subr.bf16.mxu0 0
    %5745 = vmatpush2.bf16.msra.mxu0 0
    %5746 = vmatprep.subr.bf16.mxu0 0
    %5747 = vmatpush2.bf16.msra.mxu0 0
    %5748 = vmatprep.subr.bf16.mxu0 0
    %5749 = vmatpush2.bf16.msra.mxu0 0
    %5750 = vmatprep.mubr.bf16.mxu0 0
    %5751 = vmatmul.mubr.bf16.gmra.mxu0 %v5716
    %v5752 = vpop.f32.mrf.mxu0
    %v5753 = vadd.f32 0.0, %v5752
    %v5754 = vpop.f32.mrf.mxu0
    %v5755 = vpop.f32.mrf.mxu0
    %v5756 = vadd.f32 0.0, %v5755
    %v5757 = vpop.f32.mrf.mxu0
    %5758 = vdwg.mxu0
    %v5759 = vrcp.pop %v5709
    %v5760 = vrcp.pop %v5712
    %v5761 = vmul.f32 %v5753, %v5759
    %v5762 = vmul.f32 %v5756, %v5760
    %v5763 = vpack.c.bf16 %v5762, %v5761
    %s5764 = scalar_lea.vmem %s11, 128
    %v5765 = vld [vmem:[%s5764] sm:$0xf]
    %v5766 = vld [vmem:[%s5764 + $0x4] sm:$0xf]
    %v5767 = vld [vmem:[%s5764 + $0x8] sm:$0xf]
    %v5768 = vld [vmem:[%s5764 + $0xc] sm:$0xf]
    %s5769 = scalar_lea.vmem %s5, 288
    %v5770 = vld [vmem:[%s5769] sm:$0xf]
    %v5771 = vld [vmem:[%s5769 + $0x4] sm:$0xf]
    %v5772 = vld [vmem:[%s5769 + $0x8] sm:$0xf]
    %v5773 = vld [vmem:[%s5769 + $0xc] sm:$0xf]
    %v5774 = vld [vmem:[%s5769 + $0x10] sm:$0xf]
    %v5775 = vld [vmem:[%s5769 + $0x14] sm:$0xf]
    %v5776 = vld [vmem:[%s5769 + $0x18] sm:$0xf]
    %v5777 = vld [vmem:[%s5769 + $0x1c] sm:$0xf]
    %s5778 = scalar_lea.vmem %s6, 9
    %v5779 = vld [vmem:[%s5778] sm:$0x1]
    %v5781 = vlaneseq
    %v5782 = vshrl.u32 %v5781, 7
    %v5783 = vsub.s32 0, %v5782
    %v5784 = vrot.slane %v5779, %v5783
    %v5794 = vunpack.c.l.b16 %v5770
    %v5795 = vunpack.c.l.b16 %v5771
    %v5796 = vunpack.c.l.b16 %v5772
    %v5797 = vunpack.c.l.b16 %v5773
    %v5798 = vunpack.c.l.b16 %v5774
    %v5799 = vunpack.c.l.b16 %v5775
    %v5800 = vunpack.c.l.b16 %v5776
    %v5801 = vunpack.c.l.b16 %v5777
    %v5802 = vpack.c.b16 %v5795, %v5794
    %v5803 = vpack.c.b16 %v5797, %v5796
    %v5804 = vpack.c.b16 %v5799, %v5798
    %v5805 = vpack.c.b16 %v5801, %v5800
    %5810 = vmatprep.subr.bf16.mxu0 0
    %5811 = vmatpush1.bf16.msra.mxu0 0
    %5812 = vmatprep.subr.bf16.mxu0 0
    %5813 = vmatpush1.bf16.msra.mxu0 0
    %5814 = vmatprep.subr.bf16.mxu0 0
    %5815 = vmatpush1.bf16.msra.mxu0 0
    %5816 = vmatprep.subr.bf16.mxu0 0
    %5817 = vmatpush1.bf16.msra.mxu0 0
    %5818 = vmatprep.subr.bf16.mxu0 0
    %5819 = vmatpush1.bf16.msra.mxu0 %v5805
    %5820 = vmatprep.subr.bf16.mxu0 0
    %5821 = vmatpush1.bf16.msra.mxu0 %v5804
    %5822 = vmatprep.subr.bf16.mxu0 0
    %5823 = vmatpush1.bf16.msra.mxu0 %v5803
    %5824 = vmatprep.subr.bf16.mxu0 0
    %5825 = vmatpush1.bf16.msra.mxu0 %v5802
    %5826 = vmatprep.subr.bf16.mxu0 0
    %5827 = vmatpush2.bf16.msra.mxu0 0
    %5828 = vmatprep.subr.bf16.mxu0 0
    %5829 = vmatpush2.bf16.msra.mxu0 0
    %5830 = vmatprep.subr.bf16.mxu0 0
    %5831 = vmatpush2.bf16.msra.mxu0 0
    %5832 = vmatprep.subr.bf16.mxu0 0
    %5833 = vmatpush2.bf16.msra.mxu0 0
    %5834 = vmatprep.subr.bf16.mxu0 0
    %5835 = vmatpush2.bf16.msra.mxu0 0
    %5836 = vmatprep.subr.bf16.mxu0 0
    %5837 = vmatpush2.bf16.msra.mxu0 0
    %5838 = vmatprep.subr.bf16.mxu0 0
    %5839 = vmatpush2.bf16.msra.mxu0 0
    %5840 = vmatprep.subr.bf16.mxu0 0
    %5841 = vmatpush2.bf16.msra.mxu0 0
    %5842 = vmatprep.mubr.bf16.mxu0 0
    %5843 = vmatmul.mubr.bf16.gmra.mxu0 %v5431
    %v5844 = vpop.f32.mrf.mxu0
    %v5845 = vadd.f32 %v5784, %v5844
    %v5846 = vpop.f32.mrf.mxu0
    %v5847 = vpop.f32.mrf.mxu0
    %v5848 = vadd.f32 %v5784, %v5847
    %v5849 = vpop.f32.mrf.mxu0
    %5850 = vdwg.mxu0
    %s5851 = scalar_lea.vmem %s7, 288
    %v5852 = vld [vmem:[%s5851] sm:$0xf]
    %v5853 = vld [vmem:[%s5851 + $0x4] sm:$0xf]
    %v5854 = vld [vmem:[%s5851 + $0x8] sm:$0xf]
    %v5855 = vld [vmem:[%s5851 + $0xc] sm:$0xf]
    %v5856 = vld [vmem:[%s5851 + $0x10] sm:$0xf]
    %v5857 = vld [vmem:[%s5851 + $0x14] sm:$0xf]
    %v5858 = vld [vmem:[%s5851 + $0x18] sm:$0xf]
    %v5859 = vld [vmem:[%s5851 + $0x1c] sm:$0xf]
    %s5860 = scalar_lea.vmem %s8, 9
    %v5861 = vld [vmem:[%s5860] sm:$0x1]
    %v5863 = vlaneseq
    %v5864 = vshrl.u32 %v5863, 7
    %v5865 = vsub.s32 0, %v5864
    %v5866 = vrot.slane %v5861, %v5865
    %v5876 = vunpack.c.l.b16 %v5852
    %v5877 = vunpack.c.l.b16 %v5853
    %v5878 = vunpack.c.l.b16 %v5854
    %v5879 = vunpack.c.l.b16 %v5855
    %v5880 = vunpack.c.l.b16 %v5856
    %v5881 = vunpack.c.l.b16 %v5857
    %v5882 = vunpack.c.l.b16 %v5858
    %v5883 = vunpack.c.l.b16 %v5859
    %v5884 = vpack.c.b16 %v5877, %v5876
    %v5885 = vpack.c.b16 %v5879, %v5878
    %v5886 = vpack.c.b16 %v5881, %v5880
    %v5887 = vpack.c.b16 %v5883, %v5882
    %5892 = vmatprep.subr.bf16.mxu0 0
    %5893 = vmatpush1.bf16.msra.mxu0 0
    %5894 = vmatprep.subr.bf16.mxu0 0
    %5895 = vmatpush1.bf16.msra.mxu0 0
    %5896 = vmatprep.subr.bf16.mxu0 0
    %5897 = vmatpush1.bf16.msra.mxu0 0
    %5898 = vmatprep.subr.bf16.mxu0 0
    %5899 = vmatpush1.bf16.msra.mxu0 0
    %5900 = vmatprep.subr.bf16.mxu0 0
    %5901 = vmatpush1.bf16.msra.mxu0 %v5887
    %5902 = vmatprep.subr.bf16.mxu0 0
    %5903 = vmatpush1.bf16.msra.mxu0 %v5886
    %5904 = vmatprep.subr.bf16.mxu0 0
    %5905 = vmatpush1.bf16.msra.mxu0 %v5885
    %5906 = vmatprep.subr.bf16.mxu0 0
    %5907 = vmatpush1.bf16.msra.mxu0 %v5884
    %5908 = vmatprep.subr.bf16.mxu0 0
    %5909 = vmatpush2.bf16.msra.mxu0 0
    %5910 = vmatprep.subr.bf16.mxu0 0
    %5911 = vmatpush2.bf16.msra.mxu0 0
    %5912 = vmatprep.subr.bf16.mxu0 0
    %5913 = vmatpush2.bf16.msra.mxu0 0
    %5914 = vmatprep.subr.bf16.mxu0 0
    %5915 = vmatpush2.bf16.msra.mxu0 0
    %5916 = vmatprep.subr.bf16.mxu0 0
    %5917 = vmatpush2.bf16.msra.mxu0 0
    %5918 = vmatprep.subr.bf16.mxu0 0
    %5919 = vmatpush2.bf16.msra.mxu0 0
    %5920 = vmatprep.subr.bf16.mxu0 0
    %5921 = vmatpush2.bf16.msra.mxu0 0
    %5922 = vmatprep.subr.bf16.mxu0 0
    %5923 = vmatpush2.bf16.msra.mxu0 0
    %5924 = vmatprep.mubr.bf16.mxu0 0
    %5925 = vmatmul.mubr.bf16.gmra.mxu0 %v5431
    %v5926 = vpop.f32.mrf.mxu0
    %v5927 = vadd.f32 %v5866, %v5926
    %v5928 = vpop.f32.mrf.mxu0
    %v5929 = vpop.f32.mrf.mxu0
    %v5930 = vadd.f32 %v5866, %v5929
    %v5931 = vpop.f32.mrf.mxu0
    %5932 = vdwg.mxu0
    %s5933 = scalar_lea.vmem %s9, 288
    %v5934 = vld [vmem:[%s5933] sm:$0xf]
    %v5935 = vld [vmem:[%s5933 + $0x4] sm:$0xf]
    %v5936 = vld [vmem:[%s5933 + $0x8] sm:$0xf]
    %v5937 = vld [vmem:[%s5933 + $0xc] sm:$0xf]
    %v5938 = vld [vmem:[%s5933 + $0x10] sm:$0xf]
    %v5939 = vld [vmem:[%s5933 + $0x14] sm:$0xf]
    %v5940 = vld [vmem:[%s5933 + $0x18] sm:$0xf]
    %v5941 = vld [vmem:[%s5933 + $0x1c] sm:$0xf]
    %s5942 = scalar_lea.vmem %s10, 9
    %v5943 = vld [vmem:[%s5942] sm:$0x1]
    %v5945 = vlaneseq
    %v5946 = vshrl.u32 %v5945, 7
    %v5947 = vsub.s32 0, %v5946
    %v5948 = vrot.slane %v5943, %v5947
    %v5958 = vunpack.c.l.b16 %v5934
    %v5959 = vunpack.c.l.b16 %v5935
    %v5960 = vunpack.c.l.b16 %v5936
    %v5961 = vunpack.c.l.b16 %v5937
    %v5962 = vunpack.c.l.b16 %v5938
    %v5963 = vunpack.c.l.b16 %v5939
    %v5964 = vunpack.c.l.b16 %v5940
    %v5965 = vunpack.c.l.b16 %v5941
    %v5966 = vpack.c.b16 %v5959, %v5958
    %v5967 = vpack.c.b16 %v5961, %v5960
    %v5968 = vpack.c.b16 %v5963, %v5962
    %v5969 = vpack.c.b16 %v5965, %v5964
    %5974 = vmatprep.subr.bf16.mxu0 0
    %5975 = vmatpush1.bf16.msra.mxu0 0
    %5976 = vmatprep.subr.bf16.mxu0 0
    %5977 = vmatpush1.bf16.msra.mxu0 0
    %5978 = vmatprep.subr.bf16.mxu0 0
    %5979 = vmatpush1.bf16.msra.mxu0 0
    %5980 = vmatprep.subr.bf16.mxu0 0
    %5981 = vmatpush1.bf16.msra.mxu0 0
    %5982 = vmatprep.subr.bf16.mxu0 0
    %5983 = vmatpush1.bf16.msra.mxu0 %v5969
    %5984 = vmatprep.subr.bf16.mxu0 0
    %5985 = vmatpush1.bf16.msra.mxu0 %v5968
    %5986 = vmatprep.subr.bf16.mxu0 0
    %5987 = vmatpush1.bf16.msra.mxu0 %v5967
    %5988 = vmatprep.subr.bf16.mxu0 0
    %5989 = vmatpush1.bf16.msra.mxu0 %v5966
    %5990 = vmatprep.subr.bf16.mxu0 0
    %5991 = vmatpush2.bf16.msra.mxu0 0
    %5992 = vmatprep.subr.bf16.mxu0 0
    %5993 = vmatpush2.bf16.msra.mxu0 0
    %5994 = vmatprep.subr.bf16.mxu0 0
    %5995 = vmatpush2.bf16.msra.mxu0 0
    %5996 = vmatprep.subr.bf16.mxu0 0
    %5997 = vmatpush2.bf16.msra.mxu0 0
    %5998 = vmatprep.subr.bf16.mxu0 0
    %5999 = vmatpush2.bf16.msra.mxu0 0
    %6000 = vmatprep.subr.bf16.mxu0 0
    %6001 = vmatpush2.bf16.msra.mxu0 0
    %6002 = vmatprep.subr.bf16.mxu0 0
    %6003 = vmatpush2.bf16.msra.mxu0 0
    %6004 = vmatprep.subr.bf16.mxu0 0
    %6005 = vmatpush2.bf16.msra.mxu0 0
    %6006 = vmatprep.mubr.bf16.mxu0 0
    %6007 = vmatmul.mubr.bf16.gmra.mxu0 %v5431
    %v6008 = vpop.f32.mrf.mxu0
    %v6009 = vadd.f32 %v5948, %v6008
    %v6010 = vpop.f32.mrf.mxu0
    %v6011 = vpop.f32.mrf.mxu0
    %v6012 = vadd.f32 %v5948, %v6011
    %v6013 = vpop.f32.mrf.mxu0
    %6014 = vdwg.mxu0
    %v6015 = vpack.c.bf16 %v5848, %v5845
    %v6016 = vpack.c.bf16 %v5930, %v5927
    %v6018 = vsel %vm510, %v6015, 0
    %v6021 = vsel %vm510, %v6016, 0
    %6023 = vmatprep.subr.bf16.mxu0 0
    %6024 = vmatpush1.bf16.xpose.msra.mxu0 0
    %6025 = vmatprep.subr.bf16.mxu0 0
    %6026 = vmatpush1.bf16.xpose.msra.mxu0 0
    %6027 = vmatprep.subr.bf16.mxu0 0
    %6028 = vmatpush1.bf16.xpose.msra.mxu0 0
    %6029 = vmatprep.subr.bf16.mxu0 0
    %6030 = vmatpush1.bf16.xpose.msra.mxu0 0
    %6031 = vmatprep.subr.bf16.mxu0 0
    %6032 = vmatpush1.bf16.xpose.msra.mxu0 0
    %6033 = vmatprep.subr.bf16.mxu0 0
    %6034 = vmatpush1.bf16.xpose.msra.mxu0 0
    %6035 = vmatprep.subr.bf16.mxu0 0
    %6036 = vmatpush1.bf16.xpose.msra.mxu0 0
    %6037 = vmatprep.subr.bf16.mxu0 0
    %6038 = vmatpush1.bf16.xpose.msra.mxu0 %v6021
    %6039 = vmatprep.subr.bf16.mxu0 0
    %6040 = vmatpush2.bf16.xpose.msra.mxu0 0
    %6041 = vmatprep.subr.bf16.mxu0 0
    %6042 = vmatpush2.bf16.xpose.msra.mxu0 0
    %6043 = vmatprep.subr.bf16.mxu0 0
    %6044 = vmatpush2.bf16.xpose.msra.mxu0 0
    %6045 = vmatprep.subr.bf16.mxu0 0
    %6046 = vmatpush2.bf16.xpose.msra.mxu0 0
    %6047 = vmatprep.subr.bf16.mxu0 0
    %6048 = vmatpush2.bf16.xpose.msra.mxu0 0
    %6049 = vmatprep.subr.bf16.mxu0 0
    %6050 = vmatpush2.bf16.xpose.msra.mxu0 0
    %6051 = vmatprep.subr.bf16.mxu0 0
    %6052 = vmatpush2.bf16.xpose.msra.mxu0 0
    %6053 = vmatprep.subr.bf16.mxu0 0
    %6054 = vmatpush2.bf16.xpose.msra.mxu0 0
    %6055 = vmatprep.mubr.bf16.mxu0 0
    %6056 = vmatmul.mubr.bf16.gmra.mxu0 %v6018
    %v6057 = vpop.f32.mrf.mxu0
    %v6058 = vadd.f32 0.0, %v6057
    %v6059 = vpop.f32.mrf.mxu0
    %v6060 = vpop.f32.mrf.mxu0
    %v6061 = vadd.f32 0.0, %v6060
    %v6062 = vpop.f32.mrf.mxu0
    %6063 = vdwg.mxu0
    %v6064 = vmul.f32 %v6058, 0.17677669
    %v6065 = vmul.f32 %v6061, 0.17677669
    %v6066 = vadd.f32 %v6064, %v5692
    %v6067 = vadd.f32 %v6065, %v5692
    %v6068 = vsel %vm566, %v6066, -inf
    %6069 = vmax.xlane.f32.xlu0 %v6068
    %v6070 = vpop.xlane.xlu0 %6069
    %v6071 = vsel %vm566, %v6067, -inf
    %6072 = vmax.xlane.f32.xlu0 %v6071
    %v6073 = vpop.xlane.xlu0 %6072
    %v6074 = vsub.f32 %v6066, %v6070
    %v6075 = vsub.f32 %v6067, %v6073
    %v6076 = vmul.f32 %v6074, 1.442695
    %v6077 = vpow.pop %v6076
    %v6078 = vmul.f32 %v6075, 1.442695
    %v6079 = vpow.pop %v6078
    %v6080 = vsel %vm566, %v6077, 0.0
    %6081 = vadd.xlane.f32.xlu0 %v6080
    %v6082 = vpop.xlane.xlu0 %6081
    %v6083 = vsel %vm566, %v6079, 0.0
    %6084 = vadd.xlane.f32.xlu0 %v6083
    %v6085 = vpop.xlane.xlu0 %6084
    %v6086 = vpack.c.bf16 %v6079, %v6077
    %v6087 = vpack.c.bf16 %v6012, %v6009
    %v6089 = vsel %vm566, %v6086, 0
    %6091 = vmatprep.subr.bf16.mxu0 0
    %6092 = vmatpush1.bf16.msra.mxu0 0
    %6093 = vmatprep.subr.bf16.mxu0 0
    %6094 = vmatpush1.bf16.msra.mxu0 0
    %6095 = vmatprep.subr.bf16.mxu0 0
    %6096 = vmatpush1.bf16.msra.mxu0 0
    %6097 = vmatprep.subr.bf16.mxu0 0
    %6098 = vmatpush1.bf16.msra.mxu0 0
    %6099 = vmatprep.subr.bf16.mxu0 0
    %6100 = vmatpush1.bf16.msra.mxu0 0
    %6101 = vmatprep.subr.bf16.mxu0 0
    %6102 = vmatpush1.bf16.msra.mxu0 0
    %6103 = vmatprep.subr.bf16.mxu0 0
    %6104 = vmatpush1.bf16.msra.mxu0 0
    %6105 = vmatprep.subr.bf16.mxu0 0
    %6106 = vmatpush1.bf16.msra.mxu0 %v6087
    %6107 = vmatprep.subr.bf16.mxu0 0
    %6108 = vmatpush2.bf16.msra.mxu0 0
    %6109 = vmatprep.subr.bf16.mxu0 0
    %6110 = vmatpush2.bf16.msra.mxu0 0
    %6111 = vmatprep.subr.bf16.mxu0 0
    %6112 = vmatpush2.bf16.msra.mxu0 0
    %6113 = vmatprep.subr.bf16.mxu0 0
    %6114 = vmatpush2.bf16.msra.mxu0 0
    %6115 = vmatprep.subr.bf16.mxu0 0
    %6116 = vmatpush2.bf16.msra.mxu0 0
    %6117 = vmatprep.subr.bf16.mxu0 0
    %6118 = vmatpush2.bf16.msra.mxu0 0
    %6119 = vmatprep.subr.bf16.mxu0 0
    %6120 = vmatpush2.bf16.msra.mxu0 0
    %6121 = vmatprep.subr.bf16.mxu0 0
    %6122 = vmatpush2.bf16.msra.mxu0 0
    %6123 = vmatprep.mubr.bf16.mxu0 0
    %6124 = vmatmul.mubr.bf16.gmra.mxu0 %v6089
    %v6125 = vpop.f32.mrf.mxu0
    %v6126 = vadd.f32 0.0, %v6125
    %v6127 = vpop.f32.mrf.mxu0
    %v6128 = vpop.f32.mrf.mxu0
    %v6129 = vadd.f32 0.0, %v6128
    %v6130 = vpop.f32.mrf.mxu0
    %6131 = vdwg.mxu0
    %v6132 = vrcp.pop %v6082
    %v6133 = vrcp.pop %v6085
    %v6134 = vmul.f32 %v6126, %v6132
    %v6135 = vmul.f32 %v6129, %v6133
    %v6136 = vpack.c.bf16 %v6135, %v6134
    %s6137 = scalar_lea.vmem %s11, 144
    %v6138 = vld [vmem:[%s6137] sm:$0xf]
    %v6139 = vld [vmem:[%s6137 + $0x4] sm:$0xf]
    %v6140 = vld [vmem:[%s6137 + $0x8] sm:$0xf]
    %v6141 = vld [vmem:[%s6137 + $0xc] sm:$0xf]
    %v6146 = vunpack.c.l.b16 %v6138
    %v6147 = vunpack.c.l.b16 %v6139
    %v6148 = vunpack.c.l.b16 %v6140
    %v6149 = vunpack.c.l.b16 %v6141
    %v6150 = vpack.c.b16 %v6147, %v6146
    %v6151 = vpack.c.b16 %v6149, %v6148
    %v6155 = vsel %vm510, %v6136, 0
    %6157 = vmatprep.subr.bf16.mxu0 0
    %6158 = vmatpush1.bf16.msra.mxu0 0
    %6159 = vmatprep.subr.bf16.mxu0 0
    %6160 = vmatpush1.bf16.msra.mxu0 0
    %6161 = vmatprep.subr.bf16.mxu0 0
    %6162 = vmatpush1.bf16.msra.mxu0 0
    %6163 = vmatprep.subr.bf16.mxu0 0
    %6164 = vmatpush1.bf16.msra.mxu0 0
    %6165 = vmatprep.subr.bf16.mxu0 0
    %6166 = vmatpush1.bf16.msra.mxu0 0
    %6167 = vmatprep.subr.bf16.mxu0 0
    %6168 = vmatpush1.bf16.msra.mxu0 0
    %6169 = vmatprep.subr.bf16.mxu0 0
    %6170 = vmatpush1.bf16.msra.mxu0 %v6151
    %6171 = vmatprep.subr.bf16.mxu0 0
    %6172 = vmatpush1.bf16.msra.mxu0 %v6150
    %6173 = vmatprep.subr.bf16.mxu0 0
    %6174 = vmatpush2.bf16.msra.mxu0 0
    %6175 = vmatprep.subr.bf16.mxu0 0
    %6176 = vmatpush2.bf16.msra.mxu0 0
    %6177 = vmatprep.subr.bf16.mxu0 0
    %6178 = vmatpush2.bf16.msra.mxu0 0
    %6179 = vmatprep.subr.bf16.mxu0 0
    %6180 = vmatpush2.bf16.msra.mxu0 0
    %6181 = vmatprep.subr.bf16.mxu0 0
    %6182 = vmatpush2.bf16.msra.mxu0 0
    %6183 = vmatprep.subr.bf16.mxu0 0
    %6184 = vmatpush2.bf16.msra.mxu0 0
    %6185 = vmatprep.subr.bf16.mxu0 0
    %6186 = vmatpush2.bf16.msra.mxu0 0
    %6187 = vmatprep.subr.bf16.mxu0 0
    %6188 = vmatpush2.bf16.msra.mxu0 0
    %6189 = vmatprep.mubr.bf16.mxu0 0
    %6190 = vmatmul.mubr.bf16.gmra.mxu0 %v6155
    %v6191 = vpop.f32.mrf.mxu0
    %v6192 = vadd.f32 0.0, %v6191
    %v6193 = vpop.f32.mrf.mxu0
    %v6194 = vpop.f32.mrf.mxu0
    %v6195 = vadd.f32 0.0, %v6194
    %v6196 = vpop.f32.mrf.mxu0
    %6197 = vdwg.mxu0
    %v6202 = vunpack.c.l.b16 %v5765
    %v6203 = vunpack.c.l.b16 %v5766
    %v6204 = vunpack.c.l.b16 %v5767
    %v6205 = vunpack.c.l.b16 %v5768
    %v6206 = vpack.c.b16 %v6203, %v6202
    %v6207 = vpack.c.b16 %v6205, %v6204
    %v6211 = vsel %vm510, %v5763, 0
    %6213 = vmatprep.subr.bf16.mxu0 0
    %6214 = vmatpush1.bf16.msra.mxu0 0
    %6215 = vmatprep.subr.bf16.mxu0 0
    %6216 = vmatpush1.bf16.msra.mxu0 0
    %6217 = vmatprep.subr.bf16.mxu0 0
    %6218 = vmatpush1.bf16.msra.mxu0 0
    %6219 = vmatprep.subr.bf16.mxu0 0
    %6220 = vmatpush1.bf16.msra.mxu0 0
    %6221 = vmatprep.subr.bf16.mxu0 0
    %6222 = vmatpush1.bf16.msra.mxu0 0
    %6223 = vmatprep.subr.bf16.mxu0 0
    %6224 = vmatpush1.bf16.msra.mxu0 0
    %6225 = vmatprep.subr.bf16.mxu0 0
    %6226 = vmatpush1.bf16.msra.mxu0 %v6207
    %6227 = vmatprep.subr.bf16.mxu0 0
    %6228 = vmatpush1.bf16.msra.mxu0 %v6206
    %6229 = vmatprep.subr.bf16.mxu0 0
    %6230 = vmatpush2.bf16.msra.mxu0 0
    %6231 = vmatprep.subr.bf16.mxu0 0
    %6232 = vmatpush2.bf16.msra.mxu0 0
    %6233 = vmatprep.subr.bf16.mxu0 0
    %6234 = vmatpush2.bf16.msra.mxu0 0
    %6235 = vmatprep.subr.bf16.mxu0 0
    %6236 = vmatpush2.bf16.msra.mxu0 0
    %6237 = vmatprep.subr.bf16.mxu0 0
    %6238 = vmatpush2.bf16.msra.mxu0 0
    %6239 = vmatprep.subr.bf16.mxu0 0
    %6240 = vmatpush2.bf16.msra.mxu0 0
    %6241 = vmatprep.subr.bf16.mxu0 0
    %6242 = vmatpush2.bf16.msra.mxu0 0
    %6243 = vmatprep.subr.bf16.mxu0 0
    %6244 = vmatpush2.bf16.msra.mxu0 0
    %6245 = vmatprep.mubr.bf16.mxu0 0
    %6246 = vmatmul.mubr.bf16.gmra.mxu0 %v6211
    %v6247 = vpop.f32.mrf.mxu0
    %v6248 = vadd.f32 %v6192, %v6247
    %v6249 = vpop.f32.mrf.mxu0
    %v6250 = vpop.f32.mrf.mxu0
    %v6251 = vadd.f32 %v6195, %v6250
    %v6252 = vpop.f32.mrf.mxu0
    %6253 = vdwg.mxu0
    %v6254 = vadd.f32 %v5333, %v6248
    %v6255 = vadd.f32 %v5334, %v6251
    %s6256 = scalar_lea.vmem %s12, 4
    %v6257 = vld [vmem:[%s6256] sm:$0x1]
    %v6259 = vlaneseq
    %v6260 = vshrl.u32 %v6259, 7
    %v6261 = vsub.s32 0, %v6260
    %v6262 = vrot.slane %v6257, %v6261
    %v6264 = vadd.f32 %v6254, %v6262
    %v6265 = vadd.f32 %v6255, %v6262
    %s6266 = scalar_lea.vmem %s13, 4
    %v6267 = vld [vmem:[%s6266] sm:$0x1]
    %s6268 = scalar_lea.vmem %s14, 4
    %v6269 = vld [vmem:[%s6268] sm:$0x1]
    %v6270 = vsel %vm93, %v6264, 0.0
    %6271 = vadd.xlane.f32.xlu0 %v6270
    %v6272 = vpop.xlane.xlu0 %6271
    %v6273 = vsel %vm93, %v6265, 0.0
    %6274 = vadd.xlane.f32.xlu0 %v6273
    %v6275 = vpop.xlane.xlu0 %6274
    %v6276 = vmul.f32 %v6272, %v227
    %v6277 = vmul.f32 %v6275, %v227
    %v6278 = vsub.f32 %v6264, %v6276
    %v6279 = vsub.f32 %v6265, %v6277
    %v6280 = vmul.f32 %v6278, %v6278
    %v6281 = vmul.f32 %v6279, %v6279
    %v6282 = vsel %vm93, %v6280, 0.0
    %6283 = vadd.xlane.f32.xlu0 %v6282
    %v6284 = vpop.xlane.xlu0 %6283
    %v6285 = vsel %vm93, %v6281, 0.0
    %6286 = vadd.xlane.f32.xlu0 %v6285
    %v6287 = vpop.xlane.xlu0 %6286
    %v6288 = vmul.f32 %v6284, %v227
    %v6289 = vmul.f32 %v6287, %v227
    %v6290 = vadd.f32 %v6288, 1e-05
    %v6291 = vadd.f32 %v6289, 1e-05
    %v6292 = vrsqrt.pop %v6290
    %v6293 = vrsqrt.pop %v6291
    %v6294 = vmul.f32 %v6278, %v6292
    %v6295 = vmul.f32 %v6279, %v6293
    %v6297 = vlaneseq
    %v6298 = vshrl.u32 %v6297, 7
    %v6299 = vsub.s32 0, %v6298
    %v6300 = vrot.slane %v6267, %v6299
    %v6302 = vmul.f32 %v6294, %v6300
    %v6303 = vmul.f32 %v6295, %v6300
    %v6305 = vlaneseq
    %v6306 = vshrl.u32 %v6305, 7
    %v6307 = vsub.s32 0, %v6306
    %v6308 = vrot.slane %v6269, %v6307
    %v6310 = vadd.f32 %v6302, %v6308
    %v6311 = vadd.f32 %v6303, %v6308
    %v6312 = vpack.c.bf16 %v6311, %v6310
    %s6313 = scalar_lea.vmem %s15, 256
    %v6314 = vld [vmem:[%s6313] sm:$0xff]
    %v6315 = vld [vmem:[%s6313 + $0x8] sm:$0xff]
    %v6316 = vld [vmem:[%s6313 + $0x10] sm:$0xff]
    %v6317 = vld [vmem:[%s6313 + $0x18] sm:$0xff]
    %v6318 = vld [vmem:[%s6313 + $0x20] sm:$0xff]
    %v6319 = vld [vmem:[%s6313 + $0x28] sm:$0xff]
    %v6320 = vld [vmem:[%s6313 + $0x30] sm:$0xff]
    %v6321 = vld [vmem:[%s6313 + $0x38] sm:$0xff]
    %s6322 = scalar_lea.vmem %s16, 8
    %v6323 = vld [vmem:[%s6322] sm:$0x3]
    %v6325 = vlaneseq
    %v6326 = vshrl.u32 %v6325, 7
    %v6327 = vsub.s32 0, %v6326
    %v6328 = vrot.slane %v6323, %v6327
    %v6329 = vlaneseq
    %v6330 = vshrl.u32 %v6329, 7
    %v6331 = vsub.s32 1, %v6330
    %v6332 = vrot.slane %v6323, %v6331
    %v6343 = vunpack.c.l.b16 %v6314
    %v6344 = vunpack.c.h.b16 %v6314
    %v6345 = vunpack.c.l.b16 %v6315
    %v6346 = vunpack.c.h.b16 %v6315
    %v6347 = vunpack.c.l.b16 %v6316
    %v6348 = vunpack.c.h.b16 %v6316
    %v6349 = vunpack.c.l.b16 %v6317
    %v6350 = vunpack.c.h.b16 %v6317
    %v6351 = vunpack.c.l.b16 %v6318
    %v6352 = vunpack.c.h.b16 %v6318
    %v6353 = vunpack.c.l.b16 %v6319
    %v6354 = vunpack.c.h.b16 %v6319
    %v6355 = vunpack.c.l.b16 %v6320
    %v6356 = vunpack.c.h.b16 %v6320
    %v6357 = vunpack.c.l.b16 %v6321
    %v6358 = vunpack.c.h.b16 %v6321
    %v6359 = vpack.c.b16 %v6345, %v6343
    %v6360 = vpack.c.b16 %v6346, %v6344
    %v6361 = vpack.c.b16 %v6349, %v6347
    %v6362 = vpack.c.b16 %v6350, %v6348
    %v6363 = vpack.c.b16 %v6353, %v6351
    %v6364 = vpack.c.b16 %v6354, %v6352
    %v6365 = vpack.c.b16 %v6357, %v6355
    %v6366 = vpack.c.b16 %v6358, %v6356
    %v6376 = vsel %vm93, %v6312, 0
    %6378 = vmatprep.subr.bf16.mxu0 0
    %6379 = vmatpush1.bf16.msra.mxu0 0
    %6380 = vmatprep.subr.bf16.mxu0 0
    %6381 = vmatpush1.bf16.msra.mxu0 0
    %6382 = vmatprep.subr.bf16.mxu0 0
    %6383 = vmatpush1.bf16.msra.mxu0 0
    %6384 = vmatprep.subr.bf16.mxu0 0
    %6385 = vmatpush1.bf16.msra.mxu0 0
    %6386 = vmatprep.subr.bf16.mxu0 %v6366
    %6387 = vmatpush1.bf16.msra.mxu0 %v6365
    %6388 = vmatprep.subr.bf16.mxu0 %v6364
    %6389 = vmatpush1.bf16.msra.mxu0 %v6363
    %6390 = vmatprep.subr.bf16.mxu0 %v6362
    %6391 = vmatpush1.bf16.msra.mxu0 %v6361
    %6392 = vmatprep.subr.bf16.mxu0 %v6360
    %6393 = vmatpush1.bf16.msra.mxu0 %v6359
    %6394 = vmatprep.subr.bf16.mxu0 0
    %6395 = vmatpush2.bf16.msra.mxu0 0
    %6396 = vmatprep.subr.bf16.mxu0 0
    %6397 = vmatpush2.bf16.msra.mxu0 0
    %6398 = vmatprep.subr.bf16.mxu0 0
    %6399 = vmatpush2.bf16.msra.mxu0 0
    %6400 = vmatprep.subr.bf16.mxu0 0
    %6401 = vmatpush2.bf16.msra.mxu0 0
    %6402 = vmatprep.subr.bf16.mxu0 0
    %6403 = vmatpush2.bf16.msra.mxu0 0
    %6404 = vmatprep.subr.bf16.mxu0 0
    %6405 = vmatpush2.bf16.msra.mxu0 0
    %6406 = vmatprep.subr.bf16.mxu0 0
    %6407 = vmatpush2.bf16.msra.mxu0 0
    %6408 = vmatprep.subr.bf16.mxu0 0
    %6409 = vmatpush2.bf16.msra.mxu0 0
    %6410 = vmatprep.mubr.bf16.mxu0 0
    %6411 = vmatmul.mubr.bf16.gmra.mxu0 %v6376
    %v6412 = vpop.f32.mrf.mxu0
    %v6413 = vadd.f32 %v6328, %v6412
    %v6414 = vpop.f32.mrf.mxu0
    %v6415 = vadd.f32 %v6332, %v6414
    %v6416 = vpop.f32.mrf.mxu0
    %v6417 = vadd.f32 %v6328, %v6416
    %v6418 = vpop.f32.mrf.mxu0
    %v6419 = vadd.f32 %v6332, %v6418
    %6420 = vdwg.mxu0
    %v6421 = vmax.f32 %v6413, 0.0
    %v6422 = vmax.f32 %v6415, 0.0
    %v6423 = vmax.f32 %v6417, 0.0
    %v6424 = vmax.f32 %v6419, 0.0
    %v6425 = vpack.c.bf16 %v6423, %v6421
    %v6426 = vpack.c.bf16 %v6424, %v6422
    %s6427 = scalar_lea.vmem %s17, 512
    %v6428 = vld [vmem:[%s6427] sm:$0xf]
    %v6429 = vld [vmem:[%s6427 + $0x4] sm:$0xf]
    %v6430 = vld [vmem:[%s6427 + $0x8] sm:$0xf]
    %v6431 = vld [vmem:[%s6427 + $0xc] sm:$0xf]
    %v6432 = vld [vmem:[%s6427 + $0x10] sm:$0xf]
    %v6433 = vld [vmem:[%s6427 + $0x14] sm:$0xf]
    %v6434 = vld [vmem:[%s6427 + $0x18] sm:$0xf]
    %v6435 = vld [vmem:[%s6427 + $0x1c] sm:$0xf]
    %v6436 = vld [vmem:[%s6427 + $0x20] sm:$0xf]
    %v6437 = vld [vmem:[%s6427 + $0x24] sm:$0xf]
    %v6438 = vld [vmem:[%s6427 + $0x28] sm:$0xf]
    %v6439 = vld [vmem:[%s6427 + $0x2c] sm:$0xf]
    %v6440 = vld [vmem:[%s6427 + $0x30] sm:$0xf]
    %v6441 = vld [vmem:[%s6427 + $0x34] sm:$0xf]
    %v6442 = vld [vmem:[%s6427 + $0x38] sm:$0xf]
    %v6443 = vld [vmem:[%s6427 + $0x3c] sm:$0xf]
    %v6444 = vld [vmem:[%s6427 + $0x40] sm:$0xf]
    %v6445 = vld [vmem:[%s6427 + $0x44] sm:$0xf]
    %v6446 = vld [vmem:[%s6427 + $0x48] sm:$0xf]
    %v6447 = vld [vmem:[%s6427 + $0x4c] sm:$0xf]
    %v6448 = vld [vmem:[%s6427 + $0x50] sm:$0xf]
    %v6449 = vld [vmem:[%s6427 + $0x54] sm:$0xf]
    %v6450 = vld [vmem:[%s6427 + $0x58] sm:$0xf]
    %v6451 = vld [vmem:[%s6427 + $0x5c] sm:$0xf]
    %v6452 = vld [vmem:[%s6427 + $0x60] sm:$0xf]
    %v6453 = vld [vmem:[%s6427 + $0x64] sm:$0xf]
    %v6454 = vld [vmem:[%s6427 + $0x68] sm:$0xf]
    %v6455 = vld [vmem:[%s6427 + $0x6c] sm:$0xf]
    %v6456 = vld [vmem:[%s6427 + $0x70] sm:$0xf]
    %v6457 = vld [vmem:[%s6427 + $0x74] sm:$0xf]
    %v6458 = vld [vmem:[%s6427 + $0x78] sm:$0xf]
    %v6459 = vld [vmem:[%s6427 + $0x7c] sm:$0xf]
    %s6460 = scalar_lea.vmem %s18, 4
    %v6461 = vld [vmem:[%s6460] sm:$0x1]
    %v6463 = vlaneseq
    %v6464 = vshrl.u32 %v6463, 7
    %v6465 = vsub.s32 0, %v6464
    %v6466 = vrot.slane %v6461, %v6465
    %v6500 = vunpack.c.l.b16 %v6428
    %v6501 = vunpack.c.l.b16 %v6429
    %v6502 = vunpack.c.l.b16 %v6430
    %v6503 = vunpack.c.l.b16 %v6431
    %v6504 = vunpack.c.l.b16 %v6432
    %v6505 = vunpack.c.l.b16 %v6433
    %v6506 = vunpack.c.l.b16 %v6434
    %v6507 = vunpack.c.l.b16 %v6435
    %v6508 = vunpack.c.l.b16 %v6436
    %v6509 = vunpack.c.l.b16 %v6437
    %v6510 = vunpack.c.l.b16 %v6438
    %v6511 = vunpack.c.l.b16 %v6439
    %v6512 = vunpack.c.l.b16 %v6440
    %v6513 = vunpack.c.l.b16 %v6441
    %v6514 = vunpack.c.l.b16 %v6442
    %v6515 = vunpack.c.l.b16 %v6443
    %v6516 = vunpack.c.l.b16 %v6444
    %v6517 = vunpack.c.l.b16 %v6445
    %v6518 = vunpack.c.l.b16 %v6446
    %v6519 = vunpack.c.l.b16 %v6447
    %v6520 = vunpack.c.l.b16 %v6448
    %v6521 = vunpack.c.l.b16 %v6449
    %v6522 = vunpack.c.l.b16 %v6450
    %v6523 = vunpack.c.l.b16 %v6451
    %v6524 = vunpack.c.l.b16 %v6452
    %v6525 = vunpack.c.l.b16 %v6453
    %v6526 = vunpack.c.l.b16 %v6454
    %v6527 = vunpack.c.l.b16 %v6455
    %v6528 = vunpack.c.l.b16 %v6456
    %v6529 = vunpack.c.l.b16 %v6457
    %v6530 = vunpack.c.l.b16 %v6458
    %v6531 = vunpack.c.l.b16 %v6459
    %v6532 = vpack.c.b16 %v6501, %v6500
    %v6533 = vpack.c.b16 %v6503, %v6502
    %v6534 = vpack.c.b16 %v6505, %v6504
    %v6535 = vpack.c.b16 %v6507, %v6506
    %v6536 = vpack.c.b16 %v6509, %v6508
    %v6537 = vpack.c.b16 %v6511, %v6510
    %v6538 = vpack.c.b16 %v6513, %v6512
    %v6539 = vpack.c.b16 %v6515, %v6514
    %v6540 = vpack.c.b16 %v6517, %v6516
    %v6541 = vpack.c.b16 %v6519, %v6518
    %v6542 = vpack.c.b16 %v6521, %v6520
    %v6543 = vpack.c.b16 %v6523, %v6522
    %v6544 = vpack.c.b16 %v6525, %v6524
    %v6545 = vpack.c.b16 %v6527, %v6526
    %v6546 = vpack.c.b16 %v6529, %v6528
    %v6547 = vpack.c.b16 %v6531, %v6530
    %6564 = vmatprep.subr.bf16.mxu0 0
    %6565 = vmatpush1.bf16.msra.mxu0 %v6539
    %6566 = vmatprep.subr.bf16.mxu0 0
    %6567 = vmatpush1.bf16.msra.mxu0 %v6538
    %6568 = vmatprep.subr.bf16.mxu0 0
    %6569 = vmatpush1.bf16.msra.mxu0 %v6537
    %6570 = vmatprep.subr.bf16.mxu0 0
    %6571 = vmatpush1.bf16.msra.mxu0 %v6536
    %6572 = vmatprep.subr.bf16.mxu0 0
    %6573 = vmatpush1.bf16.msra.mxu0 %v6535
    %6574 = vmatprep.subr.bf16.mxu0 0
    %6575 = vmatpush1.bf16.msra.mxu0 %v6534
    %6576 = vmatprep.subr.bf16.mxu0 0
    %6577 = vmatpush1.bf16.msra.mxu0 %v6533
    %6578 = vmatprep.subr.bf16.mxu0 0
    %6579 = vmatpush1.bf16.msra.mxu0 %v6532
    %6580 = vmatprep.subr.bf16.mxu0 0
    %6581 = vmatpush2.bf16.msra.mxu0 %v6547
    %6582 = vmatprep.subr.bf16.mxu0 0
    %6583 = vmatpush2.bf16.msra.mxu0 %v6546
    %6584 = vmatprep.subr.bf16.mxu0 0
    %6585 = vmatpush2.bf16.msra.mxu0 %v6545
    %6586 = vmatprep.subr.bf16.mxu0 0
    %6587 = vmatpush2.bf16.msra.mxu0 %v6544
    %6588 = vmatprep.subr.bf16.mxu0 0
    %6589 = vmatpush2.bf16.msra.mxu0 %v6543
    %6590 = vmatprep.subr.bf16.mxu0 0
    %6591 = vmatpush2.bf16.msra.mxu0 %v6542
    %6592 = vmatprep.subr.bf16.mxu0 0
    %6593 = vmatpush2.bf16.msra.mxu0 %v6541
    %6594 = vmatprep.subr.bf16.mxu0 0
    %6595 = vmatpush2.bf16.msra.mxu0 %v6540
    %6596 = vmatprep.mubr.bf16.mxu0 %v6426
    %6597 = vmatmul.mubr.bf16.gmra.mxu0 %v6425
    %v6598 = vpop.f32.mrf.mxu0
    %v6599 = vadd.f32 %v6466, %v6598
    %v6600 = vpop.f32.mrf.mxu0
    %v6601 = vpop.f32.mrf.mxu0
    %v6602 = vadd.f32 %v6466, %v6601
    %v6603 = vpop.f32.mrf.mxu0
    %6604 = vdwg.mxu0
    %v6605 = vadd.f32 %v6264, %v6599
    %v6606 = vadd.f32 %v6265, %v6602
    %v6607 = vsel %vm5335, 1, 0
    %v6608 = vsel %vm5336, 1, 0
    %6609 = vset.pattern.permute.xlu0 0
    %6610 = vperm.xlu0 %6609, %v6607
    %v6611 = vpop.permute.xlu0 %6610
    %6612 = vset.pattern.permute.xlu0 0
    %6613 = vperm.xlu0 %6612, %v6608
    %v6614 = vpop.permute.xlu0 %6613
    %vm6615 = vcmp.eq.s32.totalorder %v6611, 1
    %vm6616 = vcmp.eq.s32.totalorder %v6614, 1
    %v6617 = vsel %vm6615, %v6605, %v5333
    %v6618 = vsel %vm6616, %v6606, %v5334
    %vm6619 = vcmp.gt.f32.partialorder %v117, 0.8333333
    %vm6620 = vcmp.gt.f32.partialorder %v119, 0.8333333
    %vm6621 = vcmp.gt.f32.partialorder %v211, 0.8333333
    %v6622 = vsel %vm6621, 1, 0
    %v6623 = vcvt.s32.f32 %v6622
    %v6624 = vadd.f32 %v5340, %v6623
    %v6625 = vsel %vm6621, 0.0, -1e+30
    %s6626 = scalar_lea.vmem %s3, 5
    %v6627 = vld [vmem:[%s6626] sm:$0x1]
    %s6628 = scalar_lea.vmem %s4, 5
    %v6629 = vld [vmem:[%s6628] sm:$0x1]
    %v6630 = vsel %vm93, %v6617, 0.0
    %6631 = vadd.xlane.f32.xlu0 %v6630
    %v6632 = vpop.xlane.xlu0 %6631
    %v6633 = vsel %vm93, %v6618, 0.0
    %6634 = vadd.xlane.f32.xlu0 %v6633
    %v6635 = vpop.xlane.xlu0 %6634
    %v6636 = vmul.f32 %v6632, %v227
    %v6637 = vmul.f32 %v6635, %v227
    %v6638 = vsub.f32 %v6617, %v6636
    %v6639 = vsub.f32 %v6618, %v6637
    %v6640 = vmul.f32 %v6638, %v6638
    %v6641 = vmul.f32 %v6639, %v6639
    %v6642 = vsel %vm93, %v6640, 0.0
    %6643 = vadd.xlane.f32.xlu0 %v6642
    %v6644 = vpop.xlane.xlu0 %6643
    %v6645 = vsel %vm93, %v6641, 0.0
    %6646 = vadd.xlane.f32.xlu0 %v6645
    %v6647 = vpop.xlane.xlu0 %6646
    %v6648 = vmul.f32 %v6644, %v227
    %v6649 = vmul.f32 %v6647, %v227
    %v6650 = vadd.f32 %v6648, 1e-05
    %v6651 = vadd.f32 %v6649, 1e-05
    %v6652 = vrsqrt.pop %v6650
    %v6653 = vrsqrt.pop %v6651
    %v6654 = vmul.f32 %v6638, %v6652
    %v6655 = vmul.f32 %v6639, %v6653
    %v6657 = vlaneseq
    %v6658 = vshrl.u32 %v6657, 7
    %v6659 = vsub.s32 0, %v6658
    %v6660 = vrot.slane %v6627, %v6659
    %v6662 = vmul.f32 %v6654, %v6660
    %v6663 = vmul.f32 %v6655, %v6660
    %v6665 = vlaneseq
    %v6666 = vshrl.u32 %v6665, 7
    %v6667 = vsub.s32 0, %v6666
    %v6668 = vrot.slane %v6629, %v6667
    %v6670 = vadd.f32 %v6662, %v6668
    %v6671 = vadd.f32 %v6663, %v6668
    %v6672 = vpack.c.bf16 %v6671, %v6670
    %s6673 = scalar_lea.vmem %s5, 320
    %v6674 = vld [vmem:[%s6673] sm:$0xf]
    %v6675 = vld [vmem:[%s6673 + $0x4] sm:$0xf]
    %v6676 = vld [vmem:[%s6673 + $0x8] sm:$0xf]
    %v6677 = vld [vmem:[%s6673 + $0xc] sm:$0xf]
    %v6678 = vld [vmem:[%s6673 + $0x10] sm:$0xf]
    %v6679 = vld [vmem:[%s6673 + $0x14] sm:$0xf]
    %v6680 = vld [vmem:[%s6673 + $0x18] sm:$0xf]
    %v6681 = vld [vmem:[%s6673 + $0x1c] sm:$0xf]
    %s6682 = scalar_lea.vmem %s6, 10
    %v6683 = vld [vmem:[%s6682] sm:$0x1]
    %v6685 = vlaneseq
    %v6686 = vshrl.u32 %v6685, 7
    %v6687 = vsub.s32 0, %v6686
    %v6688 = vrot.slane %v6683, %v6687
    %v6698 = vunpack.c.l.b16 %v6674
    %v6699 = vunpack.c.l.b16 %v6675
    %v6700 = vunpack.c.l.b16 %v6676
    %v6701 = vunpack.c.l.b16 %v6677
    %v6702 = vunpack.c.l.b16 %v6678
    %v6703 = vunpack.c.l.b16 %v6679
    %v6704 = vunpack.c.l.b16 %v6680
    %v6705 = vunpack.c.l.b16 %v6681
    %v6706 = vpack.c.b16 %v6699, %v6698
    %v6707 = vpack.c.b16 %v6701, %v6700
    %v6708 = vpack.c.b16 %v6703, %v6702
    %v6709 = vpack.c.b16 %v6705, %v6704
    %v6715 = vsel %vm93, %v6672, 0
    %6717 = vmatprep.subr.bf16.mxu0 0
    %6718 = vmatpush1.bf16.msra.mxu0 0
    %6719 = vmatprep.subr.bf16.mxu0 0
    %6720 = vmatpush1.bf16.msra.mxu0 0
    %6721 = vmatprep.subr.bf16.mxu0 0
    %6722 = vmatpush1.bf16.msra.mxu0 0
    %6723 = vmatprep.subr.bf16.mxu0 0
    %6724 = vmatpush1.bf16.msra.mxu0 0
    %6725 = vmatprep.subr.bf16.mxu0 0
    %6726 = vmatpush1.bf16.msra.mxu0 %v6709
    %6727 = vmatprep.subr.bf16.mxu0 0
    %6728 = vmatpush1.bf16.msra.mxu0 %v6708
    %6729 = vmatprep.subr.bf16.mxu0 0
    %6730 = vmatpush1.bf16.msra.mxu0 %v6707
    %6731 = vmatprep.subr.bf16.mxu0 0
    %6732 = vmatpush1.bf16.msra.mxu0 %v6706
    %6733 = vmatprep.subr.bf16.mxu0 0
    %6734 = vmatpush2.bf16.msra.mxu0 0
    %6735 = vmatprep.subr.bf16.mxu0 0
    %6736 = vmatpush2.bf16.msra.mxu0 0
    %6737 = vmatprep.subr.bf16.mxu0 0
    %6738 = vmatpush2.bf16.msra.mxu0 0
    %6739 = vmatprep.subr.bf16.mxu0 0
    %6740 = vmatpush2.bf16.msra.mxu0 0
    %6741 = vmatprep.subr.bf16.mxu0 0
    %6742 = vmatpush2.bf16.msra.mxu0 0
    %6743 = vmatprep.subr.bf16.mxu0 0
    %6744 = vmatpush2.bf16.msra.mxu0 0
    %6745 = vmatprep.subr.bf16.mxu0 0
    %6746 = vmatpush2.bf16.msra.mxu0 0
    %6747 = vmatprep.subr.bf16.mxu0 0
    %6748 = vmatpush2.bf16.msra.mxu0 0
    %6749 = vmatprep.mubr.bf16.mxu0 0
    %6750 = vmatmul.mubr.bf16.gmra.mxu0 %v6715
    %v6751 = vpop.f32.mrf.mxu0
    %v6752 = vadd.f32 %v6688, %v6751
    %v6753 = vpop.f32.mrf.mxu0
    %v6754 = vpop.f32.mrf.mxu0
    %v6755 = vadd.f32 %v6688, %v6754
    %v6756 = vpop.f32.mrf.mxu0
    %6757 = vdwg.mxu0
    %s6758 = scalar_lea.vmem %s7, 320
    %v6759 = vld [vmem:[%s6758] sm:$0xf]
    %v6760 = vld [vmem:[%s6758 + $0x4] sm:$0xf]
    %v6761 = vld [vmem:[%s6758 + $0x8] sm:$0xf]
    %v6762 = vld [vmem:[%s6758 + $0xc] sm:$0xf]
    %v6763 = vld [vmem:[%s6758 + $0x10] sm:$0xf]
    %v6764 = vld [vmem:[%s6758 + $0x14] sm:$0xf]
    %v6765 = vld [vmem:[%s6758 + $0x18] sm:$0xf]
    %v6766 = vld [vmem:[%s6758 + $0x1c] sm:$0xf]
    %s6767 = scalar_lea.vmem %s8, 10
    %v6768 = vld [vmem:[%s6767] sm:$0x1]
    %v6770 = vlaneseq
    %v6771 = vshrl.u32 %v6770, 7
    %v6772 = vsub.s32 0, %v6771
    %v6773 = vrot.slane %v6768, %v6772
    %v6783 = vunpack.c.l.b16 %v6759
    %v6784 = vunpack.c.l.b16 %v6760
    %v6785 = vunpack.c.l.b16 %v6761
    %v6786 = vunpack.c.l.b16 %v6762
    %v6787 = vunpack.c.l.b16 %v6763
    %v6788 = vunpack.c.l.b16 %v6764
    %v6789 = vunpack.c.l.b16 %v6765
    %v6790 = vunpack.c.l.b16 %v6766
    %v6791 = vpack.c.b16 %v6784, %v6783
    %v6792 = vpack.c.b16 %v6786, %v6785
    %v6793 = vpack.c.b16 %v6788, %v6787
    %v6794 = vpack.c.b16 %v6790, %v6789
    %6799 = vmatprep.subr.bf16.mxu0 0
    %6800 = vmatpush1.bf16.msra.mxu0 0
    %6801 = vmatprep.subr.bf16.mxu0 0
    %6802 = vmatpush1.bf16.msra.mxu0 0
    %6803 = vmatprep.subr.bf16.mxu0 0
    %6804 = vmatpush1.bf16.msra.mxu0 0
    %6805 = vmatprep.subr.bf16.mxu0 0
    %6806 = vmatpush1.bf16.msra.mxu0 0
    %6807 = vmatprep.subr.bf16.mxu0 0
    %6808 = vmatpush1.bf16.msra.mxu0 %v6794
    %6809 = vmatprep.subr.bf16.mxu0 0
    %6810 = vmatpush1.bf16.msra.mxu0 %v6793
    %6811 = vmatprep.subr.bf16.mxu0 0
    %6812 = vmatpush1.bf16.msra.mxu0 %v6792
    %6813 = vmatprep.subr.bf16.mxu0 0
    %6814 = vmatpush1.bf16.msra.mxu0 %v6791
    %6815 = vmatprep.subr.bf16.mxu0 0
    %6816 = vmatpush2.bf16.msra.mxu0 0
    %6817 = vmatprep.subr.bf16.mxu0 0
    %6818 = vmatpush2.bf16.msra.mxu0 0
    %6819 = vmatprep.subr.bf16.mxu0 0
    %6820 = vmatpush2.bf16.msra.mxu0 0
    %6821 = vmatprep.subr.bf16.mxu0 0
    %6822 = vmatpush2.bf16.msra.mxu0 0
    %6823 = vmatprep.subr.bf16.mxu0 0
    %6824 = vmatpush2.bf16.msra.mxu0 0
    %6825 = vmatprep.subr.bf16.mxu0 0
    %6826 = vmatpush2.bf16.msra.mxu0 0
    %6827 = vmatprep.subr.bf16.mxu0 0
    %6828 = vmatpush2.bf16.msra.mxu0 0
    %6829 = vmatprep.subr.bf16.mxu0 0
    %6830 = vmatpush2.bf16.msra.mxu0 0
    %6831 = vmatprep.mubr.bf16.mxu0 0
    %6832 = vmatmul.mubr.bf16.gmra.mxu0 %v6715
    %v6833 = vpop.f32.mrf.mxu0
    %v6834 = vadd.f32 %v6773, %v6833
    %v6835 = vpop.f32.mrf.mxu0
    %v6836 = vpop.f32.mrf.mxu0
    %v6837 = vadd.f32 %v6773, %v6836
    %v6838 = vpop.f32.mrf.mxu0
    %6839 = vdwg.mxu0
    %s6840 = scalar_lea.vmem %s9, 320
    %v6841 = vld [vmem:[%s6840] sm:$0xf]
    %v6842 = vld [vmem:[%s6840 + $0x4] sm:$0xf]
    %v6843 = vld [vmem:[%s6840 + $0x8] sm:$0xf]
    %v6844 = vld [vmem:[%s6840 + $0xc] sm:$0xf]
    %v6845 = vld [vmem:[%s6840 + $0x10] sm:$0xf]
    %v6846 = vld [vmem:[%s6840 + $0x14] sm:$0xf]
    %v6847 = vld [vmem:[%s6840 + $0x18] sm:$0xf]
    %v6848 = vld [vmem:[%s6840 + $0x1c] sm:$0xf]
    %s6849 = scalar_lea.vmem %s10, 10
    %v6850 = vld [vmem:[%s6849] sm:$0x1]
    %v6852 = vlaneseq
    %v6853 = vshrl.u32 %v6852, 7
    %v6854 = vsub.s32 0, %v6853
    %v6855 = vrot.slane %v6850, %v6854
    %v6865 = vunpack.c.l.b16 %v6841
    %v6866 = vunpack.c.l.b16 %v6842
    %v6867 = vunpack.c.l.b16 %v6843
    %v6868 = vunpack.c.l.b16 %v6844
    %v6869 = vunpack.c.l.b16 %v6845
    %v6870 = vunpack.c.l.b16 %v6846
    %v6871 = vunpack.c.l.b16 %v6847
    %v6872 = vunpack.c.l.b16 %v6848
    %v6873 = vpack.c.b16 %v6866, %v6865
    %v6874 = vpack.c.b16 %v6868, %v6867
    %v6875 = vpack.c.b16 %v6870, %v6869
    %v6876 = vpack.c.b16 %v6872, %v6871
    %6881 = vmatprep.subr.bf16.mxu0 0
    %6882 = vmatpush1.bf16.msra.mxu0 0
    %6883 = vmatprep.subr.bf16.mxu0 0
    %6884 = vmatpush1.bf16.msra.mxu0 0
    %6885 = vmatprep.subr.bf16.mxu0 0
    %6886 = vmatpush1.bf16.msra.mxu0 0
    %6887 = vmatprep.subr.bf16.mxu0 0
    %6888 = vmatpush1.bf16.msra.mxu0 0
    %6889 = vmatprep.subr.bf16.mxu0 0
    %6890 = vmatpush1.bf16.msra.mxu0 %v6876
    %6891 = vmatprep.subr.bf16.mxu0 0
    %6892 = vmatpush1.bf16.msra.mxu0 %v6875
    %6893 = vmatprep.subr.bf16.mxu0 0
    %6894 = vmatpush1.bf16.msra.mxu0 %v6874
    %6895 = vmatprep.subr.bf16.mxu0 0
    %6896 = vmatpush1.bf16.msra.mxu0 %v6873
    %6897 = vmatprep.subr.bf16.mxu0 0
    %6898 = vmatpush2.bf16.msra.mxu0 0
    %6899 = vmatprep.subr.bf16.mxu0 0
    %6900 = vmatpush2.bf16.msra.mxu0 0
    %6901 = vmatprep.subr.bf16.mxu0 0
    %6902 = vmatpush2.bf16.msra.mxu0 0
    %6903 = vmatprep.subr.bf16.mxu0 0
    %6904 = vmatpush2.bf16.msra.mxu0 0
    %6905 = vmatprep.subr.bf16.mxu0 0
    %6906 = vmatpush2.bf16.msra.mxu0 0
    %6907 = vmatprep.subr.bf16.mxu0 0
    %6908 = vmatpush2.bf16.msra.mxu0 0
    %6909 = vmatprep.subr.bf16.mxu0 0
    %6910 = vmatpush2.bf16.msra.mxu0 0
    %6911 = vmatprep.subr.bf16.mxu0 0
    %6912 = vmatpush2.bf16.msra.mxu0 0
    %6913 = vmatprep.mubr.bf16.mxu0 0
    %6914 = vmatmul.mubr.bf16.gmra.mxu0 %v6715
    %v6915 = vpop.f32.mrf.mxu0
    %v6916 = vadd.f32 %v6855, %v6915
    %v6917 = vpop.f32.mrf.mxu0
    %v6918 = vpop.f32.mrf.mxu0
    %v6919 = vadd.f32 %v6855, %v6918
    %v6920 = vpop.f32.mrf.mxu0
    %6921 = vdwg.mxu0
    %v6922 = vpack.c.bf16 %v6755, %v6752
    %v6923 = vpack.c.bf16 %v6837, %v6834
    %v6925 = vsel %vm510, %v6922, 0
    %v6928 = vsel %vm510, %v6923, 0
    %6930 = vmatprep.subr.bf16.mxu0 0
    %6931 = vmatpush1.bf16.xpose.msra.mxu0 0
    %6932 = vmatprep.subr.bf16.mxu0 0
    %6933 = vmatpush1.bf16.xpose.msra.mxu0 0
    %6934 = vmatprep.subr.bf16.mxu0 0
    %6935 = vmatpush1.bf16.xpose.msra.mxu0 0
    %6936 = vmatprep.subr.bf16.mxu0 0
    %6937 = vmatpush1.bf16.xpose.msra.mxu0 0
    %6938 = vmatprep.subr.bf16.mxu0 0
    %6939 = vmatpush1.bf16.xpose.msra.mxu0 0
    %6940 = vmatprep.subr.bf16.mxu0 0
    %6941 = vmatpush1.bf16.xpose.msra.mxu0 0
    %6942 = vmatprep.subr.bf16.mxu0 0
    %6943 = vmatpush1.bf16.xpose.msra.mxu0 0
    %6944 = vmatprep.subr.bf16.mxu0 0
    %6945 = vmatpush1.bf16.xpose.msra.mxu0 %v6928
    %6946 = vmatprep.subr.bf16.mxu0 0
    %6947 = vmatpush2.bf16.xpose.msra.mxu0 0
    %6948 = vmatprep.subr.bf16.mxu0 0
    %6949 = vmatpush2.bf16.xpose.msra.mxu0 0
    %6950 = vmatprep.subr.bf16.mxu0 0
    %6951 = vmatpush2.bf16.xpose.msra.mxu0 0
    %6952 = vmatprep.subr.bf16.mxu0 0
    %6953 = vmatpush2.bf16.xpose.msra.mxu0 0
    %6954 = vmatprep.subr.bf16.mxu0 0
    %6955 = vmatpush2.bf16.xpose.msra.mxu0 0
    %6956 = vmatprep.subr.bf16.mxu0 0
    %6957 = vmatpush2.bf16.xpose.msra.mxu0 0
    %6958 = vmatprep.subr.bf16.mxu0 0
    %6959 = vmatpush2.bf16.xpose.msra.mxu0 0
    %6960 = vmatprep.subr.bf16.mxu0 0
    %6961 = vmatpush2.bf16.xpose.msra.mxu0 0
    %6962 = vmatprep.mubr.bf16.mxu0 0
    %6963 = vmatmul.mubr.bf16.gmra.mxu0 %v6925
    %v6964 = vpop.f32.mrf.mxu0
    %v6965 = vadd.f32 0.0, %v6964
    %v6966 = vpop.f32.mrf.mxu0
    %v6967 = vpop.f32.mrf.mxu0
    %v6968 = vadd.f32 0.0, %v6967
    %v6969 = vpop.f32.mrf.mxu0
    %6970 = vdwg.mxu0
    %v6971 = vmul.f32 %v6965, 0.17677669
    %v6972 = vmul.f32 %v6968, 0.17677669
    %v6973 = vlaneseq
    %v6974 = vshrl.u32 %v6973, 7
    %v6975 = vsub.s32 0, %v6974
    %v6976 = vrot.slane %v6625, %v6975
    %v6977 = vadd.f32 %v6971, %v6976
    %v6978 = vadd.f32 %v6972, %v6976
    %v6979 = vsel %vm566, %v6977, -inf
    %6980 = vmax.xlane.f32.xlu0 %v6979
    %v6981 = vpop.xlane.xlu0 %6980
    %v6982 = vsel %vm566, %v6978, -inf
    %6983 = vmax.xlane.f32.xlu0 %v6982
    %v6984 = vpop.xlane.xlu0 %6983
    %v6985 = vsub.f32 %v6977, %v6981
    %v6986 = vsub.f32 %v6978, %v6984
    %v6987 = vmul.f32 %v6985, 1.442695
    %v6988 = vpow.pop %v6987
    %v6989 = vmul.f32 %v6986, 1.442695
    %v6990 = vpow.pop %v6989
    %v6991 = vsel %vm566, %v6988, 0.0
    %6992 = vadd.xlane.f32.xlu0 %v6991
    %v6993 = vpop.xlane.xlu0 %6992
    %v6994 = vsel %vm566, %v6990, 0.0
    %6995 = vadd.xlane.f32.xlu0 %v6994
    %v6996 = vpop.xlane.xlu0 %6995
    %v6997 = vpack.c.bf16 %v6990, %v6988
    %v6998 = vpack.c.bf16 %v6919, %v6916
    %v7000 = vsel %vm566, %v6997, 0
    %7002 = vmatprep.subr.bf16.mxu0 0
    %7003 = vmatpush1.bf16.msra.mxu0 0
    %7004 = vmatprep.subr.bf16.mxu0 0
    %7005 = vmatpush1.bf16.msra.mxu0 0
    %7006 = vmatprep.subr.bf16.mxu0 0
    %7007 = vmatpush1.bf16.msra.mxu0 0
    %7008 = vmatprep.subr.bf16.mxu0 0
    %7009 = vmatpush1.bf16.msra.mxu0 0
    %7010 = vmatprep.subr.bf16.mxu0 0
    %7011 = vmatpush1.bf16.msra.mxu0 0
    %7012 = vmatprep.subr.bf16.mxu0 0
    %7013 = vmatpush1.bf16.msra.mxu0 0
    %7014 = vmatprep.subr.bf16.mxu0 0
    %7015 = vmatpush1.bf16.msra.mxu0 0
    %7016 = vmatprep.subr.bf16.mxu0 0
    %7017 = vmatpush1.bf16.msra.mxu0 %v6998
    %7018 = vmatprep.subr.bf16.mxu0 0
    %7019 = vmatpush2.bf16.msra.mxu0 0
    %7020 = vmatprep.subr.bf16.mxu0 0
    %7021 = vmatpush2.bf16.msra.mxu0 0
    %7022 = vmatprep.subr.bf16.mxu0 0
    %7023 = vmatpush2.bf16.msra.mxu0 0
    %7024 = vmatprep.subr.bf16.mxu0 0
    %7025 = vmatpush2.bf16.msra.mxu0 0
    %7026 = vmatprep.subr.bf16.mxu0 0
    %7027 = vmatpush2.bf16.msra.mxu0 0
    %7028 = vmatprep.subr.bf16.mxu0 0
    %7029 = vmatpush2.bf16.msra.mxu0 0
    %7030 = vmatprep.subr.bf16.mxu0 0
    %7031 = vmatpush2.bf16.msra.mxu0 0
    %7032 = vmatprep.subr.bf16.mxu0 0
    %7033 = vmatpush2.bf16.msra.mxu0 0
    %7034 = vmatprep.mubr.bf16.mxu0 0
    %7035 = vmatmul.mubr.bf16.gmra.mxu0 %v7000
    %v7036 = vpop.f32.mrf.mxu0
    %v7037 = vadd.f32 0.0, %v7036
    %v7038 = vpop.f32.mrf.mxu0
    %v7039 = vpop.f32.mrf.mxu0
    %v7040 = vadd.f32 0.0, %v7039
    %v7041 = vpop.f32.mrf.mxu0
    %7042 = vdwg.mxu0
    %v7043 = vrcp.pop %v6993
    %v7044 = vrcp.pop %v6996
    %v7045 = vmul.f32 %v7037, %v7043
    %v7046 = vmul.f32 %v7040, %v7044
    %v7047 = vpack.c.bf16 %v7046, %v7045
    %s7048 = scalar_lea.vmem %s11, 160
    %v7049 = vld [vmem:[%s7048] sm:$0xf]
    %v7050 = vld [vmem:[%s7048 + $0x4] sm:$0xf]
    %v7051 = vld [vmem:[%s7048 + $0x8] sm:$0xf]
    %v7052 = vld [vmem:[%s7048 + $0xc] sm:$0xf]
    %s7053 = scalar_lea.vmem %s5, 352
    %v7054 = vld [vmem:[%s7053] sm:$0xf]
    %v7055 = vld [vmem:[%s7053 + $0x4] sm:$0xf]
    %v7056 = vld [vmem:[%s7053 + $0x8] sm:$0xf]
    %v7057 = vld [vmem:[%s7053 + $0xc] sm:$0xf]
    %v7058 = vld [vmem:[%s7053 + $0x10] sm:$0xf]
    %v7059 = vld [vmem:[%s7053 + $0x14] sm:$0xf]
    %v7060 = vld [vmem:[%s7053 + $0x18] sm:$0xf]
    %v7061 = vld [vmem:[%s7053 + $0x1c] sm:$0xf]
    %s7062 = scalar_lea.vmem %s6, 11
    %v7063 = vld [vmem:[%s7062] sm:$0x1]
    %v7065 = vlaneseq
    %v7066 = vshrl.u32 %v7065, 7
    %v7067 = vsub.s32 0, %v7066
    %v7068 = vrot.slane %v7063, %v7067
    %v7078 = vunpack.c.l.b16 %v7054
    %v7079 = vunpack.c.l.b16 %v7055
    %v7080 = vunpack.c.l.b16 %v7056
    %v7081 = vunpack.c.l.b16 %v7057
    %v7082 = vunpack.c.l.b16 %v7058
    %v7083 = vunpack.c.l.b16 %v7059
    %v7084 = vunpack.c.l.b16 %v7060
    %v7085 = vunpack.c.l.b16 %v7061
    %v7086 = vpack.c.b16 %v7079, %v7078
    %v7087 = vpack.c.b16 %v7081, %v7080
    %v7088 = vpack.c.b16 %v7083, %v7082
    %v7089 = vpack.c.b16 %v7085, %v7084
    %7094 = vmatprep.subr.bf16.mxu0 0
    %7095 = vmatpush1.bf16.msra.mxu0 0
    %7096 = vmatprep.subr.bf16.mxu0 0
    %7097 = vmatpush1.bf16.msra.mxu0 0
    %7098 = vmatprep.subr.bf16.mxu0 0
    %7099 = vmatpush1.bf16.msra.mxu0 0
    %7100 = vmatprep.subr.bf16.mxu0 0
    %7101 = vmatpush1.bf16.msra.mxu0 0
    %7102 = vmatprep.subr.bf16.mxu0 0
    %7103 = vmatpush1.bf16.msra.mxu0 %v7089
    %7104 = vmatprep.subr.bf16.mxu0 0
    %7105 = vmatpush1.bf16.msra.mxu0 %v7088
    %7106 = vmatprep.subr.bf16.mxu0 0
    %7107 = vmatpush1.bf16.msra.mxu0 %v7087
    %7108 = vmatprep.subr.bf16.mxu0 0
    %7109 = vmatpush1.bf16.msra.mxu0 %v7086
    %7110 = vmatprep.subr.bf16.mxu0 0
    %7111 = vmatpush2.bf16.msra.mxu0 0
    %7112 = vmatprep.subr.bf16.mxu0 0
    %7113 = vmatpush2.bf16.msra.mxu0 0
    %7114 = vmatprep.subr.bf16.mxu0 0
    %7115 = vmatpush2.bf16.msra.mxu0 0
    %7116 = vmatprep.subr.bf16.mxu0 0
    %7117 = vmatpush2.bf16.msra.mxu0 0
    %7118 = vmatprep.subr.bf16.mxu0 0
    %7119 = vmatpush2.bf16.msra.mxu0 0
    %7120 = vmatprep.subr.bf16.mxu0 0
    %7121 = vmatpush2.bf16.msra.mxu0 0
    %7122 = vmatprep.subr.bf16.mxu0 0
    %7123 = vmatpush2.bf16.msra.mxu0 0
    %7124 = vmatprep.subr.bf16.mxu0 0
    %7125 = vmatpush2.bf16.msra.mxu0 0
    %7126 = vmatprep.mubr.bf16.mxu0 0
    %7127 = vmatmul.mubr.bf16.gmra.mxu0 %v6715
    %v7128 = vpop.f32.mrf.mxu0
    %v7129 = vadd.f32 %v7068, %v7128
    %v7130 = vpop.f32.mrf.mxu0
    %v7131 = vpop.f32.mrf.mxu0
    %v7132 = vadd.f32 %v7068, %v7131
    %v7133 = vpop.f32.mrf.mxu0
    %7134 = vdwg.mxu0
    %s7135 = scalar_lea.vmem %s7, 352
    %v7136 = vld [vmem:[%s7135] sm:$0xf]
    %v7137 = vld [vmem:[%s7135 + $0x4] sm:$0xf]
    %v7138 = vld [vmem:[%s7135 + $0x8] sm:$0xf]
    %v7139 = vld [vmem:[%s7135 + $0xc] sm:$0xf]
    %v7140 = vld [vmem:[%s7135 + $0x10] sm:$0xf]
    %v7141 = vld [vmem:[%s7135 + $0x14] sm:$0xf]
    %v7142 = vld [vmem:[%s7135 + $0x18] sm:$0xf]
    %v7143 = vld [vmem:[%s7135 + $0x1c] sm:$0xf]
    %s7144 = scalar_lea.vmem %s8, 11
    %v7145 = vld [vmem:[%s7144] sm:$0x1]
    %v7147 = vlaneseq
    %v7148 = vshrl.u32 %v7147, 7
    %v7149 = vsub.s32 0, %v7148
    %v7150 = vrot.slane %v7145, %v7149
    %v7160 = vunpack.c.l.b16 %v7136
    %v7161 = vunpack.c.l.b16 %v7137
    %v7162 = vunpack.c.l.b16 %v7138
    %v7163 = vunpack.c.l.b16 %v7139
    %v7164 = vunpack.c.l.b16 %v7140
    %v7165 = vunpack.c.l.b16 %v7141
    %v7166 = vunpack.c.l.b16 %v7142
    %v7167 = vunpack.c.l.b16 %v7143
    %v7168 = vpack.c.b16 %v7161, %v7160
    %v7169 = vpack.c.b16 %v7163, %v7162
    %v7170 = vpack.c.b16 %v7165, %v7164
    %v7171 = vpack.c.b16 %v7167, %v7166
    %7176 = vmatprep.subr.bf16.mxu0 0
    %7177 = vmatpush1.bf16.msra.mxu0 0
    %7178 = vmatprep.subr.bf16.mxu0 0
    %7179 = vmatpush1.bf16.msra.mxu0 0
    %7180 = vmatprep.subr.bf16.mxu0 0
    %7181 = vmatpush1.bf16.msra.mxu0 0
    %7182 = vmatprep.subr.bf16.mxu0 0
    %7183 = vmatpush1.bf16.msra.mxu0 0
    %7184 = vmatprep.subr.bf16.mxu0 0
    %7185 = vmatpush1.bf16.msra.mxu0 %v7171
    %7186 = vmatprep.subr.bf16.mxu0 0
    %7187 = vmatpush1.bf16.msra.mxu0 %v7170
    %7188 = vmatprep.subr.bf16.mxu0 0
    %7189 = vmatpush1.bf16.msra.mxu0 %v7169
    %7190 = vmatprep.subr.bf16.mxu0 0
    %7191 = vmatpush1.bf16.msra.mxu0 %v7168
    %7192 = vmatprep.subr.bf16.mxu0 0
    %7193 = vmatpush2.bf16.msra.mxu0 0
    %7194 = vmatprep.subr.bf16.mxu0 0
    %7195 = vmatpush2.bf16.msra.mxu0 0
    %7196 = vmatprep.subr.bf16.mxu0 0
    %7197 = vmatpush2.bf16.msra.mxu0 0
    %7198 = vmatprep.subr.bf16.mxu0 0
    %7199 = vmatpush2.bf16.msra.mxu0 0
    %7200 = vmatprep.subr.bf16.mxu0 0
    %7201 = vmatpush2.bf16.msra.mxu0 0
    %7202 = vmatprep.subr.bf16.mxu0 0
    %7203 = vmatpush2.bf16.msra.mxu0 0
    %7204 = vmatprep.subr.bf16.mxu0 0
    %7205 = vmatpush2.bf16.msra.mxu0 0
    %7206 = vmatprep.subr.bf16.mxu0 0
    %7207 = vmatpush2.bf16.msra.mxu0 0
    %7208 = vmatprep.mubr.bf16.mxu0 0
    %7209 = vmatmul.mubr.bf16.gmra.mxu0 %v6715
    %v7210 = vpop.f32.mrf.mxu0
    %v7211 = vadd.f32 %v7150, %v7210
    %v7212 = vpop.f32.mrf.mxu0
    %v7213 = vpop.f32.mrf.mxu0
    %v7214 = vadd.f32 %v7150, %v7213
    %v7215 = vpop.f32.mrf.mxu0
    %7216 = vdwg.mxu0
    %s7217 = scalar_lea.vmem %s9, 352
    %v7218 = vld [vmem:[%s7217] sm:$0xf]
    %v7219 = vld [vmem:[%s7217 + $0x4] sm:$0xf]
    %v7220 = vld [vmem:[%s7217 + $0x8] sm:$0xf]
    %v7221 = vld [vmem:[%s7217 + $0xc] sm:$0xf]
    %v7222 = vld [vmem:[%s7217 + $0x10] sm:$0xf]
    %v7223 = vld [vmem:[%s7217 + $0x14] sm:$0xf]
    %v7224 = vld [vmem:[%s7217 + $0x18] sm:$0xf]
    %v7225 = vld [vmem:[%s7217 + $0x1c] sm:$0xf]
    %s7226 = scalar_lea.vmem %s10, 11
    %v7227 = vld [vmem:[%s7226] sm:$0x1]
    %v7229 = vlaneseq
    %v7230 = vshrl.u32 %v7229, 7
    %v7231 = vsub.s32 0, %v7230
    %v7232 = vrot.slane %v7227, %v7231
    %v7242 = vunpack.c.l.b16 %v7218
    %v7243 = vunpack.c.l.b16 %v7219
    %v7244 = vunpack.c.l.b16 %v7220
    %v7245 = vunpack.c.l.b16 %v7221
    %v7246 = vunpack.c.l.b16 %v7222
    %v7247 = vunpack.c.l.b16 %v7223
    %v7248 = vunpack.c.l.b16 %v7224
    %v7249 = vunpack.c.l.b16 %v7225
    %v7250 = vpack.c.b16 %v7243, %v7242
    %v7251 = vpack.c.b16 %v7245, %v7244
    %v7252 = vpack.c.b16 %v7247, %v7246
    %v7253 = vpack.c.b16 %v7249, %v7248
    %7258 = vmatprep.subr.bf16.mxu0 0
    %7259 = vmatpush1.bf16.msra.mxu0 0
    %7260 = vmatprep.subr.bf16.mxu0 0
    %7261 = vmatpush1.bf16.msra.mxu0 0
    %7262 = vmatprep.subr.bf16.mxu0 0
    %7263 = vmatpush1.bf16.msra.mxu0 0
    %7264 = vmatprep.subr.bf16.mxu0 0
    %7265 = vmatpush1.bf16.msra.mxu0 0
    %7266 = vmatprep.subr.bf16.mxu0 0
    %7267 = vmatpush1.bf16.msra.mxu0 %v7253
    %7268 = vmatprep.subr.bf16.mxu0 0
    %7269 = vmatpush1.bf16.msra.mxu0 %v7252
    %7270 = vmatprep.subr.bf16.mxu0 0
    %7271 = vmatpush1.bf16.msra.mxu0 %v7251
    %7272 = vmatprep.subr.bf16.mxu0 0
    %7273 = vmatpush1.bf16.msra.mxu0 %v7250
    %7274 = vmatprep.subr.bf16.mxu0 0
    %7275 = vmatpush2.bf16.msra.mxu0 0
    %7276 = vmatprep.subr.bf16.mxu0 0
    %7277 = vmatpush2.bf16.msra.mxu0 0
    %7278 = vmatprep.subr.bf16.mxu0 0
    %7279 = vmatpush2.bf16.msra.mxu0 0
    %7280 = vmatprep.subr.bf16.mxu0 0
    %7281 = vmatpush2.bf16.msra.mxu0 0
    %7282 = vmatprep.subr.bf16.mxu0 0
    %7283 = vmatpush2.bf16.msra.mxu0 0
    %7284 = vmatprep.subr.bf16.mxu0 0
    %7285 = vmatpush2.bf16.msra.mxu0 0
    %7286 = vmatprep.subr.bf16.mxu0 0
    %7287 = vmatpush2.bf16.msra.mxu0 0
    %7288 = vmatprep.subr.bf16.mxu0 0
    %7289 = vmatpush2.bf16.msra.mxu0 0
    %7290 = vmatprep.mubr.bf16.mxu0 0
    %7291 = vmatmul.mubr.bf16.gmra.mxu0 %v6715
    %v7292 = vpop.f32.mrf.mxu0
    %v7293 = vadd.f32 %v7232, %v7292
    %v7294 = vpop.f32.mrf.mxu0
    %v7295 = vpop.f32.mrf.mxu0
    %v7296 = vadd.f32 %v7232, %v7295
    %v7297 = vpop.f32.mrf.mxu0
    %7298 = vdwg.mxu0
    %v7299 = vpack.c.bf16 %v7132, %v7129
    %v7300 = vpack.c.bf16 %v7214, %v7211
    %v7302 = vsel %vm510, %v7299, 0
    %v7305 = vsel %vm510, %v7300, 0
    %7307 = vmatprep.subr.bf16.mxu0 0
    %7308 = vmatpush1.bf16.xpose.msra.mxu0 0
    %7309 = vmatprep.subr.bf16.mxu0 0
    %7310 = vmatpush1.bf16.xpose.msra.mxu0 0
    %7311 = vmatprep.subr.bf16.mxu0 0
    %7312 = vmatpush1.bf16.xpose.msra.mxu0 0
    %7313 = vmatprep.subr.bf16.mxu0 0
    %7314 = vmatpush1.bf16.xpose.msra.mxu0 0
    %7315 = vmatprep.subr.bf16.mxu0 0
    %7316 = vmatpush1.bf16.xpose.msra.mxu0 0
    %7317 = vmatprep.subr.bf16.mxu0 0
    %7318 = vmatpush1.bf16.xpose.msra.mxu0 0
    %7319 = vmatprep.subr.bf16.mxu0 0
    %7320 = vmatpush1.bf16.xpose.msra.mxu0 0
    %7321 = vmatprep.subr.bf16.mxu0 0
    %7322 = vmatpush1.bf16.xpose.msra.mxu0 %v7305
    %7323 = vmatprep.subr.bf16.mxu0 0
    %7324 = vmatpush2.bf16.xpose.msra.mxu0 0
    %7325 = vmatprep.subr.bf16.mxu0 0
    %7326 = vmatpush2.bf16.xpose.msra.mxu0 0
    %7327 = vmatprep.subr.bf16.mxu0 0
    %7328 = vmatpush2.bf16.xpose.msra.mxu0 0
    %7329 = vmatprep.subr.bf16.mxu0 0
    %7330 = vmatpush2.bf16.xpose.msra.mxu0 0
    %7331 = vmatprep.subr.bf16.mxu0 0
    %7332 = vmatpush2.bf16.xpose.msra.mxu0 0
    %7333 = vmatprep.subr.bf16.mxu0 0
    %7334 = vmatpush2.bf16.xpose.msra.mxu0 0
    %7335 = vmatprep.subr.bf16.mxu0 0
    %7336 = vmatpush2.bf16.xpose.msra.mxu0 0
    %7337 = vmatprep.subr.bf16.mxu0 0
    %7338 = vmatpush2.bf16.xpose.msra.mxu0 0
    %7339 = vmatprep.mubr.bf16.mxu0 0
    %7340 = vmatmul.mubr.bf16.gmra.mxu0 %v7302
    %v7341 = vpop.f32.mrf.mxu0
    %v7342 = vadd.f32 0.0, %v7341
    %v7343 = vpop.f32.mrf.mxu0
    %v7344 = vpop.f32.mrf.mxu0
    %v7345 = vadd.f32 0.0, %v7344
    %v7346 = vpop.f32.mrf.mxu0
    %7347 = vdwg.mxu0
    %v7348 = vmul.f32 %v7342, 0.17677669
    %v7349 = vmul.f32 %v7345, 0.17677669
    %v7350 = vadd.f32 %v7348, %v6976
    %v7351 = vadd.f32 %v7349, %v6976
    %v7352 = vsel %vm566, %v7350, -inf
    %7353 = vmax.xlane.f32.xlu0 %v7352
    %v7354 = vpop.xlane.xlu0 %7353
    %v7355 = vsel %vm566, %v7351, -inf
    %7356 = vmax.xlane.f32.xlu0 %v7355
    %v7357 = vpop.xlane.xlu0 %7356
    %v7358 = vsub.f32 %v7350, %v7354
    %v7359 = vsub.f32 %v7351, %v7357
    %v7360 = vmul.f32 %v7358, 1.442695
    %v7361 = vpow.pop %v7360
    %v7362 = vmul.f32 %v7359, 1.442695
    %v7363 = vpow.pop %v7362
    %v7364 = vsel %vm566, %v7361, 0.0
    %7365 = vadd.xlane.f32.xlu0 %v7364
    %v7366 = vpop.xlane.xlu0 %7365
    %v7367 = vsel %vm566, %v7363, 0.0
    %7368 = vadd.xlane.f32.xlu0 %v7367
    %v7369 = vpop.xlane.xlu0 %7368
    %v7370 = vpack.c.bf16 %v7363, %v7361
    %v7371 = vpack.c.bf16 %v7296, %v7293
    %v7373 = vsel %vm566, %v7370, 0
    %7375 = vmatprep.subr.bf16.mxu0 0
    %7376 = vmatpush1.bf16.msra.mxu0 0
    %7377 = vmatprep.subr.bf16.mxu0 0
    %7378 = vmatpush1.bf16.msra.mxu0 0
    %7379 = vmatprep.subr.bf16.mxu0 0
    %7380 = vmatpush1.bf16.msra.mxu0 0
    %7381 = vmatprep.subr.bf16.mxu0 0
    %7382 = vmatpush1.bf16.msra.mxu0 0
    %7383 = vmatprep.subr.bf16.mxu0 0
    %7384 = vmatpush1.bf16.msra.mxu0 0
    %7385 = vmatprep.subr.bf16.mxu0 0
    %7386 = vmatpush1.bf16.msra.mxu0 0
    %7387 = vmatprep.subr.bf16.mxu0 0
    %7388 = vmatpush1.bf16.msra.mxu0 0
    %7389 = vmatprep.subr.bf16.mxu0 0
    %7390 = vmatpush1.bf16.msra.mxu0 %v7371
    %7391 = vmatprep.subr.bf16.mxu0 0
    %7392 = vmatpush2.bf16.msra.mxu0 0
    %7393 = vmatprep.subr.bf16.mxu0 0
    %7394 = vmatpush2.bf16.msra.mxu0 0
    %7395 = vmatprep.subr.bf16.mxu0 0
    %7396 = vmatpush2.bf16.msra.mxu0 0
    %7397 = vmatprep.subr.bf16.mxu0 0
    %7398 = vmatpush2.bf16.msra.mxu0 0
    %7399 = vmatprep.subr.bf16.mxu0 0
    %7400 = vmatpush2.bf16.msra.mxu0 0
    %7401 = vmatprep.subr.bf16.mxu0 0
    %7402 = vmatpush2.bf16.msra.mxu0 0
    %7403 = vmatprep.subr.bf16.mxu0 0
    %7404 = vmatpush2.bf16.msra.mxu0 0
    %7405 = vmatprep.subr.bf16.mxu0 0
    %7406 = vmatpush2.bf16.msra.mxu0 0
    %7407 = vmatprep.mubr.bf16.mxu0 0
    %7408 = vmatmul.mubr.bf16.gmra.mxu0 %v7373
    %v7409 = vpop.f32.mrf.mxu0
    %v7410 = vadd.f32 0.0, %v7409
    %v7411 = vpop.f32.mrf.mxu0
    %v7412 = vpop.f32.mrf.mxu0
    %v7413 = vadd.f32 0.0, %v7412
    %v7414 = vpop.f32.mrf.mxu0
    %7415 = vdwg.mxu0
    %v7416 = vrcp.pop %v7366
    %v7417 = vrcp.pop %v7369
    %v7418 = vmul.f32 %v7410, %v7416
    %v7419 = vmul.f32 %v7413, %v7417
    %v7420 = vpack.c.bf16 %v7419, %v7418
    %s7421 = scalar_lea.vmem %s11, 176
    %v7422 = vld [vmem:[%s7421] sm:$0xf]
    %v7423 = vld [vmem:[%s7421 + $0x4] sm:$0xf]
    %v7424 = vld [vmem:[%s7421 + $0x8] sm:$0xf]
    %v7425 = vld [vmem:[%s7421 + $0xc] sm:$0xf]
    %v7430 = vunpack.c.l.b16 %v7422
    %v7431 = vunpack.c.l.b16 %v7423
    %v7432 = vunpack.c.l.b16 %v7424
    %v7433 = vunpack.c.l.b16 %v7425
    %v7434 = vpack.c.b16 %v7431, %v7430
    %v7435 = vpack.c.b16 %v7433, %v7432
    %v7439 = vsel %vm510, %v7420, 0
    %7441 = vmatprep.subr.bf16.mxu0 0
    %7442 = vmatpush1.bf16.msra.mxu0 0
    %7443 = vmatprep.subr.bf16.mxu0 0
    %7444 = vmatpush1.bf16.msra.mxu0 0
    %7445 = vmatprep.subr.bf16.mxu0 0
    %7446 = vmatpush1.bf16.msra.mxu0 0
    %7447 = vmatprep.subr.bf16.mxu0 0
    %7448 = vmatpush1.bf16.msra.mxu0 0
    %7449 = vmatprep.subr.bf16.mxu0 0
    %7450 = vmatpush1.bf16.msra.mxu0 0
    %7451 = vmatprep.subr.bf16.mxu0 0
    %7452 = vmatpush1.bf16.msra.mxu0 0
    %7453 = vmatprep.subr.bf16.mxu0 0
    %7454 = vmatpush1.bf16.msra.mxu0 %v7435
    %7455 = vmatprep.subr.bf16.mxu0 0
    %7456 = vmatpush1.bf16.msra.mxu0 %v7434
    %7457 = vmatprep.subr.bf16.mxu0 0
    %7458 = vmatpush2.bf16.msra.mxu0 0
    %7459 = vmatprep.subr.bf16.mxu0 0
    %7460 = vmatpush2.bf16.msra.mxu0 0
    %7461 = vmatprep.subr.bf16.mxu0 0
    %7462 = vmatpush2.bf16.msra.mxu0 0
    %7463 = vmatprep.subr.bf16.mxu0 0
    %7464 = vmatpush2.bf16.msra.mxu0 0
    %7465 = vmatprep.subr.bf16.mxu0 0
    %7466 = vmatpush2.bf16.msra.mxu0 0
    %7467 = vmatprep.subr.bf16.mxu0 0
    %7468 = vmatpush2.bf16.msra.mxu0 0
    %7469 = vmatprep.subr.bf16.mxu0 0
    %7470 = vmatpush2.bf16.msra.mxu0 0
    %7471 = vmatprep.subr.bf16.mxu0 0
    %7472 = vmatpush2.bf16.msra.mxu0 0
    %7473 = vmatprep.mubr.bf16.mxu0 0
    %7474 = vmatmul.mubr.bf16.gmra.mxu0 %v7439
    %v7475 = vpop.f32.mrf.mxu0
    %v7476 = vadd.f32 0.0, %v7475
    %v7477 = vpop.f32.mrf.mxu0
    %v7478 = vpop.f32.mrf.mxu0
    %v7479 = vadd.f32 0.0, %v7478
    %v7480 = vpop.f32.mrf.mxu0
    %7481 = vdwg.mxu0
    %v7486 = vunpack.c.l.b16 %v7049
    %v7487 = vunpack.c.l.b16 %v7050
    %v7488 = vunpack.c.l.b16 %v7051
    %v7489 = vunpack.c.l.b16 %v7052
    %v7490 = vpack.c.b16 %v7487, %v7486
    %v7491 = vpack.c.b16 %v7489, %v7488
    %v7495 = vsel %vm510, %v7047, 0
    %7497 = vmatprep.subr.bf16.mxu0 0
    %7498 = vmatpush1.bf16.msra.mxu0 0
    %7499 = vmatprep.subr.bf16.mxu0 0
    %7500 = vmatpush1.bf16.msra.mxu0 0
    %7501 = vmatprep.subr.bf16.mxu0 0
    %7502 = vmatpush1.bf16.msra.mxu0 0
    %7503 = vmatprep.subr.bf16.mxu0 0
    %7504 = vmatpush1.bf16.msra.mxu0 0
    %7505 = vmatprep.subr.bf16.mxu0 0
    %7506 = vmatpush1.bf16.msra.mxu0 0
    %7507 = vmatprep.subr.bf16.mxu0 0
    %7508 = vmatpush1.bf16.msra.mxu0 0
    %7509 = vmatprep.subr.bf16.mxu0 0
    %7510 = vmatpush1.bf16.msra.mxu0 %v7491
    %7511 = vmatprep.subr.bf16.mxu0 0
    %7512 = vmatpush1.bf16.msra.mxu0 %v7490
    %7513 = vmatprep.subr.bf16.mxu0 0
    %7514 = vmatpush2.bf16.msra.mxu0 0
    %7515 = vmatprep.subr.bf16.mxu0 0
    %7516 = vmatpush2.bf16.msra.mxu0 0
    %7517 = vmatprep.subr.bf16.mxu0 0
    %7518 = vmatpush2.bf16.msra.mxu0 0
    %7519 = vmatprep.subr.bf16.mxu0 0
    %7520 = vmatpush2.bf16.msra.mxu0 0
    %7521 = vmatprep.subr.bf16.mxu0 0
    %7522 = vmatpush2.bf16.msra.mxu0 0
    %7523 = vmatprep.subr.bf16.mxu0 0
    %7524 = vmatpush2.bf16.msra.mxu0 0
    %7525 = vmatprep.subr.bf16.mxu0 0
    %7526 = vmatpush2.bf16.msra.mxu0 0
    %7527 = vmatprep.subr.bf16.mxu0 0
    %7528 = vmatpush2.bf16.msra.mxu0 0
    %7529 = vmatprep.mubr.bf16.mxu0 0
    %7530 = vmatmul.mubr.bf16.gmra.mxu0 %v7495
    %v7531 = vpop.f32.mrf.mxu0
    %v7532 = vadd.f32 %v7476, %v7531
    %v7533 = vpop.f32.mrf.mxu0
    %v7534 = vpop.f32.mrf.mxu0
    %v7535 = vadd.f32 %v7479, %v7534
    %v7536 = vpop.f32.mrf.mxu0
    %7537 = vdwg.mxu0
    %v7538 = vadd.f32 %v6617, %v7532
    %v7539 = vadd.f32 %v6618, %v7535
    %s7540 = scalar_lea.vmem %s12, 5
    %v7541 = vld [vmem:[%s7540] sm:$0x1]
    %v7543 = vlaneseq
    %v7544 = vshrl.u32 %v7543, 7
    %v7545 = vsub.s32 0, %v7544
    %v7546 = vrot.slane %v7541, %v7545
    %v7548 = vadd.f32 %v7538, %v7546
    %v7549 = vadd.f32 %v7539, %v7546
    %s7550 = scalar_lea.vmem %s13, 5
    %v7551 = vld [vmem:[%s7550] sm:$0x1]
    %s7552 = scalar_lea.vmem %s14, 5
    %v7553 = vld [vmem:[%s7552] sm:$0x1]
    %v7554 = vsel %vm93, %v7548, 0.0
    %7555 = vadd.xlane.f32.xlu0 %v7554
    %v7556 = vpop.xlane.xlu0 %7555
    %v7557 = vsel %vm93, %v7549, 0.0
    %7558 = vadd.xlane.f32.xlu0 %v7557
    %v7559 = vpop.xlane.xlu0 %7558
    %v7560 = vmul.f32 %v7556, %v227
    %v7561 = vmul.f32 %v7559, %v227
    %v7562 = vsub.f32 %v7548, %v7560
    %v7563 = vsub.f32 %v7549, %v7561
    %v7564 = vmul.f32 %v7562, %v7562
    %v7565 = vmul.f32 %v7563, %v7563
    %v7566 = vsel %vm93, %v7564, 0.0
    %7567 = vadd.xlane.f32.xlu0 %v7566
    %v7568 = vpop.xlane.xlu0 %7567
    %v7569 = vsel %vm93, %v7565, 0.0
    %7570 = vadd.xlane.f32.xlu0 %v7569
    %v7571 = vpop.xlane.xlu0 %7570
    %v7572 = vmul.f32 %v7568, %v227
    %v7573 = vmul.f32 %v7571, %v227
    %v7574 = vadd.f32 %v7572, 1e-05
    %v7575 = vadd.f32 %v7573, 1e-05
    %v7576 = vrsqrt.pop %v7574
    %v7577 = vrsqrt.pop %v7575
    %v7578 = vmul.f32 %v7562, %v7576
    %v7579 = vmul.f32 %v7563, %v7577
    %v7581 = vlaneseq
    %v7582 = vshrl.u32 %v7581, 7
    %v7583 = vsub.s32 0, %v7582
    %v7584 = vrot.slane %v7551, %v7583
    %v7586 = vmul.f32 %v7578, %v7584
    %v7587 = vmul.f32 %v7579, %v7584
    %v7589 = vlaneseq
    %v7590 = vshrl.u32 %v7589, 7
    %v7591 = vsub.s32 0, %v7590
    %v7592 = vrot.slane %v7553, %v7591
    %v7594 = vadd.f32 %v7586, %v7592
    %v7595 = vadd.f32 %v7587, %v7592
    %v7596 = vpack.c.bf16 %v7595, %v7594
    %s7597 = scalar_lea.vmem %s15, 320
    %v7598 = vld [vmem:[%s7597] sm:$0xff]
    %v7599 = vld [vmem:[%s7597 + $0x8] sm:$0xff]
    %v7600 = vld [vmem:[%s7597 + $0x10] sm:$0xff]
    %v7601 = vld [vmem:[%s7597 + $0x18] sm:$0xff]
    %v7602 = vld [vmem:[%s7597 + $0x20] sm:$0xff]
    %v7603 = vld [vmem:[%s7597 + $0x28] sm:$0xff]
    %v7604 = vld [vmem:[%s7597 + $0x30] sm:$0xff]
    %v7605 = vld [vmem:[%s7597 + $0x38] sm:$0xff]
    %s7606 = scalar_lea.vmem %s16, 10
    %v7607 = vld [vmem:[%s7606] sm:$0x3]
    %v7609 = vlaneseq
    %v7610 = vshrl.u32 %v7609, 7
    %v7611 = vsub.s32 0, %v7610
    %v7612 = vrot.slane %v7607, %v7611
    %v7613 = vlaneseq
    %v7614 = vshrl.u32 %v7613, 7
    %v7615 = vsub.s32 1, %v7614
    %v7616 = vrot.slane %v7607, %v7615
    %v7627 = vunpack.c.l.b16 %v7598
    %v7628 = vunpack.c.h.b16 %v7598
    %v7629 = vunpack.c.l.b16 %v7599
    %v7630 = vunpack.c.h.b16 %v7599
    %v7631 = vunpack.c.l.b16 %v7600
    %v7632 = vunpack.c.h.b16 %v7600
    %v7633 = vunpack.c.l.b16 %v7601
    %v7634 = vunpack.c.h.b16 %v7601
    %v7635 = vunpack.c.l.b16 %v7602
    %v7636 = vunpack.c.h.b16 %v7602
    %v7637 = vunpack.c.l.b16 %v7603
    %v7638 = vunpack.c.h.b16 %v7603
    %v7639 = vunpack.c.l.b16 %v7604
    %v7640 = vunpack.c.h.b16 %v7604
    %v7641 = vunpack.c.l.b16 %v7605
    %v7642 = vunpack.c.h.b16 %v7605
    %v7643 = vpack.c.b16 %v7629, %v7627
    %v7644 = vpack.c.b16 %v7630, %v7628
    %v7645 = vpack.c.b16 %v7633, %v7631
    %v7646 = vpack.c.b16 %v7634, %v7632
    %v7647 = vpack.c.b16 %v7637, %v7635
    %v7648 = vpack.c.b16 %v7638, %v7636
    %v7649 = vpack.c.b16 %v7641, %v7639
    %v7650 = vpack.c.b16 %v7642, %v7640
    %v7660 = vsel %vm93, %v7596, 0
    %7662 = vmatprep.subr.bf16.mxu0 0
    %7663 = vmatpush1.bf16.msra.mxu0 0
    %7664 = vmatprep.subr.bf16.mxu0 0
    %7665 = vmatpush1.bf16.msra.mxu0 0
    %7666 = vmatprep.subr.bf16.mxu0 0
    %7667 = vmatpush1.bf16.msra.mxu0 0
    %7668 = vmatprep.subr.bf16.mxu0 0
    %7669 = vmatpush1.bf16.msra.mxu0 0
    %7670 = vmatprep.subr.bf16.mxu0 %v7650
    %7671 = vmatpush1.bf16.msra.mxu0 %v7649
    %7672 = vmatprep.subr.bf16.mxu0 %v7648
    %7673 = vmatpush1.bf16.msra.mxu0 %v7647
    %7674 = vmatprep.subr.bf16.mxu0 %v7646
    %7675 = vmatpush1.bf16.msra.mxu0 %v7645
    %7676 = vmatprep.subr.bf16.mxu0 %v7644
    %7677 = vmatpush1.bf16.msra.mxu0 %v7643
    %7678 = vmatprep.subr.bf16.mxu0 0
    %7679 = vmatpush2.bf16.msra.mxu0 0
    %7680 = vmatprep.subr.bf16.mxu0 0
    %7681 = vmatpush2.bf16.msra.mxu0 0
    %7682 = vmatprep.subr.bf16.mxu0 0
    %7683 = vmatpush2.bf16.msra.mxu0 0
    %7684 = vmatprep.subr.bf16.mxu0 0
    %7685 = vmatpush2.bf16.msra.mxu0 0
    %7686 = vmatprep.subr.bf16.mxu0 0
    %7687 = vmatpush2.bf16.msra.mxu0 0
    %7688 = vmatprep.subr.bf16.mxu0 0
    %7689 = vmatpush2.bf16.msra.mxu0 0
    %7690 = vmatprep.subr.bf16.mxu0 0
    %7691 = vmatpush2.bf16.msra.mxu0 0
    %7692 = vmatprep.subr.bf16.mxu0 0
    %7693 = vmatpush2.bf16.msra.mxu0 0
    %7694 = vmatprep.mubr.bf16.mxu0 0
    %7695 = vmatmul.mubr.bf16.gmra.mxu0 %v7660
    %v7696 = vpop.f32.mrf.mxu0
    %v7697 = vadd.f32 %v7612, %v7696
    %v7698 = vpop.f32.mrf.mxu0
    %v7699 = vadd.f32 %v7616, %v7698
    %v7700 = vpop.f32.mrf.mxu0
    %v7701 = vadd.f32 %v7612, %v7700
    %v7702 = vpop.f32.mrf.mxu0
    %v7703 = vadd.f32 %v7616, %v7702
    %7704 = vdwg.mxu0
    %v7705 = vmax.f32 %v7697, 0.0
    %v7706 = vmax.f32 %v7699, 0.0
    %v7707 = vmax.f32 %v7701, 0.0
    %v7708 = vmax.f32 %v7703, 0.0
    %v7709 = vpack.c.bf16 %v7707, %v7705
    %v7710 = vpack.c.bf16 %v7708, %v7706
    %s7711 = scalar_lea.vmem %s17, 640
    %v7712 = vld [vmem:[%s7711] sm:$0xf]
    %v7713 = vld [vmem:[%s7711 + $0x4] sm:$0xf]
    %v7714 = vld [vmem:[%s7711 + $0x8] sm:$0xf]
    %v7715 = vld [vmem:[%s7711 + $0xc] sm:$0xf]
    %v7716 = vld [vmem:[%s7711 + $0x10] sm:$0xf]
    %v7717 = vld [vmem:[%s7711 + $0x14] sm:$0xf]
    %v7718 = vld [vmem:[%s7711 + $0x18] sm:$0xf]
    %v7719 = vld [vmem:[%s7711 + $0x1c] sm:$0xf]
    %v7720 = vld [vmem:[%s7711 + $0x20] sm:$0xf]
    %v7721 = vld [vmem:[%s7711 + $0x24] sm:$0xf]
    %v7722 = vld [vmem:[%s7711 + $0x28] sm:$0xf]
    %v7723 = vld [vmem:[%s7711 + $0x2c] sm:$0xf]
    %v7724 = vld [vmem:[%s7711 + $0x30] sm:$0xf]
    %v7725 = vld [vmem:[%s7711 + $0x34] sm:$0xf]
    %v7726 = vld [vmem:[%s7711 + $0x38] sm:$0xf]
    %v7727 = vld [vmem:[%s7711 + $0x3c] sm:$0xf]
    %v7728 = vld [vmem:[%s7711 + $0x40] sm:$0xf]
    %v7729 = vld [vmem:[%s7711 + $0x44] sm:$0xf]
    %v7730 = vld [vmem:[%s7711 + $0x48] sm:$0xf]
    %v7731 = vld [vmem:[%s7711 + $0x4c] sm:$0xf]
    %v7732 = vld [vmem:[%s7711 + $0x50] sm:$0xf]
    %v7733 = vld [vmem:[%s7711 + $0x54] sm:$0xf]
    %v7734 = vld [vmem:[%s7711 + $0x58] sm:$0xf]
    %v7735 = vld [vmem:[%s7711 + $0x5c] sm:$0xf]
    %v7736 = vld [vmem:[%s7711 + $0x60] sm:$0xf]
    %v7737 = vld [vmem:[%s7711 + $0x64] sm:$0xf]
    %v7738 = vld [vmem:[%s7711 + $0x68] sm:$0xf]
    %v7739 = vld [vmem:[%s7711 + $0x6c] sm:$0xf]
    %v7740 = vld [vmem:[%s7711 + $0x70] sm:$0xf]
    %v7741 = vld [vmem:[%s7711 + $0x74] sm:$0xf]
    %v7742 = vld [vmem:[%s7711 + $0x78] sm:$0xf]
    %v7743 = vld [vmem:[%s7711 + $0x7c] sm:$0xf]
    %s7744 = scalar_lea.vmem %s18, 5
    %v7745 = vld [vmem:[%s7744] sm:$0x1]
    %v7747 = vlaneseq
    %v7748 = vshrl.u32 %v7747, 7
    %v7749 = vsub.s32 0, %v7748
    %v7750 = vrot.slane %v7745, %v7749
    %v7784 = vunpack.c.l.b16 %v7712
    %v7785 = vunpack.c.l.b16 %v7713
    %v7786 = vunpack.c.l.b16 %v7714
    %v7787 = vunpack.c.l.b16 %v7715
    %v7788 = vunpack.c.l.b16 %v7716
    %v7789 = vunpack.c.l.b16 %v7717
    %v7790 = vunpack.c.l.b16 %v7718
    %v7791 = vunpack.c.l.b16 %v7719
    %v7792 = vunpack.c.l.b16 %v7720
    %v7793 = vunpack.c.l.b16 %v7721
    %v7794 = vunpack.c.l.b16 %v7722
    %v7795 = vunpack.c.l.b16 %v7723
    %v7796 = vunpack.c.l.b16 %v7724
    %v7797 = vunpack.c.l.b16 %v7725
    %v7798 = vunpack.c.l.b16 %v7726
    %v7799 = vunpack.c.l.b16 %v7727
    %v7800 = vunpack.c.l.b16 %v7728
    %v7801 = vunpack.c.l.b16 %v7729
    %v7802 = vunpack.c.l.b16 %v7730
    %v7803 = vunpack.c.l.b16 %v7731
    %v7804 = vunpack.c.l.b16 %v7732
    %v7805 = vunpack.c.l.b16 %v7733
    %v7806 = vunpack.c.l.b16 %v7734
    %v7807 = vunpack.c.l.b16 %v7735
    %v7808 = vunpack.c.l.b16 %v7736
    %v7809 = vunpack.c.l.b16 %v7737
    %v7810 = vunpack.c.l.b16 %v7738
    %v7811 = vunpack.c.l.b16 %v7739
    %v7812 = vunpack.c.l.b16 %v7740
    %v7813 = vunpack.c.l.b16 %v7741
    %v7814 = vunpack.c.l.b16 %v7742
    %v7815 = vunpack.c.l.b16 %v7743
    %v7816 = vpack.c.b16 %v7785, %v7784
    %v7817 = vpack.c.b16 %v7787, %v7786
    %v7818 = vpack.c.b16 %v7789, %v7788
    %v7819 = vpack.c.b16 %v7791, %v7790
    %v7820 = vpack.c.b16 %v7793, %v7792
    %v7821 = vpack.c.b16 %v7795, %v7794
    %v7822 = vpack.c.b16 %v7797, %v7796
    %v7823 = vpack.c.b16 %v7799, %v7798
    %v7824 = vpack.c.b16 %v7801, %v7800
    %v7825 = vpack.c.b16 %v7803, %v7802
    %v7826 = vpack.c.b16 %v7805, %v7804
    %v7827 = vpack.c.b16 %v7807, %v7806
    %v7828 = vpack.c.b16 %v7809, %v7808
    %v7829 = vpack.c.b16 %v7811, %v7810
    %v7830 = vpack.c.b16 %v7813, %v7812
    %v7831 = vpack.c.b16 %v7815, %v7814
    %7848 = vmatprep.subr.bf16.mxu0 0
    %7849 = vmatpush1.bf16.msra.mxu0 %v7823
    %7850 = vmatprep.subr.bf16.mxu0 0
    %7851 = vmatpush1.bf16.msra.mxu0 %v7822
    %7852 = vmatprep.subr.bf16.mxu0 0
    %7853 = vmatpush1.bf16.msra.mxu0 %v7821
    %7854 = vmatprep.subr.bf16.mxu0 0
    %7855 = vmatpush1.bf16.msra.mxu0 %v7820
    %7856 = vmatprep.subr.bf16.mxu0 0
    %7857 = vmatpush1.bf16.msra.mxu0 %v7819
    %7858 = vmatprep.subr.bf16.mxu0 0
    %7859 = vmatpush1.bf16.msra.mxu0 %v7818
    %7860 = vmatprep.subr.bf16.mxu0 0
    %7861 = vmatpush1.bf16.msra.mxu0 %v7817
    %7862 = vmatprep.subr.bf16.mxu0 0
    %7863 = vmatpush1.bf16.msra.mxu0 %v7816
    %7864 = vmatprep.subr.bf16.mxu0 0
    %7865 = vmatpush2.bf16.msra.mxu0 %v7831
    %7866 = vmatprep.subr.bf16.mxu0 0
    %7867 = vmatpush2.bf16.msra.mxu0 %v7830
    %7868 = vmatprep.subr.bf16.mxu0 0
    %7869 = vmatpush2.bf16.msra.mxu0 %v7829
    %7870 = vmatprep.subr.bf16.mxu0 0
    %7871 = vmatpush2.bf16.msra.mxu0 %v7828
    %7872 = vmatprep.subr.bf16.mxu0 0
    %7873 = vmatpush2.bf16.msra.mxu0 %v7827
    %7874 = vmatprep.subr.bf16.mxu0 0
    %7875 = vmatpush2.bf16.msra.mxu0 %v7826
    %7876 = vmatprep.subr.bf16.mxu0 0
    %7877 = vmatpush2.bf16.msra.mxu0 %v7825
    %7878 = vmatprep.subr.bf16.mxu0 0
    %7879 = vmatpush2.bf16.msra.mxu0 %v7824
    %7880 = vmatprep.mubr.bf16.mxu0 %v7710
    %7881 = vmatmul.mubr.bf16.gmra.mxu0 %v7709
    %v7882 = vpop.f32.mrf.mxu0
    %v7883 = vadd.f32 %v7750, %v7882
    %v7884 = vpop.f32.mrf.mxu0
    %v7885 = vpop.f32.mrf.mxu0
    %v7886 = vadd.f32 %v7750, %v7885
    %v7887 = vpop.f32.mrf.mxu0
    %7888 = vdwg.mxu0
    %v7889 = vadd.f32 %v7548, %v7883
    %v7890 = vadd.f32 %v7549, %v7886
    %v7891 = vsel %vm6619, 1, 0
    %v7892 = vsel %vm6620, 1, 0
    %7893 = vset.pattern.permute.xlu0 0
    %7894 = vperm.xlu0 %7893, %v7891
    %v7895 = vpop.permute.xlu0 %7894
    %7896 = vset.pattern.permute.xlu0 0
    %7897 = vperm.xlu0 %7896, %v7892
    %v7898 = vpop.permute.xlu0 %7897
    %vm7899 = vcmp.eq.s32.totalorder %v7895, 1
    %vm7900 = vcmp.eq.s32.totalorder %v7898, 1
    %v7901 = vsel %vm7899, %v7889, %v6617
    %v7902 = vsel %vm7900, %v7890, %v6618
    %vm7903 = vcmask 122880
    %7904 = vst.msk [vmem:[#allocation5] sm:$0x1] %vm7903, %v6624
    %v7905 = vld [vmem:[%s19] sm:$0x1]
    %v7906 = vld [vmem:[%s20] sm:$0x1]
    %v7907 = vsel %vm93, %v7901, 0.0
    %7908 = vadd.xlane.f32.xlu0 %v7907
    %v7909 = vpop.xlane.xlu0 %7908
    %v7910 = vsel %vm93, %v7902, 0.0
    %7911 = vadd.xlane.f32.xlu0 %v7910
    %v7912 = vpop.xlane.xlu0 %7911
    %v7913 = vmul.f32 %v7909, %v227
    %v7914 = vmul.f32 %v7912, %v227
    %v7915 = vsub.f32 %v7901, %v7913
    %v7916 = vsub.f32 %v7902, %v7914
    %v7917 = vmul.f32 %v7915, %v7915
    %v7918 = vmul.f32 %v7916, %v7916
    %v7919 = vsel %vm93, %v7917, 0.0
    %7920 = vadd.xlane.f32.xlu0 %v7919
    %v7921 = vpop.xlane.xlu0 %7920
    %v7922 = vsel %vm93, %v7918, 0.0
    %7923 = vadd.xlane.f32.xlu0 %v7922
    %v7924 = vpop.xlane.xlu0 %7923
    %v7925 = vmul.f32 %v7921, %v227
    %v7926 = vmul.f32 %v7924, %v227
    %v7927 = vadd.f32 %v7925, 1e-05
    %v7928 = vadd.f32 %v7926, 1e-05
    %v7929 = vrsqrt.pop %v7927
    %v7930 = vrsqrt.pop %v7928
    %v7931 = vmul.f32 %v7915, %v7929
    %v7932 = vmul.f32 %v7916, %v7930
    %v7934 = vlaneseq
    %v7935 = vshrl.u32 %v7934, 7
    %v7936 = vsub.s32 0, %v7935
    %v7937 = vrot.slane %v7905, %v7936
    %v7939 = vmul.f32 %v7931, %v7937
    %v7940 = vmul.f32 %v7932, %v7937
    %v7942 = vlaneseq
    %v7943 = vshrl.u32 %v7942, 7
    %v7944 = vsub.s32 0, %v7943
    %v7945 = vrot.slane %v7906, %v7944
    %v7947 = vadd.f32 %v7939, %v7945
    %v7948 = vadd.f32 %v7940, %v7945
    %v7949 = vpack.c.bf16 %v7948, %v7947
    %v7950 = vld [vmem:[%s21] sm:$0xff]
    %v7951 = vld [vmem:[%s21 + $0x8] sm:$0xff]
    %v7952 = vld [vmem:[%s21 + $0x10] sm:$0xff]
    %v7953 = vld [vmem:[%s21 + $0x18] sm:$0xff]
    %v7954 = vld [vmem:[%s21 + $0x20] sm:$0xff]
    %v7955 = vld [vmem:[%s21 + $0x28] sm:$0xff]
    %v7956 = vld [vmem:[%s21 + $0x30] sm:$0xff]
    %v7957 = vld [vmem:[%s21 + $0x38] sm:$0xff]
    %v7958 = vld [vmem:[%s22] sm:$0x3]
    %v7960 = vlaneseq
    %v7961 = vshrl.u32 %v7960, 7
    %v7962 = vsub.s32 0, %v7961
    %v7963 = vrot.slane %v7958, %v7962
    %v7964 = vlaneseq
    %v7965 = vshrl.u32 %v7964, 7
    %v7966 = vsub.s32 1, %v7965
    %v7967 = vrot.slane %v7958, %v7966
    %v7978 = vunpack.c.l.b16 %v7950
    %v7979 = vunpack.c.h.b16 %v7950
    %v7980 = vunpack.c.l.b16 %v7951
    %v7981 = vunpack.c.h.b16 %v7951
    %v7982 = vunpack.c.l.b16 %v7952
    %v7983 = vunpack.c.h.b16 %v7952
    %v7984 = vunpack.c.l.b16 %v7953
    %v7985 = vunpack.c.h.b16 %v7953
    %v7986 = vunpack.c.l.b16 %v7954
    %v7987 = vunpack.c.h.b16 %v7954
    %v7988 = vunpack.c.l.b16 %v7955
    %v7989 = vunpack.c.h.b16 %v7955
    %v7990 = vunpack.c.l.b16 %v7956
    %v7991 = vunpack.c.h.b16 %v7956
    %v7992 = vunpack.c.l.b16 %v7957
    %v7993 = vunpack.c.h.b16 %v7957
    %v7994 = vpack.c.b16 %v7980, %v7978
    %v7995 = vpack.c.b16 %v7981, %v7979
    %v7996 = vpack.c.b16 %v7984, %v7982
    %v7997 = vpack.c.b16 %v7985, %v7983
    %v7998 = vpack.c.b16 %v7988, %v7986
    %v7999 = vpack.c.b16 %v7989, %v7987
    %v8000 = vpack.c.b16 %v7992, %v7990
    %v8001 = vpack.c.b16 %v7993, %v7991
    %v8011 = vsel %vm93, %v7949, 0
    %8013 = vmatprep.subr.bf16.mxu0 0
    %8014 = vmatpush1.bf16.msra.mxu0 0
    %8015 = vmatprep.subr.bf16.mxu0 0
    %8016 = vmatpush1.bf16.msra.mxu0 0
    %8017 = vmatprep.subr.bf16.mxu0 0
    %8018 = vmatpush1.bf16.msra.mxu0 0
    %8019 = vmatprep.subr.bf16.mxu0 0
    %8020 = vmatpush1.bf16.msra.mxu0 0
    %8021 = vmatprep.subr.bf16.mxu0 %v8001
    %8022 = vmatpush1.bf16.msra.mxu0 %v8000
    %8023 = vmatprep.subr.bf16.mxu0 %v7999
    %8024 = vmatpush1.bf16.msra.mxu0 %v7998
    %8025 = vmatprep.subr.bf16.mxu0 %v7997
    %8026 = vmatpush1.bf16.msra.mxu0 %v7996
    %8027 = vmatprep.subr.bf16.mxu0 %v7995
    %8028 = vmatpush1.bf16.msra.mxu0 %v7994
    %8029 = vmatprep.subr.bf16.mxu0 0
    %8030 = vmatpush2.bf16.msra.mxu0 0
    %8031 = vmatprep.subr.bf16.mxu0 0
    %8032 = vmatpush2.bf16.msra.mxu0 0
    %8033 = vmatprep.subr.bf16.mxu0 0
    %8034 = vmatpush2.bf16.msra.mxu0 0
    %8035 = vmatprep.subr.bf16.mxu0 0
    %8036 = vmatpush2.bf16.msra.mxu0 0
    %8037 = vmatprep.subr.bf16.mxu0 0
    %8038 = vmatpush2.bf16.msra.mxu0 0
    %8039 = vmatprep.subr.bf16.mxu0 0
    %8040 = vmatpush2.bf16.msra.mxu0 0
    %8041 = vmatprep.subr.bf16.mxu0 0
    %8042 = vmatpush2.bf16.msra.mxu0 0
    %8043 = vmatprep.subr.bf16.mxu0 0
    %8044 = vmatpush2.bf16.msra.mxu0 0
    %8045 = vmatprep.mubr.bf16.mxu0 0
    %8046 = vmatmul.mubr.bf16.gmra.mxu0 %v8011
    %v8047 = vpop.f32.mrf.mxu0
    %v8048 = vadd.f32 %v7963, %v8047
    %v8049 = vpop.f32.mrf.mxu0
    %v8050 = vadd.f32 %v7967, %v8049
    %v8051 = vpop.f32.mrf.mxu0
    %v8052 = vadd.f32 %v7963, %v8051
    %v8053 = vpop.f32.mrf.mxu0
    %v8054 = vadd.f32 %v7967, %v8053
    %8055 = vdwg.mxu0
    %8056 = vst [vmem:[#allocation3] sm:$0xff] %v8048
    %8057 = vst [vmem:[#allocation3 + $0x8] sm:$0xff] %v8050
    %8058 = vst [vmem:[#allocation3 + $0x10] sm:$0xff] %v8052
    %8059 = vst [vmem:[#allocation3 + $0x18] sm:$0xff] %v8054
    // Predicated region
    $region94: #{tpu_custom_call.1} parent=1 // pred_check
      _
    $region95: #{tpu_custom_call.1} parent=1 // pred_check_branch
      %8061 = sbr.rel (0) target = $region97
    $region96: #{tpu_custom_call.1} parent=1 // pred_region
      %s8063 = ssub.s32 512, 512
      %8064 = vsyncadd [#allocation4], %s8063
      %s8065 = sshll.u32 [#allocation3], 4
      %s8066 = int_to_ptr.vmem [resolvable:$true] %s8065
      %8071 = dma.vmem_to_hbm [thread:$0]  %s8066, 512, %s23, [#allocation4], 256, 256, 16
    $region97: #{tpu_custom_call.1} parent=1 // pred_fallthru
      _
    // Predicated region
    $region98: #{tpu_custom_call.1} parent=1 // pred_check
      _
    $region99: #{tpu_custom_call.1} parent=1 // pred_check_branch
      %8073 = sbr.rel (0) target = $region101
    $region100: #{tpu_custom_call.1} parent=1 // pred_region
      %s8075 = ssub.s32 16, 16
      %8076 = vsyncadd [#allocation6], %s8075
      %s8078 = sshll.u32 [#allocation5], 4
      %s8079 = int_to_ptr.vmem [resolvable:$true] %s8078
      %8081 = dma.vmem_to_hbm [thread:$0]  %s8079, 16, %s24, [#allocation6]
    $region101: #{tpu_custom_call.1} parent=1 // pred_fallthru
      _
    // Predicated region
    $region102: #{tpu_custom_call.1} parent=1 // pred_check
      _
    $region103: #{tpu_custom_call.1} parent=1 // pred_check_branch
      %8083 = sbr.rel (0) target = $region105
    $region104: #{tpu_custom_call.1} parent=1 // pred_region
      %8084 = dma.done [#allocation4], 512
    $region105: #{tpu_custom_call.1} parent=1 // pred_fallthru
      _
    // Predicated region
    $region106: #{tpu_custom_call.1} parent=1 // pred_check
      _
    $region107: #{tpu_custom_call.1} parent=1 // pred_check_branch
      %8086 = sbr.rel (0) target = $region109
    $region108: #{tpu_custom_call.1} parent=1 // pred_region
      %8087 = dma.done [#allocation6], 16
    $region109: #{tpu_custom_call.1} parent=1 // pred_fallthru
      _
    %8088 = vsyncpa [#allocation4], 1
    %8089 = vsyncpa [#allocation6], 1

</llo_original>
